<compile_context>
chip_gen: v7x
topology: tpu7x:2x2x1
jax: 0.10.0
libtpu: 0.0.40
codegen_flags: <defaults>
</compile_context>

<pallas_src>
import functools

import jax
import jax.numpy as jnp
from jax.experimental import pallas as pl
from jax.experimental.pallas import tpu as pltpu

LANE = 128


def _round_up(x, m):
    return (x + m - 1) // m * m


# ----------------------------------------------------------------------------
# Pallas kernels
# ----------------------------------------------------------------------------
def _conv_stage_kernel(*refs, H, W, Wp, cin, cout, pool, prepacked, T_out):
    """One fused VGG feature stage (3x3 conv pad=1 + bias + ReLU [+ 2x2/2 max-pool])
    for a single image.  Output is written directly in the NEXT stage's spatially
    padded, row-flattened NHWC layout (zeroed borders), so stages chain with no XLA
    ops in between.

    refs (order):
      x_ref    : prepacked -> (E, 9*cin) im2col patch (bf16)
                 else      -> (T_in, cin) padded row-flattened activation (bf16)
      w_ref    : (9*cin, cout)  conv weight, rows ordered (kh, kw, cin)       (bf16)
      b_ref    : (1, cout)      bias                                          (f32)
      sel_ref  : (T_out, E)     0/1 pool->padded-layout selector   [pool only] (bf16)
      o_ref    : (T_out, cout)  output in next stage's padded layout          (bf16)
      patch_ref: (E, 9*cin)     VMEM scratch                    [not prepacked]
      act_ref  : (E_pad, cout)  VMEM scratch                        [pool only]
    """
    it = iter(refs)
    x_ref, w_ref, b_ref = next(it), next(it), next(it)
    sel_ref = next(it) if pool else None
    o_ref = next(it)
    patch_ref = None if prepacked else next(it)
    act_ref = next(it) if pool else None

    E = H * Wp  # conv evaluated over padded width; columns w >= W are discarded later

    # ---- stacked im2col patch: one K=9*cin MXU dot instead of 9 shallow dots ----
    if prepacked:
        patch = x_ref[...]
    else:
        for t in range(9):
            di, dj = t // 3, t % 3
            start = di * Wp + dj
            patch_ref[:, t * cin:(t + 1) * cin] = x_ref[start:start + E, :]
        patch = patch_ref[...]

    acc = jnp.dot(patch, w_ref[...], preferred_element_type=jnp.float32)  # (E, cout)
    act = jnp.maximum(acc + b_ref[...], 0.0)

    if pool:
        # 2x2/2 max-pool via shifted VMEM reads + VPU max (no pool matmuls); the
        # activation plane lives in VMEM scratch rather than the vreg file.
        e_pad = act_ref.shape[0]
        act_ref[0:E, :] = act.astype(jnp.bfloat16)
        act_ref[E:e_pad, :] = jnp.zeros((e_pad - E, cout), jnp.bfloat16)
        pooled = jnp.maximum(
            jnp.maximum(act_ref[0:E, :], act_ref[1:E + 1, :]),
            jnp.maximum(act_ref[Wp:Wp + E, :], act_ref[Wp + 1:Wp + 1 + E, :]))
        # Single 0/1 matmul: compacts pooled rows AND scatters them into the next
        # stage's zero-bordered padded layout.
        out = jnp.dot(sel_ref[...], pooled, preferred_element_type=jnp.float32)
        o_ref[...] = out.astype(o_ref.dtype)
    else:
        # No pool: emitting the padded layout is just a shifted, column-masked store.
        col = jax.lax.broadcasted_iota(jnp.int32, (E, 1), 0) % Wp
        act_m = jnp.where(col < W, act, 0.0).astype(jnp.bfloat16)
        o_ref[0:Wp + 1, :] = jnp.zeros((Wp + 1, cout), jnp.bfloat16)
        o_ref[Wp + 1:Wp + 1 + E, :] = act_m
        o_ref[Wp + 1 + E:T_out, :] = jnp.zeros((T_out - (Wp + 1 + E), cout), jnp.bfloat16)


def _classifier_kernel(x_ref, w0_ref, b0_ref, w1_ref, b1_ref, w2_ref, b2_ref, o_ref):
    """Fused classifier: Linear+ReLU -> Linear+ReLU -> Linear, single launch."""
    h = jnp.dot(x_ref[...], w0_ref[...], preferred_element_type=jnp.float32) + b0_ref[...]
    h = jnp.maximum(h, 0.0).astype(jnp.bfloat16)
    # TODO(synk): nn.Dropout(p=0.5) implemented as identity (eval-mode semantics).
    h = jnp.dot(h, w1_ref[...], preferred_element_type=jnp.float32) + b1_ref[...]
    h = jnp.maximum(h, 0.0).astype(jnp.bfloat16)
    o_ref[...] = (jnp.dot(h, w2_ref[...], preferred_element_type=jnp.float32)
                  + b2_ref[...]).astype(o_ref.dtype)


# ----------------------------------------------------------------------------
# Pallas wrappers
# ----------------------------------------------------------------------------
def conv_stage(x, st, *, prepacked):
    N = x.shape[0]
    H, W = st["H"], st["W"]
    cin, cout = st["cin_pad"], st["cout_pad"]
    Wp = W + 2
    E = H * Wp
    T_out = st["T_out"]
    pool = st["pool"]

    kern = functools.partial(_conv_stage_kernel, H=H, W=W, Wp=Wp, cin=cin, cout=cout,
                             pool=pool, prepacked=prepacked, T_out=T_out)

    in_specs = [pl.BlockSpec((None,) + x.shape[1:], lambda n: (n, 0, 0)),
                pl.BlockSpec(st["w"].shape, lambda n: (0, 0)),
                pl.BlockSpec(st["b"].shape, lambda n: (0, 0))]
    inputs = [x, st["w"], st["b"]]
    if pool:
        in_specs.append(pl.BlockSpec(st["sel"].shape, lambda n: (0, 0)))
        inputs.append(st["sel"])

    scratch = []
    if not prepacked:
        scratch.append(pltpu.VMEM((E, 9 * cin), jnp.bfloat16))
    if pool:
        e_pad = _round_up(E + Wp + 1, 8)
        scratch.append(pltpu.VMEM((e_pad, cout), jnp.bfloat16))

    flops = N * (2 * E * 9 * cin * cout + (2 * T_out * E * cout if pool else 0))
    bytes_accessed = int((x.size + st["w"].size + N * T_out * cout) * 2 + st["b"].size * 4)
    return pl.pallas_call(
        kern,
        out_shape=jax.ShapeDtypeStruct((N, T_out, cout), jnp.bfloat16),
        grid=(N,),
        in_specs=in_specs,
        out_specs=pl.BlockSpec((None, T_out, cout), lambda n: (n, 0, 0)),
        scratch_shapes=scratch,
        compiler_params=pltpu.CompilerParams(
            dimension_semantics=("parallel",),
            vmem_limit_bytes=32 * 1024 * 1024,
        ),
        cost_estimate=pl.CostEstimate(flops=int(flops), transcendentals=0,
                                      bytes_accessed=bytes_accessed),
    )(*inputs)


def classifier_forward(xf, cls):
    (w0, b0), (w1, b1), (w2, b2) = cls
    M, K = xf.shape
    hid = w0.shape[1]
    nout = w2.shape[1]
    flops = 2 * M * (K * hid + hid * hid + hid * nout)
    bytes_accessed = int((xf.size + w0.size + w1.size + w2.size) * 2
                         + (M * nout + b0.size + b1.size + b2.size) * 4)
    return pl.pallas_call(
        _classifier_kernel,
        out_shape=jax.ShapeDtypeStruct((M, nout), jnp.float32),
        grid=(1,),
        in_specs=[pl.BlockSpec((M, K), lambda i: (0, 0)),
                  pl.BlockSpec(w0.shape, lambda i: (0, 0)),
                  pl.BlockSpec(b0.shape, lambda i: (0, 0)),
                  pl.BlockSpec(w1.shape, lambda i: (0, 0)),
                  pl.BlockSpec(b1.shape, lambda i: (0, 0)),
                  pl.BlockSpec(w2.shape, lambda i: (0, 0)),
                  pl.BlockSpec(b2.shape, lambda i: (0, 0))],
        out_specs=pl.BlockSpec((M, nout), lambda i: (0, 0)),
        compiler_params=pltpu.CompilerParams(
            dimension_semantics=("arbitrary",),
            vmem_limit_bytes=32 * 1024 * 1024,
        ),
        cost_estimate=pl.CostEstimate(flops=int(flops), transcendentals=0,
                                      bytes_accessed=bytes_accessed),
    )(xf, w0, b0, w1, b1, w2, b2)


# ----------------------------------------------------------------------------
# Parameter construction / one-time preprocessing
# ----------------------------------------------------------------------------
def xavier_uniform(key, shape, fan_in, fan_out):
    bound = jnp.sqrt(6.0 / (fan_in + fan_out))
    return jax.random.uniform(key, shape, jnp.float32, -bound, bound)


def make_pool_pad_selector(H, W, T_out):
    """(T_out, E) 0/1 matrix mapping pooled top-left conv rows (E=H*(W+2)) into the
    next stage's spatially padded, row-flattened layout (zero border/tail rows)."""
    Wp = W + 2
    E = H * Wp
    Ho, Wo = H // 2, W // 2
    Hp_n, Wp_n = Ho + 2, Wo + 2
    rows = jnp.arange(T_out)
    h_n, w_n = rows // Wp_n, rows % Wp_n
    interior = ((rows < Hp_n * Wp_n) & (h_n >= 1) & (h_n <= Ho)
                & (w_n >= 1) & (w_n <= Wo))
    src = 2 * (h_n - 1) * Wp + 2 * (w_n - 1)
    src = jnp.where(interior, src, -1)
    return (src[:, None] == jnp.arange(E)[None, :]).astype(jnp.bfloat16)


def make_vgg_params(key, cfg, in_channels, num_classes, hidden, H, W):
    cin_pad = max(8, _round_up(in_channels, 8))
    params = {"features": [], "cin_pad": cin_pad, "num_classes": num_classes}
    raw = {"convs": [], "linears": []}
    h, w = H, W
    c_prev, c_prev_pad = in_channels, cin_pad
    i = 0
    while i < len(cfg):
        v = cfg[i]
        assert v != "M", "cfg must not start a stage with 'M'"
        cout = v
        cout_pad = _round_up(cout, LANE)
        key, kconv = jax.random.split(key)
        wl = xavier_uniform(kconv, (cout, c_prev, 3, 3),
                            fan_in=c_prev * 9, fan_out=cout * 9)
        pool = (i + 1 < len(cfg) and cfg[i + 1] == "M")

        wt = jnp.transpose(wl, (2, 3, 1, 0))                       # (3,3,cin,cout)
        wt = jnp.pad(wt, ((0, 0), (0, 0), (0, c_prev_pad - c_prev),
                          (0, cout_pad - cout)))
        w_mat = wt.reshape(9 * c_prev_pad, cout_pad).astype(jnp.bfloat16)
        b_mat = jnp.zeros((1, cout_pad), jnp.float32)

        ho, wo = (h // 2, w // 2) if pool else (h, w)
        T_out = _round_up((ho + 2) * (wo + 2) + 2, 8)
        st = {"w": w_mat, "b": b_mat, "H": h, "W": w, "cin_pad": c_prev_pad,
              "cout_pad": cout_pad, "pool": pool, "T_out": T_out}
        if pool:
            st["sel"] = make_pool_pad_selector(h, w, T_out)
        params["features"].append(st)
        raw["convs"].append((wl, pool))

        c_prev, c_prev_pad = cout, cout_pad
        h, w = ho, wo
        i += 2 if pool else 1

    # classifier (Linear, ReLU, Dropout, Linear, ReLU, Dropout, Linear)
    flat_dim = c_prev * h * w
    hid_pad = _round_up(hidden, LANE)
    nc_pad = _round_up(num_classes, LANE)
    key, k0, k1, k2 = jax.random.split(key, 4)
    w0l = xavier_uniform(k0, (hidden, flat_dim), fan_in=flat_dim, fan_out=hidden)
    w1l = xavier_uniform(k1, (hidden, hidden), fan_in=hidden, fan_out=hidden)
    w2l = xavier_uniform(k2, (num_classes, hidden), fan_in=hidden, fan_out=num_classes)
    raw["linears"] = [w0l, w1l, w2l]

    # Fold PyTorch NCHW-flatten ordering + the last stage's padded layout into w0.
    Hp_f, Wp_f = h + 2, w + 2
    T_f = params["features"][-1]["T_out"]
    w0r = w0l.reshape(hidden, c_prev, h, w)
    w0r = jnp.transpose(w0r, (2, 3, 1, 0))                         # (h, w, cin, hidden)
    w0r = jnp.pad(w0r, ((1, 1), (1, 1), (0, c_prev_pad - c_prev),
                        (0, hid_pad - hidden)))
    w0_mat = w0r.reshape(Hp_f * Wp_f * c_prev_pad, hid_pad)
    w0_mat = jnp.pad(w0_mat, ((0, (T_f - Hp_f * Wp_f) * c_prev_pad), (0, 0)))
    w0_mat = w0_mat.astype(jnp.bfloat16)
    b0 = jnp.zeros((1, hid_pad), jnp.float32)
    w1_mat = jnp.pad(jnp.transpose(w1l),
                     ((0, hid_pad - hidden), (0, hid_pad - hidden))).astype(jnp.bfloat16)
    b1 = jnp.zeros((1, hid_pad), jnp.float32)
    w2_mat = jnp.pad(jnp.transpose(w2l),
                     ((0, hid_pad - hidden), (0, nc_pad - num_classes))).astype(jnp.bfloat16)
    b2 = jnp.zeros((1, nc_pad), jnp.float32)
    params["classifier"] = [(w0_mat, b0), (w1_mat, b1), (w2_mat, b2)]
    params["raw"] = raw
    return params


# ----------------------------------------------------------------------------
# Full forward pass (mirrors VGG.forward; dropout = eval-mode identity)
# ----------------------------------------------------------------------------
def vgg_forward(params, x_nchw):
    feats = params["features"]
    N = x_nchw.shape[0]
    st0 = feats[0]
    H, W = st0["H"], st0["W"]
    Hp, Wp = H + 2, W + 2
    cin_pad = params["cin_pad"]
    E = H * Wp

    # Layer-1 im2col pre-pack (tiny; layer-1 channels < 128 so lane-offset in-kernel
    # packing is avoided).  This is the only XLA-side layout work in the feature stack.
    x = jnp.transpose(x_nchw, (0, 2, 3, 1))                        # NCHW -> NHWC
    x = jnp.pad(x, ((0, 0), (1, 1), (1, 1), (0, cin_pad - x.shape[-1])))
    x = x.astype(jnp.bfloat16).reshape(N, Hp * Wp, cin_pad)
    x = jnp.pad(x, ((0, 0), (0, 2), (0, 0)))
    patch0 = jnp.concatenate(
        [x[:, di * Wp + dj:di * Wp + dj + E, :] for di in range(3) for dj in range(3)],
        axis=-1)                                                   # (N, E, 9*cin_pad)

    y = conv_stage(patch0, st0, prepacked=True)
    for st in feats[1:]:
        y = conv_stage(y, st, prepacked=False)                     # no XLA glue in between

    # Flatten (padded layout + NCHW permutation already folded into w0) + classifier.
    xf = y.reshape(N, -1)
    m_pad = _round_up(max(N, 8), 8)
    xf = jnp.pad(xf, ((0, m_pad - N), (0, 0)))
    logits = classifier_forward(xf, params["classifier"])
    return logits[:N, :params["num_classes"]]


# ----------------------------------------------------------------------------
# Pure-JAX reference (same bf16/f32 precision recipe as the kernels)
# ----------------------------------------------------------------------------
def vgg_reference(params, x_nchw):
    x = jnp.transpose(x_nchw, (0, 2, 3, 1)).astype(jnp.bfloat16)   # NHWC
    for w_oihw, pool in params["raw"]["convs"]:
        w_hwio = jnp.transpose(w_oihw, (2, 3, 1, 0)).astype(jnp.bfloat16)
        y = jax.lax.conv_general_dilated(
            x, w_hwio, window_strides=(1, 1), padding="SAME",
            dimension_numbers=("NHWC", "HWIO", "NHWC"),
            preferred_element_type=jnp.float32)
        y = jnp.maximum(y, 0.0).astype(jnp.bfloat16)               # bias == 0
        if pool:
            y = jnp.maximum(jnp.maximum(y[:, 0::2, 0::2, :], y[:, 0::2, 1::2, :]),
                            jnp.maximum(y[:, 1::2, 0::2, :], y[:, 1::2, 1::2, :]))
        x = y
    x = jnp.transpose(x, (0, 3, 1, 2)).reshape(x.shape[0], -1)     # NCHW flatten
    w0l, w1l, w2l = params["raw"]["linears"]
    h = jnp.maximum(jnp.dot(x, w0l.T.astype(jnp.bfloat16),
                            preferred_element_type=jnp.float32), 0.0).astype(jnp.bfloat16)
    h = jnp.maximum(jnp.dot(h, w1l.T.astype(jnp.bfloat16),
                            preferred_element_type=jnp.float32), 0.0).astype(jnp.bfloat16)
    return jnp.dot(h, w2l.T.astype(jnp.bfloat16), preferred_element_type=jnp.float32)


if __name__ == "__main__":
    key = jax.random.PRNGKey(0)
    k_in, k_par = jax.random.split(key)

    # Small VGG-style config: conv8 -> maxpool -> conv16 -> maxpool -> classifier
    cfg = [8, "M", 16, "M"]
    N, C, H, W = 2, 3, 16, 16
    num_classes, hidden = 10, 64

    x = jax.random.normal(k_in, (N, C, H, W), jnp.float32)
    params = make_vgg_params(k_par, cfg, C, num_classes, hidden, H, W)

    fwd = jax.jit(lambda inp: vgg_forward(params, inp))
    out = jax.block_until_ready(fwd(x))
    assert out.shape == (N, num_classes), out.shape
    assert bool(jnp.all(jnp.isfinite(out)))

    ref = jax.block_until_ready(vgg_reference(params, x))
    assert bool(jnp.allclose(out, ref, atol=3e-2, rtol=3e-2)), \
        float(jnp.max(jnp.abs(out - ref)))

    print("KERNEL_OK")
</pallas_src>

<mosaic_0001>
module attributes {stable_mosaic.version = 11 : i64} {
  func.func @_conv_stage_kernel(%arg0: i32, %arg1: memref<1x104x128xbf16, #tpu.memory_space<vmem>>, %arg2: memref<1152x128xbf16, #tpu.memory_space<vmem>>, %arg3: memref<1x128xf32, #tpu.memory_space<vmem>>, %arg4: memref<40x80xbf16, #tpu.memory_space<vmem>>, %arg5: memref<1x40x128xbf16, #tpu.memory_space<vmem>>, %arg6: memref<80x1152xbf16, #tpu.memory_space<vmem>>, %arg7: memref<96x128xbf16, #tpu.memory_space<vmem>>) attributes {dimension_semantics = [#tpu.dimension_semantics<parallel>], iteration_bounds = array<i64: 2>, scalar_prefetch = 0 : i64, scratch_operands = 2 : i64, tpu.core_type = #tpu.core_type<tc>, window_params = [{transform_indices = @transform_0, window_bounds = array<i64: 1, 104, 128>}, {pipeline_mode = #tpu.pipeline_mode<synchronous>, transform_indices = @transform_1, window_bounds = array<i64: 1152, 128>}, {pipeline_mode = #tpu.pipeline_mode<synchronous>, transform_indices = @transform_2, window_bounds = array<i64: 1, 128>}, {pipeline_mode = #tpu.pipeline_mode<synchronous>, transform_indices = @transform_3, window_bounds = array<i64: 40, 80>}, {transform_indices = @transform_4, window_bounds = array<i64: 1, 40, 128>}]} {
    %c0 = arith.constant 0 : index
    %c0_0 = arith.constant 0 : index
    %c0_1 = arith.constant 0 : index
    %0 = vector.load %arg1[%c0, %c0_0, %c0_1] : memref<1x104x128xbf16, #tpu.memory_space<vmem>>, vector<1x80x128xbf16>
    %1 = vector.shape_cast %0 : vector<1x80x128xbf16> to vector<80x128xbf16>
    %c0_2 = arith.constant 0 : index
    %c0_3 = arith.constant 0 : index
    %2 = vector.load %arg6[%c0_2, %c0_3] : memref<80x1152xbf16, #tpu.memory_space<vmem>>, vector<80x128xbf16>
    tpu.vector_store %arg6[%c0_2, %c0_3], %1 {strides = array<i32>} : memref<80x1152xbf16, #tpu.memory_space<vmem>>, vector<80x128xbf16>,
    %c0_4 = arith.constant 0 : index
    %c1 = arith.constant 1 : index
    %c0_5 = arith.constant 0 : index
    %3 = vector.load %arg1[%c0_4, %c1, %c0_5] : memref<1x104x128xbf16, #tpu.memory_space<vmem>>, vector<1x80x128xbf16>
    %4 = vector.shape_cast %3 : vector<1x80x128xbf16> to vector<80x128xbf16>
    %c0_6 = arith.constant 0 : index
    %c128 = arith.constant 128 : index
    %5 = vector.load %arg6[%c0_6, %c128] : memref<80x1152xbf16, #tpu.memory_space<vmem>>, vector<80x128xbf16>
    tpu.vector_store %arg6[%c0_6, %c128], %4 {strides = array<i32>} : memref<80x1152xbf16, #tpu.memory_space<vmem>>, vector<80x128xbf16>,
    %c0_7 = arith.constant 0 : index
    %c2 = arith.constant 2 : index
    %c0_8 = arith.constant 0 : index
    %6 = vector.load %arg1[%c0_7, %c2, %c0_8] : memref<1x104x128xbf16, #tpu.memory_space<vmem>>, vector<1x80x128xbf16>
    %7 = vector.shape_cast %6 : vector<1x80x128xbf16> to vector<80x128xbf16>
    %c0_9 = arith.constant 0 : index
    %c256 = arith.constant 256 : index
    %8 = vector.load %arg6[%c0_9, %c256] : memref<80x1152xbf16, #tpu.memory_space<vmem>>, vector<80x128xbf16>
    tpu.vector_store %arg6[%c0_9, %c256], %7 {strides = array<i32>} : memref<80x1152xbf16, #tpu.memory_space<vmem>>, vector<80x128xbf16>,
    %c0_10 = arith.constant 0 : index
    %c10 = arith.constant 10 : index
    %c0_11 = arith.constant 0 : index
    %9 = vector.load %arg1[%c0_10, %c10, %c0_11] : memref<1x104x128xbf16, #tpu.memory_space<vmem>>, vector<1x80x128xbf16>
    %10 = vector.shape_cast %9 : vector<1x80x128xbf16> to vector<80x128xbf16>
    %c0_12 = arith.constant 0 : index
    %c384 = arith.constant 384 : index
    %11 = vector.load %arg6[%c0_12, %c384] : memref<80x1152xbf16, #tpu.memory_space<vmem>>, vector<80x128xbf16>
    tpu.vector_store %arg6[%c0_12, %c384], %10 {strides = array<i32>} : memref<80x1152xbf16, #tpu.memory_space<vmem>>, vector<80x128xbf16>,
    %c0_13 = arith.constant 0 : index
    %c11 = arith.constant 11 : index
    %c0_14 = arith.constant 0 : index
    %12 = vector.load %arg1[%c0_13, %c11, %c0_14] : memref<1x104x128xbf16, #tpu.memory_space<vmem>>, vector<1x80x128xbf16>
    %13 = vector.shape_cast %12 : vector<1x80x128xbf16> to vector<80x128xbf16>
    %c0_15 = arith.constant 0 : index
    %c512 = arith.constant 512 : index
    %14 = vector.load %arg6[%c0_15, %c512] : memref<80x1152xbf16, #tpu.memory_space<vmem>>, vector<80x128xbf16>
    tpu.vector_store %arg6[%c0_15, %c512], %13 {strides = array<i32>} : memref<80x1152xbf16, #tpu.memory_space<vmem>>, vector<80x128xbf16>,
    %c0_16 = arith.constant 0 : index
    %c12 = arith.constant 12 : index
    %c0_17 = arith.constant 0 : index
    %15 = vector.load %arg1[%c0_16, %c12, %c0_17] : memref<1x104x128xbf16, #tpu.memory_space<vmem>>, vector<1x80x128xbf16>
    %16 = vector.shape_cast %15 : vector<1x80x128xbf16> to vector<80x128xbf16>
    %c0_18 = arith.constant 0 : index
    %c640 = arith.constant 640 : index
    %17 = vector.load %arg6[%c0_18, %c640] : memref<80x1152xbf16, #tpu.memory_space<vmem>>, vector<80x128xbf16>
    tpu.vector_store %arg6[%c0_18, %c640], %16 {strides = array<i32>} : memref<80x1152xbf16, #tpu.memory_space<vmem>>, vector<80x128xbf16>,
    %c0_19 = arith.constant 0 : index
    %c20 = arith.constant 20 : index
    %c0_20 = arith.constant 0 : index
    %18 = vector.load %arg1[%c0_19, %c20, %c0_20] : memref<1x104x128xbf16, #tpu.memory_space<vmem>>, vector<1x80x128xbf16>
    %19 = vector.shape_cast %18 : vector<1x80x128xbf16> to vector<80x128xbf16>
    %c0_21 = arith.constant 0 : index
    %c768 = arith.constant 768 : index
    %20 = vector.load %arg6[%c0_21, %c768] : memref<80x1152xbf16, #tpu.memory_space<vmem>>, vector<80x128xbf16>
    tpu.vector_store %arg6[%c0_21, %c768], %19 {strides = array<i32>} : memref<80x1152xbf16, #tpu.memory_space<vmem>>, vector<80x128xbf16>,
    %c0_22 = arith.constant 0 : index
    %c21 = arith.constant 21 : index
    %c0_23 = arith.constant 0 : index
    %21 = vector.load %arg1[%c0_22, %c21, %c0_23] : memref<1x104x128xbf16, #tpu.memory_space<vmem>>, vector<1x80x128xbf16>
    %22 = vector.shape_cast %21 : vector<1x80x128xbf16> to vector<80x128xbf16>
    %c0_24 = arith.constant 0 : index
    %c896 = arith.constant 896 : index
    %23 = vector.load %arg6[%c0_24, %c896] : memref<80x1152xbf16, #tpu.memory_space<vmem>>, vector<80x128xbf16>
    tpu.vector_store %arg6[%c0_24, %c896], %22 {strides = array<i32>} : memref<80x1152xbf16, #tpu.memory_space<vmem>>, vector<80x128xbf16>,
    %c0_25 = arith.constant 0 : index
    %c22 = arith.constant 22 : index
    %c0_26 = arith.constant 0 : index
    %24 = vector.load %arg1[%c0_25, %c22, %c0_26] : memref<1x104x128xbf16, #tpu.memory_space<vmem>>, vector<1x80x128xbf16>
    %25 = vector.shape_cast %24 : vector<1x80x128xbf16> to vector<80x128xbf16>
    %c0_27 = arith.constant 0 : index
    %c1024 = arith.constant 1024 : index
    %26 = vector.load %arg6[%c0_27, %c1024] : memref<80x1152xbf16, #tpu.memory_space<vmem>>, vector<80x128xbf16>
    tpu.vector_store %arg6[%c0_27, %c1024], %25 {strides = array<i32>} : memref<80x1152xbf16, #tpu.memory_space<vmem>>, vector<80x128xbf16>,
    %c0_28 = arith.constant 0 : index
    %c0_29 = arith.constant 0 : index
    %27 = vector.load %arg6[%c0_28, %c0_29] : memref<80x1152xbf16, #tpu.memory_space<vmem>>, vector<80x1152xbf16>
    %c0_30 = arith.constant 0 : index
    %c0_31 = arith.constant 0 : index
    %28 = vector.load %arg2[%c0_30, %c0_31] : memref<1152x128xbf16, #tpu.memory_space<vmem>>, vector<1152x128xbf16>
    %cst = arith.constant dense<0.000000e+00> : vector<80x128xf32>
    %29 = tpu.matmul %27, %28, %cst {dimension_numbers = #tpu.dot_dimension_numbers<[1], [0], [0], [1], [0, 0, 1, 1], [], []>} : vector<80x1152xbf16>, vector<1152x128xbf16>, vector<80x128xf32> -> vector<80x128xf32>
    %c0_32 = arith.constant 0 : index
    %c0_33 = arith.constant 0 : index
    %30 = vector.load %arg3[%c0_32, %c0_33] : memref<1x128xf32, #tpu.memory_space<vmem>>, vector<1x128xf32>
    %31 = vector.broadcast %30 : vector<1x128xf32> to vector<80x128xf32>
    %32 = arith.addf %29, %31 : vector<80x128xf32>
    %cst_34 = arith.constant 0.000000e+00 : f32
    %33 = vector.broadcast %cst_34 : f32 to vector<80x128xf32>
    %34 = arith.maximumf %32, %33 : vector<80x128xf32>
    %35 = arith.truncf %34 : vector<80x128xf32> to vector<80x128xbf16>
    %c0_35 = arith.constant 0 : index
    %c0_36 = arith.constant 0 : index
    %36 = vector.load %arg7[%c0_35, %c0_36] : memref<96x128xbf16, #tpu.memory_space<vmem>>, vector<80x128xbf16>
    tpu.vector_store %arg7[%c0_35, %c0_36], %35 {strides = array<i32>} : memref<96x128xbf16, #tpu.memory_space<vmem>>, vector<80x128xbf16>,
    %cst_37 = arith.constant 0.000000e+00 : bf16
    %37 = vector.broadcast %cst_37 : bf16 to vector<16x128xbf16>
    %c80 = arith.constant 80 : index
    %c0_38 = arith.constant 0 : index
    %38 = vector.load %arg7[%c80, %c0_38] : memref<96x128xbf16, #tpu.memory_space<vmem>>, vector<16x128xbf16>
    tpu.vector_store %arg7[%c80, %c0_38], %37 {strides = array<i32>} : memref<96x128xbf16, #tpu.memory_space<vmem>>, vector<16x128xbf16>,
    %c0_39 = arith.constant 0 : index
    %c0_40 = arith.constant 0 : index
    %39 = vector.load %arg7[%c0_39, %c0_40] : memref<96x128xbf16, #tpu.memory_space<vmem>>, vector<80x128xbf16>
    %c1_41 = arith.constant 1 : index
    %c0_42 = arith.constant 0 : index
    %40 = vector.load %arg7[%c1_41, %c0_42] : memref<96x128xbf16, #tpu.memory_space<vmem>>, vector<80x128xbf16>
    %41 = arith.maximumf %39, %40 : vector<80x128xbf16>
    %c10_43 = arith.constant 10 : index
    %c0_44 = arith.constant 0 : index
    %42 = vector.load %arg7[%c10_43, %c0_44] : memref<96x128xbf16, #tpu.memory_space<vmem>>, vector<80x128xbf16>
    %c11_45 = arith.constant 11 : index
    %c0_46 = arith.constant 0 : index
    %43 = vector.load %arg7[%c11_45, %c0_46] : memref<96x128xbf16, #tpu.memory_space<vmem>>, vector<80x128xbf16>
    %44 = arith.maximumf %42, %43 : vector<80x128xbf16>
    %45 = arith.maximumf %41, %44 : vector<80x128xbf16>
    %c0_47 = arith.constant 0 : index
    %c0_48 = arith.constant 0 : index
    %46 = vector.load %arg4[%c0_47, %c0_48] : memref<40x80xbf16, #tpu.memory_space<vmem>>, vector<40x80xbf16>
    %cst_49 = arith.constant dense<0.000000e+00> : vector<40x128xf32>
    %47 = tpu.matmul %46, %45, %cst_49 {dimension_numbers = #tpu.dot_dimension_numbers<[1], [0], [0], [1], [0, 0, 1, 1], [], []>} : vector<40x80xbf16>, vector<80x128xbf16>, vector<40x128xf32> -> vector<40x128xf32>
    %48 = arith.truncf %47 : vector<40x128xf32> to vector<40x128xbf16>
    %c0_50 = arith.constant 0 : index
    %c0_51 = arith.constant 0 : index
    %c0_52 = arith.constant 0 : index
    %49 = vector.load %arg5[%c0_50, %c0_51, %c0_52] : memref<1x40x128xbf16, #tpu.memory_space<vmem>>, vector<1x40x128xbf16>
    %50 = vector.shape_cast %49 : vector<1x40x128xbf16> to vector<40x128xbf16>
    %51 = vector.shape_cast %48 : vector<40x128xbf16> to vector<1x40x128xbf16>
    tpu.vector_store %arg5[%c0_50, %c0_51, %c0_52], %51 {strides = array<i32>} : memref<1x40x128xbf16, #tpu.memory_space<vmem>>, vector<1x40x128xbf16>,
    return
  }
  func.func @transform_0(%arg0: i32) -> (i32, i32, i32) {
    %c0_i32 = arith.constant 0 : i32
    %c0_i32_0 = arith.constant 0 : i32
    %c0_i32_1 = arith.constant 0 : i32
    return %arg0, %c0_i32, %c0_i32_0 : i32, i32, i32
  }
  func.func @transform_1(%arg0: i32) -> (i32, i32) {
    %c0_i32 = arith.constant 0 : i32
    %c0_i32_0 = arith.constant 0 : i32
    %c0_i32_1 = arith.constant 0 : i32
    return %c0_i32, %c0_i32_0 : i32, i32
  }
  func.func @transform_2(%arg0: i32) -> (i32, i32) {
    %c0_i32 = arith.constant 0 : i32
    %c0_i32_0 = arith.constant 0 : i32
    %c0_i32_1 = arith.constant 0 : i32
    return %c0_i32, %c0_i32_0 : i32, i32
  }
  func.func @transform_3(%arg0: i32) -> (i32, i32) {
    %c0_i32 = arith.constant 0 : i32
    %c0_i32_0 = arith.constant 0 : i32
    %c0_i32_1 = arith.constant 0 : i32
    return %c0_i32, %c0_i32_0 : i32, i32
  }
  func.func @transform_4(%arg0: i32) -> (i32, i32, i32) {
    %c0_i32 = arith.constant 0 : i32
    %c0_i32_0 = arith.constant 0 : i32
    %c0_i32_1 = arith.constant 0 : i32
    return %arg0, %c0_i32, %c0_i32_0 : i32, i32, i32
  }
}

module attributes {stable_mosaic.version = 11 : i64} {
  func.func @_conv_stage_kernel(%arg0: i32, %arg1: memref<1x288x72xbf16, #tpu.memory_space<vmem>>, %arg2: memref<72x128xbf16, #tpu.memory_space<vmem>>, %arg3: memref<1x128xf32, #tpu.memory_space<vmem>>, %arg4: memref<104x288xbf16, #tpu.memory_space<vmem>>, %arg5: memref<1x104x128xbf16, #tpu.memory_space<vmem>>, %arg6: memref<312x128xbf16, #tpu.memory_space<vmem>>) attributes {dimension_semantics = [#tpu.dimension_semantics<parallel>], iteration_bounds = array<i64: 2>, scalar_prefetch = 0 : i64, scratch_operands = 1 : i64, tpu.core_type = #tpu.core_type<tc>, window_params = [{transform_indices = @transform_0, window_bounds = array<i64: 1, 288, 72>}, {pipeline_mode = #tpu.pipeline_mode<synchronous>, transform_indices = @transform_1, window_bounds = array<i64: 72, 128>}, {pipeline_mode = #tpu.pipeline_mode<synchronous>, transform_indices = @transform_2, window_bounds = array<i64: 1, 128>}, {pipeline_mode = #tpu.pipeline_mode<synchronous>, transform_indices = @transform_3, window_bounds = array<i64: 104, 288>}, {transform_indices = @transform_4, window_bounds = array<i64: 1, 104, 128>}]} {
    %c0 = arith.constant 0 : index
    %c0_0 = arith.constant 0 : index
    %c0_1 = arith.constant 0 : index
    %0 = vector.load %arg1[%c0, %c0_0, %c0_1] : memref<1x288x72xbf16, #tpu.memory_space<vmem>>, vector<1x288x72xbf16>
    %1 = vector.shape_cast %0 : vector<1x288x72xbf16> to vector<288x72xbf16>
    %c0_2 = arith.constant 0 : index
    %c0_3 = arith.constant 0 : index
    %2 = vector.load %arg2[%c0_2, %c0_3] : memref<72x128xbf16, #tpu.memory_space<vmem>>, vector<72x128xbf16>
    %cst = arith.constant dense<0.000000e+00> : vector<288x128xf32>
    %3 = tpu.matmul %1, %2, %cst {dimension_numbers = #tpu.dot_dimension_numbers<[1], [0], [0], [1], [0, 0, 1, 1], [], []>} : vector<288x72xbf16>, vector<72x128xbf16>, vector<288x128xf32> -> vector<288x128xf32>
    %c0_4 = arith.constant 0 : index
    %c0_5 = arith.constant 0 : index
    %4 = vector.load %arg3[%c0_4, %c0_5] : memref<1x128xf32, #tpu.memory_space<vmem>>, vector<1x128xf32>
    %5 = vector.broadcast %4 : vector<1x128xf32> to vector<288x128xf32>
    %6 = arith.addf %3, %5 : vector<288x128xf32>
    %cst_6 = arith.constant 0.000000e+00 : f32
    %7 = vector.broadcast %cst_6 : f32 to vector<288x128xf32>
    %8 = arith.maximumf %6, %7 : vector<288x128xf32>
    %9 = arith.truncf %8 : vector<288x128xf32> to vector<288x128xbf16>
    %c0_7 = arith.constant 0 : index
    %c0_8 = arith.constant 0 : index
    %10 = vector.load %arg6[%c0_7, %c0_8] : memref<312x128xbf16, #tpu.memory_space<vmem>>, vector<288x128xbf16>
    tpu.vector_store %arg6[%c0_7, %c0_8], %9 {strides = array<i32>} : memref<312x128xbf16, #tpu.memory_space<vmem>>, vector<288x128xbf16>,
    %cst_9 = arith.constant 0.000000e+00 : bf16
    %11 = vector.broadcast %cst_9 : bf16 to vector<24x128xbf16>
    %c288 = arith.constant 288 : index
    %c0_10 = arith.constant 0 : index
    %12 = vector.load %arg6[%c288, %c0_10] : memref<312x128xbf16, #tpu.memory_space<vmem>>, vector<24x128xbf16>
    tpu.vector_store %arg6[%c288, %c0_10], %11 {strides = array<i32>} : memref<312x128xbf16, #tpu.memory_space<vmem>>, vector<24x128xbf16>,
    %c0_11 = arith.constant 0 : index
    %c0_12 = arith.constant 0 : index
    %13 = vector.load %arg6[%c0_11, %c0_12] : memref<312x128xbf16, #tpu.memory_space<vmem>>, vector<288x128xbf16>
    %c1 = arith.constant 1 : index
    %c0_13 = arith.constant 0 : index
    %14 = vector.load %arg6[%c1, %c0_13] : memref<312x128xbf16, #tpu.memory_space<vmem>>, vector<288x128xbf16>
    %15 = arith.maximumf %13, %14 : vector<288x128xbf16>
    %c18 = arith.constant 18 : index
    %c0_14 = arith.constant 0 : index
    %16 = vector.load %arg6[%c18, %c0_14] : memref<312x128xbf16, #tpu.memory_space<vmem>>, vector<288x128xbf16>
    %c19 = arith.constant 19 : index
    %c0_15 = arith.constant 0 : index
    %17 = vector.load %arg6[%c19, %c0_15] : memref<312x128xbf16, #tpu.memory_space<vmem>>, vector<288x128xbf16>
    %18 = arith.maximumf %16, %17 : vector<288x128xbf16>
    %19 = arith.maximumf %15, %18 : vector<288x128xbf16>
    %c0_16 = arith.constant 0 : index
    %c0_17 = arith.constant 0 : index
    %20 = vector.load %arg4[%c0_16, %c0_17] : memref<104x288xbf16, #tpu.memory_space<vmem>>, vector<104x288xbf16>
    %cst_18 = arith.constant dense<0.000000e+00> : vector<104x128xf32>
    %21 = tpu.matmul %20, %19, %cst_18 {dimension_numbers = #tpu.dot_dimension_numbers<[1], [0], [0], [1], [0, 0, 1, 1], [], []>} : vector<104x288xbf16>, vector<288x128xbf16>, vector<104x128xf32> -> vector<104x128xf32>
    %22 = arith.truncf %21 : vector<104x128xf32> to vector<104x128xbf16>
    %c0_19 = arith.constant 0 : index
    %c0_20 = arith.constant 0 : index
    %c0_21 = arith.constant 0 : index
    %23 = vector.load %arg5[%c0_19, %c0_20, %c0_21] : memref<1x104x128xbf16, #tpu.memory_space<vmem>>, vector<1x104x128xbf16>
    %24 = vector.shape_cast %23 : vector<1x104x128xbf16> to vector<104x128xbf16>
    %25 = vector.shape_cast %22 : vector<104x128xbf16> to vector<1x104x128xbf16>
    tpu.vector_store %arg5[%c0_19, %c0_20, %c0_21], %25 {strides = array<i32>} : memref<1x104x128xbf16, #tpu.memory_space<vmem>>, vector<1x104x128xbf16>,
    return
  }
  func.func @transform_0(%arg0: i32) -> (i32, i32, i32) {
    %c0_i32 = arith.constant 0 : i32
    %c0_i32_0 = arith.constant 0 : i32
    %c0_i32_1 = arith.constant 0 : i32
    return %arg0, %c0_i32, %c0_i32_0 : i32, i32, i32
  }
  func.func @transform_1(%arg0: i32) -> (i32, i32) {
    %c0_i32 = arith.constant 0 : i32
    %c0_i32_0 = arith.constant 0 : i32
    %c0_i32_1 = arith.constant 0 : i32
    return %c0_i32, %c0_i32_0 : i32, i32
  }
  func.func @transform_2(%arg0: i32) -> (i32, i32) {
    %c0_i32 = arith.constant 0 : i32
    %c0_i32_0 = arith.constant 0 : i32
    %c0_i32_1 = arith.constant 0 : i32
    return %c0_i32, %c0_i32_0 : i32, i32
  }
  func.func @transform_3(%arg0: i32) -> (i32, i32) {
    %c0_i32 = arith.constant 0 : i32
    %c0_i32_0 = arith.constant 0 : i32
    %c0_i32_1 = arith.constant 0 : i32
    return %c0_i32, %c0_i32_0 : i32, i32
  }
  func.func @transform_4(%arg0: i32) -> (i32, i32, i32) {
    %c0_i32 = arith.constant 0 : i32
    %c0_i32_0 = arith.constant 0 : i32
    %c0_i32_1 = arith.constant 0 : i32
    return %arg0, %c0_i32, %c0_i32_0 : i32, i32, i32
  }
}

module attributes {stable_mosaic.version = 11 : i64} {
  func.func @_classifier_kernel(%arg0: i32, %arg1: memref<8x5120xbf16, #tpu.memory_space<vmem>>, %arg2: memref<5120x128xbf16, #tpu.memory_space<vmem>>, %arg3: memref<1x128xf32, #tpu.memory_space<vmem>>, %arg4: memref<128x128xbf16, #tpu.memory_space<vmem>>, %arg5: memref<1x128xf32, #tpu.memory_space<vmem>>, %arg6: memref<128x128xbf16, #tpu.memory_space<vmem>>, %arg7: memref<1x128xf32, #tpu.memory_space<vmem>>, %arg8: memref<8x128xf32, #tpu.memory_space<vmem>>) attributes {dimension_semantics = [#tpu.dimension_semantics<arbitrary>], iteration_bounds = array<i64: 1>, scalar_prefetch = 0 : i64, scratch_operands = 0 : i64, tpu.core_type = #tpu.core_type<tc>, window_params = [{pipeline_mode = #tpu.pipeline_mode<synchronous>, transform_indices = @transform_0, window_bounds = array<i64: 8, 5120>}, {pipeline_mode = #tpu.pipeline_mode<synchronous>, transform_indices = @transform_1, window_bounds = array<i64: 5120, 128>}, {pipeline_mode = #tpu.pipeline_mode<synchronous>, transform_indices = @transform_2, window_bounds = array<i64: 1, 128>}, {pipeline_mode = #tpu.pipeline_mode<synchronous>, transform_indices = @transform_3, window_bounds = array<i64: 128, 128>}, {pipeline_mode = #tpu.pipeline_mode<synchronous>, transform_indices = @transform_4, window_bounds = array<i64: 1, 128>}, {pipeline_mode = #tpu.pipeline_mode<synchronous>, transform_indices = @transform_5, window_bounds = array<i64: 128, 128>}, {pipeline_mode = #tpu.pipeline_mode<synchronous>, transform_indices = @transform_6, window_bounds = array<i64: 1, 128>}, {pipeline_mode = #tpu.pipeline_mode<synchronous>, transform_indices = @transform_7, window_bounds = array<i64: 8, 128>}]} {
    %c0 = arith.constant 0 : index
    %c0_0 = arith.constant 0 : index
    %0 = vector.load %arg1[%c0, %c0_0] : memref<8x5120xbf16, #tpu.memory_space<vmem>>, vector<8x5120xbf16>
    %c0_1 = arith.constant 0 : index
    %c0_2 = arith.constant 0 : index
    %1 = vector.load %arg2[%c0_1, %c0_2] : memref<5120x128xbf16, #tpu.memory_space<vmem>>, vector<5120x128xbf16>
    %cst = arith.constant dense<0.000000e+00> : vector<8x128xf32>
    %2 = tpu.matmul %0, %1, %cst {dimension_numbers = #tpu.dot_dimension_numbers<[1], [0], [0], [1], [0, 0, 1, 1], [], []>} : vector<8x5120xbf16>, vector<5120x128xbf16>, vector<8x128xf32> -> vector<8x128xf32>
    %c0_3 = arith.constant 0 : index
    %c0_4 = arith.constant 0 : index
    %3 = vector.load %arg3[%c0_3, %c0_4] : memref<1x128xf32, #tpu.memory_space<vmem>>, vector<1x128xf32>
    %4 = vector.broadcast %3 : vector<1x128xf32> to vector<8x128xf32>
    %5 = arith.addf %2, %4 : vector<8x128xf32>
    %cst_5 = arith.constant 0.000000e+00 : f32
    %6 = vector.broadcast %cst_5 : f32 to vector<8x128xf32>
    %7 = arith.maximumf %5, %6 : vector<8x128xf32>
    %8 = arith.truncf %7 : vector<8x128xf32> to vector<8x128xbf16>
    %c0_6 = arith.constant 0 : index
    %c0_7 = arith.constant 0 : index
    %9 = vector.load %arg4[%c0_6, %c0_7] : memref<128x128xbf16, #tpu.memory_space<vmem>>, vector<128x128xbf16>
    %cst_8 = arith.constant dense<0.000000e+00> : vector<8x128xf32>
    %10 = tpu.matmul %8, %9, %cst_8 {dimension_numbers = #tpu.dot_dimension_numbers<[1], [0], [0], [1], [0, 0, 1, 1], [], []>} : vector<8x128xbf16>, vector<128x128xbf16>, vector<8x128xf32> -> vector<8x128xf32>
    %c0_9 = arith.constant 0 : index
    %c0_10 = arith.constant 0 : index
    %11 = vector.load %arg5[%c0_9, %c0_10] : memref<1x128xf32, #tpu.memory_space<vmem>>, vector<1x128xf32>
    %12 = vector.broadcast %11 : vector<1x128xf32> to vector<8x128xf32>
    %13 = arith.addf %10, %12 : vector<8x128xf32>
    %cst_11 = arith.constant 0.000000e+00 : f32
    %14 = vector.broadcast %cst_11 : f32 to vector<8x128xf32>
    %15 = arith.maximumf %13, %14 : vector<8x128xf32>
    %16 = arith.truncf %15 : vector<8x128xf32> to vector<8x128xbf16>
    %c0_12 = arith.constant 0 : index
    %c0_13 = arith.constant 0 : index
    %17 = vector.load %arg6[%c0_12, %c0_13] : memref<128x128xbf16, #tpu.memory_space<vmem>>, vector<128x128xbf16>
    %cst_14 = arith.constant dense<0.000000e+00> : vector<8x128xf32>
    %18 = tpu.matmul %16, %17, %cst_14 {dimension_numbers = #tpu.dot_dimension_numbers<[1], [0], [0], [1], [0, 0, 1, 1], [], []>} : vector<8x128xbf16>, vector<128x128xbf16>, vector<8x128xf32> -> vector<8x128xf32>
    %c0_15 = arith.constant 0 : index
    %c0_16 = arith.constant 0 : index
    %19 = vector.load %arg7[%c0_15, %c0_16] : memref<1x128xf32, #tpu.memory_space<vmem>>, vector<1x128xf32>
    %20 = vector.broadcast %19 : vector<1x128xf32> to vector<8x128xf32>
    %21 = arith.addf %18, %20 : vector<8x128xf32>
    %c0_17 = arith.constant 0 : index
    %c0_18 = arith.constant 0 : index
    %22 = vector.load %arg8[%c0_17, %c0_18] : memref<8x128xf32, #tpu.memory_space<vmem>>, vector<8x128xf32>
    tpu.vector_store %arg8[%c0_17, %c0_18], %21 {strides = array<i32>} : memref<8x128xf32, #tpu.memory_space<vmem>>, vector<8x128xf32>,
    return
  }
  func.func @transform_0(%arg0: i32) -> (i32, i32) {
    %c0_i32 = arith.constant 0 : i32
    %c0_i32_0 = arith.constant 0 : i32
    %c0_i32_1 = arith.constant 0 : i32
    return %c0_i32, %c0_i32_0 : i32, i32
  }
  func.func @transform_1(%arg0: i32) -> (i32, i32) {
    %c0_i32 = arith.constant 0 : i32
    %c0_i32_0 = arith.constant 0 : i32
    %c0_i32_1 = arith.constant 0 : i32
    return %c0_i32, %c0_i32_0 : i32, i32
  }
  func.func @transform_2(%arg0: i32) -> (i32, i32) {
    %c0_i32 = arith.constant 0 : i32
    %c0_i32_0 = arith.constant 0 : i32
    %c0_i32_1 = arith.constant 0 : i32
    return %c0_i32, %c0_i32_0 : i32, i32
  }
  func.func @transform_3(%arg0: i32) -> (i32, i32) {
    %c0_i32 = arith.constant 0 : i32
    %c0_i32_0 = arith.constant 0 : i32
    %c0_i32_1 = arith.constant 0 : i32
    return %c0_i32, %c0_i32_0 : i32, i32
  }
  func.func @transform_4(%arg0: i32) -> (i32, i32) {
    %c0_i32 = arith.constant 0 : i32
    %c0_i32_0 = arith.constant 0 : i32
    %c0_i32_1 = arith.constant 0 : i32
    return %c0_i32, %c0_i32_0 : i32, i32
  }
  func.func @transform_5(%arg0: i32) -> (i32, i32) {
    %c0_i32 = arith.constant 0 : i32
    %c0_i32_0 = arith.constant 0 : i32
    %c0_i32_1 = arith.constant 0 : i32
    return %c0_i32, %c0_i32_0 : i32, i32
  }
  func.func @transform_6(%arg0: i32) -> (i32, i32) {
    %c0_i32 = arith.constant 0 : i32
    %c0_i32_0 = arith.constant 0 : i32
    %c0_i32_1 = arith.constant 0 : i32
    return %c0_i32, %c0_i32_0 : i32, i32
  }
  func.func @transform_7(%arg0: i32) -> (i32, i32) {
    %c0_i32 = arith.constant 0 : i32
    %c0_i32_0 = arith.constant 0 : i32
    %c0_i32_1 = arith.constant 0 : i32
    return %c0_i32, %c0_i32_0 : i32, i32
  }
}

</mosaic_0001>

<llo_original>
// kernel: _lambda_.3
$region0: #{_lambda_.3}
  #allocation0 [shape = 'u32[]', space=smem, size = 0x4, offset = 0x4, fixed_abs, tag = 'smem constant byte address 0x4 - core index']
  #allocation1 [shape = 'u32[144,128]{1,0:T(1,128)}', space=vmem, size = 0x12000, scoped, tag = 'internal scratch']
  #allocation2 [shape = 'bf16[312,128]{1,0:T(8,128)(2,1)}', space=vmem, size = 0x13800, scoped, tag = 'scratch operand']
  %s0 = inlined_call_operand.vmem [shape: bf16[2,288,72], index: 0, kind: input, shape index: {}]
  %s1 = inlined_call_operand.vmem [shape: bf16[72,128], index: 1, kind: input, shape index: {}]
  %s2 = inlined_call_operand.vmem [shape: f32[1,128], index: 2, kind: input, shape index: {}]
  %s3 = inlined_call_operand.vmem [shape: bf16[104,288], index: 3, kind: input, shape index: {}]
  %s4 = inlined_call_operand.vmem [shape: bf16[2,104,128], index: 4, kind: output, shape index: {}]
  %s5 = sld [smem:[#allocation0]]
  $region49: #{_lambda_.3} parent=0
    _
  %s7 = ssub.s32 1, %s5
  %s8 = scalar_select 0, %s7, %s5
  loop: start=0, step=1, limit=4
  $region2: #{_lambda_.3} parent=0 // loop_pre_header
    _
  $region3: #{_lambda_.3} parent=0 // loop_header
    %s10 = sphi 0, %s14
    %p11 = scmp.ge.s32.totalorder %s10, 4
    %s20 = sphi 0, %s22
    %s23 = sphi 0, %s20
    %s24 = sphi 0, %s23
    %s40 = sphi 0, %s24
    %s44 = sphi 0, %s44
    %s46 = sphi 0, %s44
    %s47 = sphi 0, %s46
    %s61 = sphi 0, %s47
    %s65 = sphi 0, %s65
    %s67 = sphi 0, %s65
    %s68 = sphi 0, %s67
    %s82 = sphi 0, %s68
    %s86 = sphi 0, %s86
    %s88 = sphi 0, %s86
    %s89 = sphi 0, %s88
    %s103 = sphi 0, %s89
    %s109 = sphi 0, %s111
    %s112 = sphi 0, %s109
    %s113 = sphi 0, %s112
    %s129 = sphi 0, %s113
  $region4: #{_lambda_.3} parent=0 // loop_header_branch
    %13 = sbr.rel (%p11) target = $region8
  $region5: #{_lambda_.3} parent=0 // loop_body
    %s15 = ssub.s32 %s10, 1
    %s16 = ssub.s32 %s10, 2
    %s17 = sadd.s32 %s10, 1
    %s18 = ssub.s32 %s10, %s17
    %p19 = scmp.eq.s32.totalorder %s18, 0
    %s21 = sadd.s32 %s20, 1
    %s22 = scalar_select %p19, %s20, %s21
    %p25 = pneg %p19
    %p26 = scmp.eq.s32.totalorder %s10, 1
    %p27 = por %p25, %p26
    %p28 = scmp.ne.s32.totalorder %s20, %s23
    %p29 = scmp.eq.s32.totalorder %s10, 0
    %p30 = por %p28, %p29
    %p31 = scmp.ne.s32.totalorder %s20, %s23
    %p32 = scmp.eq.s32.totalorder %s15, 1
    %p33 = por %p31, %p32
    %p34 = scmp.ne.s32.totalorder %s23, %s24
    %p35 = scmp.eq.s32.totalorder %s15, 0
    %p36 = por %p34, %p35
    %p37 = scmp.ne.s32.totalorder %s23, %s24
    %p38 = scmp.eq.s32.totalorder %s16, 1
    %p39 = por %p37, %p38
    %p41 = scmp.ne.s32.totalorder %s24, %s40
    %p42 = scmp.eq.s32.totalorder %s16, 0
    %p43 = por %p41, %p42
    %s45 = sadd.s32 %s44, 1
    %p48 = scmp.eq.s32.totalorder %s10, 1
    %p49 = scmp.ne.s32.totalorder %s44, %s46
    %p50 = scmp.eq.s32.totalorder %s10, 0
    %p51 = por %p49, %p50
    %p52 = scmp.ne.s32.totalorder %s44, %s46
    %p53 = scmp.eq.s32.totalorder %s15, 1
    %p54 = por %p52, %p53
    %p55 = scmp.ne.s32.totalorder %s46, %s47
    %p56 = scmp.eq.s32.totalorder %s15, 0
    %p57 = por %p55, %p56
    %p58 = scmp.ne.s32.totalorder %s46, %s47
    %p59 = scmp.eq.s32.totalorder %s16, 1
    %p60 = por %p58, %p59
    %p62 = scmp.ne.s32.totalorder %s47, %s61
    %p63 = scmp.eq.s32.totalorder %s16, 0
    %p64 = por %p62, %p63
    %s66 = sadd.s32 %s65, 1
    %p69 = scmp.eq.s32.totalorder %s10, 1
    %p70 = scmp.ne.s32.totalorder %s65, %s67
    %p71 = scmp.eq.s32.totalorder %s10, 0
    %p72 = por %p70, %p71
    %p73 = scmp.ne.s32.totalorder %s65, %s67
    %p74 = scmp.eq.s32.totalorder %s15, 1
    %p75 = por %p73, %p74
    %p76 = scmp.ne.s32.totalorder %s67, %s68
    %p77 = scmp.eq.s32.totalorder %s15, 0
    %p78 = por %p76, %p77
    %p79 = scmp.ne.s32.totalorder %s67, %s68
    %p80 = scmp.eq.s32.totalorder %s16, 1
    %p81 = por %p79, %p80
    %p83 = scmp.ne.s32.totalorder %s68, %s82
    %p84 = scmp.eq.s32.totalorder %s16, 0
    %p85 = por %p83, %p84
    %s87 = sadd.s32 %s86, 1
    %p90 = scmp.eq.s32.totalorder %s10, 1
    %p91 = scmp.ne.s32.totalorder %s86, %s88
    %p92 = scmp.eq.s32.totalorder %s10, 0
    %p93 = por %p91, %p92
    %p94 = scmp.ne.s32.totalorder %s86, %s88
    %p95 = scmp.eq.s32.totalorder %s15, 1
    %p96 = por %p94, %p95
    %p97 = scmp.ne.s32.totalorder %s88, %s89
    %p98 = scmp.eq.s32.totalorder %s15, 0
    %p99 = por %p97, %p98
    %p100 = scmp.ne.s32.totalorder %s88, %s89
    %p101 = scmp.eq.s32.totalorder %s16, 1
    %p102 = por %p100, %p101
    %p104 = scmp.ne.s32.totalorder %s89, %s103
    %p105 = scmp.eq.s32.totalorder %s16, 0
    %p106 = por %p104, %p105
    %s107 = ssub.s32 %s10, %s17
    %p108 = scmp.eq.s32.totalorder %s107, 0
    %s110 = sadd.s32 %s109, 1
    %s111 = scalar_select %p108, %s109, %s110
    %p114 = pneg %p108
    %p115 = scmp.eq.s32.totalorder %s10, 1
    %p116 = por %p114, %p115
    %p117 = scmp.ne.s32.totalorder %s109, %s112
    %p118 = scmp.eq.s32.totalorder %s10, 0
    %p119 = por %p117, %p118
    %p120 = scmp.ne.s32.totalorder %s109, %s112
    %p121 = scmp.eq.s32.totalorder %s15, 1
    %p122 = por %p120, %p121
    %p123 = scmp.ne.s32.totalorder %s112, %s113
    %p124 = scmp.eq.s32.totalorder %s15, 0
    %p125 = por %p123, %p124
    %p126 = scmp.ne.s32.totalorder %s112, %s113
    %p127 = scmp.eq.s32.totalorder %s16, 1
    %p128 = por %p126, %p127
    %p130 = scmp.ne.s32.totalorder %s113, %s129
    %p131 = scmp.eq.s32.totalorder %s16, 0
    %p132 = por %p130, %p131
    %p133 = scmp.le.s32.totalorder 1, %s10
    %p134 = scmp.lt.s32.totalorder %s10, 3
    %p135 = pnand %p133, %p134
    %p136 = pneg %p135
    // Predicated region
    $region9: #{_lambda_.3} parent=5 // pred_check
      _
    $region10: #{_lambda_.3} parent=5 // pred_check_branch
      %138 = sbr.rel (%p135) target = $region12
    $region11: #{_lambda_.3} parent=5 // pred_region
      %s139 = ssub.s32 %s10, 1
      // Predicated region
      $region13: #{_lambda_.3} parent=11 // pred_check
        %p140 = pneg %p57
      $region14: #{_lambda_.3} parent=11 // pred_check_branch
        %142 = sbr.rel (%p140) target = $region16
      $region15: #{_lambda_.3} parent=11 // pred_region
        _
      $region16: #{_lambda_.3} parent=11 // pred_fallthru
        _
      // Predicated region
      $region17: #{_lambda_.3} parent=11 // pred_check
        %p143 = pneg %p78
      $region18: #{_lambda_.3} parent=11 // pred_check_branch
        %145 = sbr.rel (%p143) target = $region20
      $region19: #{_lambda_.3} parent=11 // pred_region
        _
      $region20: #{_lambda_.3} parent=11 // pred_fallthru
        _
      // Predicated region
      $region21: #{_lambda_.3} parent=11 // pred_check
        %p146 = pneg %p99
      $region22: #{_lambda_.3} parent=11 // pred_check_branch
        %148 = sbr.rel (%p146) target = $region24
      $region23: #{_lambda_.3} parent=11 // pred_region
        _
      $region24: #{_lambda_.3} parent=11 // pred_fallthru
        _
    $region12: #{_lambda_.3} parent=5 // pred_fallthru
      _
    %p149 = scmp.lt.s32.totalorder %s10, 2
    // Predicated region
    $region25: #{_lambda_.3} parent=5 // pred_check
      %p150 = pneg %p149
    $region26: #{_lambda_.3} parent=5 // pred_check_branch
      %152 = sbr.rel (%p150) target = $region28
    $region27: #{_lambda_.3} parent=5 // pred_region
      // Predicated region
      $region29: #{_lambda_.3} parent=27 // pred_check
        %p153 = pneg %p30
      $region30: #{_lambda_.3} parent=27 // pred_check_branch
        %155 = sbr.rel (%p153) target = $region32
      $region31: #{_lambda_.3} parent=27 // pred_region
        %p156 = scmp.lt.s32.totalorder %s10, 1
        %s157 = scalar_select %p156, %s10, 1
        %s158 = smul.addr %s157, 36
        %s159 = smul.addr %s158, 4
        %s160 = scalar_lea.vmem %s0, %s159
      $region32: #{_lambda_.3} parent=27 // pred_fallthru
        _
    $region28: #{_lambda_.3} parent=5 // pred_fallthru
      _
    %p161 = scmp.le.s32.totalorder 1, %s10
    %p162 = scmp.lt.s32.totalorder %s10, 3
    %p163 = pnand %p161, %p162
    %p164 = pneg %p163
    // Predicated region
    $region33: #{_lambda_.3} parent=5 // pred_check
      _
    $region34: #{_lambda_.3} parent=5 // pred_check_branch
      %166 = sbr.rel (%p163) target = $region36
    $region35: #{_lambda_.3} parent=5 // pred_region
      %s167 = ssub.s32 %s10, 1
      %p168 = scmp.lt.s32.totalorder %s15, 1
      %s169 = scalar_select %p168, %s15, 1
      %s170 = smul.addr %s169, 36
      %s171 = smul.addr %s170, 4
      %s172 = scalar_lea.vmem %s0, %s171
      %p173 = pneg %p36
      %p174 = pneg %p33
      %p175 = pneg %p57
      %p176 = pneg %p54
      %p177 = pneg %p78
      %p178 = pneg %p75
      %p179 = pneg %p99
      %p180 = pneg %p96
      %p181 = pneg %p125
      %p182 = pneg %p122
      %p183 = scmp.lt.s32.totalorder %s15, 1
      %s184 = scalar_select %p183, %s15, 1
      %s185 = smul.addr %s184, 13
      %s186 = smul.addr %s185, 4
      %s187 = scalar_lea.vmem %s4, %s186
      %p188 = scmp.lt.s32.totalorder %s15, 1
      %s189 = scalar_select %p188, %s15, 1
      %s190 = smul.addr %s189, 36
      %s191 = smul.addr %s190, 4
      %s192 = scalar_lea.vmem %s0, %s191
      %p193 = scmp.lt.s32.totalorder %s15, 1
      %s194 = scalar_select %p193, %s15, 1
      %s195 = smul.addr %s194, 13
      %s196 = smul.addr %s195, 4
      %s197 = scalar_lea.vmem %s4, %s196
      %v199 = vld [vmem:[%s192] sm:$0xf]
      %v200 = vld [vmem:[%s192 + $0x4] sm:$0xf]
      %v201 = vld [vmem:[%s192 + $0x8] sm:$0xf]
      %v202 = vld [vmem:[%s192 + $0xc] sm:$0xf]
      %v203 = vld [vmem:[%s192 + $0x10] sm:$0xf]
      %v204 = vld [vmem:[%s192 + $0x14] sm:$0xf]
      %v205 = vld [vmem:[%s192 + $0x18] sm:$0xf]
      %v206 = vld [vmem:[%s192 + $0x1c] sm:$0xf]
      %v207 = vld [vmem:[%s192 + $0x20] sm:$0xf]
      %v208 = vld [vmem:[%s192 + $0x24] sm:$0xf]
      %v209 = vld [vmem:[%s192 + $0x28] sm:$0xf]
      %v210 = vld [vmem:[%s192 + $0x2c] sm:$0xf]
      %v211 = vld [vmem:[%s192 + $0x30] sm:$0xf]
      %v212 = vld [vmem:[%s192 + $0x34] sm:$0xf]
      %v213 = vld [vmem:[%s192 + $0x38] sm:$0xf]
      %v214 = vld [vmem:[%s192 + $0x3c] sm:$0xf]
      %v215 = vld [vmem:[%s192 + $0x40] sm:$0xf]
      %v216 = vld [vmem:[%s192 + $0x44] sm:$0xf]
      %v217 = vld [vmem:[%s192 + $0x48] sm:$0xf]
      %v218 = vld [vmem:[%s192 + $0x4c] sm:$0xf]
      %v219 = vld [vmem:[%s192 + $0x50] sm:$0xf]
      %v220 = vld [vmem:[%s192 + $0x54] sm:$0xf]
      %v221 = vld [vmem:[%s192 + $0x58] sm:$0xf]
      %v222 = vld [vmem:[%s192 + $0x5c] sm:$0xf]
      %v223 = vld [vmem:[%s192 + $0x60] sm:$0xf]
      %v224 = vld [vmem:[%s192 + $0x64] sm:$0xf]
      %v225 = vld [vmem:[%s192 + $0x68] sm:$0xf]
      %v226 = vld [vmem:[%s192 + $0x6c] sm:$0xf]
      %v227 = vld [vmem:[%s192 + $0x70] sm:$0xf]
      %v228 = vld [vmem:[%s192 + $0x74] sm:$0xf]
      %v229 = vld [vmem:[%s192 + $0x78] sm:$0xf]
      %v230 = vld [vmem:[%s192 + $0x7c] sm:$0xf]
      %v231 = vld [vmem:[%s192 + $0x80] sm:$0xf]
      %v232 = vld [vmem:[%s192 + $0x84] sm:$0xf]
      %v233 = vld [vmem:[%s192 + $0x88] sm:$0xf]
      %v234 = vld [vmem:[%s192 + $0x8c] sm:$0xf]
      %v235 = vld [vmem:[%s1] sm:$0xf]
      %v236 = vld [vmem:[%s1 + $0x4] sm:$0xf]
      %v237 = vld [vmem:[%s1 + $0x8] sm:$0xf]
      %v238 = vld [vmem:[%s1 + $0xc] sm:$0xf]
      %v239 = vld [vmem:[%s1 + $0x10] sm:$0xf]
      %v240 = vld [vmem:[%s1 + $0x14] sm:$0xf]
      %v241 = vld [vmem:[%s1 + $0x18] sm:$0xf]
      %v242 = vld [vmem:[%s1 + $0x1c] sm:$0xf]
      %v243 = vld [vmem:[%s1 + $0x20] sm:$0xf]
      %v244 = vld [vmem:[%s2] sm:$0x1]
      %v246 = vlaneseq
      %v247 = vshrl.u32 %v246, 7
      %v248 = vsub.s32 0, %v247
      %v249 = vrot.slane %v244, %v248
      %v287 = vunpack.c.l.b16 %v199
      %v288 = vunpack.c.l.b16 %v200
      %v289 = vunpack.c.l.b16 %v201
      %v290 = vunpack.c.l.b16 %v202
      %v291 = vunpack.c.l.b16 %v203
      %v292 = vunpack.c.l.b16 %v204
      %v293 = vunpack.c.l.b16 %v205
      %v294 = vunpack.c.l.b16 %v206
      %v295 = vunpack.c.l.b16 %v207
      %v296 = vunpack.c.l.b16 %v208
      %v297 = vunpack.c.l.b16 %v209
      %v298 = vunpack.c.l.b16 %v210
      %v299 = vunpack.c.l.b16 %v211
      %v300 = vunpack.c.l.b16 %v212
      %v301 = vunpack.c.l.b16 %v213
      %v302 = vunpack.c.l.b16 %v214
      %v303 = vunpack.c.l.b16 %v215
      %v304 = vunpack.c.l.b16 %v216
      %v305 = vunpack.c.l.b16 %v217
      %v306 = vunpack.c.l.b16 %v218
      %v307 = vunpack.c.l.b16 %v219
      %v308 = vunpack.c.l.b16 %v220
      %v309 = vunpack.c.l.b16 %v221
      %v310 = vunpack.c.l.b16 %v222
      %v311 = vunpack.c.l.b16 %v223
      %v312 = vunpack.c.l.b16 %v224
      %v313 = vunpack.c.l.b16 %v225
      %v314 = vunpack.c.l.b16 %v226
      %v315 = vunpack.c.l.b16 %v227
      %v316 = vunpack.c.l.b16 %v228
      %v317 = vunpack.c.l.b16 %v229
      %v318 = vunpack.c.l.b16 %v230
      %v319 = vunpack.c.l.b16 %v231
      %v320 = vunpack.c.l.b16 %v232
      %v321 = vunpack.c.l.b16 %v233
      %v322 = vunpack.c.l.b16 %v234
      %v323 = vpack.c.b16 %v288, %v287
      %v324 = vpack.c.b16 %v290, %v289
      %v325 = vpack.c.b16 %v292, %v291
      %v326 = vpack.c.b16 %v294, %v293
      %v327 = vpack.c.b16 %v296, %v295
      %v328 = vpack.c.b16 %v298, %v297
      %v329 = vpack.c.b16 %v300, %v299
      %v330 = vpack.c.b16 %v302, %v301
      %v331 = vpack.c.b16 %v304, %v303
      %v332 = vpack.c.b16 %v306, %v305
      %v333 = vpack.c.b16 %v308, %v307
      %v334 = vpack.c.b16 %v310, %v309
      %v335 = vpack.c.b16 %v312, %v311
      %v336 = vpack.c.b16 %v314, %v313
      %v337 = vpack.c.b16 %v316, %v315
      %v338 = vpack.c.b16 %v318, %v317
      %v339 = vpack.c.b16 %v320, %v319
      %v340 = vpack.c.b16 %v322, %v321
      %v350 = vunpack.c.l.b16 %v235
      %v351 = vunpack.c.l.b16 %v236
      %v352 = vunpack.c.l.b16 %v237
      %v353 = vunpack.c.l.b16 %v238
      %v354 = vunpack.c.l.b16 %v239
      %v355 = vunpack.c.l.b16 %v240
      %v356 = vunpack.c.l.b16 %v241
      %v357 = vunpack.c.l.b16 %v242
      %v358 = vunpack.c.l.b16 %v243
      %v359 = vpack.c.b16 %v351, %v350
      %v360 = vpack.c.b16 %v353, %v352
      %v361 = vpack.c.b16 %v355, %v354
      %v362 = vpack.c.b16 %v357, %v356
      %v363 = vpack.c.b16 %v358, %v358
      %vm368 = vcmask 588800
      %v370 = vsel %vm368, %v323, 0
      %v373 = vsel %vm368, %v324, 0
      %v376 = vsel %vm368, %v325, 0
      %v379 = vsel %vm368, %v326, 0
      %v382 = vsel %vm368, %v327, 0
      %v385 = vsel %vm368, %v328, 0
      %v388 = vsel %vm368, %v329, 0
      %v391 = vsel %vm368, %v330, 0
      %v394 = vsel %vm368, %v331, 0
      %v397 = vsel %vm368, %v332, 0
      %v400 = vsel %vm368, %v333, 0
      %v403 = vsel %vm368, %v334, 0
      %v406 = vsel %vm368, %v335, 0
      %v409 = vsel %vm368, %v336, 0
      %v412 = vsel %vm368, %v337, 0
      %v415 = vsel %vm368, %v338, 0
      %v418 = vsel %vm368, %v339, 0
      %v421 = vsel %vm368, %v340, 0
      %vm423 = vcmask 1043456
      %v425 = vsel %vm423, %v363, 0
      %427 = vmatprep.subr.bf16.mxu0 0
      %428 = vmatpush1.bf16.msra.mxu0 %v359
      %429 = vmatprep.subr.bf16.mxu0 0
      %430 = vmatpush1.bf16.msra.mxu0 %v360
      %431 = vmatprep.subr.bf16.mxu0 0
      %432 = vmatpush1.bf16.msra.mxu0 %v361
      %433 = vmatprep.subr.bf16.mxu0 0
      %434 = vmatpush1.bf16.msra.mxu0 %v362
      %435 = vmatprep.subr.bf16.mxu0 0
      %436 = vmatpush1.bf16.msra.mxu0 %v425
      %437 = vmatprep.subr.bf16.mxu0 0
      %438 = vmatpush1.bf16.msra.mxu0 0
      %439 = vmatprep.subr.bf16.mxu0 0
      %440 = vmatpush1.bf16.msra.mxu0 0
      %441 = vmatprep.subr.bf16.mxu0 0
      %442 = vmatpush1.bf16.msra.mxu0 0
      %443 = vmatprep.subr.bf16.mxu0 0
      %444 = vmatpush1.bf16.msra.mxu0 0
      %445 = vmatprep.subr.bf16.mxu0 0
      %446 = vmatpush1.bf16.msra.mxu0 0
      %447 = vmatprep.subr.bf16.mxu0 0
      %448 = vmatpush1.bf16.msra.mxu0 0
      %449 = vmatprep.subr.bf16.mxu0 0
      %450 = vmatpush1.bf16.msra.mxu0 0
      %451 = vmatprep.subr.bf16.mxu0 0
      %452 = vmatpush1.bf16.msra.mxu0 0
      %453 = vmatprep.subr.bf16.mxu0 0
      %454 = vmatpush1.bf16.msra.mxu0 0
      %455 = vmatprep.subr.bf16.mxu0 0
      %456 = vmatpush1.bf16.msra.mxu0 0
      %457 = vmatprep.subr.bf16.mxu0 0
      %458 = vmatpush1.bf16.msra.mxu0 0
      %459 = vmatprep.mubr.bf16.mxu0 0
      %460 = vmatmul.mubr.bf16.gmra.mrb[0].mxu0 %v370
      %v461 = vpop.f32.mrb[0].mxu0
      %v462 = vadd.f32 %v249, %v461
      %v463 = vpop.f32.mrb[0].mxu0
      %v464 = vpop.f32.mrb[0].mxu0
      %v465 = vadd.f32 %v249, %v464
      %v466 = vpop.f32.mrb[0].mxu0
      %467 = vmatprep.mubr.bf16.mxu0 0
      %468 = vmatmul.mubr.bf16.gmra.mrb[0].mxu0 %v373
      %v469 = vpop.f32.mrb[0].mxu0
      %v470 = vadd.f32 %v249, %v469
      %v471 = vpop.f32.mrb[0].mxu0
      %v472 = vpop.f32.mrb[0].mxu0
      %v473 = vadd.f32 %v249, %v472
      %v474 = vpop.f32.mrb[0].mxu0
      %475 = vmatprep.mubr.bf16.mxu0 0
      %476 = vmatmul.mubr.bf16.gmra.mrb[0].mxu0 %v376
      %v477 = vpop.f32.mrb[0].mxu0
      %v478 = vadd.f32 %v249, %v477
      %v479 = vpop.f32.mrb[0].mxu0
      %v480 = vpop.f32.mrb[0].mxu0
      %v481 = vadd.f32 %v249, %v480
      %v482 = vpop.f32.mrb[0].mxu0
      %483 = vmatprep.mubr.bf16.mxu0 0
      %484 = vmatmul.mubr.bf16.gmra.mrb[0].mxu0 %v379
      %v485 = vpop.f32.mrb[0].mxu0
      %v486 = vadd.f32 %v249, %v485
      %v487 = vpop.f32.mrb[0].mxu0
      %v488 = vpop.f32.mrb[0].mxu0
      %v489 = vadd.f32 %v249, %v488
      %v490 = vpop.f32.mrb[0].mxu0
      %491 = vmatprep.mubr.bf16.mxu0 0
      %492 = vmatmul.mubr.bf16.gmra.mrb[0].mxu0 %v382
      %v493 = vpop.f32.mrb[0].mxu0
      %v494 = vadd.f32 %v249, %v493
      %v495 = vpop.f32.mrb[0].mxu0
      %v496 = vpop.f32.mrb[0].mxu0
      %v497 = vadd.f32 %v249, %v496
      %v498 = vpop.f32.mrb[0].mxu0
      %499 = vmatprep.mubr.bf16.mxu0 0
      %500 = vmatmul.mubr.bf16.gmra.mrb[0].mxu0 %v385
      %v501 = vpop.f32.mrb[0].mxu0
      %v502 = vadd.f32 %v249, %v501
      %v503 = vpop.f32.mrb[0].mxu0
      %v504 = vpop.f32.mrb[0].mxu0
      %v505 = vadd.f32 %v249, %v504
      %v506 = vpop.f32.mrb[0].mxu0
      %507 = vmatprep.mubr.bf16.mxu0 0
      %508 = vmatmul.mubr.bf16.gmra.mrb[0].mxu0 %v388
      %v509 = vpop.f32.mrb[0].mxu0
      %v510 = vadd.f32 %v249, %v509
      %v511 = vpop.f32.mrb[0].mxu0
      %v512 = vpop.f32.mrb[0].mxu0
      %v513 = vadd.f32 %v249, %v512
      %v514 = vpop.f32.mrb[0].mxu0
      %515 = vmatprep.mubr.bf16.mxu0 0
      %516 = vmatmul.mubr.bf16.gmra.mrb[0].mxu0 %v391
      %v517 = vpop.f32.mrb[0].mxu0
      %v518 = vadd.f32 %v249, %v517
      %v519 = vpop.f32.mrb[0].mxu0
      %v520 = vpop.f32.mrb[0].mxu0
      %v521 = vadd.f32 %v249, %v520
      %v522 = vpop.f32.mrb[0].mxu0
      %523 = vmatprep.mubr.bf16.mxu0 0
      %524 = vmatmul.mubr.bf16.gmra.mrb[0].mxu0 %v394
      %v525 = vpop.f32.mrb[0].mxu0
      %v526 = vadd.f32 %v249, %v525
      %v527 = vpop.f32.mrb[0].mxu0
      %v528 = vpop.f32.mrb[0].mxu0
      %v529 = vadd.f32 %v249, %v528
      %v530 = vpop.f32.mrb[0].mxu0
      %531 = vmatprep.mubr.bf16.mxu0 0
      %532 = vmatmul.mubr.bf16.gmra.mrb[0].mxu0 %v397
      %v533 = vpop.f32.mrb[0].mxu0
      %v534 = vadd.f32 %v249, %v533
      %v535 = vpop.f32.mrb[0].mxu0
      %v536 = vpop.f32.mrb[0].mxu0
      %v537 = vadd.f32 %v249, %v536
      %v538 = vpop.f32.mrb[0].mxu0
      %539 = vmatprep.mubr.bf16.mxu0 0
      %540 = vmatmul.mubr.bf16.gmra.mrb[0].mxu0 %v400
      %v541 = vpop.f32.mrb[0].mxu0
      %v542 = vadd.f32 %v249, %v541
      %v543 = vpop.f32.mrb[0].mxu0
      %v544 = vpop.f32.mrb[0].mxu0
      %v545 = vadd.f32 %v249, %v544
      %v546 = vpop.f32.mrb[0].mxu0
      %547 = vmatprep.mubr.bf16.mxu0 0
      %548 = vmatmul.mubr.bf16.gmra.mrb[0].mxu0 %v403
      %v549 = vpop.f32.mrb[0].mxu0
      %v550 = vadd.f32 %v249, %v549
      %v551 = vpop.f32.mrb[0].mxu0
      %v552 = vpop.f32.mrb[0].mxu0
      %v553 = vadd.f32 %v249, %v552
      %v554 = vpop.f32.mrb[0].mxu0
      %555 = vmatprep.mubr.bf16.mxu0 0
      %556 = vmatmul.mubr.bf16.gmra.mrb[0].mxu0 %v406
      %v557 = vpop.f32.mrb[0].mxu0
      %v558 = vadd.f32 %v249, %v557
      %v559 = vpop.f32.mrb[0].mxu0
      %v560 = vpop.f32.mrb[0].mxu0
      %v561 = vadd.f32 %v249, %v560
      %v562 = vpop.f32.mrb[0].mxu0
      %563 = vmatprep.mubr.bf16.mxu0 0
      %564 = vmatmul.mubr.bf16.gmra.mrb[0].mxu0 %v409
      %v565 = vpop.f32.mrb[0].mxu0
      %v566 = vadd.f32 %v249, %v565
      %v567 = vpop.f32.mrb[0].mxu0
      %v568 = vpop.f32.mrb[0].mxu0
      %v569 = vadd.f32 %v249, %v568
      %v570 = vpop.f32.mrb[0].mxu0
      %571 = vmatprep.mubr.bf16.mxu0 0
      %572 = vmatmul.mubr.bf16.gmra.mrb[0].mxu0 %v412
      %v573 = vpop.f32.mrb[0].mxu0
      %v574 = vadd.f32 %v249, %v573
      %v575 = vpop.f32.mrb[0].mxu0
      %v576 = vpop.f32.mrb[0].mxu0
      %v577 = vadd.f32 %v249, %v576
      %v578 = vpop.f32.mrb[0].mxu0
      %579 = vmatprep.mubr.bf16.mxu0 0
      %580 = vmatmul.mubr.bf16.gmra.mrb[0].mxu0 %v415
      %v581 = vpop.f32.mrb[0].mxu0
      %v582 = vadd.f32 %v249, %v581
      %v583 = vpop.f32.mrb[0].mxu0
      %v584 = vpop.f32.mrb[0].mxu0
      %v585 = vadd.f32 %v249, %v584
      %v586 = vpop.f32.mrb[0].mxu0
      %587 = vmatprep.mubr.bf16.mxu0 0
      %588 = vmatmul.mubr.bf16.gmra.mrb[0].mxu0 %v418
      %v589 = vpop.f32.mrb[0].mxu0
      %v590 = vadd.f32 %v249, %v589
      %v591 = vpop.f32.mrb[0].mxu0
      %v592 = vpop.f32.mrb[0].mxu0
      %v593 = vadd.f32 %v249, %v592
      %v594 = vpop.f32.mrb[0].mxu0
      %595 = vmatprep.mubr.bf16.mxu0 0
      %596 = vmatmul.mubr.bf16.gmra.mrb[0].mxu0 %v421
      %v597 = vpop.f32.mrb[0].mxu0
      %v598 = vadd.f32 %v249, %v597
      %v599 = vpop.f32.mrb[0].mxu0
      %v600 = vpop.f32.mrb[0].mxu0
      %v601 = vadd.f32 %v249, %v600
      %v602 = vpop.f32.mrb[0].mxu0
      %603 = vdwg.mxu0
      %v604 = vmax.f32 %v462, 0.0
      %v605 = vmax.f32 %v465, 0.0
      %v606 = vmax.f32 %v470, 0.0
      %v607 = vmax.f32 %v473, 0.0
      %v608 = vmax.f32 %v478, 0.0
      %v609 = vmax.f32 %v481, 0.0
      %v610 = vmax.f32 %v486, 0.0
      %v611 = vmax.f32 %v489, 0.0
      %v612 = vmax.f32 %v494, 0.0
      %v613 = vmax.f32 %v497, 0.0
      %v614 = vmax.f32 %v502, 0.0
      %v615 = vmax.f32 %v505, 0.0
      %v616 = vmax.f32 %v510, 0.0
      %v617 = vmax.f32 %v513, 0.0
      %v618 = vmax.f32 %v518, 0.0
      %v619 = vmax.f32 %v521, 0.0
      %v620 = vmax.f32 %v526, 0.0
      %v621 = vmax.f32 %v529, 0.0
      %v622 = vmax.f32 %v534, 0.0
      %v623 = vmax.f32 %v537, 0.0
      %v624 = vmax.f32 %v542, 0.0
      %v625 = vmax.f32 %v545, 0.0
      %v626 = vmax.f32 %v550, 0.0
      %v627 = vmax.f32 %v553, 0.0
      %v628 = vmax.f32 %v558, 0.0
      %v629 = vmax.f32 %v561, 0.0
      %v630 = vmax.f32 %v566, 0.0
      %v631 = vmax.f32 %v569, 0.0
      %v632 = vmax.f32 %v574, 0.0
      %v633 = vmax.f32 %v577, 0.0
      %v634 = vmax.f32 %v582, 0.0
      %v635 = vmax.f32 %v585, 0.0
      %v636 = vmax.f32 %v590, 0.0
      %v637 = vmax.f32 %v593, 0.0
      %v638 = vmax.f32 %v598, 0.0
      %v639 = vmax.f32 %v601, 0.0
      %v640 = vpack.c.bf16 %v605, %v604
      %v641 = vpack.c.bf16 %v607, %v606
      %v642 = vpack.c.bf16 %v609, %v608
      %v643 = vpack.c.bf16 %v611, %v610
      %v644 = vpack.c.bf16 %v613, %v612
      %v645 = vpack.c.bf16 %v615, %v614
      %v646 = vpack.c.bf16 %v617, %v616
      %v647 = vpack.c.bf16 %v619, %v618
      %v648 = vpack.c.bf16 %v621, %v620
      %v649 = vpack.c.bf16 %v623, %v622
      %v650 = vpack.c.bf16 %v625, %v624
      %v651 = vpack.c.bf16 %v627, %v626
      %v652 = vpack.c.bf16 %v629, %v628
      %v653 = vpack.c.bf16 %v631, %v630
      %v654 = vpack.c.bf16 %v633, %v632
      %v655 = vpack.c.bf16 %v635, %v634
      %v656 = vpack.c.bf16 %v637, %v636
      %v657 = vpack.c.bf16 %v639, %v638
      %v676 = vunpack.c.l.b16 %v640
      %v677 = vunpack.c.h.b16 %v640
      %v678 = vunpack.c.l.b16 %v641
      %v679 = vunpack.c.h.b16 %v641
      %v680 = vunpack.c.l.b16 %v642
      %v681 = vunpack.c.h.b16 %v642
      %v682 = vunpack.c.l.b16 %v643
      %v683 = vunpack.c.h.b16 %v643
      %v684 = vunpack.c.l.b16 %v644
      %v685 = vunpack.c.h.b16 %v644
      %v686 = vunpack.c.l.b16 %v645
      %v687 = vunpack.c.h.b16 %v645
      %v688 = vunpack.c.l.b16 %v646
      %v689 = vunpack.c.h.b16 %v646
      %v690 = vunpack.c.l.b16 %v647
      %v691 = vunpack.c.h.b16 %v647
      %v692 = vunpack.c.l.b16 %v648
      %v693 = vunpack.c.h.b16 %v648
      %v694 = vunpack.c.l.b16 %v649
      %v695 = vunpack.c.h.b16 %v649
      %v696 = vunpack.c.l.b16 %v650
      %v697 = vunpack.c.h.b16 %v650
      %v698 = vunpack.c.l.b16 %v651
      %v699 = vunpack.c.h.b16 %v651
      %v700 = vunpack.c.l.b16 %v652
      %v701 = vunpack.c.h.b16 %v652
      %v702 = vunpack.c.l.b16 %v653
      %v703 = vunpack.c.h.b16 %v653
      %v704 = vunpack.c.l.b16 %v654
      %v705 = vunpack.c.h.b16 %v654
      %v706 = vunpack.c.l.b16 %v655
      %v707 = vunpack.c.h.b16 %v655
      %v708 = vunpack.c.l.b16 %v656
      %v709 = vunpack.c.h.b16 %v656
      %v710 = vunpack.c.l.b16 %v657
      %v711 = vunpack.c.h.b16 %v657
      %v712 = vpack.c.b16 %v676, %v676
      %v713 = vpack.c.b16 %v677, %v677
      %v714 = vpack.c.b16 %v678, %v678
      %v715 = vpack.c.b16 %v679, %v679
      %v716 = vpack.c.b16 %v680, %v680
      %v717 = vpack.c.b16 %v681, %v681
      %v718 = vpack.c.b16 %v682, %v682
      %v719 = vpack.c.b16 %v683, %v683
      %v720 = vpack.c.b16 %v684, %v684
      %v721 = vpack.c.b16 %v685, %v685
      %v722 = vpack.c.b16 %v686, %v686
      %v723 = vpack.c.b16 %v687, %v687
      %v724 = vpack.c.b16 %v688, %v688
      %v725 = vpack.c.b16 %v689, %v689
      %v726 = vpack.c.b16 %v690, %v690
      %v727 = vpack.c.b16 %v691, %v691
      %v728 = vpack.c.b16 %v692, %v692
      %v729 = vpack.c.b16 %v693, %v693
      %v730 = vpack.c.b16 %v694, %v694
      %v731 = vpack.c.b16 %v695, %v695
      %v732 = vpack.c.b16 %v696, %v696
      %v733 = vpack.c.b16 %v697, %v697
      %v734 = vpack.c.b16 %v698, %v698
      %v735 = vpack.c.b16 %v699, %v699
      %v736 = vpack.c.b16 %v700, %v700
      %v737 = vpack.c.b16 %v701, %v701
      %v738 = vpack.c.b16 %v702, %v702
      %v739 = vpack.c.b16 %v703, %v703
      %v740 = vpack.c.b16 %v704, %v704
      %v741 = vpack.c.b16 %v705, %v705
      %v742 = vpack.c.b16 %v706, %v706
      %v743 = vpack.c.b16 %v707, %v707
      %v744 = vpack.c.b16 %v708, %v708
      %v745 = vpack.c.b16 %v709, %v709
      %v746 = vpack.c.b16 %v710, %v710
      %v747 = vpack.c.b16 %v711, %v711
      %784 = vst [vmem:[#allocation2] sm:$0xf] %v712
      %785 = vst [vmem:[#allocation2 + $0x4] sm:$0xf] %v713
      %786 = vst [vmem:[#allocation2 + $0x8] sm:$0xf] %v714
      %787 = vst [vmem:[#allocation2 + $0xc] sm:$0xf] %v715
      %788 = vst [vmem:[#allocation2 + $0x10] sm:$0xf] %v716
      %789 = vst [vmem:[#allocation2 + $0x14] sm:$0xf] %v717
      %790 = vst [vmem:[#allocation2 + $0x18] sm:$0xf] %v718
      %791 = vst [vmem:[#allocation2 + $0x1c] sm:$0xf] %v719
      %792 = vst [vmem:[#allocation2 + $0x20] sm:$0xf] %v720
      %793 = vst [vmem:[#allocation2 + $0x24] sm:$0xf] %v721
      %794 = vst [vmem:[#allocation2 + $0x28] sm:$0xf] %v722
      %795 = vst [vmem:[#allocation2 + $0x2c] sm:$0xf] %v723
      %796 = vst [vmem:[#allocation2 + $0x30] sm:$0xf] %v724
      %797 = vst [vmem:[#allocation2 + $0x34] sm:$0xf] %v725
      %798 = vst [vmem:[#allocation2 + $0x38] sm:$0xf] %v726
      %799 = vst [vmem:[#allocation2 + $0x3c] sm:$0xf] %v727
      %800 = vst [vmem:[#allocation2 + $0x40] sm:$0xf] %v728
      %801 = vst [vmem:[#allocation2 + $0x44] sm:$0xf] %v729
      %802 = vst [vmem:[#allocation2 + $0x48] sm:$0xf] %v730
      %803 = vst [vmem:[#allocation2 + $0x4c] sm:$0xf] %v731
      %804 = vst [vmem:[#allocation2 + $0x50] sm:$0xf] %v732
      %805 = vst [vmem:[#allocation2 + $0x54] sm:$0xf] %v733
      %806 = vst [vmem:[#allocation2 + $0x58] sm:$0xf] %v734
      %807 = vst [vmem:[#allocation2 + $0x5c] sm:$0xf] %v735
      %808 = vst [vmem:[#allocation2 + $0x60] sm:$0xf] %v736
      %809 = vst [vmem:[#allocation2 + $0x64] sm:$0xf] %v737
      %810 = vst [vmem:[#allocation2 + $0x68] sm:$0xf] %v738
      %811 = vst [vmem:[#allocation2 + $0x6c] sm:$0xf] %v739
      %812 = vst [vmem:[#allocation2 + $0x70] sm:$0xf] %v740
      %813 = vst [vmem:[#allocation2 + $0x74] sm:$0xf] %v741
      %814 = vst [vmem:[#allocation2 + $0x78] sm:$0xf] %v742
      %815 = vst [vmem:[#allocation2 + $0x7c] sm:$0xf] %v743
      %816 = vst [vmem:[#allocation2 + $0x80] sm:$0xf] %v744
      %817 = vst [vmem:[#allocation2 + $0x84] sm:$0xf] %v745
      %818 = vst [vmem:[#allocation2 + $0x88] sm:$0xf] %v746
      %819 = vst [vmem:[#allocation2 + $0x8c] sm:$0xf] %v747
      %820 = vst [vmem:[#allocation2 + $0x90] sm:$0xf] 0
      %821 = vst [vmem:[#allocation2 + $0x94] sm:$0xf] 0
      %822 = vst [vmem:[#allocation2 + $0x98] sm:$0xf] 0
      %v823 = vld [vmem:[#allocation2] sm:$0xf]
      %v824 = vld [vmem:[#allocation2 + $0x4] sm:$0xf]
      %v825 = vld [vmem:[#allocation2 + $0x8] sm:$0xf]
      %v826 = vld [vmem:[#allocation2 + $0xc] sm:$0xf]
      %v827 = vld [vmem:[#allocation2 + $0x10] sm:$0xf]
      %v828 = vld [vmem:[#allocation2 + $0x14] sm:$0xf]
      %v829 = vld [vmem:[#allocation2 + $0x18] sm:$0xf]
      %v830 = vld [vmem:[#allocation2 + $0x1c] sm:$0xf]
      %v831 = vld [vmem:[#allocation2 + $0x20] sm:$0xf]
      %v832 = vld [vmem:[#allocation2 + $0x24] sm:$0xf]
      %v833 = vld [vmem:[#allocation2 + $0x28] sm:$0xf]
      %v834 = vld [vmem:[#allocation2 + $0x2c] sm:$0xf]
      %v835 = vld [vmem:[#allocation2 + $0x30] sm:$0xf]
      %v836 = vld [vmem:[#allocation2 + $0x34] sm:$0xf]
      %v837 = vld [vmem:[#allocation2 + $0x38] sm:$0xf]
      %v838 = vld [vmem:[#allocation2 + $0x3c] sm:$0xf]
      %v839 = vld [vmem:[#allocation2 + $0x40] sm:$0xf]
      %v840 = vld [vmem:[#allocation2 + $0x44] sm:$0xf]
      %v841 = vld [vmem:[#allocation2 + $0x48] sm:$0xf]
      %v842 = vld [vmem:[#allocation2 + $0x4c] sm:$0xf]
      %v843 = vld [vmem:[#allocation2 + $0x50] sm:$0xf]
      %v844 = vld [vmem:[#allocation2 + $0x54] sm:$0xf]
      %v845 = vld [vmem:[#allocation2 + $0x58] sm:$0xf]
      %v846 = vld [vmem:[#allocation2 + $0x5c] sm:$0xf]
      %v847 = vld [vmem:[#allocation2 + $0x60] sm:$0xf]
      %v848 = vld [vmem:[#allocation2 + $0x64] sm:$0xf]
      %v849 = vld [vmem:[#allocation2 + $0x68] sm:$0xf]
      %v850 = vld [vmem:[#allocation2 + $0x6c] sm:$0xf]
      %v851 = vld [vmem:[#allocation2 + $0x70] sm:$0xf]
      %v852 = vld [vmem:[#allocation2 + $0x74] sm:$0xf]
      %v853 = vld [vmem:[#allocation2 + $0x78] sm:$0xf]
      %v854 = vld [vmem:[#allocation2 + $0x7c] sm:$0xf]
      %v855 = vld [vmem:[#allocation2 + $0x80] sm:$0xf]
      %v856 = vld [vmem:[#allocation2 + $0x84] sm:$0xf]
      %v857 = vld [vmem:[#allocation2 + $0x88] sm:$0xf]
      %v858 = vld [vmem:[#allocation2 + $0x8c] sm:$0xf]
      %v859 = vld [vmem:[#allocation2 + $0x90] sm:$0x1]
      %vm860 = vsmask.f32 3328
      %vm861 = vsmask.f32 7440
      %vm862 = vmor %vm860, %vm861
      %v864 = vshrl.u32 %v823, 16
      %v866 = vrot.slane %v864, 4
      %v867 = vshll.u32 %v823, 16
      %v869 = vrot.slane %v867, 5
      %v870 = vor.u32 %v866, %v869
      %v871 = vrot.slane %v870, 4
      %v873 = vshll.u32 %v824, 16
      %v875 = vrot.slane %v873, 5
      %v876 = vsel %vm862, %v871, %v875
      %v877 = vshrl.u32 %v824, 16
      %v879 = vrot.slane %v877, 4
      %v880 = vor.u32 %v879, %v875
      %v881 = vrot.slane %v880, 4
      %v883 = vshll.u32 %v825, 16
      %v885 = vrot.slane %v883, 5
      %v886 = vsel %vm862, %v881, %v885
      %v887 = vshrl.u32 %v825, 16
      %v889 = vrot.slane %v887, 4
      %v890 = vor.u32 %v889, %v885
      %v891 = vrot.slane %v890, 4
      %v893 = vshll.u32 %v826, 16
      %v895 = vrot.slane %v893, 5
      %v896 = vsel %vm862, %v891, %v895
      %v897 = vshrl.u32 %v826, 16
      %v899 = vrot.slane %v897, 4
      %v900 = vor.u32 %v899, %v895
      %v901 = vrot.slane %v900, 4
      %v903 = vshll.u32 %v827, 16
      %v905 = vrot.slane %v903, 5
      %v906 = vsel %vm862, %v901, %v905
      %v907 = vshrl.u32 %v827, 16
      %v909 = vrot.slane %v907, 4
      %v910 = vor.u32 %v909, %v905
      %v911 = vrot.slane %v910, 4
      %v913 = vshll.u32 %v828, 16
      %v915 = vrot.slane %v913, 5
      %v916 = vsel %vm862, %v911, %v915
      %v917 = vshrl.u32 %v828, 16
      %v919 = vrot.slane %v917, 4
      %v920 = vor.u32 %v919, %v915
      %v921 = vrot.slane %v920, 4
      %v923 = vshll.u32 %v829, 16
      %v925 = vrot.slane %v923, 5
      %v926 = vsel %vm862, %v921, %v925
      %v927 = vshrl.u32 %v829, 16
      %v929 = vrot.slane %v927, 4
      %v930 = vor.u32 %v929, %v925
      %v931 = vrot.slane %v930, 4
      %v933 = vshll.u32 %v830, 16
      %v935 = vrot.slane %v933, 5
      %v936 = vsel %vm862, %v931, %v935
      %v937 = vshrl.u32 %v830, 16
      %v939 = vrot.slane %v937, 4
      %v940 = vor.u32 %v939, %v935
      %v941 = vrot.slane %v940, 4
      %v943 = vshll.u32 %v831, 16
      %v945 = vrot.slane %v943, 5
      %v946 = vsel %vm862, %v941, %v945
      %v947 = vshrl.u32 %v831, 16
      %v949 = vrot.slane %v947, 4
      %v950 = vor.u32 %v949, %v945
      %v951 = vrot.slane %v950, 4
      %v953 = vshll.u32 %v832, 16
      %v955 = vrot.slane %v953, 5
      %v956 = vsel %vm862, %v951, %v955
      %v957 = vshrl.u32 %v832, 16
      %v959 = vrot.slane %v957, 4
      %v960 = vor.u32 %v959, %v955
      %v961 = vrot.slane %v960, 4
      %v963 = vshll.u32 %v833, 16
      %v965 = vrot.slane %v963, 5
      %v966 = vsel %vm862, %v961, %v965
      %v967 = vshrl.u32 %v833, 16
      %v969 = vrot.slane %v967, 4
      %v970 = vor.u32 %v969, %v965
      %v971 = vrot.slane %v970, 4
      %v973 = vshll.u32 %v834, 16
      %v975 = vrot.slane %v973, 5
      %v976 = vsel %vm862, %v971, %v975
      %v977 = vshrl.u32 %v834, 16
      %v979 = vrot.slane %v977, 4
      %v980 = vor.u32 %v979, %v975
      %v981 = vrot.slane %v980, 4
      %v983 = vshll.u32 %v835, 16
      %v985 = vrot.slane %v983, 5
      %v986 = vsel %vm862, %v981, %v985
      %v987 = vshrl.u32 %v835, 16
      %v989 = vrot.slane %v987, 4
      %v990 = vor.u32 %v989, %v985
      %v991 = vrot.slane %v990, 4
      %v993 = vshll.u32 %v836, 16
      %v995 = vrot.slane %v993, 5
      %v996 = vsel %vm862, %v991, %v995
      %v997 = vshrl.u32 %v836, 16
      %v999 = vrot.slane %v997, 4
      %v1000 = vor.u32 %v999, %v995
      %v1001 = vrot.slane %v1000, 4
      %v1003 = vshll.u32 %v837, 16
      %v1005 = vrot.slane %v1003, 5
      %v1006 = vsel %vm862, %v1001, %v1005
      %v1007 = vshrl.u32 %v837, 16
      %v1009 = vrot.slane %v1007, 4
      %v1010 = vor.u32 %v1009, %v1005
      %v1011 = vrot.slane %v1010, 4
      %v1013 = vshll.u32 %v838, 16
      %v1015 = vrot.slane %v1013, 5
      %v1016 = vsel %vm862, %v1011, %v1015
      %v1017 = vshrl.u32 %v838, 16
      %v1019 = vrot.slane %v1017, 4
      %v1020 = vor.u32 %v1019, %v1015
      %v1021 = vrot.slane %v1020, 4
      %v1023 = vshll.u32 %v839, 16
      %v1025 = vrot.slane %v1023, 5
      %v1026 = vsel %vm862, %v1021, %v1025
      %v1027 = vshrl.u32 %v839, 16
      %v1029 = vrot.slane %v1027, 4
      %v1030 = vor.u32 %v1029, %v1025
      %v1031 = vrot.slane %v1030, 4
      %v1033 = vshll.u32 %v840, 16
      %v1035 = vrot.slane %v1033, 5
      %v1036 = vsel %vm862, %v1031, %v1035
      %v1037 = vshrl.u32 %v840, 16
      %v1039 = vrot.slane %v1037, 4
      %v1040 = vor.u32 %v1039, %v1035
      %v1041 = vrot.slane %v1040, 4
      %v1043 = vshll.u32 %v841, 16
      %v1045 = vrot.slane %v1043, 5
      %v1046 = vsel %vm862, %v1041, %v1045
      %v1047 = vshrl.u32 %v841, 16
      %v1049 = vrot.slane %v1047, 4
      %v1050 = vor.u32 %v1049, %v1045
      %v1051 = vrot.slane %v1050, 4
      %v1053 = vshll.u32 %v842, 16
      %v1055 = vrot.slane %v1053, 5
      %v1056 = vsel %vm862, %v1051, %v1055
      %v1057 = vshrl.u32 %v842, 16
      %v1059 = vrot.slane %v1057, 4
      %v1060 = vor.u32 %v1059, %v1055
      %v1061 = vrot.slane %v1060, 4
      %v1063 = vshll.u32 %v843, 16
      %v1065 = vrot.slane %v1063, 5
      %v1066 = vsel %vm862, %v1061, %v1065
      %v1067 = vshrl.u32 %v843, 16
      %v1069 = vrot.slane %v1067, 4
      %v1070 = vor.u32 %v1069, %v1065
      %v1071 = vrot.slane %v1070, 4
      %v1073 = vshll.u32 %v844, 16
      %v1075 = vrot.slane %v1073, 5
      %v1076 = vsel %vm862, %v1071, %v1075
      %v1077 = vshrl.u32 %v844, 16
      %v1079 = vrot.slane %v1077, 4
      %v1080 = vor.u32 %v1079, %v1075
      %v1081 = vrot.slane %v1080, 4
      %v1083 = vshll.u32 %v845, 16
      %v1085 = vrot.slane %v1083, 5
      %v1086 = vsel %vm862, %v1081, %v1085
      %v1087 = vshrl.u32 %v845, 16
      %v1089 = vrot.slane %v1087, 4
      %v1090 = vor.u32 %v1089, %v1085
      %v1091 = vrot.slane %v1090, 4
      %v1093 = vshll.u32 %v846, 16
      %v1095 = vrot.slane %v1093, 5
      %v1096 = vsel %vm862, %v1091, %v1095
      %v1097 = vshrl.u32 %v846, 16
      %v1099 = vrot.slane %v1097, 4
      %v1100 = vor.u32 %v1099, %v1095
      %v1101 = vrot.slane %v1100, 4
      %v1103 = vshll.u32 %v847, 16
      %v1105 = vrot.slane %v1103, 5
      %v1106 = vsel %vm862, %v1101, %v1105
      %v1107 = vshrl.u32 %v847, 16
      %v1109 = vrot.slane %v1107, 4
      %v1110 = vor.u32 %v1109, %v1105
      %v1111 = vrot.slane %v1110, 4
      %v1113 = vshll.u32 %v848, 16
      %v1115 = vrot.slane %v1113, 5
      %v1116 = vsel %vm862, %v1111, %v1115
      %v1117 = vshrl.u32 %v848, 16
      %v1119 = vrot.slane %v1117, 4
      %v1120 = vor.u32 %v1119, %v1115
      %v1121 = vrot.slane %v1120, 4
      %v1123 = vshll.u32 %v849, 16
      %v1125 = vrot.slane %v1123, 5
      %v1126 = vsel %vm862, %v1121, %v1125
      %v1127 = vshrl.u32 %v849, 16
      %v1129 = vrot.slane %v1127, 4
      %v1130 = vor.u32 %v1129, %v1125
      %v1131 = vrot.slane %v1130, 4
      %v1133 = vshll.u32 %v850, 16
      %v1135 = vrot.slane %v1133, 5
      %v1136 = vsel %vm862, %v1131, %v1135
      %v1137 = vshrl.u32 %v850, 16
      %v1139 = vrot.slane %v1137, 4
      %v1140 = vor.u32 %v1139, %v1135
      %v1141 = vrot.slane %v1140, 4
      %v1143 = vshll.u32 %v851, 16
      %v1145 = vrot.slane %v1143, 5
      %v1146 = vsel %vm862, %v1141, %v1145
      %v1147 = vshrl.u32 %v851, 16
      %v1149 = vrot.slane %v1147, 4
      %v1150 = vor.u32 %v1149, %v1145
      %v1151 = vrot.slane %v1150, 4
      %v1153 = vshll.u32 %v852, 16
      %v1155 = vrot.slane %v1153, 5
      %v1156 = vsel %vm862, %v1151, %v1155
      %v1157 = vshrl.u32 %v852, 16
      %v1159 = vrot.slane %v1157, 4
      %v1160 = vor.u32 %v1159, %v1155
      %v1161 = vrot.slane %v1160, 4
      %v1163 = vshll.u32 %v853, 16
      %v1165 = vrot.slane %v1163, 5
      %v1166 = vsel %vm862, %v1161, %v1165
      %v1167 = vshrl.u32 %v853, 16
      %v1169 = vrot.slane %v1167, 4
      %v1170 = vor.u32 %v1169, %v1165
      %v1171 = vrot.slane %v1170, 4
      %v1173 = vshll.u32 %v854, 16
      %v1175 = vrot.slane %v1173, 5
      %v1176 = vsel %vm862, %v1171, %v1175
      %v1177 = vshrl.u32 %v854, 16
      %v1179 = vrot.slane %v1177, 4
      %v1180 = vor.u32 %v1179, %v1175
      %v1181 = vrot.slane %v1180, 4
      %v1183 = vshll.u32 %v855, 16
      %v1185 = vrot.slane %v1183, 5
      %v1186 = vsel %vm862, %v1181, %v1185
      %v1187 = vshrl.u32 %v855, 16
      %v1189 = vrot.slane %v1187, 4
      %v1190 = vor.u32 %v1189, %v1185
      %v1191 = vrot.slane %v1190, 4
      %v1193 = vshll.u32 %v856, 16
      %v1195 = vrot.slane %v1193, 5
      %v1196 = vsel %vm862, %v1191, %v1195
      %v1197 = vshrl.u32 %v856, 16
      %v1199 = vrot.slane %v1197, 4
      %v1200 = vor.u32 %v1199, %v1195
      %v1201 = vrot.slane %v1200, 4
      %v1203 = vshll.u32 %v857, 16
      %v1205 = vrot.slane %v1203, 5
      %v1206 = vsel %vm862, %v1201, %v1205
      %v1207 = vshrl.u32 %v857, 16
      %v1209 = vrot.slane %v1207, 4
      %v1210 = vor.u32 %v1209, %v1205
      %v1211 = vrot.slane %v1210, 4
      %v1213 = vshll.u32 %v858, 16
      %v1215 = vrot.slane %v1213, 5
      %v1216 = vsel %vm862, %v1211, %v1215
      %v1217 = vshrl.u32 %v858, 16
      %v1219 = vrot.slane %v1217, 4
      %v1220 = vor.u32 %v1219, %v1215
      %v1221 = vrot.slane %v1220, 4
      %v1223 = vshll.u32 %v859, 16
      %v1225 = vrot.slane %v1223, 5
      %v1226 = vsel %vm862, %v1221, %v1225
      %v1263 = vmax.bf16 %v823, %v876
      %v1264 = vmax.bf16 %v824, %v886
      %v1265 = vmax.bf16 %v825, %v896
      %v1266 = vmax.bf16 %v826, %v906
      %v1267 = vmax.bf16 %v827, %v916
      %v1268 = vmax.bf16 %v828, %v926
      %v1269 = vmax.bf16 %v829, %v936
      %v1270 = vmax.bf16 %v830, %v946
      %v1271 = vmax.bf16 %v831, %v956
      %v1272 = vmax.bf16 %v832, %v966
      %v1273 = vmax.bf16 %v833, %v976
      %v1274 = vmax.bf16 %v834, %v986
      %v1275 = vmax.bf16 %v835, %v996
      %v1276 = vmax.bf16 %v836, %v1006
      %v1277 = vmax.bf16 %v837, %v1016
      %v1278 = vmax.bf16 %v838, %v1026
      %v1279 = vmax.bf16 %v839, %v1036
      %v1280 = vmax.bf16 %v840, %v1046
      %v1281 = vmax.bf16 %v841, %v1056
      %v1282 = vmax.bf16 %v842, %v1066
      %v1283 = vmax.bf16 %v843, %v1076
      %v1284 = vmax.bf16 %v844, %v1086
      %v1285 = vmax.bf16 %v845, %v1096
      %v1286 = vmax.bf16 %v846, %v1106
      %v1287 = vmax.bf16 %v847, %v1116
      %v1288 = vmax.bf16 %v848, %v1126
      %v1289 = vmax.bf16 %v849, %v1136
      %v1290 = vmax.bf16 %v850, %v1146
      %v1291 = vmax.bf16 %v851, %v1156
      %v1292 = vmax.bf16 %v852, %v1166
      %v1293 = vmax.bf16 %v853, %v1176
      %v1294 = vmax.bf16 %v854, %v1186
      %v1295 = vmax.bf16 %v855, %v1196
      %v1296 = vmax.bf16 %v856, %v1206
      %v1297 = vmax.bf16 %v857, %v1216
      %v1298 = vmax.bf16 %v858, %v1226
      %v1299 = vld [vmem:[#allocation2 + $0x8] sm:$0xe]
      %v1300 = vld [vmem:[#allocation2 + $0xc] sm:$0xf]
      %v1301 = vld [vmem:[#allocation2 + $0x10] sm:$0xf]
      %v1302 = vld [vmem:[#allocation2 + $0x14] sm:$0xf]
      %v1303 = vld [vmem:[#allocation2 + $0x18] sm:$0xf]
      %v1304 = vld [vmem:[#allocation2 + $0x1c] sm:$0xf]
      %v1305 = vld [vmem:[#allocation2 + $0x20] sm:$0xf]
      %v1306 = vld [vmem:[#allocation2 + $0x24] sm:$0xf]
      %v1307 = vld [vmem:[#allocation2 + $0x28] sm:$0xf]
      %v1308 = vld [vmem:[#allocation2 + $0x2c] sm:$0xf]
      %v1309 = vld [vmem:[#allocation2 + $0x30] sm:$0xf]
      %v1310 = vld [vmem:[#allocation2 + $0x34] sm:$0xf]
      %v1311 = vld [vmem:[#allocation2 + $0x38] sm:$0xf]
      %v1312 = vld [vmem:[#allocation2 + $0x3c] sm:$0xf]
      %v1313 = vld [vmem:[#allocation2 + $0x40] sm:$0xf]
      %v1314 = vld [vmem:[#allocation2 + $0x44] sm:$0xf]
      %v1315 = vld [vmem:[#allocation2 + $0x48] sm:$0xf]
      %v1316 = vld [vmem:[#allocation2 + $0x4c] sm:$0xf]
      %v1317 = vld [vmem:[#allocation2 + $0x50] sm:$0xf]
      %v1318 = vld [vmem:[#allocation2 + $0x54] sm:$0xf]
      %v1319 = vld [vmem:[#allocation2 + $0x58] sm:$0xf]
      %v1320 = vld [vmem:[#allocation2 + $0x5c] sm:$0xf]
      %v1321 = vld [vmem:[#allocation2 + $0x60] sm:$0xf]
      %v1322 = vld [vmem:[#allocation2 + $0x64] sm:$0xf]
      %v1323 = vld [vmem:[#allocation2 + $0x68] sm:$0xf]
      %v1324 = vld [vmem:[#allocation2 + $0x6c] sm:$0xf]
      %v1325 = vld [vmem:[#allocation2 + $0x70] sm:$0xf]
      %v1326 = vld [vmem:[#allocation2 + $0x74] sm:$0xf]
      %v1327 = vld [vmem:[#allocation2 + $0x78] sm:$0xf]
      %v1328 = vld [vmem:[#allocation2 + $0x7c] sm:$0xf]
      %v1329 = vld [vmem:[#allocation2 + $0x80] sm:$0xf]
      %v1330 = vld [vmem:[#allocation2 + $0x84] sm:$0xf]
      %v1331 = vld [vmem:[#allocation2 + $0x88] sm:$0xf]
      %v1332 = vld [vmem:[#allocation2 + $0x8c] sm:$0xf]
      %v1333 = vld [vmem:[#allocation2 + $0x90] sm:$0xf]
      %v1334 = vld [vmem:[#allocation2 + $0x94] sm:$0xf]
      %v1335 = vld [vmem:[#allocation2 + $0x98] sm:$0x1]
      %v1336 = vld [vmem:[#allocation2 + $0x98] sm:$0x3]
      %v1338 = vshrl.u32 %v1299, 16
      %v1340 = vrot.slane %v1338, 4
      %v1341 = vshll.u32 %v1299, 16
      %v1343 = vrot.slane %v1341, 5
      %v1344 = vor.u32 %v1340, %v1343
      %v1345 = vrot.slane %v1344, 4
      %v1347 = vshll.u32 %v1300, 16
      %v1349 = vrot.slane %v1347, 5
      %v1350 = vsel %vm862, %v1345, %v1349
      %v1351 = vshrl.u32 %v1300, 16
      %v1353 = vrot.slane %v1351, 4
      %v1354 = vor.u32 %v1353, %v1349
      %v1355 = vrot.slane %v1354, 4
      %v1357 = vshll.u32 %v1301, 16
      %v1359 = vrot.slane %v1357, 5
      %v1360 = vsel %vm862, %v1355, %v1359
      %v1361 = vshrl.u32 %v1301, 16
      %v1363 = vrot.slane %v1361, 4
      %v1364 = vor.u32 %v1363, %v1359
      %v1365 = vrot.slane %v1364, 4
      %v1367 = vshll.u32 %v1302, 16
      %v1369 = vrot.slane %v1367, 5
      %v1370 = vsel %vm862, %v1365, %v1369
      %v1371 = vshrl.u32 %v1302, 16
      %v1373 = vrot.slane %v1371, 4
      %v1374 = vor.u32 %v1373, %v1369
      %v1375 = vrot.slane %v1374, 4
      %v1377 = vshll.u32 %v1303, 16
      %v1379 = vrot.slane %v1377, 5
      %v1380 = vsel %vm862, %v1375, %v1379
      %v1381 = vshrl.u32 %v1303, 16
      %v1383 = vrot.slane %v1381, 4
      %v1384 = vor.u32 %v1383, %v1379
      %v1385 = vrot.slane %v1384, 4
      %v1387 = vshll.u32 %v1304, 16
      %v1389 = vrot.slane %v1387, 5
      %v1390 = vsel %vm862, %v1385, %v1389
      %v1391 = vshrl.u32 %v1304, 16
      %v1393 = vrot.slane %v1391, 4
      %v1394 = vor.u32 %v1393, %v1389
      %v1395 = vrot.slane %v1394, 4
      %v1397 = vshll.u32 %v1305, 16
      %v1399 = vrot.slane %v1397, 5
      %v1400 = vsel %vm862, %v1395, %v1399
      %v1401 = vshrl.u32 %v1305, 16
      %v1403 = vrot.slane %v1401, 4
      %v1404 = vor.u32 %v1403, %v1399
      %v1405 = vrot.slane %v1404, 4
      %v1407 = vshll.u32 %v1306, 16
      %v1409 = vrot.slane %v1407, 5
      %v1410 = vsel %vm862, %v1405, %v1409
      %v1411 = vshrl.u32 %v1306, 16
      %v1413 = vrot.slane %v1411, 4
      %v1414 = vor.u32 %v1413, %v1409
      %v1415 = vrot.slane %v1414, 4
      %v1417 = vshll.u32 %v1307, 16
      %v1419 = vrot.slane %v1417, 5
      %v1420 = vsel %vm862, %v1415, %v1419
      %v1421 = vshrl.u32 %v1307, 16
      %v1423 = vrot.slane %v1421, 4
      %v1424 = vor.u32 %v1423, %v1419
      %v1425 = vrot.slane %v1424, 4
      %v1427 = vshll.u32 %v1308, 16
      %v1429 = vrot.slane %v1427, 5
      %v1430 = vsel %vm862, %v1425, %v1429
      %v1431 = vshrl.u32 %v1308, 16
      %v1433 = vrot.slane %v1431, 4
      %v1434 = vor.u32 %v1433, %v1429
      %v1435 = vrot.slane %v1434, 4
      %v1437 = vshll.u32 %v1309, 16
      %v1439 = vrot.slane %v1437, 5
      %v1440 = vsel %vm862, %v1435, %v1439
      %v1441 = vshrl.u32 %v1309, 16
      %v1443 = vrot.slane %v1441, 4
      %v1444 = vor.u32 %v1443, %v1439
      %v1445 = vrot.slane %v1444, 4
      %v1447 = vshll.u32 %v1310, 16
      %v1449 = vrot.slane %v1447, 5
      %v1450 = vsel %vm862, %v1445, %v1449
      %v1451 = vshrl.u32 %v1310, 16
      %v1453 = vrot.slane %v1451, 4
      %v1454 = vor.u32 %v1453, %v1449
      %v1455 = vrot.slane %v1454, 4
      %v1457 = vshll.u32 %v1311, 16
      %v1459 = vrot.slane %v1457, 5
      %v1460 = vsel %vm862, %v1455, %v1459
      %v1461 = vshrl.u32 %v1311, 16
      %v1463 = vrot.slane %v1461, 4
      %v1464 = vor.u32 %v1463, %v1459
      %v1465 = vrot.slane %v1464, 4
      %v1467 = vshll.u32 %v1312, 16
      %v1469 = vrot.slane %v1467, 5
      %v1470 = vsel %vm862, %v1465, %v1469
      %v1471 = vshrl.u32 %v1312, 16
      %v1473 = vrot.slane %v1471, 4
      %v1474 = vor.u32 %v1473, %v1469
      %v1475 = vrot.slane %v1474, 4
      %v1477 = vshll.u32 %v1313, 16
      %v1479 = vrot.slane %v1477, 5
      %v1480 = vsel %vm862, %v1475, %v1479
      %v1481 = vshrl.u32 %v1313, 16
      %v1483 = vrot.slane %v1481, 4
      %v1484 = vor.u32 %v1483, %v1479
      %v1485 = vrot.slane %v1484, 4
      %v1487 = vshll.u32 %v1314, 16
      %v1489 = vrot.slane %v1487, 5
      %v1490 = vsel %vm862, %v1485, %v1489
      %v1491 = vshrl.u32 %v1314, 16
      %v1493 = vrot.slane %v1491, 4
      %v1494 = vor.u32 %v1493, %v1489
      %v1495 = vrot.slane %v1494, 4
      %v1497 = vshll.u32 %v1315, 16
      %v1499 = vrot.slane %v1497, 5
      %v1500 = vsel %vm862, %v1495, %v1499
      %v1501 = vshrl.u32 %v1315, 16
      %v1503 = vrot.slane %v1501, 4
      %v1504 = vor.u32 %v1503, %v1499
      %v1505 = vrot.slane %v1504, 4
      %v1507 = vshll.u32 %v1316, 16
      %v1509 = vrot.slane %v1507, 5
      %v1510 = vsel %vm862, %v1505, %v1509
      %v1511 = vshrl.u32 %v1316, 16
      %v1513 = vrot.slane %v1511, 4
      %v1514 = vor.u32 %v1513, %v1509
      %v1515 = vrot.slane %v1514, 4
      %v1517 = vshll.u32 %v1317, 16
      %v1519 = vrot.slane %v1517, 5
      %v1520 = vsel %vm862, %v1515, %v1519
      %v1521 = vshrl.u32 %v1317, 16
      %v1523 = vrot.slane %v1521, 4
      %v1524 = vor.u32 %v1523, %v1519
      %v1525 = vrot.slane %v1524, 4
      %v1527 = vshll.u32 %v1318, 16
      %v1529 = vrot.slane %v1527, 5
      %v1530 = vsel %vm862, %v1525, %v1529
      %v1531 = vshrl.u32 %v1318, 16
      %v1533 = vrot.slane %v1531, 4
      %v1534 = vor.u32 %v1533, %v1529
      %v1535 = vrot.slane %v1534, 4
      %v1537 = vshll.u32 %v1319, 16
      %v1539 = vrot.slane %v1537, 5
      %v1540 = vsel %vm862, %v1535, %v1539
      %v1541 = vshrl.u32 %v1319, 16
      %v1543 = vrot.slane %v1541, 4
      %v1544 = vor.u32 %v1543, %v1539
      %v1545 = vrot.slane %v1544, 4
      %v1547 = vshll.u32 %v1320, 16
      %v1549 = vrot.slane %v1547, 5
      %v1550 = vsel %vm862, %v1545, %v1549
      %v1551 = vshrl.u32 %v1320, 16
      %v1553 = vrot.slane %v1551, 4
      %v1554 = vor.u32 %v1553, %v1549
      %v1555 = vrot.slane %v1554, 4
      %v1557 = vshll.u32 %v1321, 16
      %v1559 = vrot.slane %v1557, 5
      %v1560 = vsel %vm862, %v1555, %v1559
      %v1561 = vshrl.u32 %v1321, 16
      %v1563 = vrot.slane %v1561, 4
      %v1564 = vor.u32 %v1563, %v1559
      %v1565 = vrot.slane %v1564, 4
      %v1567 = vshll.u32 %v1322, 16
      %v1569 = vrot.slane %v1567, 5
      %v1570 = vsel %vm862, %v1565, %v1569
      %v1571 = vshrl.u32 %v1322, 16
      %v1573 = vrot.slane %v1571, 4
      %v1574 = vor.u32 %v1573, %v1569
      %v1575 = vrot.slane %v1574, 4
      %v1577 = vshll.u32 %v1323, 16
      %v1579 = vrot.slane %v1577, 5
      %v1580 = vsel %vm862, %v1575, %v1579
      %v1581 = vshrl.u32 %v1323, 16
      %v1583 = vrot.slane %v1581, 4
      %v1584 = vor.u32 %v1583, %v1579
      %v1585 = vrot.slane %v1584, 4
      %v1587 = vshll.u32 %v1324, 16
      %v1589 = vrot.slane %v1587, 5
      %v1590 = vsel %vm862, %v1585, %v1589
      %v1591 = vshrl.u32 %v1324, 16
      %v1593 = vrot.slane %v1591, 4
      %v1594 = vor.u32 %v1593, %v1589
      %v1595 = vrot.slane %v1594, 4
      %v1597 = vshll.u32 %v1325, 16
      %v1599 = vrot.slane %v1597, 5
      %v1600 = vsel %vm862, %v1595, %v1599
      %v1601 = vshrl.u32 %v1325, 16
      %v1603 = vrot.slane %v1601, 4
      %v1604 = vor.u32 %v1603, %v1599
      %v1605 = vrot.slane %v1604, 4
      %v1607 = vshll.u32 %v1326, 16
      %v1609 = vrot.slane %v1607, 5
      %v1610 = vsel %vm862, %v1605, %v1609
      %v1611 = vshrl.u32 %v1326, 16
      %v1613 = vrot.slane %v1611, 4
      %v1614 = vor.u32 %v1613, %v1609
      %v1615 = vrot.slane %v1614, 4
      %v1617 = vshll.u32 %v1327, 16
      %v1619 = vrot.slane %v1617, 5
      %v1620 = vsel %vm862, %v1615, %v1619
      %v1621 = vshrl.u32 %v1327, 16
      %v1623 = vrot.slane %v1621, 4
      %v1624 = vor.u32 %v1623, %v1619
      %v1625 = vrot.slane %v1624, 4
      %v1627 = vshll.u32 %v1328, 16
      %v1629 = vrot.slane %v1627, 5
      %v1630 = vsel %vm862, %v1625, %v1629
      %v1631 = vshrl.u32 %v1328, 16
      %v1633 = vrot.slane %v1631, 4
      %v1634 = vor.u32 %v1633, %v1629
      %v1635 = vrot.slane %v1634, 4
      %v1637 = vshll.u32 %v1329, 16
      %v1639 = vrot.slane %v1637, 5
      %v1640 = vsel %vm862, %v1635, %v1639
      %v1641 = vshrl.u32 %v1329, 16
      %v1643 = vrot.slane %v1641, 4
      %v1644 = vor.u32 %v1643, %v1639
      %v1645 = vrot.slane %v1644, 4
      %v1647 = vshll.u32 %v1330, 16
      %v1649 = vrot.slane %v1647, 5
      %v1650 = vsel %vm862, %v1645, %v1649
      %v1651 = vshrl.u32 %v1330, 16
      %v1653 = vrot.slane %v1651, 4
      %v1654 = vor.u32 %v1653, %v1649
      %v1655 = vrot.slane %v1654, 4
      %v1657 = vshll.u32 %v1331, 16
      %v1659 = vrot.slane %v1657, 5
      %v1660 = vsel %vm862, %v1655, %v1659
      %v1661 = vshrl.u32 %v1331, 16
      %v1663 = vrot.slane %v1661, 4
      %v1664 = vor.u32 %v1663, %v1659
      %v1665 = vrot.slane %v1664, 4
      %v1667 = vshll.u32 %v1332, 16
      %v1669 = vrot.slane %v1667, 5
      %v1670 = vsel %vm862, %v1665, %v1669
      %v1671 = vshrl.u32 %v1332, 16
      %v1673 = vrot.slane %v1671, 4
      %v1674 = vor.u32 %v1673, %v1669
      %v1675 = vrot.slane %v1674, 4
      %v1677 = vshll.u32 %v1333, 16
      %v1679 = vrot.slane %v1677, 5
      %v1680 = vsel %vm862, %v1675, %v1679
      %v1681 = vshrl.u32 %v1333, 16
      %v1683 = vrot.slane %v1681, 4
      %v1684 = vor.u32 %v1683, %v1679
      %v1685 = vrot.slane %v1684, 4
      %v1687 = vshll.u32 %v1334, 16
      %v1689 = vrot.slane %v1687, 5
      %v1690 = vsel %vm862, %v1685, %v1689
      %v1691 = vshrl.u32 %v1334, 16
      %v1693 = vrot.slane %v1691, 4
      %v1694 = vor.u32 %v1693, %v1689
      %v1695 = vrot.slane %v1694, 4
      %v1697 = vshll.u32 %v1336, 16
      %v1699 = vrot.slane %v1697, 5
      %v1700 = vsel %vm862, %v1695, %v1699
      %v1701 = vshrl.u32 %v1336, 16
      %v1703 = vrot.slane %v1701, 4
      %v1704 = vor.u32 %v1703, %v1699
      %v1705 = vrot.slane %v1704, 4
      %v1743 = vmax.bf16 %v1299, %v1350
      %v1744 = vmax.bf16 %v1300, %v1360
      %v1745 = vmax.bf16 %v1301, %v1370
      %v1746 = vmax.bf16 %v1302, %v1380
      %v1747 = vmax.bf16 %v1303, %v1390
      %v1748 = vmax.bf16 %v1304, %v1400
      %v1749 = vmax.bf16 %v1305, %v1410
      %v1750 = vmax.bf16 %v1306, %v1420
      %v1751 = vmax.bf16 %v1307, %v1430
      %v1752 = vmax.bf16 %v1308, %v1440
      %v1753 = vmax.bf16 %v1309, %v1450
      %v1754 = vmax.bf16 %v1310, %v1460
      %v1755 = vmax.bf16 %v1311, %v1470
      %v1756 = vmax.bf16 %v1312, %v1480
      %v1757 = vmax.bf16 %v1313, %v1490
      %v1758 = vmax.bf16 %v1314, %v1500
      %v1759 = vmax.bf16 %v1315, %v1510
      %v1760 = vmax.bf16 %v1316, %v1520
      %v1761 = vmax.bf16 %v1317, %v1530
      %v1762 = vmax.bf16 %v1318, %v1540
      %v1763 = vmax.bf16 %v1319, %v1550
      %v1764 = vmax.bf16 %v1320, %v1560
      %v1765 = vmax.bf16 %v1321, %v1570
      %v1766 = vmax.bf16 %v1322, %v1580
      %v1767 = vmax.bf16 %v1323, %v1590
      %v1768 = vmax.bf16 %v1324, %v1600
      %v1769 = vmax.bf16 %v1325, %v1610
      %v1770 = vmax.bf16 %v1326, %v1620
      %v1771 = vmax.bf16 %v1327, %v1630
      %v1772 = vmax.bf16 %v1328, %v1640
      %v1773 = vmax.bf16 %v1329, %v1650
      %v1774 = vmax.bf16 %v1330, %v1660
      %v1775 = vmax.bf16 %v1331, %v1670
      %v1776 = vmax.bf16 %v1332, %v1680
      %v1777 = vmax.bf16 %v1333, %v1690
      %v1778 = vmax.bf16 %v1334, %v1700
      %v1779 = vmax.bf16 %v1335, %v1705
      %vm1817 = vcmask 1042432
      %vm1818 = vcmask 1046532
      %vm1819 = vmor %vm1817, %vm1818
      %v1820 = vrot.slane %v1743, 5
      %v1821 = vrot.slane %v1820, 4
      %v1822 = vrot.slane %v1744, 5
      %v1823 = vsel %vm1819, %v1821, %v1822
      %v1824 = vrot.slane %v1822, 4
      %v1825 = vrot.slane %v1745, 5
      %v1826 = vsel %vm1819, %v1824, %v1825
      %v1827 = vrot.slane %v1825, 4
      %v1828 = vrot.slane %v1746, 5
      %v1829 = vsel %vm1819, %v1827, %v1828
      %v1830 = vrot.slane %v1828, 4
      %v1831 = vrot.slane %v1747, 5
      %v1832 = vsel %vm1819, %v1830, %v1831
      %v1833 = vrot.slane %v1831, 4
      %v1834 = vrot.slane %v1748, 5
      %v1835 = vsel %vm1819, %v1833, %v1834
      %v1836 = vrot.slane %v1834, 4
      %v1837 = vrot.slane %v1749, 5
      %v1838 = vsel %vm1819, %v1836, %v1837
      %v1839 = vrot.slane %v1837, 4
      %v1840 = vrot.slane %v1750, 5
      %v1841 = vsel %vm1819, %v1839, %v1840
      %v1842 = vrot.slane %v1840, 4
      %v1843 = vrot.slane %v1751, 5
      %v1844 = vsel %vm1819, %v1842, %v1843
      %v1845 = vrot.slane %v1843, 4
      %v1846 = vrot.slane %v1752, 5
      %v1847 = vsel %vm1819, %v1845, %v1846
      %v1848 = vrot.slane %v1846, 4
      %v1849 = vrot.slane %v1753, 5
      %v1850 = vsel %vm1819, %v1848, %v1849
      %v1851 = vrot.slane %v1849, 4
      %v1852 = vrot.slane %v1754, 5
      %v1853 = vsel %vm1819, %v1851, %v1852
      %v1854 = vrot.slane %v1852, 4
      %v1855 = vrot.slane %v1755, 5
      %v1856 = vsel %vm1819, %v1854, %v1855
      %v1857 = vrot.slane %v1855, 4
      %v1858 = vrot.slane %v1756, 5
      %v1859 = vsel %vm1819, %v1857, %v1858
      %v1860 = vrot.slane %v1858, 4
      %v1861 = vrot.slane %v1757, 5
      %v1862 = vsel %vm1819, %v1860, %v1861
      %v1863 = vrot.slane %v1861, 4
      %v1864 = vrot.slane %v1758, 5
      %v1865 = vsel %vm1819, %v1863, %v1864
      %v1866 = vrot.slane %v1864, 4
      %v1867 = vrot.slane %v1759, 5
      %v1868 = vsel %vm1819, %v1866, %v1867
      %v1869 = vrot.slane %v1867, 4
      %v1870 = vrot.slane %v1760, 5
      %v1871 = vsel %vm1819, %v1869, %v1870
      %v1872 = vrot.slane %v1870, 4
      %v1873 = vrot.slane %v1761, 5
      %v1874 = vsel %vm1819, %v1872, %v1873
      %v1875 = vrot.slane %v1873, 4
      %v1876 = vrot.slane %v1762, 5
      %v1877 = vsel %vm1819, %v1875, %v1876
      %v1878 = vrot.slane %v1876, 4
      %v1879 = vrot.slane %v1763, 5
      %v1880 = vsel %vm1819, %v1878, %v1879
      %v1881 = vrot.slane %v1879, 4
      %v1882 = vrot.slane %v1764, 5
      %v1883 = vsel %vm1819, %v1881, %v1882
      %v1884 = vrot.slane %v1882, 4
      %v1885 = vrot.slane %v1765, 5
      %v1886 = vsel %vm1819, %v1884, %v1885
      %v1887 = vrot.slane %v1885, 4
      %v1888 = vrot.slane %v1766, 5
      %v1889 = vsel %vm1819, %v1887, %v1888
      %v1890 = vrot.slane %v1888, 4
      %v1891 = vrot.slane %v1767, 5
      %v1892 = vsel %vm1819, %v1890, %v1891
      %v1893 = vrot.slane %v1891, 4
      %v1894 = vrot.slane %v1768, 5
      %v1895 = vsel %vm1819, %v1893, %v1894
      %v1896 = vrot.slane %v1894, 4
      %v1897 = vrot.slane %v1769, 5
      %v1898 = vsel %vm1819, %v1896, %v1897
      %v1899 = vrot.slane %v1897, 4
      %v1900 = vrot.slane %v1770, 5
      %v1901 = vsel %vm1819, %v1899, %v1900
      %v1902 = vrot.slane %v1900, 4
      %v1903 = vrot.slane %v1771, 5
      %v1904 = vsel %vm1819, %v1902, %v1903
      %v1905 = vrot.slane %v1903, 4
      %v1906 = vrot.slane %v1772, 5
      %v1907 = vsel %vm1819, %v1905, %v1906
      %v1908 = vrot.slane %v1906, 4
      %v1909 = vrot.slane %v1773, 5
      %v1910 = vsel %vm1819, %v1908, %v1909
      %v1911 = vrot.slane %v1909, 4
      %v1912 = vrot.slane %v1774, 5
      %v1913 = vsel %vm1819, %v1911, %v1912
      %v1914 = vrot.slane %v1912, 4
      %v1915 = vrot.slane %v1775, 5
      %v1916 = vsel %vm1819, %v1914, %v1915
      %v1917 = vrot.slane %v1915, 4
      %v1918 = vrot.slane %v1776, 5
      %v1919 = vsel %vm1819, %v1917, %v1918
      %v1920 = vrot.slane %v1918, 4
      %v1921 = vrot.slane %v1777, 5
      %v1922 = vsel %vm1819, %v1920, %v1921
      %v1923 = vrot.slane %v1921, 4
      %v1924 = vrot.slane %v1778, 5
      %v1925 = vsel %vm1819, %v1923, %v1924
      %v1926 = vrot.slane %v1924, 4
      %v1927 = vrot.slane %v1779, 5
      %v1928 = vsel %vm1819, %v1926, %v1927
      %v1965 = vmax.bf16 %v1263, %v1823
      %v1966 = vmax.bf16 %v1264, %v1826
      %v1967 = vmax.bf16 %v1265, %v1829
      %v1968 = vmax.bf16 %v1266, %v1832
      %v1969 = vmax.bf16 %v1267, %v1835
      %v1970 = vmax.bf16 %v1268, %v1838
      %v1971 = vmax.bf16 %v1269, %v1841
      %v1972 = vmax.bf16 %v1270, %v1844
      %v1973 = vmax.bf16 %v1271, %v1847
      %v1974 = vmax.bf16 %v1272, %v1850
      %v1975 = vmax.bf16 %v1273, %v1853
      %v1976 = vmax.bf16 %v1274, %v1856
      %v1977 = vmax.bf16 %v1275, %v1859
      %v1978 = vmax.bf16 %v1276, %v1862
      %v1979 = vmax.bf16 %v1277, %v1865
      %v1980 = vmax.bf16 %v1278, %v1868
      %v1981 = vmax.bf16 %v1279, %v1871
      %v1982 = vmax.bf16 %v1280, %v1874
      %v1983 = vmax.bf16 %v1281, %v1877
      %v1984 = vmax.bf16 %v1282, %v1880
      %v1985 = vmax.bf16 %v1283, %v1883
      %v1986 = vmax.bf16 %v1284, %v1886
      %v1987 = vmax.bf16 %v1285, %v1889
      %v1988 = vmax.bf16 %v1286, %v1892
      %v1989 = vmax.bf16 %v1287, %v1895
      %v1990 = vmax.bf16 %v1288, %v1898
      %v1991 = vmax.bf16 %v1289, %v1901
      %v1992 = vmax.bf16 %v1290, %v1904
      %v1993 = vmax.bf16 %v1291, %v1907
      %v1994 = vmax.bf16 %v1292, %v1910
      %v1995 = vmax.bf16 %v1293, %v1913
      %v1996 = vmax.bf16 %v1294, %v1916
      %v1997 = vmax.bf16 %v1295, %v1919
      %v1998 = vmax.bf16 %v1296, %v1922
      %v1999 = vmax.bf16 %v1297, %v1925
      %v2000 = vmax.bf16 %v1298, %v1928
      %v2001 = vld [vmem:[%s3] sm:$0xff]
      %v2002 = vld [vmem:[%s3 + $0x8] sm:$0xf]
      %v2003 = vld [vmem:[%s3 + $0xc] sm:$0xff]
      %v2004 = vld [vmem:[%s3 + $0x14] sm:$0xf]
      %v2005 = vld [vmem:[%s3 + $0x18] sm:$0xff]
      %v2006 = vld [vmem:[%s3 + $0x20] sm:$0xf]
      %v2007 = vld [vmem:[%s3 + $0x24] sm:$0xff]
      %v2008 = vld [vmem:[%s3 + $0x2c] sm:$0xf]
      %v2009 = vld [vmem:[%s3 + $0x30] sm:$0xff]
      %v2010 = vld [vmem:[%s3 + $0x38] sm:$0xf]
      %v2011 = vld [vmem:[%s3 + $0x3c] sm:$0xff]
      %v2012 = vld [vmem:[%s3 + $0x44] sm:$0xf]
      %v2013 = vld [vmem:[%s3 + $0x48] sm:$0xff]
      %v2014 = vld [vmem:[%s3 + $0x50] sm:$0xf]
      %v2015 = vld [vmem:[%s3 + $0x54] sm:$0xff]
      %v2016 = vld [vmem:[%s3 + $0x5c] sm:$0xf]
      %v2017 = vld [vmem:[%s3 + $0x60] sm:$0xff]
      %v2018 = vld [vmem:[%s3 + $0x68] sm:$0xf]
      %v2019 = vld [vmem:[%s3 + $0x6c] sm:$0xff]
      %v2020 = vld [vmem:[%s3 + $0x74] sm:$0xf]
      %v2021 = vld [vmem:[%s3 + $0x78] sm:$0xff]
      %v2022 = vld [vmem:[%s3 + $0x80] sm:$0xf]
      %v2023 = vld [vmem:[%s3 + $0x84] sm:$0xff]
      %v2024 = vld [vmem:[%s3 + $0x8c] sm:$0xf]
      %v2025 = vld [vmem:[%s3 + $0x90] sm:$0xff]
      %v2026 = vld [vmem:[%s3 + $0x98] sm:$0xf]
      %v2053 = vunpack.c.l.b16 %v2001
      %v2054 = vunpack.c.h.b16 %v2001
      %v2055 = vunpack.c.l.b16 %v2002
      %v2056 = vunpack.c.l.b16 %v2003
      %v2057 = vunpack.c.h.b16 %v2003
      %v2058 = vunpack.c.l.b16 %v2004
      %v2059 = vunpack.c.l.b16 %v2005
      %v2060 = vunpack.c.h.b16 %v2005
      %v2061 = vunpack.c.l.b16 %v2006
      %v2062 = vunpack.c.l.b16 %v2007
      %v2063 = vunpack.c.h.b16 %v2007
      %v2064 = vunpack.c.l.b16 %v2008
      %v2065 = vunpack.c.l.b16 %v2009
      %v2066 = vunpack.c.h.b16 %v2009
      %v2067 = vunpack.c.l.b16 %v2010
      %v2068 = vunpack.c.l.b16 %v2011
      %v2069 = vunpack.c.h.b16 %v2011
      %v2070 = vunpack.c.l.b16 %v2012
      %v2071 = vunpack.c.l.b16 %v2013
      %v2072 = vunpack.c.h.b16 %v2013
      %v2073 = vunpack.c.l.b16 %v2014
      %v2074 = vunpack.c.l.b16 %v2015
      %v2075 = vunpack.c.h.b16 %v2015
      %v2076 = vunpack.c.l.b16 %v2016
      %v2077 = vunpack.c.l.b16 %v2017
      %v2078 = vunpack.c.h.b16 %v2017
      %v2079 = vunpack.c.l.b16 %v2018
      %v2080 = vunpack.c.l.b16 %v2019
      %v2081 = vunpack.c.h.b16 %v2019
      %v2082 = vunpack.c.l.b16 %v2020
      %v2083 = vunpack.c.l.b16 %v2021
      %v2084 = vunpack.c.h.b16 %v2021
      %v2085 = vunpack.c.l.b16 %v2022
      %v2086 = vunpack.c.l.b16 %v2023
      %v2087 = vunpack.c.h.b16 %v2023
      %v2088 = vunpack.c.l.b16 %v2024
      %v2089 = vunpack.c.l.b16 %v2025
      %v2090 = vunpack.c.h.b16 %v2025
      %v2091 = vunpack.c.l.b16 %v2026
      %v2092 = vpack.c.b16 %v2056, %v2053
      %v2093 = vpack.c.b16 %v2057, %v2054
      %v2094 = vpack.c.b16 %v2058, %v2055
      %v2095 = vpack.c.b16 %v2062, %v2059
      %v2096 = vpack.c.b16 %v2063, %v2060
      %v2097 = vpack.c.b16 %v2064, %v2061
      %v2098 = vpack.c.b16 %v2068, %v2065
      %v2099 = vpack.c.b16 %v2069, %v2066
      %v2100 = vpack.c.b16 %v2070, %v2067
      %v2101 = vpack.c.b16 %v2074, %v2071
      %v2102 = vpack.c.b16 %v2075, %v2072
      %v2103 = vpack.c.b16 %v2076, %v2073
      %v2104 = vpack.c.b16 %v2080, %v2077
      %v2105 = vpack.c.b16 %v2081, %v2078
      %v2106 = vpack.c.b16 %v2082, %v2079
      %v2107 = vpack.c.b16 %v2086, %v2083
      %v2108 = vpack.c.b16 %v2087, %v2084
      %v2109 = vpack.c.b16 %v2088, %v2085
      %v2110 = vpack.c.b16 %v2089, %v2089
      %v2111 = vpack.c.b16 %v2090, %v2090
      %v2112 = vpack.c.b16 %v2091, %v2091
      %v2163 = vunpack.c.l.b16 %v1965
      %v2164 = vunpack.c.l.b16 %v1966
      %v2165 = vunpack.c.l.b16 %v1967
      %v2166 = vunpack.c.l.b16 %v1968
      %v2167 = vunpack.c.l.b16 %v1969
      %v2168 = vunpack.c.l.b16 %v1970
      %v2169 = vunpack.c.l.b16 %v1971
      %v2170 = vunpack.c.l.b16 %v1972
      %v2171 = vunpack.c.l.b16 %v1973
      %v2172 = vunpack.c.l.b16 %v1974
      %v2173 = vunpack.c.l.b16 %v1975
      %v2174 = vunpack.c.l.b16 %v1976
      %v2175 = vunpack.c.l.b16 %v1977
      %v2176 = vunpack.c.l.b16 %v1978
      %v2177 = vunpack.c.l.b16 %v1979
      %v2178 = vunpack.c.l.b16 %v1980
      %v2179 = vunpack.c.l.b16 %v1981
      %v2180 = vunpack.c.l.b16 %v1982
      %v2181 = vunpack.c.l.b16 %v1983
      %v2182 = vunpack.c.l.b16 %v1984
      %v2183 = vunpack.c.l.b16 %v1985
      %v2184 = vunpack.c.l.b16 %v1986
      %v2185 = vunpack.c.l.b16 %v1987
      %v2186 = vunpack.c.l.b16 %v1988
      %v2187 = vunpack.c.l.b16 %v1989
      %v2188 = vunpack.c.l.b16 %v1990
      %v2189 = vunpack.c.l.b16 %v1991
      %v2190 = vunpack.c.l.b16 %v1992
      %v2191 = vunpack.c.l.b16 %v1993
      %v2192 = vunpack.c.l.b16 %v1994
      %v2193 = vunpack.c.l.b16 %v1995
      %v2194 = vunpack.c.l.b16 %v1996
      %v2195 = vunpack.c.l.b16 %v1997
      %v2196 = vunpack.c.l.b16 %v1998
      %v2197 = vunpack.c.l.b16 %v1999
      %v2198 = vunpack.c.l.b16 %v2000
      %v2199 = vpack.c.b16 %v2164, %v2163
      %v2200 = vpack.c.b16 %v2166, %v2165
      %v2201 = vpack.c.b16 %v2168, %v2167
      %v2202 = vpack.c.b16 %v2170, %v2169
      %v2203 = vpack.c.b16 %v2172, %v2171
      %v2204 = vpack.c.b16 %v2174, %v2173
      %v2205 = vpack.c.b16 %v2176, %v2175
      %v2206 = vpack.c.b16 %v2178, %v2177
      %v2207 = vpack.c.b16 %v2180, %v2179
      %v2208 = vpack.c.b16 %v2182, %v2181
      %v2209 = vpack.c.b16 %v2184, %v2183
      %v2210 = vpack.c.b16 %v2186, %v2185
      %v2211 = vpack.c.b16 %v2188, %v2187
      %v2212 = vpack.c.b16 %v2190, %v2189
      %v2213 = vpack.c.b16 %v2192, %v2191
      %v2214 = vpack.c.b16 %v2194, %v2193
      %v2215 = vpack.c.b16 %v2196, %v2195
      %v2216 = vpack.c.b16 %v2198, %v2197
      %vm2235 = vcmask 261120
      %v2237 = vsel %vm2235, %v2094, 0
      %v2240 = vsel %vm2235, %v2097, 0
      %v2243 = vsel %vm2235, %v2100, 0
      %v2246 = vsel %vm2235, %v2103, 0
      %v2249 = vsel %vm2235, %v2106, 0
      %v2252 = vsel %vm2235, %v2109, 0
      %v2255 = vsel %vm2235, %v2112, 0
      %2257 = vmatprep.subr.bf16.mxu0 0
      %2258 = vmatpush1.bf16.msra.mxu0 %v2199
      %2259 = vmatprep.subr.bf16.mxu0 0
      %2260 = vmatpush1.bf16.msra.mxu0 %v2200
      %2261 = vmatprep.subr.bf16.mxu0 0
      %2262 = vmatpush1.bf16.msra.mxu0 %v2201
      %2263 = vmatprep.subr.bf16.mxu0 0
      %2264 = vmatpush1.bf16.msra.mxu0 %v2202
      %2265 = vmatprep.subr.bf16.mxu0 0
      %2266 = vmatpush1.bf16.msra.mxu0 %v2203
      %2267 = vmatprep.subr.bf16.mxu0 0
      %2268 = vmatpush1.bf16.msra.mxu0 %v2204
      %2269 = vmatprep.subr.bf16.mxu0 0
      %2270 = vmatpush1.bf16.msra.mxu0 %v2205
      %2271 = vmatprep.subr.bf16.mxu0 0
      %2272 = vmatpush1.bf16.msra.mxu0 %v2206
      %2273 = vmatprep.subr.bf16.mxu0 0
      %2274 = vmatpush1.bf16.msra.mxu0 %v2207
      %2275 = vmatprep.subr.bf16.mxu0 0
      %2276 = vmatpush1.bf16.msra.mxu0 %v2208
      %2277 = vmatprep.subr.bf16.mxu0 0
      %2278 = vmatpush1.bf16.msra.mxu0 %v2209
      %2279 = vmatprep.subr.bf16.mxu0 0
      %2280 = vmatpush1.bf16.msra.mxu0 %v2210
      %2281 = vmatprep.subr.bf16.mxu0 0
      %2282 = vmatpush1.bf16.msra.mxu0 %v2211
      %2283 = vmatprep.subr.bf16.mxu0 0
      %2284 = vmatpush1.bf16.msra.mxu0 %v2212
      %2285 = vmatprep.subr.bf16.mxu0 0
      %2286 = vmatpush1.bf16.msra.mxu0 %v2213
      %2287 = vmatprep.subr.bf16.mxu0 0
      %2288 = vmatpush1.bf16.msra.mxu0 %v2214
      %2289 = vmatprep.mubr.bf16.mxu0 %v2093
      %2290 = vmatmul.mubr.bf16.gmra.mrb[0].mxu0 %v2092
      %v2291 = vpop.f32.mrb[0].mxu0
      %v2292 = vadd.f32 0.0, %v2291
      %v2293 = vpop.f32.mrb[0].mxu0
      %v2294 = vpop.f32.mrb[0].mxu0
      %v2295 = vadd.f32 0.0, %v2294
      %v2296 = vpop.f32.mrb[0].mxu0
      %2297 = vmatprep.mubr.bf16.mxu0 %v2096
      %2298 = vmatmul.mubr.bf16.gmra.mrb[0].mxu0 %v2095
      %v2299 = vpop.f32.mrb[0].mxu0
      %v2300 = vadd.f32 0.0, %v2299
      %v2301 = vpop.f32.mrb[0].mxu0
      %v2302 = vpop.f32.mrb[0].mxu0
      %v2303 = vadd.f32 0.0, %v2302
      %v2304 = vpop.f32.mrb[0].mxu0
      %2305 = vmatprep.mubr.bf16.mxu0 %v2099
      %2306 = vmatmul.mubr.bf16.gmra.mrb[0].mxu0 %v2098
      %v2307 = vpop.f32.mrb[0].mxu0
      %v2308 = vadd.f32 0.0, %v2307
      %v2309 = vpop.f32.mrb[0].mxu0
      %v2310 = vpop.f32.mrb[0].mxu0
      %v2311 = vadd.f32 0.0, %v2310
      %v2312 = vpop.f32.mrb[0].mxu0
      %2313 = vmatprep.mubr.bf16.mxu0 %v2102
      %2314 = vmatmul.mubr.bf16.gmra.mrb[0].mxu0 %v2101
      %v2315 = vpop.f32.mrb[0].mxu0
      %v2316 = vadd.f32 0.0, %v2315
      %v2317 = vpop.f32.mrb[0].mxu0
      %v2318 = vpop.f32.mrb[0].mxu0
      %v2319 = vadd.f32 0.0, %v2318
      %v2320 = vpop.f32.mrb[0].mxu0
      %2321 = vmatprep.mubr.bf16.mxu0 %v2105
      %2322 = vmatmul.mubr.bf16.gmra.mrb[0].mxu0 %v2104
      %v2323 = vpop.f32.mrb[0].mxu0
      %v2324 = vadd.f32 0.0, %v2323
      %v2325 = vpop.f32.mrb[0].mxu0
      %v2326 = vpop.f32.mrb[0].mxu0
      %v2327 = vadd.f32 0.0, %v2326
      %v2328 = vpop.f32.mrb[0].mxu0
      %2329 = vmatprep.mubr.bf16.mxu0 %v2108
      %2330 = vmatmul.mubr.bf16.gmra.mrb[0].mxu0 %v2107
      %v2331 = vpop.f32.mrb[0].mxu0
      %v2332 = vadd.f32 0.0, %v2331
      %v2333 = vpop.f32.mrb[0].mxu0
      %v2334 = vpop.f32.mrb[0].mxu0
      %v2335 = vadd.f32 0.0, %v2334
      %v2336 = vpop.f32.mrb[0].mxu0
      %2337 = vmatprep.mubr.bf16.mxu0 %v2111
      %2338 = vmatmul.mubr.bf16.gmra.mrb[0].mxu0 %v2110
      %v2339 = vpop.f32.mrb[0].mxu0
      %v2340 = vadd.f32 0.0, %v2339
      %v2341 = vpop.f32.mrb[0].mxu0
      %v2342 = vpop.f32.mrb[0].mxu0
      %v2343 = vpop.f32.mrb[0].mxu0
      %2344 = vdwg.mxu0
      %2345 = vmatprep.subr.bf16.mxu0 0
      %2346 = vmatpush1.bf16.msra.mxu0 %v2215
      %2347 = vmatprep.subr.bf16.mxu0 0
      %2348 = vmatpush1.bf16.msra.mxu0 %v2216
      %2349 = vmatprep.subr.bf16.mxu0 0
      %2350 = vmatpush1.bf16.msra.mxu0 0
      %2351 = vmatprep.subr.bf16.mxu0 0
      %2352 = vmatpush1.bf16.msra.mxu0 0
      %2353 = vmatprep.subr.bf16.mxu0 0
      %2354 = vmatpush1.bf16.msra.mxu0 0
      %2355 = vmatprep.subr.bf16.mxu0 0
      %2356 = vmatpush1.bf16.msra.mxu0 0
      %2357 = vmatprep.subr.bf16.mxu0 0
      %2358 = vmatpush1.bf16.msra.mxu0 0
      %2359 = vmatprep.subr.bf16.mxu0 0
      %2360 = vmatpush1.bf16.msra.mxu0 0
      %2361 = vmatprep.subr.bf16.mxu0 0
      %2362 = vmatpush1.bf16.msra.mxu0 0
      %2363 = vmatprep.subr.bf16.mxu0 0
      %2364 = vmatpush1.bf16.msra.mxu0 0
      %2365 = vmatprep.subr.bf16.mxu0 0
      %2366 = vmatpush1.bf16.msra.mxu0 0
      %2367 = vmatprep.subr.bf16.mxu0 0
      %2368 = vmatpush1.bf16.msra.mxu0 0
      %2369 = vmatprep.subr.bf16.mxu0 0
      %2370 = vmatpush1.bf16.msra.mxu0 0
      %2371 = vmatprep.subr.bf16.mxu0 0
      %2372 = vmatpush1.bf16.msra.mxu0 0
      %2373 = vmatprep.subr.bf16.mxu0 0
      %2374 = vmatpush1.bf16.msra.mxu0 0
      %2375 = vmatprep.subr.bf16.mxu0 0
      %2376 = vmatpush1.bf16.msra.mxu0 0
      %2377 = vmatprep.mubr.bf16.mxu0 0
      %2378 = vmatmul.mubr.bf16.gmra.mrb[0].mxu0 %v2237
      %v2379 = vpop.f32.mrb[0].mxu0
      %v2380 = vadd.f32 %v2292, %v2379
      %v2381 = vpop.f32.mrb[0].mxu0
      %v2382 = vpop.f32.mrb[0].mxu0
      %v2383 = vadd.f32 %v2295, %v2382
      %v2384 = vpop.f32.mrb[0].mxu0
      %2385 = vmatprep.mubr.bf16.mxu0 0
      %2386 = vmatmul.mubr.bf16.gmra.mrb[0].mxu0 %v2240
      %v2387 = vpop.f32.mrb[0].mxu0
      %v2388 = vadd.f32 %v2300, %v2387
      %v2389 = vpop.f32.mrb[0].mxu0
      %v2390 = vpop.f32.mrb[0].mxu0
      %v2391 = vadd.f32 %v2303, %v2390
      %v2392 = vpop.f32.mrb[0].mxu0
      %2393 = vmatprep.mubr.bf16.mxu0 0
      %2394 = vmatmul.mubr.bf16.gmra.mrb[0].mxu0 %v2243
      %v2395 = vpop.f32.mrb[0].mxu0
      %v2396 = vadd.f32 %v2308, %v2395
      %v2397 = vpop.f32.mrb[0].mxu0
      %v2398 = vpop.f32.mrb[0].mxu0
      %v2399 = vadd.f32 %v2311, %v2398
      %v2400 = vpop.f32.mrb[0].mxu0
      %2401 = vmatprep.mubr.bf16.mxu0 0
      %2402 = vmatmul.mubr.bf16.gmra.mrb[0].mxu0 %v2246
      %v2403 = vpop.f32.mrb[0].mxu0
      %v2404 = vadd.f32 %v2316, %v2403
      %v2405 = vpop.f32.mrb[0].mxu0
      %v2406 = vpop.f32.mrb[0].mxu0
      %v2407 = vadd.f32 %v2319, %v2406
      %v2408 = vpop.f32.mrb[0].mxu0
      %2409 = vmatprep.mubr.bf16.mxu0 0
      %2410 = vmatmul.mubr.bf16.gmra.mrb[0].mxu0 %v2249
      %v2411 = vpop.f32.mrb[0].mxu0
      %v2412 = vadd.f32 %v2324, %v2411
      %v2413 = vpop.f32.mrb[0].mxu0
      %v2414 = vpop.f32.mrb[0].mxu0
      %v2415 = vadd.f32 %v2327, %v2414
      %v2416 = vpop.f32.mrb[0].mxu0
      %2417 = vmatprep.mubr.bf16.mxu0 0
      %2418 = vmatmul.mubr.bf16.gmra.mrb[0].mxu0 %v2252
      %v2419 = vpop.f32.mrb[0].mxu0
      %v2420 = vadd.f32 %v2332, %v2419
      %v2421 = vpop.f32.mrb[0].mxu0
      %v2422 = vpop.f32.mrb[0].mxu0
      %v2423 = vadd.f32 %v2335, %v2422
      %v2424 = vpop.f32.mrb[0].mxu0
      %2425 = vmatprep.mubr.bf16.mxu0 0
      %2426 = vmatmul.mubr.bf16.gmra.mrb[0].mxu0 %v2255
      %v2427 = vpop.f32.mrb[0].mxu0
      %v2428 = vadd.f32 %v2340, %v2427
      %v2429 = vpop.f32.mrb[0].mxu0
      %v2430 = vpop.f32.mrb[0].mxu0
      %v2431 = vpop.f32.mrb[0].mxu0
      %2432 = vdwg.mxu0
      %v2433 = vpack.c.bf16 %v2383, %v2380
      %v2434 = vpack.c.bf16 %v2391, %v2388
      %v2435 = vpack.c.bf16 %v2399, %v2396
      %v2436 = vpack.c.bf16 %v2407, %v2404
      %v2437 = vpack.c.bf16 %v2415, %v2412
      %v2438 = vpack.c.bf16 %v2423, %v2420
      %v2439 = vpack.c.bf16 %v2428, %v2428
      %v2447 = vunpack.c.l.b16 %v2433
      %v2448 = vunpack.c.h.b16 %v2433
      %v2449 = vunpack.c.l.b16 %v2434
      %v2450 = vunpack.c.h.b16 %v2434
      %v2451 = vunpack.c.l.b16 %v2435
      %v2452 = vunpack.c.h.b16 %v2435
      %v2453 = vunpack.c.l.b16 %v2436
      %v2454 = vunpack.c.h.b16 %v2436
      %v2455 = vunpack.c.l.b16 %v2437
      %v2456 = vunpack.c.h.b16 %v2437
      %v2457 = vunpack.c.l.b16 %v2438
      %v2458 = vunpack.c.h.b16 %v2438
      %v2459 = vunpack.c.l.b16 %v2439
      %v2460 = vpack.c.b16 %v2447, %v2447
      %v2461 = vpack.c.b16 %v2448, %v2448
      %v2462 = vpack.c.b16 %v2449, %v2449
      %v2463 = vpack.c.b16 %v2450, %v2450
      %v2464 = vpack.c.b16 %v2451, %v2451
      %v2465 = vpack.c.b16 %v2452, %v2452
      %v2466 = vpack.c.b16 %v2453, %v2453
      %v2467 = vpack.c.b16 %v2454, %v2454
      %v2468 = vpack.c.b16 %v2455, %v2455
      %v2469 = vpack.c.b16 %v2456, %v2456
      %v2470 = vpack.c.b16 %v2457, %v2457
      %v2471 = vpack.c.b16 %v2458, %v2458
      %v2472 = vpack.c.b16 %v2459, %v2459
      %2486 = vst [vmem:[%s197] sm:$0xf] %v2460
      %2487 = vst [vmem:[%s197 + $0x4] sm:$0xf] %v2461
      %2488 = vst [vmem:[%s197 + $0x8] sm:$0xf] %v2462
      %2489 = vst [vmem:[%s197 + $0xc] sm:$0xf] %v2463
      %2490 = vst [vmem:[%s197 + $0x10] sm:$0xf] %v2464
      %2491 = vst [vmem:[%s197 + $0x14] sm:$0xf] %v2465
      %2492 = vst [vmem:[%s197 + $0x18] sm:$0xf] %v2466
      %2493 = vst [vmem:[%s197 + $0x1c] sm:$0xf] %v2467
      %2494 = vst [vmem:[%s197 + $0x20] sm:$0xf] %v2468
      %2495 = vst [vmem:[%s197 + $0x24] sm:$0xf] %v2469
      %2496 = vst [vmem:[%s197 + $0x28] sm:$0xf] %v2470
      %2497 = vst [vmem:[%s197 + $0x2c] sm:$0xf] %v2471
      %2498 = vst [vmem:[%s197 + $0x30] sm:$0xf] %v2472
      %p2499 = scmp.lt.s32.totalorder %s15, 1
      %s2500 = scalar_select %p2499, %s15, 1
      %s2501 = smul.addr %s2500, 13
      %s2502 = smul.addr %s2501, 4
      %s2503 = scalar_lea.vmem %s4, %s2502
      // Predicated region
      $region37: #{_lambda_.3} parent=35 // pred_check
        %p2504 = pneg %p122
      $region38: #{_lambda_.3} parent=35 // pred_check_branch
        %2506 = sbr.rel (%p2504) target = $region40
      $region39: #{_lambda_.3} parent=35 // pred_region
        _
      $region40: #{_lambda_.3} parent=35 // pred_fallthru
        _
    $region36: #{_lambda_.3} parent=5 // pred_fallthru
      _
    %p2507 = scmp.le.s32.totalorder 2, %s10
    // Predicated region
    $region41: #{_lambda_.3} parent=5 // pred_check
      %p2508 = pneg %p2507
    $region42: #{_lambda_.3} parent=5 // pred_check_branch
      %2510 = sbr.rel (%p2508) target = $region44
    $region43: #{_lambda_.3} parent=5 // pred_region
      %s2511 = ssub.s32 %s10, 2
      // Predicated region
      $region45: #{_lambda_.3} parent=43 // pred_check
        %p2512 = pneg %p128
      $region46: #{_lambda_.3} parent=43 // pred_check_branch
        %2514 = sbr.rel (%p2512) target = $region48
      $region47: #{_lambda_.3} parent=43 // pred_region
        %p2515 = scmp.lt.s32.totalorder %s16, 1
        %s2516 = scalar_select %p2515, %s16, 1
        %s2517 = smul.addr %s2516, 13
        %s2518 = smul.addr %s2517, 4
        %s2519 = scalar_lea.vmem %s4, %s2518
      $region48: #{_lambda_.3} parent=43 // pred_fallthru
        _
    $region44: #{_lambda_.3} parent=5 // pred_fallthru
      _
  $region6: #{_lambda_.3} parent=0 // loop_footer
    %s14 = sadd.s32 1, %s10
  $region7: #{_lambda_.3} parent=0 // loop_footer_branch
    %9 = sbr.rel target = $region3
  $region8: #{_lambda_.3} parent=0 // loop_exit
    _

// kernel: _lambda_.4
$region0: #{_lambda_.4}
  #allocation0 [shape = 'u32[]', space=smem, size = 0x4, offset = 0x4, fixed_abs, tag = 'smem constant byte address 0x4 - core index']
  #allocation1 [shape = 'u32[144,128]{1,0:T(1,128)}', space=vmem, size = 0x12000, scoped, tag = 'internal scratch']
  #allocation2 [shape = 'bf16[80,1152]{1,0:T(16,128)(2,1)}', space=vmem, size = 0x2d000, scoped, tag = 'scratch operand']
  #allocation3 [shape = 'bf16[96,128]{1,0:T(16,128)(2,1)}', space=vmem, size = 0x6000, scoped, tag = 'scratch operand']
  %s0 = inlined_call_operand.vmem [shape: bf16[2,104,128], index: 0, kind: input, shape index: {}]
  %s1 = inlined_call_operand.vmem [shape: bf16[1152,128], index: 1, kind: input, shape index: {}]
  %s2 = inlined_call_operand.vmem [shape: f32[1,128], index: 2, kind: input, shape index: {}]
  %s3 = inlined_call_operand.vmem [shape: bf16[40,80], index: 3, kind: input, shape index: {}]
  %s4 = inlined_call_operand.vmem [shape: bf16[2,40,128], index: 4, kind: output, shape index: {}]
  %s5 = sld [smem:[#allocation0]]
  $region49: #{_lambda_.4} parent=0
    _
  %s7 = ssub.s32 1, %s5
  %s8 = scalar_select 0, %s7, %s5
  loop: start=0, step=1, limit=4
  $region2: #{_lambda_.4} parent=0 // loop_pre_header
    _
  $region3: #{_lambda_.4} parent=0 // loop_header
    %s10 = sphi 0, %s14
    %p11 = scmp.ge.s32.totalorder %s10, 4
    %s20 = sphi 0, %s22
    %s23 = sphi 0, %s20
    %s24 = sphi 0, %s23
    %s40 = sphi 0, %s24
    %s44 = sphi 0, %s44
    %s46 = sphi 0, %s44
    %s47 = sphi 0, %s46
    %s61 = sphi 0, %s47
    %s65 = sphi 0, %s65
    %s67 = sphi 0, %s65
    %s68 = sphi 0, %s67
    %s82 = sphi 0, %s68
    %s86 = sphi 0, %s86
    %s88 = sphi 0, %s86
    %s89 = sphi 0, %s88
    %s103 = sphi 0, %s89
    %s109 = sphi 0, %s111
    %s112 = sphi 0, %s109
    %s113 = sphi 0, %s112
    %s129 = sphi 0, %s113
  $region4: #{_lambda_.4} parent=0 // loop_header_branch
    %13 = sbr.rel (%p11) target = $region8
  $region5: #{_lambda_.4} parent=0 // loop_body
    %s15 = ssub.s32 %s10, 1
    %s16 = ssub.s32 %s10, 2
    %s17 = sadd.s32 %s10, 1
    %s18 = ssub.s32 %s10, %s17
    %p19 = scmp.eq.s32.totalorder %s18, 0
    %s21 = sadd.s32 %s20, 1
    %s22 = scalar_select %p19, %s20, %s21
    %p25 = pneg %p19
    %p26 = scmp.eq.s32.totalorder %s10, 1
    %p27 = por %p25, %p26
    %p28 = scmp.ne.s32.totalorder %s20, %s23
    %p29 = scmp.eq.s32.totalorder %s10, 0
    %p30 = por %p28, %p29
    %p31 = scmp.ne.s32.totalorder %s20, %s23
    %p32 = scmp.eq.s32.totalorder %s15, 1
    %p33 = por %p31, %p32
    %p34 = scmp.ne.s32.totalorder %s23, %s24
    %p35 = scmp.eq.s32.totalorder %s15, 0
    %p36 = por %p34, %p35
    %p37 = scmp.ne.s32.totalorder %s23, %s24
    %p38 = scmp.eq.s32.totalorder %s16, 1
    %p39 = por %p37, %p38
    %p41 = scmp.ne.s32.totalorder %s24, %s40
    %p42 = scmp.eq.s32.totalorder %s16, 0
    %p43 = por %p41, %p42
    %s45 = sadd.s32 %s44, 1
    %p48 = scmp.eq.s32.totalorder %s10, 1
    %p49 = scmp.ne.s32.totalorder %s44, %s46
    %p50 = scmp.eq.s32.totalorder %s10, 0
    %p51 = por %p49, %p50
    %p52 = scmp.ne.s32.totalorder %s44, %s46
    %p53 = scmp.eq.s32.totalorder %s15, 1
    %p54 = por %p52, %p53
    %p55 = scmp.ne.s32.totalorder %s46, %s47
    %p56 = scmp.eq.s32.totalorder %s15, 0
    %p57 = por %p55, %p56
    %p58 = scmp.ne.s32.totalorder %s46, %s47
    %p59 = scmp.eq.s32.totalorder %s16, 1
    %p60 = por %p58, %p59
    %p62 = scmp.ne.s32.totalorder %s47, %s61
    %p63 = scmp.eq.s32.totalorder %s16, 0
    %p64 = por %p62, %p63
    %s66 = sadd.s32 %s65, 1
    %p69 = scmp.eq.s32.totalorder %s10, 1
    %p70 = scmp.ne.s32.totalorder %s65, %s67
    %p71 = scmp.eq.s32.totalorder %s10, 0
    %p72 = por %p70, %p71
    %p73 = scmp.ne.s32.totalorder %s65, %s67
    %p74 = scmp.eq.s32.totalorder %s15, 1
    %p75 = por %p73, %p74
    %p76 = scmp.ne.s32.totalorder %s67, %s68
    %p77 = scmp.eq.s32.totalorder %s15, 0
    %p78 = por %p76, %p77
    %p79 = scmp.ne.s32.totalorder %s67, %s68
    %p80 = scmp.eq.s32.totalorder %s16, 1
    %p81 = por %p79, %p80
    %p83 = scmp.ne.s32.totalorder %s68, %s82
    %p84 = scmp.eq.s32.totalorder %s16, 0
    %p85 = por %p83, %p84
    %s87 = sadd.s32 %s86, 1
    %p90 = scmp.eq.s32.totalorder %s10, 1
    %p91 = scmp.ne.s32.totalorder %s86, %s88
    %p92 = scmp.eq.s32.totalorder %s10, 0
    %p93 = por %p91, %p92
    %p94 = scmp.ne.s32.totalorder %s86, %s88
    %p95 = scmp.eq.s32.totalorder %s15, 1
    %p96 = por %p94, %p95
    %p97 = scmp.ne.s32.totalorder %s88, %s89
    %p98 = scmp.eq.s32.totalorder %s15, 0
    %p99 = por %p97, %p98
    %p100 = scmp.ne.s32.totalorder %s88, %s89
    %p101 = scmp.eq.s32.totalorder %s16, 1
    %p102 = por %p100, %p101
    %p104 = scmp.ne.s32.totalorder %s89, %s103
    %p105 = scmp.eq.s32.totalorder %s16, 0
    %p106 = por %p104, %p105
    %s107 = ssub.s32 %s10, %s17
    %p108 = scmp.eq.s32.totalorder %s107, 0
    %s110 = sadd.s32 %s109, 1
    %s111 = scalar_select %p108, %s109, %s110
    %p114 = pneg %p108
    %p115 = scmp.eq.s32.totalorder %s10, 1
    %p116 = por %p114, %p115
    %p117 = scmp.ne.s32.totalorder %s109, %s112
    %p118 = scmp.eq.s32.totalorder %s10, 0
    %p119 = por %p117, %p118
    %p120 = scmp.ne.s32.totalorder %s109, %s112
    %p121 = scmp.eq.s32.totalorder %s15, 1
    %p122 = por %p120, %p121
    %p123 = scmp.ne.s32.totalorder %s112, %s113
    %p124 = scmp.eq.s32.totalorder %s15, 0
    %p125 = por %p123, %p124
    %p126 = scmp.ne.s32.totalorder %s112, %s113
    %p127 = scmp.eq.s32.totalorder %s16, 1
    %p128 = por %p126, %p127
    %p130 = scmp.ne.s32.totalorder %s113, %s129
    %p131 = scmp.eq.s32.totalorder %s16, 0
    %p132 = por %p130, %p131
    %p133 = scmp.le.s32.totalorder 1, %s10
    %p134 = scmp.lt.s32.totalorder %s10, 3
    %p135 = pnand %p133, %p134
    %p136 = pneg %p135
    // Predicated region
    $region9: #{_lambda_.4} parent=5 // pred_check
      _
    $region10: #{_lambda_.4} parent=5 // pred_check_branch
      %138 = sbr.rel (%p135) target = $region12
    $region11: #{_lambda_.4} parent=5 // pred_region
      %s139 = ssub.s32 %s10, 1
      // Predicated region
      $region13: #{_lambda_.4} parent=11 // pred_check
        %p140 = pneg %p57
      $region14: #{_lambda_.4} parent=11 // pred_check_branch
        %142 = sbr.rel (%p140) target = $region16
      $region15: #{_lambda_.4} parent=11 // pred_region
        _
      $region16: #{_lambda_.4} parent=11 // pred_fallthru
        _
      // Predicated region
      $region17: #{_lambda_.4} parent=11 // pred_check
        %p143 = pneg %p78
      $region18: #{_lambda_.4} parent=11 // pred_check_branch
        %145 = sbr.rel (%p143) target = $region20
      $region19: #{_lambda_.4} parent=11 // pred_region
        _
      $region20: #{_lambda_.4} parent=11 // pred_fallthru
        _
      // Predicated region
      $region21: #{_lambda_.4} parent=11 // pred_check
        %p146 = pneg %p99
      $region22: #{_lambda_.4} parent=11 // pred_check_branch
        %148 = sbr.rel (%p146) target = $region24
      $region23: #{_lambda_.4} parent=11 // pred_region
        _
      $region24: #{_lambda_.4} parent=11 // pred_fallthru
        _
    $region12: #{_lambda_.4} parent=5 // pred_fallthru
      _
    %p149 = scmp.lt.s32.totalorder %s10, 2
    // Predicated region
    $region25: #{_lambda_.4} parent=5 // pred_check
      %p150 = pneg %p149
    $region26: #{_lambda_.4} parent=5 // pred_check_branch
      %152 = sbr.rel (%p150) target = $region28
    $region27: #{_lambda_.4} parent=5 // pred_region
      // Predicated region
      $region29: #{_lambda_.4} parent=27 // pred_check
        %p153 = pneg %p30
      $region30: #{_lambda_.4} parent=27 // pred_check_branch
        %155 = sbr.rel (%p153) target = $region32
      $region31: #{_lambda_.4} parent=27 // pred_region
        %p156 = scmp.lt.s32.totalorder %s10, 1
        %s157 = scalar_select %p156, %s10, 1
        %s158 = smul.addr %s157, 13
        %s159 = smul.addr %s158, 4
        %s160 = scalar_lea.vmem %s0, %s159
      $region32: #{_lambda_.4} parent=27 // pred_fallthru
        _
    $region28: #{_lambda_.4} parent=5 // pred_fallthru
      _
    %p161 = scmp.le.s32.totalorder 1, %s10
    %p162 = scmp.lt.s32.totalorder %s10, 3
    %p163 = pnand %p161, %p162
    %p164 = pneg %p163
    // Predicated region
    $region33: #{_lambda_.4} parent=5 // pred_check
      _
    $region34: #{_lambda_.4} parent=5 // pred_check_branch
      %166 = sbr.rel (%p163) target = $region36
    $region35: #{_lambda_.4} parent=5 // pred_region
      %s167 = ssub.s32 %s10, 1
      %p168 = scmp.lt.s32.totalorder %s15, 1
      %s169 = scalar_select %p168, %s15, 1
      %s170 = smul.addr %s169, 13
      %s171 = smul.addr %s170, 4
      %s172 = scalar_lea.vmem %s0, %s171
      %p173 = pneg %p36
      %p174 = pneg %p33
      %p175 = pneg %p57
      %p176 = pneg %p54
      %p177 = pneg %p78
      %p178 = pneg %p75
      %p179 = pneg %p99
      %p180 = pneg %p96
      %p181 = pneg %p125
      %p182 = pneg %p122
      %p183 = scmp.lt.s32.totalorder %s15, 1
      %s184 = scalar_select %p183, %s15, 1
      %s185 = smul.addr %s184, 5
      %s186 = smul.addr %s185, 4
      %s187 = scalar_lea.vmem %s4, %s186
      %p188 = scmp.lt.s32.totalorder %s15, 1
      %s189 = scalar_select %p188, %s15, 1
      %s190 = smul.addr %s189, 13
      %s191 = smul.addr %s190, 4
      %s192 = scalar_lea.vmem %s0, %s191
      %p193 = scmp.lt.s32.totalorder %s15, 1
      %s194 = scalar_select %p193, %s15, 1
      %s195 = smul.addr %s194, 5
      %s196 = smul.addr %s195, 4
      %s197 = scalar_lea.vmem %s4, %s196
      %v199 = vld [vmem:[%s192] sm:$0xf]
      %v200 = vld [vmem:[%s192 + $0x4] sm:$0xf]
      %v201 = vld [vmem:[%s192 + $0x8] sm:$0xf]
      %v202 = vld [vmem:[%s192 + $0xc] sm:$0xf]
      %v203 = vld [vmem:[%s192 + $0x10] sm:$0xf]
      %v204 = vld [vmem:[%s192 + $0x14] sm:$0xf]
      %v205 = vld [vmem:[%s192 + $0x18] sm:$0xf]
      %v206 = vld [vmem:[%s192 + $0x1c] sm:$0xf]
      %v207 = vld [vmem:[%s192 + $0x20] sm:$0xf]
      %v208 = vld [vmem:[%s192 + $0x24] sm:$0xf]
      %v219 = vunpack.c.l.b16 %v199
      %v220 = vunpack.c.l.b16 %v200
      %v221 = vunpack.c.l.b16 %v201
      %v222 = vunpack.c.l.b16 %v202
      %v223 = vunpack.c.l.b16 %v203
      %v224 = vunpack.c.l.b16 %v204
      %v225 = vunpack.c.l.b16 %v205
      %v226 = vunpack.c.l.b16 %v206
      %v227 = vunpack.c.l.b16 %v207
      %v228 = vunpack.c.l.b16 %v208
      %v229 = vpack.c.b16 %v220, %v219
      %v230 = vpack.c.b16 %v222, %v221
      %v231 = vpack.c.b16 %v224, %v223
      %v232 = vpack.c.b16 %v226, %v225
      %v233 = vpack.c.b16 %v228, %v227
      %239 = vst [vmem:[#allocation2] sm:$0xff] %v229
      %240 = vst [vmem:[#allocation2 + $0x48] sm:$0xff] %v230
      %241 = vst [vmem:[#allocation2 + $0x90] sm:$0xff] %v231
      %242 = vst [vmem:[#allocation2 + $0xd8] sm:$0xff] %v232
      %243 = vst [vmem:[#allocation2 + $0x120] sm:$0xff] %v233
      %v244 = vld [vmem:[%s192] sm:$0xf]
      %v245 = vld [vmem:[%s192 + $0x4] sm:$0xf]
      %v246 = vld [vmem:[%s192 + $0x8] sm:$0xf]
      %v247 = vld [vmem:[%s192 + $0xc] sm:$0xf]
      %v248 = vld [vmem:[%s192 + $0x10] sm:$0xf]
      %v249 = vld [vmem:[%s192 + $0x14] sm:$0xf]
      %v250 = vld [vmem:[%s192 + $0x18] sm:$0xf]
      %v251 = vld [vmem:[%s192 + $0x1c] sm:$0xf]
      %v252 = vld [vmem:[%s192 + $0x20] sm:$0xf]
      %v253 = vld [vmem:[%s192 + $0x24] sm:$0xf]
      %v254 = vld [vmem:[%s192 + $0x28] sm:$0x1]
      %v266 = vunpack.c.l.b16 %v244
      %v267 = vunpack.c.l.b16 %v245
      %v268 = vunpack.c.l.b16 %v246
      %v269 = vunpack.c.l.b16 %v247
      %v270 = vunpack.c.l.b16 %v248
      %v271 = vunpack.c.l.b16 %v249
      %v272 = vunpack.c.l.b16 %v250
      %v273 = vunpack.c.l.b16 %v251
      %v274 = vunpack.c.l.b16 %v252
      %v275 = vunpack.c.l.b16 %v253
      %v276 = vunpack.c.l.b16 %v254
      %v277 = vpack.c.b16 %v267, %v266
      %v278 = vpack.c.b16 %v269, %v268
      %v279 = vpack.c.b16 %v271, %v270
      %v280 = vpack.c.b16 %v273, %v272
      %v281 = vpack.c.b16 %v275, %v274
      %v282 = vpack.c.b16 %v276, %v276
      %vm283 = vsmask.f32 7424
      %v285 = vshrl.u32 %v277, 16
      %v287 = vshll.u32 %v277, 16
      %v289 = vrot.slane %v287, 1
      %v290 = vor.u32 %v285, %v289
      %v292 = vshll.u32 %v278, 16
      %v294 = vrot.slane %v292, 1
      %v295 = vsel %vm283, %v290, %v294
      %v296 = vshrl.u32 %v278, 16
      %v298 = vor.u32 %v296, %v294
      %v300 = vshll.u32 %v279, 16
      %v302 = vrot.slane %v300, 1
      %v303 = vsel %vm283, %v298, %v302
      %v304 = vshrl.u32 %v279, 16
      %v306 = vor.u32 %v304, %v302
      %v308 = vshll.u32 %v280, 16
      %v310 = vrot.slane %v308, 1
      %v311 = vsel %vm283, %v306, %v310
      %v312 = vshrl.u32 %v280, 16
      %v314 = vor.u32 %v312, %v310
      %v316 = vshll.u32 %v281, 16
      %v318 = vrot.slane %v316, 1
      %v319 = vsel %vm283, %v314, %v318
      %v320 = vshrl.u32 %v281, 16
      %v322 = vor.u32 %v320, %v318
      %v324 = vshll.u32 %v282, 16
      %v326 = vrot.slane %v324, 1
      %v327 = vsel %vm283, %v322, %v326
      %333 = vst [vmem:[#allocation2 + $0x8] sm:$0xff] %v295
      %334 = vst [vmem:[#allocation2 + $0x50] sm:$0xff] %v303
      %335 = vst [vmem:[#allocation2 + $0x98] sm:$0xff] %v311
      %336 = vst [vmem:[#allocation2 + $0xe0] sm:$0xff] %v319
      %337 = vst [vmem:[#allocation2 + $0x128] sm:$0xff] %v327
      %v338 = vld [vmem:[%s192] sm:$0xe]
      %v339 = vld [vmem:[%s192 + $0x4] sm:$0xf]
      %v340 = vld [vmem:[%s192 + $0x8] sm:$0xf]
      %v341 = vld [vmem:[%s192 + $0xc] sm:$0xf]
      %v342 = vld [vmem:[%s192 + $0x10] sm:$0xf]
      %v343 = vld [vmem:[%s192 + $0x14] sm:$0xf]
      %v344 = vld [vmem:[%s192 + $0x18] sm:$0xf]
      %v345 = vld [vmem:[%s192 + $0x1c] sm:$0xf]
      %v346 = vld [vmem:[%s192 + $0x20] sm:$0xf]
      %v347 = vld [vmem:[%s192 + $0x24] sm:$0xf]
      %v348 = vld [vmem:[%s192 + $0x28] sm:$0x1]
      %v360 = vunpack.c.l.b16 %v338
      %v361 = vunpack.c.l.b16 %v339
      %v362 = vunpack.c.l.b16 %v340
      %v363 = vunpack.c.l.b16 %v341
      %v364 = vunpack.c.l.b16 %v342
      %v365 = vunpack.c.l.b16 %v343
      %v366 = vunpack.c.l.b16 %v344
      %v367 = vunpack.c.l.b16 %v345
      %v368 = vunpack.c.l.b16 %v346
      %v369 = vunpack.c.l.b16 %v347
      %v370 = vunpack.c.l.b16 %v348
      %v371 = vpack.c.b16 %v361, %v360
      %v372 = vpack.c.b16 %v363, %v362
      %v373 = vpack.c.b16 %v365, %v364
      %v374 = vpack.c.b16 %v367, %v366
      %v375 = vpack.c.b16 %v369, %v368
      %v376 = vpack.c.b16 %v370, %v370
      %vm377 = vcmask 1046528
      %v378 = vrot.slane %v371, 1
      %v379 = vrot.slane %v372, 1
      %v380 = vsel %vm377, %v378, %v379
      %v381 = vrot.slane %v373, 1
      %v382 = vsel %vm377, %v379, %v381
      %v383 = vrot.slane %v374, 1
      %v384 = vsel %vm377, %v381, %v383
      %v385 = vrot.slane %v375, 1
      %v386 = vsel %vm377, %v383, %v385
      %v387 = vrot.slane %v376, 1
      %v388 = vsel %vm377, %v385, %v387
      %394 = vst [vmem:[#allocation2 + $0x10] sm:$0xff] %v380
      %395 = vst [vmem:[#allocation2 + $0x58] sm:$0xff] %v382
      %396 = vst [vmem:[#allocation2 + $0xa0] sm:$0xff] %v384
      %397 = vst [vmem:[#allocation2 + $0xe8] sm:$0xff] %v386
      %398 = vst [vmem:[#allocation2 + $0x130] sm:$0xff] %v388
      %v399 = vld [vmem:[%s192 + $0x4] sm:$0xe]
      %v400 = vld [vmem:[%s192 + $0x8] sm:$0xf]
      %v401 = vld [vmem:[%s192 + $0xc] sm:$0xf]
      %v402 = vld [vmem:[%s192 + $0x10] sm:$0xf]
      %v403 = vld [vmem:[%s192 + $0x14] sm:$0xf]
      %v404 = vld [vmem:[%s192 + $0x18] sm:$0xf]
      %v405 = vld [vmem:[%s192 + $0x1c] sm:$0xf]
      %v406 = vld [vmem:[%s192 + $0x20] sm:$0xf]
      %v407 = vld [vmem:[%s192 + $0x24] sm:$0xf]
      %v408 = vld [vmem:[%s192 + $0x28] sm:$0xf]
      %v409 = vld [vmem:[%s192 + $0x2c] sm:$0x1]
      %v421 = vunpack.c.l.b16 %v399
      %v422 = vunpack.c.l.b16 %v400
      %v423 = vunpack.c.l.b16 %v401
      %v424 = vunpack.c.l.b16 %v402
      %v425 = vunpack.c.l.b16 %v403
      %v426 = vunpack.c.l.b16 %v404
      %v427 = vunpack.c.l.b16 %v405
      %v428 = vunpack.c.l.b16 %v406
      %v429 = vunpack.c.l.b16 %v407
      %v430 = vunpack.c.l.b16 %v408
      %v431 = vunpack.c.l.b16 %v409
      %v432 = vpack.c.b16 %v422, %v421
      %v433 = vpack.c.b16 %v424, %v423
      %v434 = vpack.c.b16 %v426, %v425
      %v435 = vpack.c.b16 %v428, %v427
      %v436 = vpack.c.b16 %v430, %v429
      %v437 = vpack.c.b16 %v431, %v431
      %v438 = vrot.slane %v432, 1
      %v439 = vrot.slane %v433, 1
      %v440 = vsel %vm377, %v438, %v439
      %v441 = vrot.slane %v434, 1
      %v442 = vsel %vm377, %v439, %v441
      %v443 = vrot.slane %v435, 1
      %v444 = vsel %vm377, %v441, %v443
      %v445 = vrot.slane %v436, 1
      %v446 = vsel %vm377, %v443, %v445
      %v447 = vrot.slane %v437, 1
      %v448 = vsel %vm377, %v445, %v447
      %454 = vst [vmem:[#allocation2 + $0x18] sm:$0xff] %v440
      %455 = vst [vmem:[#allocation2 + $0x60] sm:$0xff] %v442
      %456 = vst [vmem:[#allocation2 + $0xa8] sm:$0xff] %v444
      %457 = vst [vmem:[#allocation2 + $0xf0] sm:$0xff] %v446
      %458 = vst [vmem:[#allocation2 + $0x138] sm:$0xff] %v448
      %v459 = vld [vmem:[%s192 + $0x4] sm:$0xe]
      %v460 = vld [vmem:[%s192 + $0x8] sm:$0xf]
      %v461 = vld [vmem:[%s192 + $0xc] sm:$0xf]
      %v462 = vld [vmem:[%s192 + $0x10] sm:$0xf]
      %v463 = vld [vmem:[%s192 + $0x14] sm:$0xf]
      %v464 = vld [vmem:[%s192 + $0x18] sm:$0xf]
      %v465 = vld [vmem:[%s192 + $0x1c] sm:$0xf]
      %v466 = vld [vmem:[%s192 + $0x20] sm:$0xf]
      %v467 = vld [vmem:[%s192 + $0x24] sm:$0xf]
      %v468 = vld [vmem:[%s192 + $0x28] sm:$0xf]
      %v469 = vld [vmem:[%s192 + $0x2c] sm:$0x3]
      %v481 = vunpack.c.l.b16 %v459
      %v482 = vunpack.c.l.b16 %v460
      %v483 = vunpack.c.l.b16 %v461
      %v484 = vunpack.c.l.b16 %v462
      %v485 = vunpack.c.l.b16 %v463
      %v486 = vunpack.c.l.b16 %v464
      %v487 = vunpack.c.l.b16 %v465
      %v488 = vunpack.c.l.b16 %v466
      %v489 = vunpack.c.l.b16 %v467
      %v490 = vunpack.c.l.b16 %v468
      %v491 = vunpack.c.l.b16 %v469
      %v492 = vpack.c.b16 %v482, %v481
      %v493 = vpack.c.b16 %v484, %v483
      %v494 = vpack.c.b16 %v486, %v485
      %v495 = vpack.c.b16 %v488, %v487
      %v496 = vpack.c.b16 %v490, %v489
      %v497 = vpack.c.b16 %v491, %v491
      %vm498 = vsmask.f32 6400
      %v500 = vshrl.u32 %v492, 16
      %v502 = vrot.slane %v500, 1
      %v503 = vshll.u32 %v492, 16
      %v505 = vrot.slane %v503, 2
      %v506 = vor.u32 %v502, %v505
      %v508 = vshrl.u32 %v493, 16
      %v510 = vrot.slane %v508, 1
      %v511 = vshll.u32 %v493, 16
      %v513 = vrot.slane %v511, 2
      %v514 = vor.u32 %v510, %v513
      %v515 = vsel %vm498, %v506, %v514
      %v517 = vshrl.u32 %v494, 16
      %v519 = vrot.slane %v517, 1
      %v520 = vshll.u32 %v494, 16
      %v522 = vrot.slane %v520, 2
      %v523 = vor.u32 %v519, %v522
      %v524 = vsel %vm498, %v514, %v523
      %v526 = vshrl.u32 %v495, 16
      %v528 = vrot.slane %v526, 1
      %v529 = vshll.u32 %v495, 16
      %v531 = vrot.slane %v529, 2
      %v532 = vor.u32 %v528, %v531
      %v533 = vsel %vm498, %v523, %v532
      %v535 = vshrl.u32 %v496, 16
      %v537 = vrot.slane %v535, 1
      %v538 = vshll.u32 %v496, 16
      %v540 = vrot.slane %v538, 2
      %v541 = vor.u32 %v537, %v540
      %v542 = vsel %vm498, %v532, %v541
      %v544 = vshrl.u32 %v497, 16
      %v546 = vrot.slane %v544, 1
      %v547 = vshll.u32 %v497, 16
      %v549 = vrot.slane %v547, 2
      %v550 = vor.u32 %v546, %v549
      %v551 = vsel %vm498, %v541, %v550
      %557 = vst [vmem:[#allocation2 + $0x20] sm:$0xff] %v515
      %558 = vst [vmem:[#allocation2 + $0x68] sm:$0xff] %v524
      %559 = vst [vmem:[#allocation2 + $0xb0] sm:$0xff] %v533
      %560 = vst [vmem:[#allocation2 + $0xf8] sm:$0xff] %v542
      %561 = vst [vmem:[#allocation2 + $0x140] sm:$0xff] %v551
      %v562 = vld [vmem:[%s192 + $0x4] sm:$0xc]
      %v563 = vld [vmem:[%s192 + $0x8] sm:$0xf]
      %v564 = vld [vmem:[%s192 + $0xc] sm:$0xf]
      %v565 = vld [vmem:[%s192 + $0x10] sm:$0xf]
      %v566 = vld [vmem:[%s192 + $0x14] sm:$0xf]
      %v567 = vld [vmem:[%s192 + $0x18] sm:$0xf]
      %v568 = vld [vmem:[%s192 + $0x1c] sm:$0xf]
      %v569 = vld [vmem:[%s192 + $0x20] sm:$0xf]
      %v570 = vld [vmem:[%s192 + $0x24] sm:$0xf]
      %v571 = vld [vmem:[%s192 + $0x28] sm:$0xf]
      %v572 = vld [vmem:[%s192 + $0x2c] sm:$0x3]
      %v584 = vunpack.c.l.b16 %v562
      %v585 = vunpack.c.l.b16 %v563
      %v586 = vunpack.c.l.b16 %v564
      %v587 = vunpack.c.l.b16 %v565
      %v588 = vunpack.c.l.b16 %v566
      %v589 = vunpack.c.l.b16 %v567
      %v590 = vunpack.c.l.b16 %v568
      %v591 = vunpack.c.l.b16 %v569
      %v592 = vunpack.c.l.b16 %v570
      %v593 = vunpack.c.l.b16 %v571
      %v594 = vunpack.c.l.b16 %v572
      %v595 = vpack.c.b16 %v585, %v584
      %v596 = vpack.c.b16 %v587, %v586
      %v597 = vpack.c.b16 %v589, %v588
      %v598 = vpack.c.b16 %v591, %v590
      %v599 = vpack.c.b16 %v593, %v592
      %v600 = vpack.c.b16 %v594, %v594
      %vm601 = vcmask 1045504
      %v602 = vrot.slane %v595, 2
      %v603 = vrot.slane %v596, 2
      %v604 = vsel %vm601, %v602, %v603
      %v605 = vrot.slane %v597, 2
      %v606 = vsel %vm601, %v603, %v605
      %v607 = vrot.slane %v598, 2
      %v608 = vsel %vm601, %v605, %v607
      %v609 = vrot.slane %v599, 2
      %v610 = vsel %vm601, %v607, %v609
      %v611 = vrot.slane %v600, 2
      %v612 = vsel %vm601, %v609, %v611
      %618 = vst [vmem:[#allocation2 + $0x28] sm:$0xff] %v604
      %619 = vst [vmem:[#allocation2 + $0x70] sm:$0xff] %v606
      %620 = vst [vmem:[#allocation2 + $0xb8] sm:$0xff] %v608
      %621 = vst [vmem:[#allocation2 + $0x100] sm:$0xff] %v610
      %622 = vst [vmem:[#allocation2 + $0x148] sm:$0xff] %v612
      %v623 = vld [vmem:[%s192 + $0x8] sm:$0xc]
      %v624 = vld [vmem:[%s192 + $0xc] sm:$0xf]
      %v625 = vld [vmem:[%s192 + $0x10] sm:$0xf]
      %v626 = vld [vmem:[%s192 + $0x14] sm:$0xf]
      %v627 = vld [vmem:[%s192 + $0x18] sm:$0xf]
      %v628 = vld [vmem:[%s192 + $0x1c] sm:$0xf]
      %v629 = vld [vmem:[%s192 + $0x20] sm:$0xf]
      %v630 = vld [vmem:[%s192 + $0x24] sm:$0xf]
      %v631 = vld [vmem:[%s192 + $0x28] sm:$0xf]
      %v632 = vld [vmem:[%s192 + $0x2c] sm:$0xf]
      %v633 = vld [vmem:[%s192 + $0x30] sm:$0x3]
      %v645 = vunpack.c.l.b16 %v623
      %v646 = vunpack.c.l.b16 %v624
      %v647 = vunpack.c.l.b16 %v625
      %v648 = vunpack.c.l.b16 %v626
      %v649 = vunpack.c.l.b16 %v627
      %v650 = vunpack.c.l.b16 %v628
      %v651 = vunpack.c.l.b16 %v629
      %v652 = vunpack.c.l.b16 %v630
      %v653 = vunpack.c.l.b16 %v631
      %v654 = vunpack.c.l.b16 %v632
      %v655 = vunpack.c.l.b16 %v633
      %v656 = vpack.c.b16 %v646, %v645
      %v657 = vpack.c.b16 %v648, %v647
      %v658 = vpack.c.b16 %v650, %v649
      %v659 = vpack.c.b16 %v652, %v651
      %v660 = vpack.c.b16 %v654, %v653
      %v661 = vpack.c.b16 %v655, %v655
      %v662 = vrot.slane %v656, 2
      %v663 = vrot.slane %v657, 2
      %v664 = vsel %vm601, %v662, %v663
      %v665 = vrot.slane %v658, 2
      %v666 = vsel %vm601, %v663, %v665
      %v667 = vrot.slane %v659, 2
      %v668 = vsel %vm601, %v665, %v667
      %v669 = vrot.slane %v660, 2
      %v670 = vsel %vm601, %v667, %v669
      %v671 = vrot.slane %v661, 2
      %v672 = vsel %vm601, %v669, %v671
      %678 = vst [vmem:[#allocation2 + $0x30] sm:$0xff] %v664
      %679 = vst [vmem:[#allocation2 + $0x78] sm:$0xff] %v666
      %680 = vst [vmem:[#allocation2 + $0xc0] sm:$0xff] %v668
      %681 = vst [vmem:[#allocation2 + $0x108] sm:$0xff] %v670
      %682 = vst [vmem:[#allocation2 + $0x150] sm:$0xff] %v672
      %v683 = vld [vmem:[%s192 + $0x8] sm:$0xc]
      %v684 = vld [vmem:[%s192 + $0xc] sm:$0xf]
      %v685 = vld [vmem:[%s192 + $0x10] sm:$0xf]
      %v686 = vld [vmem:[%s192 + $0x14] sm:$0xf]
      %v687 = vld [vmem:[%s192 + $0x18] sm:$0xf]
      %v688 = vld [vmem:[%s192 + $0x1c] sm:$0xf]
      %v689 = vld [vmem:[%s192 + $0x20] sm:$0xf]
      %v690 = vld [vmem:[%s192 + $0x24] sm:$0xf]
      %v691 = vld [vmem:[%s192 + $0x28] sm:$0xf]
      %v692 = vld [vmem:[%s192 + $0x2c] sm:$0xf]
      %v693 = vld [vmem:[%s192 + $0x30] sm:$0x7]
      %v705 = vunpack.c.l.b16 %v683
      %v706 = vunpack.c.l.b16 %v684
      %v707 = vunpack.c.l.b16 %v685
      %v708 = vunpack.c.l.b16 %v686
      %v709 = vunpack.c.l.b16 %v687
      %v710 = vunpack.c.l.b16 %v688
      %v711 = vunpack.c.l.b16 %v689
      %v712 = vunpack.c.l.b16 %v690
      %v713 = vunpack.c.l.b16 %v691
      %v714 = vunpack.c.l.b16 %v692
      %v715 = vunpack.c.l.b16 %v693
      %v716 = vpack.c.b16 %v706, %v705
      %v717 = vpack.c.b16 %v708, %v707
      %v718 = vpack.c.b16 %v710, %v709
      %v719 = vpack.c.b16 %v712, %v711
      %v720 = vpack.c.b16 %v714, %v713
      %v721 = vpack.c.b16 %v715, %v715
      %vm722 = vsmask.f32 5376
      %v724 = vshrl.u32 %v716, 16
      %v726 = vrot.slane %v724, 2
      %v727 = vshll.u32 %v716, 16
      %v729 = vrot.slane %v727, 3
      %v730 = vor.u32 %v726, %v729
      %v732 = vshrl.u32 %v717, 16
      %v734 = vrot.slane %v732, 2
      %v735 = vshll.u32 %v717, 16
      %v737 = vrot.slane %v735, 3
      %v738 = vor.u32 %v734, %v737
      %v739 = vsel %vm722, %v730, %v738
      %v741 = vshrl.u32 %v718, 16
      %v743 = vrot.slane %v741, 2
      %v744 = vshll.u32 %v718, 16
      %v746 = vrot.slane %v744, 3
      %v747 = vor.u32 %v743, %v746
      %v748 = vsel %vm722, %v738, %v747
      %v750 = vshrl.u32 %v719, 16
      %v752 = vrot.slane %v750, 2
      %v753 = vshll.u32 %v719, 16
      %v755 = vrot.slane %v753, 3
      %v756 = vor.u32 %v752, %v755
      %v757 = vsel %vm722, %v747, %v756
      %v759 = vshrl.u32 %v720, 16
      %v761 = vrot.slane %v759, 2
      %v762 = vshll.u32 %v720, 16
      %v764 = vrot.slane %v762, 3
      %v765 = vor.u32 %v761, %v764
      %v766 = vsel %vm722, %v756, %v765
      %v768 = vshrl.u32 %v721, 16
      %v770 = vrot.slane %v768, 2
      %v771 = vshll.u32 %v721, 16
      %v773 = vrot.slane %v771, 3
      %v774 = vor.u32 %v770, %v773
      %v775 = vsel %vm722, %v765, %v774
      %781 = vst [vmem:[#allocation2 + $0x38] sm:$0xff] %v739
      %782 = vst [vmem:[#allocation2 + $0x80] sm:$0xff] %v748
      %783 = vst [vmem:[#allocation2 + $0xc8] sm:$0xff] %v757
      %784 = vst [vmem:[#allocation2 + $0x110] sm:$0xff] %v766
      %785 = vst [vmem:[#allocation2 + $0x158] sm:$0xff] %v775
      %v786 = vld [vmem:[%s192 + $0x8] sm:$0x8]
      %v787 = vld [vmem:[%s192 + $0xc] sm:$0xf]
      %v788 = vld [vmem:[%s192 + $0x10] sm:$0xf]
      %v789 = vld [vmem:[%s192 + $0x14] sm:$0xf]
      %v790 = vld [vmem:[%s192 + $0x18] sm:$0xf]
      %v791 = vld [vmem:[%s192 + $0x1c] sm:$0xf]
      %v792 = vld [vmem:[%s192 + $0x20] sm:$0xf]
      %v793 = vld [vmem:[%s192 + $0x24] sm:$0xf]
      %v794 = vld [vmem:[%s192 + $0x28] sm:$0xf]
      %v795 = vld [vmem:[%s192 + $0x2c] sm:$0xf]
      %v796 = vld [vmem:[%s192 + $0x30] sm:$0x7]
      %v808 = vunpack.c.l.b16 %v786
      %v809 = vunpack.c.l.b16 %v787
      %v810 = vunpack.c.l.b16 %v788
      %v811 = vunpack.c.l.b16 %v789
      %v812 = vunpack.c.l.b16 %v790
      %v813 = vunpack.c.l.b16 %v791
      %v814 = vunpack.c.l.b16 %v792
      %v815 = vunpack.c.l.b16 %v793
      %v816 = vunpack.c.l.b16 %v794
      %v817 = vunpack.c.l.b16 %v795
      %v818 = vunpack.c.l.b16 %v796
      %v819 = vpack.c.b16 %v809, %v808
      %v820 = vpack.c.b16 %v811, %v810
      %v821 = vpack.c.b16 %v813, %v812
      %v822 = vpack.c.b16 %v815, %v814
      %v823 = vpack.c.b16 %v817, %v816
      %v824 = vpack.c.b16 %v818, %v818
      %vm825 = vcmask 1044480
      %v826 = vrot.slane %v819, 3
      %v827 = vrot.slane %v820, 3
      %v828 = vsel %vm825, %v826, %v827
      %v829 = vrot.slane %v821, 3
      %v830 = vsel %vm825, %v827, %v829
      %v831 = vrot.slane %v822, 3
      %v832 = vsel %vm825, %v829, %v831
      %v833 = vrot.slane %v823, 3
      %v834 = vsel %vm825, %v831, %v833
      %v835 = vrot.slane %v824, 3
      %v836 = vsel %vm825, %v833, %v835
      %842 = vst [vmem:[#allocation2 + $0x40] sm:$0xff] %v828
      %843 = vst [vmem:[#allocation2 + $0x88] sm:$0xff] %v830
      %844 = vst [vmem:[#allocation2 + $0xd0] sm:$0xff] %v832
      %845 = vst [vmem:[#allocation2 + $0x118] sm:$0xff] %v834
      %846 = vst [vmem:[#allocation2 + $0x160] sm:$0xff] %v836
      %v847 = vld [vmem:[#allocation2] sm:$0xff]
      %v848 = vld [vmem:[#allocation2 + $0x8] sm:$0xff]
      %v849 = vld [vmem:[#allocation2 + $0x10] sm:$0xff]
      %v850 = vld [vmem:[#allocation2 + $0x18] sm:$0xff]
      %v851 = vld [vmem:[#allocation2 + $0x20] sm:$0xff]
      %v852 = vld [vmem:[#allocation2 + $0x28] sm:$0xff]
      %v853 = vld [vmem:[#allocation2 + $0x30] sm:$0xff]
      %v854 = vld [vmem:[#allocation2 + $0x38] sm:$0xff]
      %v855 = vld [vmem:[#allocation2 + $0x40] sm:$0xff]
      %v856 = vld [vmem:[#allocation2 + $0x48] sm:$0xff]
      %v857 = vld [vmem:[#allocation2 + $0x50] sm:$0xff]
      %v858 = vld [vmem:[#allocation2 + $0x58] sm:$0xff]
      %v859 = vld [vmem:[#allocation2 + $0x60] sm:$0xff]
      %v860 = vld [vmem:[#allocation2 + $0x68] sm:$0xff]
      %v861 = vld [vmem:[#allocation2 + $0x70] sm:$0xff]
      %v862 = vld [vmem:[#allocation2 + $0x78] sm:$0xff]
      %v863 = vld [vmem:[#allocation2 + $0x80] sm:$0xff]
      %v864 = vld [vmem:[#allocation2 + $0x88] sm:$0xff]
      %v865 = vld [vmem:[#allocation2 + $0x90] sm:$0xff]
      %v866 = vld [vmem:[#allocation2 + $0x98] sm:$0xff]
      %v867 = vld [vmem:[#allocation2 + $0xa0] sm:$0xff]
      %v868 = vld [vmem:[#allocation2 + $0xa8] sm:$0xff]
      %v869 = vld [vmem:[#allocation2 + $0xb0] sm:$0xff]
      %v870 = vld [vmem:[#allocation2 + $0xb8] sm:$0xff]
      %v871 = vld [vmem:[#allocation2 + $0xc0] sm:$0xff]
      %v872 = vld [vmem:[#allocation2 + $0xc8] sm:$0xff]
      %v873 = vld [vmem:[#allocation2 + $0xd0] sm:$0xff]
      %v874 = vld [vmem:[#allocation2 + $0xd8] sm:$0xff]
      %v875 = vld [vmem:[#allocation2 + $0xe0] sm:$0xff]
      %v876 = vld [vmem:[#allocation2 + $0xe8] sm:$0xff]
      %v877 = vld [vmem:[#allocation2 + $0xf0] sm:$0xff]
      %v878 = vld [vmem:[#allocation2 + $0xf8] sm:$0xff]
      %v879 = vld [vmem:[#allocation2 + $0x100] sm:$0xff]
      %v880 = vld [vmem:[#allocation2 + $0x108] sm:$0xff]
      %v881 = vld [vmem:[#allocation2 + $0x110] sm:$0xff]
      %v882 = vld [vmem:[#allocation2 + $0x118] sm:$0xff]
      %v883 = vld [vmem:[#allocation2 + $0x120] sm:$0xff]
      %v884 = vld [vmem:[#allocation2 + $0x128] sm:$0xff]
      %v885 = vld [vmem:[#allocation2 + $0x130] sm:$0xff]
      %v886 = vld [vmem:[#allocation2 + $0x138] sm:$0xff]
      %v887 = vld [vmem:[#allocation2 + $0x140] sm:$0xff]
      %v888 = vld [vmem:[#allocation2 + $0x148] sm:$0xff]
      %v889 = vld [vmem:[#allocation2 + $0x150] sm:$0xff]
      %v890 = vld [vmem:[#allocation2 + $0x158] sm:$0xff]
      %v891 = vld [vmem:[#allocation2 + $0x160] sm:$0xff]
      %v892 = vld [vmem:[%s1] sm:$0xf]
      %v893 = vld [vmem:[%s1 + $0x4] sm:$0xf]
      %v894 = vld [vmem:[%s1 + $0x8] sm:$0xf]
      %v895 = vld [vmem:[%s1 + $0xc] sm:$0xf]
      %v896 = vld [vmem:[%s1 + $0x10] sm:$0xf]
      %v897 = vld [vmem:[%s1 + $0x14] sm:$0xf]
      %v898 = vld [vmem:[%s1 + $0x18] sm:$0xf]
      %v899 = vld [vmem:[%s1 + $0x1c] sm:$0xf]
      %v900 = vld [vmem:[%s1 + $0x20] sm:$0xf]
      %v901 = vld [vmem:[%s1 + $0x24] sm:$0xf]
      %v902 = vld [vmem:[%s1 + $0x28] sm:$0xf]
      %v903 = vld [vmem:[%s1 + $0x2c] sm:$0xf]
      %v904 = vld [vmem:[%s1 + $0x30] sm:$0xf]
      %v905 = vld [vmem:[%s1 + $0x34] sm:$0xf]
      %v906 = vld [vmem:[%s1 + $0x38] sm:$0xf]
      %v907 = vld [vmem:[%s1 + $0x3c] sm:$0xf]
      %v908 = vld [vmem:[%s1 + $0x40] sm:$0xf]
      %v909 = vld [vmem:[%s1 + $0x44] sm:$0xf]
      %v910 = vld [vmem:[%s1 + $0x48] sm:$0xf]
      %v911 = vld [vmem:[%s1 + $0x4c] sm:$0xf]
      %v912 = vld [vmem:[%s1 + $0x50] sm:$0xf]
      %v913 = vld [vmem:[%s1 + $0x54] sm:$0xf]
      %v914 = vld [vmem:[%s1 + $0x58] sm:$0xf]
      %v915 = vld [vmem:[%s1 + $0x5c] sm:$0xf]
      %v916 = vld [vmem:[%s1 + $0x60] sm:$0xf]
      %v917 = vld [vmem:[%s1 + $0x64] sm:$0xf]
      %v918 = vld [vmem:[%s1 + $0x68] sm:$0xf]
      %v919 = vld [vmem:[%s1 + $0x6c] sm:$0xf]
      %v920 = vld [vmem:[%s1 + $0x70] sm:$0xf]
      %v921 = vld [vmem:[%s1 + $0x74] sm:$0xf]
      %v922 = vld [vmem:[%s1 + $0x78] sm:$0xf]
      %v923 = vld [vmem:[%s1 + $0x7c] sm:$0xf]
      %v924 = vld [vmem:[%s1 + $0x80] sm:$0xf]
      %v925 = vld [vmem:[%s1 + $0x84] sm:$0xf]
      %v926 = vld [vmem:[%s1 + $0x88] sm:$0xf]
      %v927 = vld [vmem:[%s1 + $0x8c] sm:$0xf]
      %v928 = vld [vmem:[%s1 + $0x90] sm:$0xf]
      %v929 = vld [vmem:[%s1 + $0x94] sm:$0xf]
      %v930 = vld [vmem:[%s1 + $0x98] sm:$0xf]
      %v931 = vld [vmem:[%s1 + $0x9c] sm:$0xf]
      %v932 = vld [vmem:[%s1 + $0xa0] sm:$0xf]
      %v933 = vld [vmem:[%s1 + $0xa4] sm:$0xf]
      %v934 = vld [vmem:[%s1 + $0xa8] sm:$0xf]
      %v935 = vld [vmem:[%s1 + $0xac] sm:$0xf]
      %v936 = vld [vmem:[%s1 + $0xb0] sm:$0xf]
      %v937 = vld [vmem:[%s1 + $0xb4] sm:$0xf]
      %v938 = vld [vmem:[%s1 + $0xb8] sm:$0xf]
      %v939 = vld [vmem:[%s1 + $0xbc] sm:$0xf]
      %v940 = vld [vmem:[%s1 + $0xc0] sm:$0xf]
      %v941 = vld [vmem:[%s1 + $0xc4] sm:$0xf]
      %v942 = vld [vmem:[%s1 + $0xc8] sm:$0xf]
      %v943 = vld [vmem:[%s1 + $0xcc] sm:$0xf]
      %v944 = vld [vmem:[%s1 + $0xd0] sm:$0xf]
      %v945 = vld [vmem:[%s1 + $0xd4] sm:$0xf]
      %v946 = vld [vmem:[%s1 + $0xd8] sm:$0xf]
      %v947 = vld [vmem:[%s1 + $0xdc] sm:$0xf]
      %v948 = vld [vmem:[%s1 + $0xe0] sm:$0xf]
      %v949 = vld [vmem:[%s1 + $0xe4] sm:$0xf]
      %v950 = vld [vmem:[%s1 + $0xe8] sm:$0xf]
      %v951 = vld [vmem:[%s1 + $0xec] sm:$0xf]
      %v952 = vld [vmem:[%s1 + $0xf0] sm:$0xf]
      %v953 = vld [vmem:[%s1 + $0xf4] sm:$0xf]
      %v954 = vld [vmem:[%s1 + $0xf8] sm:$0xf]
      %v955 = vld [vmem:[%s1 + $0xfc] sm:$0xf]
      %v956 = vld [vmem:[%s1 + $0x100] sm:$0xf]
      %v957 = vld [vmem:[%s1 + $0x104] sm:$0xf]
      %v958 = vld [vmem:[%s1 + $0x108] sm:$0xf]
      %v959 = vld [vmem:[%s1 + $0x10c] sm:$0xf]
      %v960 = vld [vmem:[%s1 + $0x110] sm:$0xf]
      %v961 = vld [vmem:[%s1 + $0x114] sm:$0xf]
      %v962 = vld [vmem:[%s1 + $0x118] sm:$0xf]
      %v963 = vld [vmem:[%s1 + $0x11c] sm:$0xf]
      %v964 = vld [vmem:[%s1 + $0x120] sm:$0xf]
      %v965 = vld [vmem:[%s1 + $0x124] sm:$0xf]
      %v966 = vld [vmem:[%s1 + $0x128] sm:$0xf]
      %v967 = vld [vmem:[%s1 + $0x12c] sm:$0xf]
      %v968 = vld [vmem:[%s1 + $0x130] sm:$0xf]
      %v969 = vld [vmem:[%s1 + $0x134] sm:$0xf]
      %v970 = vld [vmem:[%s1 + $0x138] sm:$0xf]
      %v971 = vld [vmem:[%s1 + $0x13c] sm:$0xf]
      %v972 = vld [vmem:[%s1 + $0x140] sm:$0xf]
      %v973 = vld [vmem:[%s1 + $0x144] sm:$0xf]
      %v974 = vld [vmem:[%s1 + $0x148] sm:$0xf]
      %v975 = vld [vmem:[%s1 + $0x14c] sm:$0xf]
      %v976 = vld [vmem:[%s1 + $0x150] sm:$0xf]
      %v977 = vld [vmem:[%s1 + $0x154] sm:$0xf]
      %v978 = vld [vmem:[%s1 + $0x158] sm:$0xf]
      %v979 = vld [vmem:[%s1 + $0x15c] sm:$0xf]
      %v980 = vld [vmem:[%s1 + $0x160] sm:$0xf]
      %v981 = vld [vmem:[%s1 + $0x164] sm:$0xf]
      %v982 = vld [vmem:[%s1 + $0x168] sm:$0xf]
      %v983 = vld [vmem:[%s1 + $0x16c] sm:$0xf]
      %v984 = vld [vmem:[%s1 + $0x170] sm:$0xf]
      %v985 = vld [vmem:[%s1 + $0x174] sm:$0xf]
      %v986 = vld [vmem:[%s1 + $0x178] sm:$0xf]
      %v987 = vld [vmem:[%s1 + $0x17c] sm:$0xf]
      %v988 = vld [vmem:[%s1 + $0x180] sm:$0xf]
      %v989 = vld [vmem:[%s1 + $0x184] sm:$0xf]
      %v990 = vld [vmem:[%s1 + $0x188] sm:$0xf]
      %v991 = vld [vmem:[%s1 + $0x18c] sm:$0xf]
      %v992 = vld [vmem:[%s1 + $0x190] sm:$0xf]
      %v993 = vld [vmem:[%s1 + $0x194] sm:$0xf]
      %v994 = vld [vmem:[%s1 + $0x198] sm:$0xf]
      %v995 = vld [vmem:[%s1 + $0x19c] sm:$0xf]
      %v996 = vld [vmem:[%s1 + $0x1a0] sm:$0xf]
      %v997 = vld [vmem:[%s1 + $0x1a4] sm:$0xf]
      %v998 = vld [vmem:[%s1 + $0x1a8] sm:$0xf]
      %v999 = vld [vmem:[%s1 + $0x1ac] sm:$0xf]
      %v1000 = vld [vmem:[%s1 + $0x1b0] sm:$0xf]
      %v1001 = vld [vmem:[%s1 + $0x1b4] sm:$0xf]
      %v1002 = vld [vmem:[%s1 + $0x1b8] sm:$0xf]
      %v1003 = vld [vmem:[%s1 + $0x1bc] sm:$0xf]
      %v1004 = vld [vmem:[%s1 + $0x1c0] sm:$0xf]
      %v1005 = vld [vmem:[%s1 + $0x1c4] sm:$0xf]
      %v1006 = vld [vmem:[%s1 + $0x1c8] sm:$0xf]
      %v1007 = vld [vmem:[%s1 + $0x1cc] sm:$0xf]
      %v1008 = vld [vmem:[%s1 + $0x1d0] sm:$0xf]
      %v1009 = vld [vmem:[%s1 + $0x1d4] sm:$0xf]
      %v1010 = vld [vmem:[%s1 + $0x1d8] sm:$0xf]
      %v1011 = vld [vmem:[%s1 + $0x1dc] sm:$0xf]
      %v1012 = vld [vmem:[%s1 + $0x1e0] sm:$0xf]
      %v1013 = vld [vmem:[%s1 + $0x1e4] sm:$0xf]
      %v1014 = vld [vmem:[%s1 + $0x1e8] sm:$0xf]
      %v1015 = vld [vmem:[%s1 + $0x1ec] sm:$0xf]
      %v1016 = vld [vmem:[%s1 + $0x1f0] sm:$0xf]
      %v1017 = vld [vmem:[%s1 + $0x1f4] sm:$0xf]
      %v1018 = vld [vmem:[%s1 + $0x1f8] sm:$0xf]
      %v1019 = vld [vmem:[%s1 + $0x1fc] sm:$0xf]
      %v1020 = vld [vmem:[%s1 + $0x200] sm:$0xf]
      %v1021 = vld [vmem:[%s1 + $0x204] sm:$0xf]
      %v1022 = vld [vmem:[%s1 + $0x208] sm:$0xf]
      %v1023 = vld [vmem:[%s1 + $0x20c] sm:$0xf]
      %v1024 = vld [vmem:[%s1 + $0x210] sm:$0xf]
      %v1025 = vld [vmem:[%s1 + $0x214] sm:$0xf]
      %v1026 = vld [vmem:[%s1 + $0x218] sm:$0xf]
      %v1027 = vld [vmem:[%s1 + $0x21c] sm:$0xf]
      %v1028 = vld [vmem:[%s1 + $0x220] sm:$0xf]
      %v1029 = vld [vmem:[%s1 + $0x224] sm:$0xf]
      %v1030 = vld [vmem:[%s1 + $0x228] sm:$0xf]
      %v1031 = vld [vmem:[%s1 + $0x22c] sm:$0xf]
      %v1032 = vld [vmem:[%s1 + $0x230] sm:$0xf]
      %v1033 = vld [vmem:[%s1 + $0x234] sm:$0xf]
      %v1034 = vld [vmem:[%s1 + $0x238] sm:$0xf]
      %v1035 = vld [vmem:[%s1 + $0x23c] sm:$0xf]
      %v1036 = vld [vmem:[%s2] sm:$0x1]
      %v1038 = vlaneseq
      %v1039 = vshrl.u32 %v1038, 7
      %v1040 = vsub.s32 0, %v1039
      %v1041 = vrot.slane %v1036, %v1040
      %v1187 = vunpack.c.l.b16 %v892
      %v1188 = vunpack.c.l.b16 %v893
      %v1189 = vunpack.c.l.b16 %v894
      %v1190 = vunpack.c.l.b16 %v895
      %v1191 = vunpack.c.l.b16 %v896
      %v1192 = vunpack.c.l.b16 %v897
      %v1193 = vunpack.c.l.b16 %v898
      %v1194 = vunpack.c.l.b16 %v899
      %v1195 = vunpack.c.l.b16 %v900
      %v1196 = vunpack.c.l.b16 %v901
      %v1197 = vunpack.c.l.b16 %v902
      %v1198 = vunpack.c.l.b16 %v903
      %v1199 = vunpack.c.l.b16 %v904
      %v1200 = vunpack.c.l.b16 %v905
      %v1201 = vunpack.c.l.b16 %v906
      %v1202 = vunpack.c.l.b16 %v907
      %v1203 = vunpack.c.l.b16 %v908
      %v1204 = vunpack.c.l.b16 %v909
      %v1205 = vunpack.c.l.b16 %v910
      %v1206 = vunpack.c.l.b16 %v911
      %v1207 = vunpack.c.l.b16 %v912
      %v1208 = vunpack.c.l.b16 %v913
      %v1209 = vunpack.c.l.b16 %v914
      %v1210 = vunpack.c.l.b16 %v915
      %v1211 = vunpack.c.l.b16 %v916
      %v1212 = vunpack.c.l.b16 %v917
      %v1213 = vunpack.c.l.b16 %v918
      %v1214 = vunpack.c.l.b16 %v919
      %v1215 = vunpack.c.l.b16 %v920
      %v1216 = vunpack.c.l.b16 %v921
      %v1217 = vunpack.c.l.b16 %v922
      %v1218 = vunpack.c.l.b16 %v923
      %v1219 = vunpack.c.l.b16 %v924
      %v1220 = vunpack.c.l.b16 %v925
      %v1221 = vunpack.c.l.b16 %v926
      %v1222 = vunpack.c.l.b16 %v927
      %v1223 = vunpack.c.l.b16 %v928
      %v1224 = vunpack.c.l.b16 %v929
      %v1225 = vunpack.c.l.b16 %v930
      %v1226 = vunpack.c.l.b16 %v931
      %v1227 = vunpack.c.l.b16 %v932
      %v1228 = vunpack.c.l.b16 %v933
      %v1229 = vunpack.c.l.b16 %v934
      %v1230 = vunpack.c.l.b16 %v935
      %v1231 = vunpack.c.l.b16 %v936
      %v1232 = vunpack.c.l.b16 %v937
      %v1233 = vunpack.c.l.b16 %v938
      %v1234 = vunpack.c.l.b16 %v939
      %v1235 = vunpack.c.l.b16 %v940
      %v1236 = vunpack.c.l.b16 %v941
      %v1237 = vunpack.c.l.b16 %v942
      %v1238 = vunpack.c.l.b16 %v943
      %v1239 = vunpack.c.l.b16 %v944
      %v1240 = vunpack.c.l.b16 %v945
      %v1241 = vunpack.c.l.b16 %v946
      %v1242 = vunpack.c.l.b16 %v947
      %v1243 = vunpack.c.l.b16 %v948
      %v1244 = vunpack.c.l.b16 %v949
      %v1245 = vunpack.c.l.b16 %v950
      %v1246 = vunpack.c.l.b16 %v951
      %v1247 = vunpack.c.l.b16 %v952
      %v1248 = vunpack.c.l.b16 %v953
      %v1249 = vunpack.c.l.b16 %v954
      %v1250 = vunpack.c.l.b16 %v955
      %v1251 = vunpack.c.l.b16 %v956
      %v1252 = vunpack.c.l.b16 %v957
      %v1253 = vunpack.c.l.b16 %v958
      %v1254 = vunpack.c.l.b16 %v959
      %v1255 = vunpack.c.l.b16 %v960
      %v1256 = vunpack.c.l.b16 %v961
      %v1257 = vunpack.c.l.b16 %v962
      %v1258 = vunpack.c.l.b16 %v963
      %v1259 = vunpack.c.l.b16 %v964
      %v1260 = vunpack.c.l.b16 %v965
      %v1261 = vunpack.c.l.b16 %v966
      %v1262 = vunpack.c.l.b16 %v967
      %v1263 = vunpack.c.l.b16 %v968
      %v1264 = vunpack.c.l.b16 %v969
      %v1265 = vunpack.c.l.b16 %v970
      %v1266 = vunpack.c.l.b16 %v971
      %v1267 = vunpack.c.l.b16 %v972
      %v1268 = vunpack.c.l.b16 %v973
      %v1269 = vunpack.c.l.b16 %v974
      %v1270 = vunpack.c.l.b16 %v975
      %v1271 = vunpack.c.l.b16 %v976
      %v1272 = vunpack.c.l.b16 %v977
      %v1273 = vunpack.c.l.b16 %v978
      %v1274 = vunpack.c.l.b16 %v979
      %v1275 = vunpack.c.l.b16 %v980
      %v1276 = vunpack.c.l.b16 %v981
      %v1277 = vunpack.c.l.b16 %v982
      %v1278 = vunpack.c.l.b16 %v983
      %v1279 = vunpack.c.l.b16 %v984
      %v1280 = vunpack.c.l.b16 %v985
      %v1281 = vunpack.c.l.b16 %v986
      %v1282 = vunpack.c.l.b16 %v987
      %v1283 = vunpack.c.l.b16 %v988
      %v1284 = vunpack.c.l.b16 %v989
      %v1285 = vunpack.c.l.b16 %v990
      %v1286 = vunpack.c.l.b16 %v991
      %v1287 = vunpack.c.l.b16 %v992
      %v1288 = vunpack.c.l.b16 %v993
      %v1289 = vunpack.c.l.b16 %v994
      %v1290 = vunpack.c.l.b16 %v995
      %v1291 = vunpack.c.l.b16 %v996
      %v1292 = vunpack.c.l.b16 %v997
      %v1293 = vunpack.c.l.b16 %v998
      %v1294 = vunpack.c.l.b16 %v999
      %v1295 = vunpack.c.l.b16 %v1000
      %v1296 = vunpack.c.l.b16 %v1001
      %v1297 = vunpack.c.l.b16 %v1002
      %v1298 = vunpack.c.l.b16 %v1003
      %v1299 = vunpack.c.l.b16 %v1004
      %v1300 = vunpack.c.l.b16 %v1005
      %v1301 = vunpack.c.l.b16 %v1006
      %v1302 = vunpack.c.l.b16 %v1007
      %v1303 = vunpack.c.l.b16 %v1008
      %v1304 = vunpack.c.l.b16 %v1009
      %v1305 = vunpack.c.l.b16 %v1010
      %v1306 = vunpack.c.l.b16 %v1011
      %v1307 = vunpack.c.l.b16 %v1012
      %v1308 = vunpack.c.l.b16 %v1013
      %v1309 = vunpack.c.l.b16 %v1014
      %v1310 = vunpack.c.l.b16 %v1015
      %v1311 = vunpack.c.l.b16 %v1016
      %v1312 = vunpack.c.l.b16 %v1017
      %v1313 = vunpack.c.l.b16 %v1018
      %v1314 = vunpack.c.l.b16 %v1019
      %v1315 = vunpack.c.l.b16 %v1020
      %v1316 = vunpack.c.l.b16 %v1021
      %v1317 = vunpack.c.l.b16 %v1022
      %v1318 = vunpack.c.l.b16 %v1023
      %v1319 = vunpack.c.l.b16 %v1024
      %v1320 = vunpack.c.l.b16 %v1025
      %v1321 = vunpack.c.l.b16 %v1026
      %v1322 = vunpack.c.l.b16 %v1027
      %v1323 = vunpack.c.l.b16 %v1028
      %v1324 = vunpack.c.l.b16 %v1029
      %v1325 = vunpack.c.l.b16 %v1030
      %v1326 = vunpack.c.l.b16 %v1031
      %v1327 = vunpack.c.l.b16 %v1032
      %v1328 = vunpack.c.l.b16 %v1033
      %v1329 = vunpack.c.l.b16 %v1034
      %v1330 = vunpack.c.l.b16 %v1035
      %v1331 = vpack.c.b16 %v1188, %v1187
      %v1332 = vpack.c.b16 %v1190, %v1189
      %v1333 = vpack.c.b16 %v1192, %v1191
      %v1334 = vpack.c.b16 %v1194, %v1193
      %v1335 = vpack.c.b16 %v1196, %v1195
      %v1336 = vpack.c.b16 %v1198, %v1197
      %v1337 = vpack.c.b16 %v1200, %v1199
      %v1338 = vpack.c.b16 %v1202, %v1201
      %v1339 = vpack.c.b16 %v1204, %v1203
      %v1340 = vpack.c.b16 %v1206, %v1205
      %v1341 = vpack.c.b16 %v1208, %v1207
      %v1342 = vpack.c.b16 %v1210, %v1209
      %v1343 = vpack.c.b16 %v1212, %v1211
      %v1344 = vpack.c.b16 %v1214, %v1213
      %v1345 = vpack.c.b16 %v1216, %v1215
      %v1346 = vpack.c.b16 %v1218, %v1217
      %v1347 = vpack.c.b16 %v1220, %v1219
      %v1348 = vpack.c.b16 %v1222, %v1221
      %v1349 = vpack.c.b16 %v1224, %v1223
      %v1350 = vpack.c.b16 %v1226, %v1225
      %v1351 = vpack.c.b16 %v1228, %v1227
      %v1352 = vpack.c.b16 %v1230, %v1229
      %v1353 = vpack.c.b16 %v1232, %v1231
      %v1354 = vpack.c.b16 %v1234, %v1233
      %v1355 = vpack.c.b16 %v1236, %v1235
      %v1356 = vpack.c.b16 %v1238, %v1237
      %v1357 = vpack.c.b16 %v1240, %v1239
      %v1358 = vpack.c.b16 %v1242, %v1241
      %v1359 = vpack.c.b16 %v1244, %v1243
      %v1360 = vpack.c.b16 %v1246, %v1245
      %v1361 = vpack.c.b16 %v1248, %v1247
      %v1362 = vpack.c.b16 %v1250, %v1249
      %v1363 = vpack.c.b16 %v1252, %v1251
      %v1364 = vpack.c.b16 %v1254, %v1253
      %v1365 = vpack.c.b16 %v1256, %v1255
      %v1366 = vpack.c.b16 %v1258, %v1257
      %v1367 = vpack.c.b16 %v1260, %v1259
      %v1368 = vpack.c.b16 %v1262, %v1261
      %v1369 = vpack.c.b16 %v1264, %v1263
      %v1370 = vpack.c.b16 %v1266, %v1265
      %v1371 = vpack.c.b16 %v1268, %v1267
      %v1372 = vpack.c.b16 %v1270, %v1269
      %v1373 = vpack.c.b16 %v1272, %v1271
      %v1374 = vpack.c.b16 %v1274, %v1273
      %v1375 = vpack.c.b16 %v1276, %v1275
      %v1376 = vpack.c.b16 %v1278, %v1277
      %v1377 = vpack.c.b16 %v1280, %v1279
      %v1378 = vpack.c.b16 %v1282, %v1281
      %v1379 = vpack.c.b16 %v1284, %v1283
      %v1380 = vpack.c.b16 %v1286, %v1285
      %v1381 = vpack.c.b16 %v1288, %v1287
      %v1382 = vpack.c.b16 %v1290, %v1289
      %v1383 = vpack.c.b16 %v1292, %v1291
      %v1384 = vpack.c.b16 %v1294, %v1293
      %v1385 = vpack.c.b16 %v1296, %v1295
      %v1386 = vpack.c.b16 %v1298, %v1297
      %v1387 = vpack.c.b16 %v1300, %v1299
      %v1388 = vpack.c.b16 %v1302, %v1301
      %v1389 = vpack.c.b16 %v1304, %v1303
      %v1390 = vpack.c.b16 %v1306, %v1305
      %v1391 = vpack.c.b16 %v1308, %v1307
      %v1392 = vpack.c.b16 %v1310, %v1309
      %v1393 = vpack.c.b16 %v1312, %v1311
      %v1394 = vpack.c.b16 %v1314, %v1313
      %v1395 = vpack.c.b16 %v1316, %v1315
      %v1396 = vpack.c.b16 %v1318, %v1317
      %v1397 = vpack.c.b16 %v1320, %v1319
      %v1398 = vpack.c.b16 %v1322, %v1321
      %v1399 = vpack.c.b16 %v1324, %v1323
      %v1400 = vpack.c.b16 %v1326, %v1325
      %v1401 = vpack.c.b16 %v1328, %v1327
      %v1402 = vpack.c.b16 %v1330, %v1329
      %1475 = vmatprep.subr.bf16.mxu0 0
      %1476 = vmatpush1.bf16.msra.mxu0 %v1331
      %1477 = vmatprep.subr.bf16.mxu0 0
      %1478 = vmatpush1.bf16.msra.mxu0 %v1332
      %1479 = vmatprep.subr.bf16.mxu0 0
      %1480 = vmatpush1.bf16.msra.mxu0 %v1333
      %1481 = vmatprep.subr.bf16.mxu0 0
      %1482 = vmatpush1.bf16.msra.mxu0 %v1334
      %1483 = vmatprep.subr.bf16.mxu0 0
      %1484 = vmatpush1.bf16.msra.mxu0 %v1335
      %1485 = vmatprep.subr.bf16.mxu0 0
      %1486 = vmatpush1.bf16.msra.mxu0 %v1336
      %1487 = vmatprep.subr.bf16.mxu0 0
      %1488 = vmatpush1.bf16.msra.mxu0 %v1337
      %1489 = vmatprep.subr.bf16.mxu0 0
      %1490 = vmatpush1.bf16.msra.mxu0 %v1338
      %1491 = vmatprep.subr.bf16.mxu0 0
      %1492 = vmatpush1.bf16.msra.mxu0 %v1339
      %1493 = vmatprep.subr.bf16.mxu0 0
      %1494 = vmatpush1.bf16.msra.mxu0 %v1340
      %1495 = vmatprep.subr.bf16.mxu0 0
      %1496 = vmatpush1.bf16.msra.mxu0 %v1341
      %1497 = vmatprep.subr.bf16.mxu0 0
      %1498 = vmatpush1.bf16.msra.mxu0 %v1342
      %1499 = vmatprep.subr.bf16.mxu0 0
      %1500 = vmatpush1.bf16.msra.mxu0 %v1343
      %1501 = vmatprep.subr.bf16.mxu0 0
      %1502 = vmatpush1.bf16.msra.mxu0 %v1344
      %1503 = vmatprep.subr.bf16.mxu0 0
      %1504 = vmatpush1.bf16.msra.mxu0 %v1345
      %1505 = vmatprep.subr.bf16.mxu0 0
      %1506 = vmatpush1.bf16.msra.mxu0 %v1346
      %1507 = vmatprep.mubr.bf16.mxu0 %v848
      %1508 = vmatmul.mubr.bf16.gmra.mrb[0].mxu0 %v847
      %v1509 = vpop.f32.mrb[0].mxu0
      %v1510 = vadd.f32 %v1041, %v1509
      %v1511 = vpop.f32.mrb[0].mxu0
      %v1512 = vpop.f32.mrb[0].mxu0
      %v1513 = vadd.f32 %v1041, %v1512
      %v1514 = vpop.f32.mrb[0].mxu0
      %1515 = vmatprep.mubr.bf16.mxu0 %v857
      %1516 = vmatmul.mubr.bf16.gmra.mrb[0].mxu0 %v856
      %v1517 = vpop.f32.mrb[0].mxu0
      %v1518 = vadd.f32 %v1041, %v1517
      %v1519 = vpop.f32.mrb[0].mxu0
      %v1520 = vpop.f32.mrb[0].mxu0
      %v1521 = vadd.f32 %v1041, %v1520
      %v1522 = vpop.f32.mrb[0].mxu0
      %1523 = vmatprep.mubr.bf16.mxu0 %v866
      %1524 = vmatmul.mubr.bf16.gmra.mrb[0].mxu0 %v865
      %v1525 = vpop.f32.mrb[0].mxu0
      %v1526 = vadd.f32 %v1041, %v1525
      %v1527 = vpop.f32.mrb[0].mxu0
      %v1528 = vpop.f32.mrb[0].mxu0
      %v1529 = vadd.f32 %v1041, %v1528
      %v1530 = vpop.f32.mrb[0].mxu0
      %1531 = vmatprep.mubr.bf16.mxu0 %v875
      %1532 = vmatmul.mubr.bf16.gmra.mrb[0].mxu0 %v874
      %v1533 = vpop.f32.mrb[0].mxu0
      %v1534 = vadd.f32 %v1041, %v1533
      %v1535 = vpop.f32.mrb[0].mxu0
      %v1536 = vpop.f32.mrb[0].mxu0
      %v1537 = vadd.f32 %v1041, %v1536
      %v1538 = vpop.f32.mrb[0].mxu0
      %1539 = vmatprep.mubr.bf16.mxu0 %v884
      %1540 = vmatmul.mubr.bf16.gmra.mrb[0].mxu0 %v883
      %v1541 = vpop.f32.mrb[0].mxu0
      %v1542 = vadd.f32 %v1041, %v1541
      %v1543 = vpop.f32.mrb[0].mxu0
      %v1544 = vpop.f32.mrb[0].mxu0
      %v1545 = vadd.f32 %v1041, %v1544
      %v1546 = vpop.f32.mrb[0].mxu0
      %1547 = vdwg.mxu0
      %1548 = vmatprep.subr.bf16.mxu0 0
      %1549 = vmatpush1.bf16.msra.mxu0 %v1347
      %1550 = vmatprep.subr.bf16.mxu0 0
      %1551 = vmatpush1.bf16.msra.mxu0 %v1348
      %1552 = vmatprep.subr.bf16.mxu0 0
      %1553 = vmatpush1.bf16.msra.mxu0 %v1349
      %1554 = vmatprep.subr.bf16.mxu0 0
      %1555 = vmatpush1.bf16.msra.mxu0 %v1350
      %1556 = vmatprep.subr.bf16.mxu0 0
      %1557 = vmatpush1.bf16.msra.mxu0 %v1351
      %1558 = vmatprep.subr.bf16.mxu0 0
      %1559 = vmatpush1.bf16.msra.mxu0 %v1352
      %1560 = vmatprep.subr.bf16.mxu0 0
      %1561 = vmatpush1.bf16.msra.mxu0 %v1353
      %1562 = vmatprep.subr.bf16.mxu0 0
      %1563 = vmatpush1.bf16.msra.mxu0 %v1354
      %1564 = vmatprep.subr.bf16.mxu0 0
      %1565 = vmatpush1.bf16.msra.mxu0 %v1355
      %1566 = vmatprep.subr.bf16.mxu0 0
      %1567 = vmatpush1.bf16.msra.mxu0 %v1356
      %1568 = vmatprep.subr.bf16.mxu0 0
      %1569 = vmatpush1.bf16.msra.mxu0 %v1357
      %1570 = vmatprep.subr.bf16.mxu0 0
      %1571 = vmatpush1.bf16.msra.mxu0 %v1358
      %1572 = vmatprep.subr.bf16.mxu0 0
      %1573 = vmatpush1.bf16.msra.mxu0 %v1359
      %1574 = vmatprep.subr.bf16.mxu0 0
      %1575 = vmatpush1.bf16.msra.mxu0 %v1360
      %1576 = vmatprep.subr.bf16.mxu0 0
      %1577 = vmatpush1.bf16.msra.mxu0 %v1361
      %1578 = vmatprep.subr.bf16.mxu0 0
      %1579 = vmatpush1.bf16.msra.mxu0 %v1362
      %1580 = vmatprep.mubr.bf16.mxu0 %v850
      %1581 = vmatmul.mubr.bf16.gmra.mrb[0].mxu0 %v849
      %v1582 = vpop.f32.mrb[0].mxu0
      %v1583 = vadd.f32 %v1510, %v1582
      %v1584 = vpop.f32.mrb[0].mxu0
      %v1585 = vpop.f32.mrb[0].mxu0
      %v1586 = vadd.f32 %v1513, %v1585
      %v1587 = vpop.f32.mrb[0].mxu0
      %1588 = vmatprep.mubr.bf16.mxu0 %v859
      %1589 = vmatmul.mubr.bf16.gmra.mrb[0].mxu0 %v858
      %v1590 = vpop.f32.mrb[0].mxu0
      %v1591 = vadd.f32 %v1518, %v1590
      %v1592 = vpop.f32.mrb[0].mxu0
      %v1593 = vpop.f32.mrb[0].mxu0
      %v1594 = vadd.f32 %v1521, %v1593
      %v1595 = vpop.f32.mrb[0].mxu0
      %1596 = vmatprep.mubr.bf16.mxu0 %v868
      %1597 = vmatmul.mubr.bf16.gmra.mrb[0].mxu0 %v867
      %v1598 = vpop.f32.mrb[0].mxu0
      %v1599 = vadd.f32 %v1526, %v1598
      %v1600 = vpop.f32.mrb[0].mxu0
      %v1601 = vpop.f32.mrb[0].mxu0
      %v1602 = vadd.f32 %v1529, %v1601
      %v1603 = vpop.f32.mrb[0].mxu0
      %1604 = vmatprep.mubr.bf16.mxu0 %v877
      %1605 = vmatmul.mubr.bf16.gmra.mrb[0].mxu0 %v876
      %v1606 = vpop.f32.mrb[0].mxu0
      %v1607 = vadd.f32 %v1534, %v1606
      %v1608 = vpop.f32.mrb[0].mxu0
      %v1609 = vpop.f32.mrb[0].mxu0
      %v1610 = vadd.f32 %v1537, %v1609
      %v1611 = vpop.f32.mrb[0].mxu0
      %1612 = vmatprep.mubr.bf16.mxu0 %v886
      %1613 = vmatmul.mubr.bf16.gmra.mrb[0].mxu0 %v885
      %v1614 = vpop.f32.mrb[0].mxu0
      %v1615 = vadd.f32 %v1542, %v1614
      %v1616 = vpop.f32.mrb[0].mxu0
      %v1617 = vpop.f32.mrb[0].mxu0
      %v1618 = vadd.f32 %v1545, %v1617
      %v1619 = vpop.f32.mrb[0].mxu0
      %1620 = vdwg.mxu0
      %1621 = vmatprep.subr.bf16.mxu0 0
      %1622 = vmatpush1.bf16.msra.mxu0 %v1363
      %1623 = vmatprep.subr.bf16.mxu0 0
      %1624 = vmatpush1.bf16.msra.mxu0 %v1364
      %1625 = vmatprep.subr.bf16.mxu0 0
      %1626 = vmatpush1.bf16.msra.mxu0 %v1365
      %1627 = vmatprep.subr.bf16.mxu0 0
      %1628 = vmatpush1.bf16.msra.mxu0 %v1366
      %1629 = vmatprep.subr.bf16.mxu0 0
      %1630 = vmatpush1.bf16.msra.mxu0 %v1367
      %1631 = vmatprep.subr.bf16.mxu0 0
      %1632 = vmatpush1.bf16.msra.mxu0 %v1368
      %1633 = vmatprep.subr.bf16.mxu0 0
      %1634 = vmatpush1.bf16.msra.mxu0 %v1369
      %1635 = vmatprep.subr.bf16.mxu0 0
      %1636 = vmatpush1.bf16.msra.mxu0 %v1370
      %1637 = vmatprep.subr.bf16.mxu0 0
      %1638 = vmatpush1.bf16.msra.mxu0 %v1371
      %1639 = vmatprep.subr.bf16.mxu0 0
      %1640 = vmatpush1.bf16.msra.mxu0 %v1372
      %1641 = vmatprep.subr.bf16.mxu0 0
      %1642 = vmatpush1.bf16.msra.mxu0 %v1373
      %1643 = vmatprep.subr.bf16.mxu0 0
      %1644 = vmatpush1.bf16.msra.mxu0 %v1374
      %1645 = vmatprep.subr.bf16.mxu0 0
      %1646 = vmatpush1.bf16.msra.mxu0 %v1375
      %1647 = vmatprep.subr.bf16.mxu0 0
      %1648 = vmatpush1.bf16.msra.mxu0 %v1376
      %1649 = vmatprep.subr.bf16.mxu0 0
      %1650 = vmatpush1.bf16.msra.mxu0 %v1377
      %1651 = vmatprep.subr.bf16.mxu0 0
      %1652 = vmatpush1.bf16.msra.mxu0 %v1378
      %1653 = vmatprep.mubr.bf16.mxu0 %v852
      %1654 = vmatmul.mubr.bf16.gmra.mrb[0].mxu0 %v851
      %v1655 = vpop.f32.mrb[0].mxu0
      %v1656 = vadd.f32 %v1583, %v1655
      %v1657 = vpop.f32.mrb[0].mxu0
      %v1658 = vpop.f32.mrb[0].mxu0
      %v1659 = vadd.f32 %v1586, %v1658
      %v1660 = vpop.f32.mrb[0].mxu0
      %1661 = vmatprep.mubr.bf16.mxu0 %v861
      %1662 = vmatmul.mubr.bf16.gmra.mrb[0].mxu0 %v860
      %v1663 = vpop.f32.mrb[0].mxu0
      %v1664 = vadd.f32 %v1591, %v1663
      %v1665 = vpop.f32.mrb[0].mxu0
      %v1666 = vpop.f32.mrb[0].mxu0
      %v1667 = vadd.f32 %v1594, %v1666
      %v1668 = vpop.f32.mrb[0].mxu0
      %1669 = vmatprep.mubr.bf16.mxu0 %v870
      %1670 = vmatmul.mubr.bf16.gmra.mrb[0].mxu0 %v869
      %v1671 = vpop.f32.mrb[0].mxu0
      %v1672 = vadd.f32 %v1599, %v1671
      %v1673 = vpop.f32.mrb[0].mxu0
      %v1674 = vpop.f32.mrb[0].mxu0
      %v1675 = vadd.f32 %v1602, %v1674
      %v1676 = vpop.f32.mrb[0].mxu0
      %1677 = vmatprep.mubr.bf16.mxu0 %v879
      %1678 = vmatmul.mubr.bf16.gmra.mrb[0].mxu0 %v878
      %v1679 = vpop.f32.mrb[0].mxu0
      %v1680 = vadd.f32 %v1607, %v1679
      %v1681 = vpop.f32.mrb[0].mxu0
      %v1682 = vpop.f32.mrb[0].mxu0
      %v1683 = vadd.f32 %v1610, %v1682
      %v1684 = vpop.f32.mrb[0].mxu0
      %1685 = vmatprep.mubr.bf16.mxu0 %v888
      %1686 = vmatmul.mubr.bf16.gmra.mrb[0].mxu0 %v887
      %v1687 = vpop.f32.mrb[0].mxu0
      %v1688 = vadd.f32 %v1615, %v1687
      %v1689 = vpop.f32.mrb[0].mxu0
      %v1690 = vpop.f32.mrb[0].mxu0
      %v1691 = vadd.f32 %v1618, %v1690
      %v1692 = vpop.f32.mrb[0].mxu0
      %1693 = vdwg.mxu0
      %1694 = vmatprep.subr.bf16.mxu0 0
      %1695 = vmatpush1.bf16.msra.mxu0 %v1379
      %1696 = vmatprep.subr.bf16.mxu0 0
      %1697 = vmatpush1.bf16.msra.mxu0 %v1380
      %1698 = vmatprep.subr.bf16.mxu0 0
      %1699 = vmatpush1.bf16.msra.mxu0 %v1381
      %1700 = vmatprep.subr.bf16.mxu0 0
      %1701 = vmatpush1.bf16.msra.mxu0 %v1382
      %1702 = vmatprep.subr.bf16.mxu0 0
      %1703 = vmatpush1.bf16.msra.mxu0 %v1383
      %1704 = vmatprep.subr.bf16.mxu0 0
      %1705 = vmatpush1.bf16.msra.mxu0 %v1384
      %1706 = vmatprep.subr.bf16.mxu0 0
      %1707 = vmatpush1.bf16.msra.mxu0 %v1385
      %1708 = vmatprep.subr.bf16.mxu0 0
      %1709 = vmatpush1.bf16.msra.mxu0 %v1386
      %1710 = vmatprep.subr.bf16.mxu0 0
      %1711 = vmatpush1.bf16.msra.mxu0 %v1387
      %1712 = vmatprep.subr.bf16.mxu0 0
      %1713 = vmatpush1.bf16.msra.mxu0 %v1388
      %1714 = vmatprep.subr.bf16.mxu0 0
      %1715 = vmatpush1.bf16.msra.mxu0 %v1389
      %1716 = vmatprep.subr.bf16.mxu0 0
      %1717 = vmatpush1.bf16.msra.mxu0 %v1390
      %1718 = vmatprep.subr.bf16.mxu0 0
      %1719 = vmatpush1.bf16.msra.mxu0 %v1391
      %1720 = vmatprep.subr.bf16.mxu0 0
      %1721 = vmatpush1.bf16.msra.mxu0 %v1392
      %1722 = vmatprep.subr.bf16.mxu0 0
      %1723 = vmatpush1.bf16.msra.mxu0 %v1393
      %1724 = vmatprep.subr.bf16.mxu0 0
      %1725 = vmatpush1.bf16.msra.mxu0 %v1394
      %1726 = vmatprep.mubr.bf16.mxu0 %v854
      %1727 = vmatmul.mubr.bf16.gmra.mrb[0].mxu0 %v853
      %v1728 = vpop.f32.mrb[0].mxu0
      %v1729 = vadd.f32 %v1656, %v1728
      %v1730 = vpop.f32.mrb[0].mxu0
      %v1731 = vpop.f32.mrb[0].mxu0
      %v1732 = vadd.f32 %v1659, %v1731
      %v1733 = vpop.f32.mrb[0].mxu0
      %1734 = vmatprep.mubr.bf16.mxu0 %v863
      %1735 = vmatmul.mubr.bf16.gmra.mrb[0].mxu0 %v862
      %v1736 = vpop.f32.mrb[0].mxu0
      %v1737 = vadd.f32 %v1664, %v1736
      %v1738 = vpop.f32.mrb[0].mxu0
      %v1739 = vpop.f32.mrb[0].mxu0
      %v1740 = vadd.f32 %v1667, %v1739
      %v1741 = vpop.f32.mrb[0].mxu0
      %1742 = vmatprep.mubr.bf16.mxu0 %v872
      %1743 = vmatmul.mubr.bf16.gmra.mrb[0].mxu0 %v871
      %v1744 = vpop.f32.mrb[0].mxu0
      %v1745 = vadd.f32 %v1672, %v1744
      %v1746 = vpop.f32.mrb[0].mxu0
      %v1747 = vpop.f32.mrb[0].mxu0
      %v1748 = vadd.f32 %v1675, %v1747
      %v1749 = vpop.f32.mrb[0].mxu0
      %1750 = vmatprep.mubr.bf16.mxu0 %v881
      %1751 = vmatmul.mubr.bf16.gmra.mrb[0].mxu0 %v880
      %v1752 = vpop.f32.mrb[0].mxu0
      %v1753 = vadd.f32 %v1680, %v1752
      %v1754 = vpop.f32.mrb[0].mxu0
      %v1755 = vpop.f32.mrb[0].mxu0
      %v1756 = vadd.f32 %v1683, %v1755
      %v1757 = vpop.f32.mrb[0].mxu0
      %1758 = vmatprep.mubr.bf16.mxu0 %v890
      %1759 = vmatmul.mubr.bf16.gmra.mrb[0].mxu0 %v889
      %v1760 = vpop.f32.mrb[0].mxu0
      %v1761 = vadd.f32 %v1688, %v1760
      %v1762 = vpop.f32.mrb[0].mxu0
      %v1763 = vpop.f32.mrb[0].mxu0
      %v1764 = vadd.f32 %v1691, %v1763
      %v1765 = vpop.f32.mrb[0].mxu0
      %1766 = vdwg.mxu0
      %1767 = vmatprep.subr.bf16.mxu0 0
      %1768 = vmatpush1.bf16.msra.mxu0 %v1395
      %1769 = vmatprep.subr.bf16.mxu0 0
      %1770 = vmatpush1.bf16.msra.mxu0 %v1396
      %1771 = vmatprep.subr.bf16.mxu0 0
      %1772 = vmatpush1.bf16.msra.mxu0 %v1397
      %1773 = vmatprep.subr.bf16.mxu0 0
      %1774 = vmatpush1.bf16.msra.mxu0 %v1398
      %1775 = vmatprep.subr.bf16.mxu0 0
      %1776 = vmatpush1.bf16.msra.mxu0 %v1399
      %1777 = vmatprep.subr.bf16.mxu0 0
      %1778 = vmatpush1.bf16.msra.mxu0 %v1400
      %1779 = vmatprep.subr.bf16.mxu0 0
      %1780 = vmatpush1.bf16.msra.mxu0 %v1401
      %1781 = vmatprep.subr.bf16.mxu0 0
      %1782 = vmatpush1.bf16.msra.mxu0 %v1402
      %1783 = vmatprep.subr.bf16.mxu0 0
      %1784 = vmatpush1.bf16.msra.mxu0 0
      %1785 = vmatprep.subr.bf16.mxu0 0
      %1786 = vmatpush1.bf16.msra.mxu0 0
      %1787 = vmatprep.subr.bf16.mxu0 0
      %1788 = vmatpush1.bf16.msra.mxu0 0
      %1789 = vmatprep.subr.bf16.mxu0 0
      %1790 = vmatpush1.bf16.msra.mxu0 0
      %1791 = vmatprep.subr.bf16.mxu0 0
      %1792 = vmatpush1.bf16.msra.mxu0 0
      %1793 = vmatprep.subr.bf16.mxu0 0
      %1794 = vmatpush1.bf16.msra.mxu0 0
      %1795 = vmatprep.subr.bf16.mxu0 0
      %1796 = vmatpush1.bf16.msra.mxu0 0
      %1797 = vmatprep.subr.bf16.mxu0 0
      %1798 = vmatpush1.bf16.msra.mxu0 0
      %1799 = vmatprep.mubr.bf16.mxu0 0
      %1800 = vmatmul.mubr.bf16.gmra.mrb[0].mxu0 %v855
      %v1801 = vpop.f32.mrb[0].mxu0
      %v1802 = vadd.f32 %v1729, %v1801
      %v1803 = vpop.f32.mrb[0].mxu0
      %v1804 = vpop.f32.mrb[0].mxu0
      %v1805 = vadd.f32 %v1732, %v1804
      %v1806 = vpop.f32.mrb[0].mxu0
      %1807 = vmatprep.mubr.bf16.mxu0 0
      %1808 = vmatmul.mubr.bf16.gmra.mrb[0].mxu0 %v864
      %v1809 = vpop.f32.mrb[0].mxu0
      %v1810 = vadd.f32 %v1737, %v1809
      %v1811 = vpop.f32.mrb[0].mxu0
      %v1812 = vpop.f32.mrb[0].mxu0
      %v1813 = vadd.f32 %v1740, %v1812
      %v1814 = vpop.f32.mrb[0].mxu0
      %1815 = vmatprep.mubr.bf16.mxu0 0
      %1816 = vmatmul.mubr.bf16.gmra.mrb[0].mxu0 %v873
      %v1817 = vpop.f32.mrb[0].mxu0
      %v1818 = vadd.f32 %v1745, %v1817
      %v1819 = vpop.f32.mrb[0].mxu0
      %v1820 = vpop.f32.mrb[0].mxu0
      %v1821 = vadd.f32 %v1748, %v1820
      %v1822 = vpop.f32.mrb[0].mxu0
      %1823 = vmatprep.mubr.bf16.mxu0 0
      %1824 = vmatmul.mubr.bf16.gmra.mrb[0].mxu0 %v882
      %v1825 = vpop.f32.mrb[0].mxu0
      %v1826 = vadd.f32 %v1753, %v1825
      %v1827 = vpop.f32.mrb[0].mxu0
      %v1828 = vpop.f32.mrb[0].mxu0
      %v1829 = vadd.f32 %v1756, %v1828
      %v1830 = vpop.f32.mrb[0].mxu0
      %1831 = vmatprep.mubr.bf16.mxu0 0
      %1832 = vmatmul.mubr.bf16.gmra.mrb[0].mxu0 %v891
      %v1833 = vpop.f32.mrb[0].mxu0
      %v1834 = vadd.f32 %v1761, %v1833
      %v1835 = vpop.f32.mrb[0].mxu0
      %v1836 = vpop.f32.mrb[0].mxu0
      %v1837 = vadd.f32 %v1764, %v1836
      %v1838 = vpop.f32.mrb[0].mxu0
      %1839 = vdwg.mxu0
      %v1840 = vmax.f32 %v1802, 0.0
      %v1841 = vmax.f32 %v1805, 0.0
      %v1842 = vmax.f32 %v1810, 0.0
      %v1843 = vmax.f32 %v1813, 0.0
      %v1844 = vmax.f32 %v1818, 0.0
      %v1845 = vmax.f32 %v1821, 0.0
      %v1846 = vmax.f32 %v1826, 0.0
      %v1847 = vmax.f32 %v1829, 0.0
      %v1848 = vmax.f32 %v1834, 0.0
      %v1849 = vmax.f32 %v1837, 0.0
      %v1850 = vpack.c.bf16 %v1841, %v1840
      %v1851 = vpack.c.bf16 %v1843, %v1842
      %v1852 = vpack.c.bf16 %v1845, %v1844
      %v1853 = vpack.c.bf16 %v1847, %v1846
      %v1854 = vpack.c.bf16 %v1849, %v1848
      %1855 = vst [vmem:[#allocation3] sm:$0xff] %v1850
      %1856 = vst [vmem:[#allocation3 + $0x8] sm:$0xff] %v1851
      %1857 = vst [vmem:[#allocation3 + $0x10] sm:$0xff] %v1852
      %1858 = vst [vmem:[#allocation3 + $0x18] sm:$0xff] %v1853
      %1859 = vst [vmem:[#allocation3 + $0x20] sm:$0xff] %v1854
      %1860 = vst [vmem:[#allocation3 + $0x28] sm:$0xff] 0
      %v1861 = vld [vmem:[#allocation3] sm:$0xff]
      %v1862 = vld [vmem:[#allocation3 + $0x8] sm:$0xff]
      %v1863 = vld [vmem:[#allocation3 + $0x10] sm:$0xff]
      %v1864 = vld [vmem:[#allocation3 + $0x18] sm:$0xff]
      %v1865 = vld [vmem:[#allocation3 + $0x20] sm:$0xff]
      %v1866 = vld [vmem:[#allocation3] sm:$0xff]
      %v1867 = vld [vmem:[#allocation3 + $0x8] sm:$0xff]
      %v1868 = vld [vmem:[#allocation3 + $0x10] sm:$0xff]
      %v1869 = vld [vmem:[#allocation3 + $0x18] sm:$0xff]
      %v1870 = vld [vmem:[#allocation3 + $0x20] sm:$0xff]
      %v1871 = vld [vmem:[#allocation3 + $0x28] sm:$0x1]
      %v1873 = vshrl.u32 %v1866, 16
      %v1875 = vshll.u32 %v1866, 16
      %v1877 = vrot.slane %v1875, 1
      %v1878 = vor.u32 %v1873, %v1877
      %v1880 = vshll.u32 %v1867, 16
      %v1882 = vrot.slane %v1880, 1
      %v1883 = vsel %vm283, %v1878, %v1882
      %v1884 = vshrl.u32 %v1867, 16
      %v1886 = vor.u32 %v1884, %v1882
      %v1888 = vshll.u32 %v1868, 16
      %v1890 = vrot.slane %v1888, 1
      %v1891 = vsel %vm283, %v1886, %v1890
      %v1892 = vshrl.u32 %v1868, 16
      %v1894 = vor.u32 %v1892, %v1890
      %v1896 = vshll.u32 %v1869, 16
      %v1898 = vrot.slane %v1896, 1
      %v1899 = vsel %vm283, %v1894, %v1898
      %v1900 = vshrl.u32 %v1869, 16
      %v1902 = vor.u32 %v1900, %v1898
      %v1904 = vshll.u32 %v1870, 16
      %v1906 = vrot.slane %v1904, 1
      %v1907 = vsel %vm283, %v1902, %v1906
      %v1908 = vshrl.u32 %v1870, 16
      %v1910 = vor.u32 %v1908, %v1906
      %v1912 = vshll.u32 %v1871, 16
      %v1914 = vrot.slane %v1912, 1
      %v1915 = vsel %vm283, %v1910, %v1914
      %v1921 = vmax.bf16 %v1861, %v1883
      %v1922 = vmax.bf16 %v1862, %v1891
      %v1923 = vmax.bf16 %v1863, %v1899
      %v1924 = vmax.bf16 %v1864, %v1907
      %v1925 = vmax.bf16 %v1865, %v1915
      %v1926 = vld [vmem:[#allocation3] sm:$0xe0]
      %v1927 = vld [vmem:[#allocation3 + $0x28] sm:$0x1f]
      %v1928 = vld [vmem:[#allocation3 + $0x28] sm:$0x3f]
      %v1930 = vshrl.u32 %v1926, 16
      %v1932 = vshll.u32 %v1926, 16
      %v1934 = vrot.slane %v1932, 1
      %v1935 = vor.u32 %v1930, %v1934
      %v1936 = vsel %vm283, %v1935, %v1882
      %v1938 = vshll.u32 %v1928, 16
      %v1940 = vrot.slane %v1938, 1
      %v1941 = vsel %vm283, %v1910, %v1940
      %v1942 = vshrl.u32 %v1928, 16
      %v1944 = vor.u32 %v1942, %v1940
      %v1948 = vmax.bf16 %v1926, %v1936
      %v1949 = vmax.bf16 %v1867, %v1891
      %v1950 = vmax.bf16 %v1868, %v1899
      %v1951 = vmax.bf16 %v1869, %v1907
      %v1952 = vmax.bf16 %v1870, %v1941
      %v1953 = vmax.bf16 %v1927, %v1944
      %vm1960 = vcmask 1042432
      %v1961 = vrot.slane %v1948, 5
      %v1962 = vrot.slane %v1949, 5
      %v1963 = vsel %vm1960, %v1961, %v1962
      %v1964 = vrot.slane %v1950, 5
      %v1965 = vsel %vm1960, %v1962, %v1964
      %v1966 = vrot.slane %v1951, 5
      %v1967 = vsel %vm1960, %v1964, %v1966
      %v1968 = vrot.slane %v1952, 5
      %v1969 = vsel %vm1960, %v1966, %v1968
      %v1970 = vrot.slane %v1953, 5
      %v1971 = vsel %vm1960, %v1968, %v1970
      %v1977 = vmax.bf16 %v1921, %v1963
      %v1978 = vmax.bf16 %v1922, %v1965
      %v1979 = vmax.bf16 %v1923, %v1967
      %v1980 = vmax.bf16 %v1924, %v1969
      %v1981 = vmax.bf16 %v1925, %v1971
      %v1982 = vld [vmem:[%s3] sm:$0xf]
      %v1983 = vld [vmem:[%s3 + $0x4] sm:$0xf]
      %v1984 = vld [vmem:[%s3 + $0x8] sm:$0xf]
      %v1985 = vld [vmem:[%s3 + $0xc] sm:$0xf]
      %v1986 = vld [vmem:[%s3 + $0x10] sm:$0xf]
      %v1992 = vunpack.c.l.b16 %v1982
      %v1993 = vunpack.c.l.b16 %v1983
      %v1994 = vunpack.c.l.b16 %v1984
      %v1995 = vunpack.c.l.b16 %v1985
      %v1996 = vunpack.c.l.b16 %v1986
      %v1997 = vpack.c.b16 %v1993, %v1992
      %v1998 = vpack.c.b16 %v1995, %v1994
      %v1999 = vpack.c.b16 %v1996, %v1996
      %vm2000 = vcmask 654336
      %v2002 = vsel %vm2000, %v1997, 0
      %v2005 = vsel %vm2000, %v1998, 0
      %v2008 = vsel %vm2000, %v1999, 0
      %2010 = vmatprep.subr.bf16.mxu0 0
      %2011 = vmatpush1.bf16.msra.mxu0 %v1977
      %2012 = vmatprep.subr.bf16.mxu0 0
      %2013 = vmatpush1.bf16.msra.mxu0 %v1978
      %2014 = vmatprep.subr.bf16.mxu0 0
      %2015 = vmatpush1.bf16.msra.mxu0 %v1979
      %2016 = vmatprep.subr.bf16.mxu0 0
      %2017 = vmatpush1.bf16.msra.mxu0 %v1980
      %2018 = vmatprep.subr.bf16.mxu0 0
      %2019 = vmatpush1.bf16.msra.mxu0 %v1981
      %2020 = vmatprep.subr.bf16.mxu0 0
      %2021 = vmatpush1.bf16.msra.mxu0 0
      %2022 = vmatprep.subr.bf16.mxu0 0
      %2023 = vmatpush1.bf16.msra.mxu0 0
      %2024 = vmatprep.subr.bf16.mxu0 0
      %2025 = vmatpush1.bf16.msra.mxu0 0
      %2026 = vmatprep.subr.bf16.mxu0 0
      %2027 = vmatpush1.bf16.msra.mxu0 0
      %2028 = vmatprep.subr.bf16.mxu0 0
      %2029 = vmatpush1.bf16.msra.mxu0 0
      %2030 = vmatprep.subr.bf16.mxu0 0
      %2031 = vmatpush1.bf16.msra.mxu0 0
      %2032 = vmatprep.subr.bf16.mxu0 0
      %2033 = vmatpush1.bf16.msra.mxu0 0
      %2034 = vmatprep.subr.bf16.mxu0 0
      %2035 = vmatpush1.bf16.msra.mxu0 0
      %2036 = vmatprep.subr.bf16.mxu0 0
      %2037 = vmatpush1.bf16.msra.mxu0 0
      %2038 = vmatprep.subr.bf16.mxu0 0
      %2039 = vmatpush1.bf16.msra.mxu0 0
      %2040 = vmatprep.subr.bf16.mxu0 0
      %2041 = vmatpush1.bf16.msra.mxu0 0
      %2042 = vmatprep.mubr.bf16.mxu0 0
      %2043 = vmatmul.mubr.bf16.gmra.mrb[0].mxu0 %v2002
      %v2044 = vpop.f32.mrb[0].mxu0
      %v2045 = vadd.f32 0.0, %v2044
      %v2046 = vpop.f32.mrb[0].mxu0
      %v2047 = vpop.f32.mrb[0].mxu0
      %v2048 = vadd.f32 0.0, %v2047
      %v2049 = vpop.f32.mrb[0].mxu0
      %2050 = vmatprep.mubr.bf16.mxu0 0
      %2051 = vmatmul.mubr.bf16.gmra.mrb[0].mxu0 %v2005
      %v2052 = vpop.f32.mrb[0].mxu0
      %v2053 = vadd.f32 0.0, %v2052
      %v2054 = vpop.f32.mrb[0].mxu0
      %v2055 = vpop.f32.mrb[0].mxu0
      %v2056 = vadd.f32 0.0, %v2055
      %v2057 = vpop.f32.mrb[0].mxu0
      %2058 = vmatprep.mubr.bf16.mxu0 0
      %2059 = vmatmul.mubr.bf16.gmra.mrb[0].mxu0 %v2008
      %v2060 = vpop.f32.mrb[0].mxu0
      %v2061 = vadd.f32 0.0, %v2060
      %v2062 = vpop.f32.mrb[0].mxu0
      %v2063 = vpop.f32.mrb[0].mxu0
      %v2064 = vpop.f32.mrb[0].mxu0
      %2065 = vdwg.mxu0
      %v2066 = vpack.c.bf16 %v2048, %v2045
      %v2067 = vpack.c.bf16 %v2056, %v2053
      %v2068 = vpack.c.bf16 %v2061, %v2061
      %v2072 = vunpack.c.l.b16 %v2066
      %v2073 = vunpack.c.h.b16 %v2066
      %v2074 = vunpack.c.l.b16 %v2067
      %v2075 = vunpack.c.h.b16 %v2067
      %v2076 = vunpack.c.l.b16 %v2068
      %v2077 = vpack.c.b16 %v2072, %v2072
      %v2078 = vpack.c.b16 %v2073, %v2073
      %v2079 = vpack.c.b16 %v2074, %v2074
      %v2080 = vpack.c.b16 %v2075, %v2075
      %v2081 = vpack.c.b16 %v2076, %v2076
      %2087 = vst [vmem:[%s197] sm:$0xf] %v2077
      %2088 = vst [vmem:[%s197 + $0x4] sm:$0xf] %v2078
      %2089 = vst [vmem:[%s197 + $0x8] sm:$0xf] %v2079
      %2090 = vst [vmem:[%s197 + $0xc] sm:$0xf] %v2080
      %2091 = vst [vmem:[%s197 + $0x10] sm:$0xf] %v2081
      %p2092 = scmp.lt.s32.totalorder %s15, 1
      %s2093 = scalar_select %p2092, %s15, 1
      %s2094 = smul.addr %s2093, 5
      %s2095 = smul.addr %s2094, 4
      %s2096 = scalar_lea.vmem %s4, %s2095
      // Predicated region
      $region37: #{_lambda_.4} parent=35 // pred_check
        %p2097 = pneg %p122
      $region38: #{_lambda_.4} parent=35 // pred_check_branch
        %2099 = sbr.rel (%p2097) target = $region40
      $region39: #{_lambda_.4} parent=35 // pred_region
        _
      $region40: #{_lambda_.4} parent=35 // pred_fallthru
        _
    $region36: #{_lambda_.4} parent=5 // pred_fallthru
      _
    %p2100 = scmp.le.s32.totalorder 2, %s10
    // Predicated region
    $region41: #{_lambda_.4} parent=5 // pred_check
      %p2101 = pneg %p2100
    $region42: #{_lambda_.4} parent=5 // pred_check_branch
      %2103 = sbr.rel (%p2101) target = $region44
    $region43: #{_lambda_.4} parent=5 // pred_region
      %s2104 = ssub.s32 %s10, 2
      // Predicated region
      $region45: #{_lambda_.4} parent=43 // pred_check
        %p2105 = pneg %p128
      $region46: #{_lambda_.4} parent=43 // pred_check_branch
        %2107 = sbr.rel (%p2105) target = $region48
      $region47: #{_lambda_.4} parent=43 // pred_region
        %p2108 = scmp.lt.s32.totalorder %s16, 1
        %s2109 = scalar_select %p2108, %s16, 1
        %s2110 = smul.addr %s2109, 5
        %s2111 = smul.addr %s2110, 4
        %s2112 = scalar_lea.vmem %s4, %s2111
      $region48: #{_lambda_.4} parent=43 // pred_fallthru
        _
    $region44: #{_lambda_.4} parent=5 // pred_fallthru
      _
  $region6: #{_lambda_.4} parent=0 // loop_footer
    %s14 = sadd.s32 1, %s10
  $region7: #{_lambda_.4} parent=0 // loop_footer_branch
    %9 = sbr.rel target = $region3
  $region8: #{_lambda_.4} parent=0 // loop_exit
    _

// kernel: _lambda_.5
$region0: #{_lambda_.5}
  #allocation0 [shape = 'u32[]', space=smem, size = 0x4, offset = 0x4, fixed_abs, tag = 'smem constant byte address 0x4 - core index']
  #allocation1 [shape = 'u32[144,128]{1,0:T(1,128)}', space=vmem, size = 0x12000, scoped, tag = 'internal scratch']
  %s0 = inlined_call_operand.vmem [shape: bf16[8,5120], index: 0, kind: input, shape index: {}]
  %s1 = inlined_call_operand.vmem [shape: bf16[5120,128], index: 1, kind: input, shape index: {}]
  %s2 = inlined_call_operand.vmem [shape: f32[1,128], index: 2, kind: input, shape index: {}, may-alias: {2,4,6}]
  %s3 = inlined_call_operand.vmem [shape: bf16[128,128], index: 3, kind: input, shape index: {}]
  %s4 = inlined_call_operand.vmem [shape: f32[1,128], index: 4, kind: input, shape index: {}, may-alias: {2,4,6}]
  %s5 = inlined_call_operand.vmem [shape: bf16[128,128], index: 5, kind: input, shape index: {}]
  %s6 = inlined_call_operand.vmem [shape: f32[1,128], index: 6, kind: input, shape index: {}, may-alias: {2,4,6}]
  %s7 = inlined_call_operand.vmem [shape: f32[8,128], index: 7, kind: output, shape index: {}]
  %s8 = sld [smem:[#allocation0]]
  $region38: #{_lambda_.5} parent=0
    _
  %s10 = ssub.s32 1, %s8
  %s11 = scalar_select 0, %s10, %s8
  // Predicated region
  $region2: #{_lambda_.5} parent=0 // pred_check
    _
  $region3: #{_lambda_.5} parent=0 // pred_check_branch
    %13 = sbr.rel (0) target = $region5
  $region4: #{_lambda_.5} parent=0 // pred_region
    _
  $region5: #{_lambda_.5} parent=0 // pred_fallthru
    _
  // Predicated region
  $region6: #{_lambda_.5} parent=0 // pred_check
    _
  $region7: #{_lambda_.5} parent=0 // pred_check_branch
    %15 = sbr.rel (0) target = $region9
  $region8: #{_lambda_.5} parent=0 // pred_region
    _
  $region9: #{_lambda_.5} parent=0 // pred_fallthru
    _
  // Predicated region
  $region10: #{_lambda_.5} parent=0 // pred_check
    _
  $region11: #{_lambda_.5} parent=0 // pred_check_branch
    %17 = sbr.rel (0) target = $region13
  $region12: #{_lambda_.5} parent=0 // pred_region
    _
  $region13: #{_lambda_.5} parent=0 // pred_fallthru
    _
  // Predicated region
  $region14: #{_lambda_.5} parent=0 // pred_check
    _
  $region15: #{_lambda_.5} parent=0 // pred_check_branch
    %19 = sbr.rel (0) target = $region17
  $region16: #{_lambda_.5} parent=0 // pred_region
    _
  $region17: #{_lambda_.5} parent=0 // pred_fallthru
    _
  // Predicated region
  $region18: #{_lambda_.5} parent=0 // pred_check
    _
  $region19: #{_lambda_.5} parent=0 // pred_check_branch
    %21 = sbr.rel (0) target = $region21
  $region20: #{_lambda_.5} parent=0 // pred_region
    _
  $region21: #{_lambda_.5} parent=0 // pred_fallthru
    _
  // Predicated region
  $region22: #{_lambda_.5} parent=0 // pred_check
    _
  $region23: #{_lambda_.5} parent=0 // pred_check_branch
    %23 = sbr.rel (0) target = $region25
  $region24: #{_lambda_.5} parent=0 // pred_region
    _
  $region25: #{_lambda_.5} parent=0 // pred_fallthru
    _
  // Predicated region
  $region26: #{_lambda_.5} parent=0 // pred_check
    _
  $region27: #{_lambda_.5} parent=0 // pred_check_branch
    %25 = sbr.rel (0) target = $region29
  $region28: #{_lambda_.5} parent=0 // pred_region
    _
  $region29: #{_lambda_.5} parent=0 // pred_fallthru
    _
  %v27 = vld [vmem:[%s0] sm:$0xff]
  %v28 = vld [vmem:[%s0 + $0x8] sm:$0xff]
  %v29 = vld [vmem:[%s0 + $0x10] sm:$0xff]
  %v30 = vld [vmem:[%s0 + $0x18] sm:$0xff]
  %v31 = vld [vmem:[%s0 + $0x20] sm:$0xff]
  %v32 = vld [vmem:[%s0 + $0x28] sm:$0xff]
  %v33 = vld [vmem:[%s0 + $0x30] sm:$0xff]
  %v34 = vld [vmem:[%s0 + $0x38] sm:$0xff]
  %v35 = vld [vmem:[%s0 + $0x40] sm:$0xff]
  %v36 = vld [vmem:[%s0 + $0x48] sm:$0xff]
  %v37 = vld [vmem:[%s0 + $0x50] sm:$0xff]
  %v38 = vld [vmem:[%s0 + $0x58] sm:$0xff]
  %v39 = vld [vmem:[%s0 + $0x60] sm:$0xff]
  %v40 = vld [vmem:[%s0 + $0x68] sm:$0xff]
  %v41 = vld [vmem:[%s0 + $0x70] sm:$0xff]
  %v42 = vld [vmem:[%s0 + $0x78] sm:$0xff]
  %v43 = vld [vmem:[%s0 + $0x80] sm:$0xff]
  %v44 = vld [vmem:[%s0 + $0x88] sm:$0xff]
  %v45 = vld [vmem:[%s0 + $0x90] sm:$0xff]
  %v46 = vld [vmem:[%s0 + $0x98] sm:$0xff]
  %v47 = vld [vmem:[%s1] sm:$0xf]
  %v48 = vld [vmem:[%s1 + $0x4] sm:$0xf]
  %v49 = vld [vmem:[%s1 + $0x8] sm:$0xf]
  %v50 = vld [vmem:[%s1 + $0xc] sm:$0xf]
  %v51 = vld [vmem:[%s1 + $0x10] sm:$0xf]
  %v52 = vld [vmem:[%s1 + $0x14] sm:$0xf]
  %v53 = vld [vmem:[%s1 + $0x18] sm:$0xf]
  %v54 = vld [vmem:[%s1 + $0x1c] sm:$0xf]
  %v55 = vld [vmem:[%s1 + $0x20] sm:$0xf]
  %v56 = vld [vmem:[%s1 + $0x24] sm:$0xf]
  %v57 = vld [vmem:[%s1 + $0x28] sm:$0xf]
  %v58 = vld [vmem:[%s1 + $0x2c] sm:$0xf]
  %v59 = vld [vmem:[%s1 + $0x30] sm:$0xf]
  %v60 = vld [vmem:[%s1 + $0x34] sm:$0xf]
  %v61 = vld [vmem:[%s1 + $0x38] sm:$0xf]
  %v62 = vld [vmem:[%s1 + $0x3c] sm:$0xf]
  %v63 = vld [vmem:[%s1 + $0x40] sm:$0xf]
  %v64 = vld [vmem:[%s1 + $0x44] sm:$0xf]
  %v65 = vld [vmem:[%s1 + $0x48] sm:$0xf]
  %v66 = vld [vmem:[%s1 + $0x4c] sm:$0xf]
  %v67 = vld [vmem:[%s1 + $0x50] sm:$0xf]
  %v68 = vld [vmem:[%s1 + $0x54] sm:$0xf]
  %v69 = vld [vmem:[%s1 + $0x58] sm:$0xf]
  %v70 = vld [vmem:[%s1 + $0x5c] sm:$0xf]
  %v71 = vld [vmem:[%s1 + $0x60] sm:$0xf]
  %v72 = vld [vmem:[%s1 + $0x64] sm:$0xf]
  %v73 = vld [vmem:[%s1 + $0x68] sm:$0xf]
  %v74 = vld [vmem:[%s1 + $0x6c] sm:$0xf]
  %v75 = vld [vmem:[%s1 + $0x70] sm:$0xf]
  %v76 = vld [vmem:[%s1 + $0x74] sm:$0xf]
  %v77 = vld [vmem:[%s1 + $0x78] sm:$0xf]
  %v78 = vld [vmem:[%s1 + $0x7c] sm:$0xf]
  %v79 = vld [vmem:[%s1 + $0x80] sm:$0xf]
  %v80 = vld [vmem:[%s1 + $0x84] sm:$0xf]
  %v81 = vld [vmem:[%s1 + $0x88] sm:$0xf]
  %v82 = vld [vmem:[%s1 + $0x8c] sm:$0xf]
  %v83 = vld [vmem:[%s1 + $0x90] sm:$0xf]
  %v84 = vld [vmem:[%s1 + $0x94] sm:$0xf]
  %v85 = vld [vmem:[%s1 + $0x98] sm:$0xf]
  %v86 = vld [vmem:[%s1 + $0x9c] sm:$0xf]
  %v87 = vld [vmem:[%s1 + $0xa0] sm:$0xf]
  %v88 = vld [vmem:[%s1 + $0xa4] sm:$0xf]
  %v89 = vld [vmem:[%s1 + $0xa8] sm:$0xf]
  %v90 = vld [vmem:[%s1 + $0xac] sm:$0xf]
  %v91 = vld [vmem:[%s1 + $0xb0] sm:$0xf]
  %v92 = vld [vmem:[%s1 + $0xb4] sm:$0xf]
  %v93 = vld [vmem:[%s1 + $0xb8] sm:$0xf]
  %v94 = vld [vmem:[%s1 + $0xbc] sm:$0xf]
  %v95 = vld [vmem:[%s1 + $0xc0] sm:$0xf]
  %v96 = vld [vmem:[%s1 + $0xc4] sm:$0xf]
  %v97 = vld [vmem:[%s1 + $0xc8] sm:$0xf]
  %v98 = vld [vmem:[%s1 + $0xcc] sm:$0xf]
  %v99 = vld [vmem:[%s1 + $0xd0] sm:$0xf]
  %v100 = vld [vmem:[%s1 + $0xd4] sm:$0xf]
  %v101 = vld [vmem:[%s1 + $0xd8] sm:$0xf]
  %v102 = vld [vmem:[%s1 + $0xdc] sm:$0xf]
  %v103 = vld [vmem:[%s1 + $0xe0] sm:$0xf]
  %v104 = vld [vmem:[%s1 + $0xe4] sm:$0xf]
  %v105 = vld [vmem:[%s1 + $0xe8] sm:$0xf]
  %v106 = vld [vmem:[%s1 + $0xec] sm:$0xf]
  %v107 = vld [vmem:[%s1 + $0xf0] sm:$0xf]
  %v108 = vld [vmem:[%s1 + $0xf4] sm:$0xf]
  %v109 = vld [vmem:[%s1 + $0xf8] sm:$0xf]
  %v110 = vld [vmem:[%s1 + $0xfc] sm:$0xf]
  %v111 = vld [vmem:[%s1 + $0x100] sm:$0xf]
  %v112 = vld [vmem:[%s1 + $0x104] sm:$0xf]
  %v113 = vld [vmem:[%s1 + $0x108] sm:$0xf]
  %v114 = vld [vmem:[%s1 + $0x10c] sm:$0xf]
  %v115 = vld [vmem:[%s1 + $0x110] sm:$0xf]
  %v116 = vld [vmem:[%s1 + $0x114] sm:$0xf]
  %v117 = vld [vmem:[%s1 + $0x118] sm:$0xf]
  %v118 = vld [vmem:[%s1 + $0x11c] sm:$0xf]
  %v119 = vld [vmem:[%s1 + $0x120] sm:$0xf]
  %v120 = vld [vmem:[%s1 + $0x124] sm:$0xf]
  %v121 = vld [vmem:[%s1 + $0x128] sm:$0xf]
  %v122 = vld [vmem:[%s1 + $0x12c] sm:$0xf]
  %v123 = vld [vmem:[%s1 + $0x130] sm:$0xf]
  %v124 = vld [vmem:[%s1 + $0x134] sm:$0xf]
  %v125 = vld [vmem:[%s1 + $0x138] sm:$0xf]
  %v126 = vld [vmem:[%s1 + $0x13c] sm:$0xf]
  %v127 = vld [vmem:[%s1 + $0x140] sm:$0xf]
  %v128 = vld [vmem:[%s1 + $0x144] sm:$0xf]
  %v129 = vld [vmem:[%s1 + $0x148] sm:$0xf]
  %v130 = vld [vmem:[%s1 + $0x14c] sm:$0xf]
  %v131 = vld [vmem:[%s1 + $0x150] sm:$0xf]
  %v132 = vld [vmem:[%s1 + $0x154] sm:$0xf]
  %v133 = vld [vmem:[%s1 + $0x158] sm:$0xf]
  %v134 = vld [vmem:[%s1 + $0x15c] sm:$0xf]
  %v135 = vld [vmem:[%s1 + $0x160] sm:$0xf]
  %v136 = vld [vmem:[%s1 + $0x164] sm:$0xf]
  %v137 = vld [vmem:[%s1 + $0x168] sm:$0xf]
  %v138 = vld [vmem:[%s1 + $0x16c] sm:$0xf]
  %v139 = vld [vmem:[%s1 + $0x170] sm:$0xf]
  %v140 = vld [vmem:[%s1 + $0x174] sm:$0xf]
  %v141 = vld [vmem:[%s1 + $0x178] sm:$0xf]
  %v142 = vld [vmem:[%s1 + $0x17c] sm:$0xf]
  %v143 = vld [vmem:[%s1 + $0x180] sm:$0xf]
  %v144 = vld [vmem:[%s1 + $0x184] sm:$0xf]
  %v145 = vld [vmem:[%s1 + $0x188] sm:$0xf]
  %v146 = vld [vmem:[%s1 + $0x18c] sm:$0xf]
  %v147 = vld [vmem:[%s1 + $0x190] sm:$0xf]
  %v148 = vld [vmem:[%s1 + $0x194] sm:$0xf]
  %v149 = vld [vmem:[%s1 + $0x198] sm:$0xf]
  %v150 = vld [vmem:[%s1 + $0x19c] sm:$0xf]
  %v151 = vld [vmem:[%s1 + $0x1a0] sm:$0xf]
  %v152 = vld [vmem:[%s1 + $0x1a4] sm:$0xf]
  %v153 = vld [vmem:[%s1 + $0x1a8] sm:$0xf]
  %v154 = vld [vmem:[%s1 + $0x1ac] sm:$0xf]
  %v155 = vld [vmem:[%s1 + $0x1b0] sm:$0xf]
  %v156 = vld [vmem:[%s1 + $0x1b4] sm:$0xf]
  %v157 = vld [vmem:[%s1 + $0x1b8] sm:$0xf]
  %v158 = vld [vmem:[%s1 + $0x1bc] sm:$0xf]
  %v159 = vld [vmem:[%s1 + $0x1c0] sm:$0xf]
  %v160 = vld [vmem:[%s1 + $0x1c4] sm:$0xf]
  %v161 = vld [vmem:[%s1 + $0x1c8] sm:$0xf]
  %v162 = vld [vmem:[%s1 + $0x1cc] sm:$0xf]
  %v163 = vld [vmem:[%s1 + $0x1d0] sm:$0xf]
  %v164 = vld [vmem:[%s1 + $0x1d4] sm:$0xf]
  %v165 = vld [vmem:[%s1 + $0x1d8] sm:$0xf]
  %v166 = vld [vmem:[%s1 + $0x1dc] sm:$0xf]
  %v167 = vld [vmem:[%s1 + $0x1e0] sm:$0xf]
  %v168 = vld [vmem:[%s1 + $0x1e4] sm:$0xf]
  %v169 = vld [vmem:[%s1 + $0x1e8] sm:$0xf]
  %v170 = vld [vmem:[%s1 + $0x1ec] sm:$0xf]
  %v171 = vld [vmem:[%s1 + $0x1f0] sm:$0xf]
  %v172 = vld [vmem:[%s1 + $0x1f4] sm:$0xf]
  %v173 = vld [vmem:[%s1 + $0x1f8] sm:$0xf]
  %v174 = vld [vmem:[%s1 + $0x1fc] sm:$0xf]
  %v175 = vld [vmem:[%s1 + $0x200] sm:$0xf]
  %v176 = vld [vmem:[%s1 + $0x204] sm:$0xf]
  %v177 = vld [vmem:[%s1 + $0x208] sm:$0xf]
  %v178 = vld [vmem:[%s1 + $0x20c] sm:$0xf]
  %v179 = vld [vmem:[%s1 + $0x210] sm:$0xf]
  %v180 = vld [vmem:[%s1 + $0x214] sm:$0xf]
  %v181 = vld [vmem:[%s1 + $0x218] sm:$0xf]
  %v182 = vld [vmem:[%s1 + $0x21c] sm:$0xf]
  %v183 = vld [vmem:[%s1 + $0x220] sm:$0xf]
  %v184 = vld [vmem:[%s1 + $0x224] sm:$0xf]
  %v185 = vld [vmem:[%s1 + $0x228] sm:$0xf]
  %v186 = vld [vmem:[%s1 + $0x22c] sm:$0xf]
  %v187 = vld [vmem:[%s1 + $0x230] sm:$0xf]
  %v188 = vld [vmem:[%s1 + $0x234] sm:$0xf]
  %v189 = vld [vmem:[%s1 + $0x238] sm:$0xf]
  %v190 = vld [vmem:[%s1 + $0x23c] sm:$0xf]
  %v191 = vld [vmem:[%s1 + $0x240] sm:$0xf]
  %v192 = vld [vmem:[%s1 + $0x244] sm:$0xf]
  %v193 = vld [vmem:[%s1 + $0x248] sm:$0xf]
  %v194 = vld [vmem:[%s1 + $0x24c] sm:$0xf]
  %v195 = vld [vmem:[%s1 + $0x250] sm:$0xf]
  %v196 = vld [vmem:[%s1 + $0x254] sm:$0xf]
  %v197 = vld [vmem:[%s1 + $0x258] sm:$0xf]
  %v198 = vld [vmem:[%s1 + $0x25c] sm:$0xf]
  %v199 = vld [vmem:[%s1 + $0x260] sm:$0xf]
  %v200 = vld [vmem:[%s1 + $0x264] sm:$0xf]
  %v201 = vld [vmem:[%s1 + $0x268] sm:$0xf]
  %v202 = vld [vmem:[%s1 + $0x26c] sm:$0xf]
  %v203 = vld [vmem:[%s1 + $0x270] sm:$0xf]
  %v204 = vld [vmem:[%s1 + $0x274] sm:$0xf]
  %v205 = vld [vmem:[%s1 + $0x278] sm:$0xf]
  %v206 = vld [vmem:[%s1 + $0x27c] sm:$0xf]
  %v207 = vld [vmem:[%s1 + $0x280] sm:$0xf]
  %v208 = vld [vmem:[%s1 + $0x284] sm:$0xf]
  %v209 = vld [vmem:[%s1 + $0x288] sm:$0xf]
  %v210 = vld [vmem:[%s1 + $0x28c] sm:$0xf]
  %v211 = vld [vmem:[%s1 + $0x290] sm:$0xf]
  %v212 = vld [vmem:[%s1 + $0x294] sm:$0xf]
  %v213 = vld [vmem:[%s1 + $0x298] sm:$0xf]
  %v214 = vld [vmem:[%s1 + $0x29c] sm:$0xf]
  %v215 = vld [vmem:[%s1 + $0x2a0] sm:$0xf]
  %v216 = vld [vmem:[%s1 + $0x2a4] sm:$0xf]
  %v217 = vld [vmem:[%s1 + $0x2a8] sm:$0xf]
  %v218 = vld [vmem:[%s1 + $0x2ac] sm:$0xf]
  %v219 = vld [vmem:[%s1 + $0x2b0] sm:$0xf]
  %v220 = vld [vmem:[%s1 + $0x2b4] sm:$0xf]
  %v221 = vld [vmem:[%s1 + $0x2b8] sm:$0xf]
  %v222 = vld [vmem:[%s1 + $0x2bc] sm:$0xf]
  %v223 = vld [vmem:[%s1 + $0x2c0] sm:$0xf]
  %v224 = vld [vmem:[%s1 + $0x2c4] sm:$0xf]
  %v225 = vld [vmem:[%s1 + $0x2c8] sm:$0xf]
  %v226 = vld [vmem:[%s1 + $0x2cc] sm:$0xf]
  %v227 = vld [vmem:[%s1 + $0x2d0] sm:$0xf]
  %v228 = vld [vmem:[%s1 + $0x2d4] sm:$0xf]
  %v229 = vld [vmem:[%s1 + $0x2d8] sm:$0xf]
  %v230 = vld [vmem:[%s1 + $0x2dc] sm:$0xf]
  %v231 = vld [vmem:[%s1 + $0x2e0] sm:$0xf]
  %v232 = vld [vmem:[%s1 + $0x2e4] sm:$0xf]
  %v233 = vld [vmem:[%s1 + $0x2e8] sm:$0xf]
  %v234 = vld [vmem:[%s1 + $0x2ec] sm:$0xf]
  %v235 = vld [vmem:[%s1 + $0x2f0] sm:$0xf]
  %v236 = vld [vmem:[%s1 + $0x2f4] sm:$0xf]
  %v237 = vld [vmem:[%s1 + $0x2f8] sm:$0xf]
  %v238 = vld [vmem:[%s1 + $0x2fc] sm:$0xf]
  %v239 = vld [vmem:[%s1 + $0x300] sm:$0xf]
  %v240 = vld [vmem:[%s1 + $0x304] sm:$0xf]
  %v241 = vld [vmem:[%s1 + $0x308] sm:$0xf]
  %v242 = vld [vmem:[%s1 + $0x30c] sm:$0xf]
  %v243 = vld [vmem:[%s1 + $0x310] sm:$0xf]
  %v244 = vld [vmem:[%s1 + $0x314] sm:$0xf]
  %v245 = vld [vmem:[%s1 + $0x318] sm:$0xf]
  %v246 = vld [vmem:[%s1 + $0x31c] sm:$0xf]
  %v247 = vld [vmem:[%s1 + $0x320] sm:$0xf]
  %v248 = vld [vmem:[%s1 + $0x324] sm:$0xf]
  %v249 = vld [vmem:[%s1 + $0x328] sm:$0xf]
  %v250 = vld [vmem:[%s1 + $0x32c] sm:$0xf]
  %v251 = vld [vmem:[%s1 + $0x330] sm:$0xf]
  %v252 = vld [vmem:[%s1 + $0x334] sm:$0xf]
  %v253 = vld [vmem:[%s1 + $0x338] sm:$0xf]
  %v254 = vld [vmem:[%s1 + $0x33c] sm:$0xf]
  %v255 = vld [vmem:[%s1 + $0x340] sm:$0xf]
  %v256 = vld [vmem:[%s1 + $0x344] sm:$0xf]
  %v257 = vld [vmem:[%s1 + $0x348] sm:$0xf]
  %v258 = vld [vmem:[%s1 + $0x34c] sm:$0xf]
  %v259 = vld [vmem:[%s1 + $0x350] sm:$0xf]
  %v260 = vld [vmem:[%s1 + $0x354] sm:$0xf]
  %v261 = vld [vmem:[%s1 + $0x358] sm:$0xf]
  %v262 = vld [vmem:[%s1 + $0x35c] sm:$0xf]
  %v263 = vld [vmem:[%s1 + $0x360] sm:$0xf]
  %v264 = vld [vmem:[%s1 + $0x364] sm:$0xf]
  %v265 = vld [vmem:[%s1 + $0x368] sm:$0xf]
  %v266 = vld [vmem:[%s1 + $0x36c] sm:$0xf]
  %v267 = vld [vmem:[%s1 + $0x370] sm:$0xf]
  %v268 = vld [vmem:[%s1 + $0x374] sm:$0xf]
  %v269 = vld [vmem:[%s1 + $0x378] sm:$0xf]
  %v270 = vld [vmem:[%s1 + $0x37c] sm:$0xf]
  %v271 = vld [vmem:[%s1 + $0x380] sm:$0xf]
  %v272 = vld [vmem:[%s1 + $0x384] sm:$0xf]
  %v273 = vld [vmem:[%s1 + $0x388] sm:$0xf]
  %v274 = vld [vmem:[%s1 + $0x38c] sm:$0xf]
  %v275 = vld [vmem:[%s1 + $0x390] sm:$0xf]
  %v276 = vld [vmem:[%s1 + $0x394] sm:$0xf]
  %v277 = vld [vmem:[%s1 + $0x398] sm:$0xf]
  %v278 = vld [vmem:[%s1 + $0x39c] sm:$0xf]
  %v279 = vld [vmem:[%s1 + $0x3a0] sm:$0xf]
  %v280 = vld [vmem:[%s1 + $0x3a4] sm:$0xf]
  %v281 = vld [vmem:[%s1 + $0x3a8] sm:$0xf]
  %v282 = vld [vmem:[%s1 + $0x3ac] sm:$0xf]
  %v283 = vld [vmem:[%s1 + $0x3b0] sm:$0xf]
  %v284 = vld [vmem:[%s1 + $0x3b4] sm:$0xf]
  %v285 = vld [vmem:[%s1 + $0x3b8] sm:$0xf]
  %v286 = vld [vmem:[%s1 + $0x3bc] sm:$0xf]
  %v287 = vld [vmem:[%s1 + $0x3c0] sm:$0xf]
  %v288 = vld [vmem:[%s1 + $0x3c4] sm:$0xf]
  %v289 = vld [vmem:[%s1 + $0x3c8] sm:$0xf]
  %v290 = vld [vmem:[%s1 + $0x3cc] sm:$0xf]
  %v291 = vld [vmem:[%s1 + $0x3d0] sm:$0xf]
  %v292 = vld [vmem:[%s1 + $0x3d4] sm:$0xf]
  %v293 = vld [vmem:[%s1 + $0x3d8] sm:$0xf]
  %v294 = vld [vmem:[%s1 + $0x3dc] sm:$0xf]
  %v295 = vld [vmem:[%s1 + $0x3e0] sm:$0xf]
  %v296 = vld [vmem:[%s1 + $0x3e4] sm:$0xf]
  %v297 = vld [vmem:[%s1 + $0x3e8] sm:$0xf]
  %v298 = vld [vmem:[%s1 + $0x3ec] sm:$0xf]
  %v299 = vld [vmem:[%s1 + $0x3f0] sm:$0xf]
  %v300 = vld [vmem:[%s1 + $0x3f4] sm:$0xf]
  %v301 = vld [vmem:[%s1 + $0x3f8] sm:$0xf]
  %v302 = vld [vmem:[%s1 + $0x3fc] sm:$0xf]
  %v303 = vld [vmem:[%s1 + $0x400] sm:$0xf]
  %v304 = vld [vmem:[%s1 + $0x404] sm:$0xf]
  %v305 = vld [vmem:[%s1 + $0x408] sm:$0xf]
  %v306 = vld [vmem:[%s1 + $0x40c] sm:$0xf]
  %v307 = vld [vmem:[%s1 + $0x410] sm:$0xf]
  %v308 = vld [vmem:[%s1 + $0x414] sm:$0xf]
  %v309 = vld [vmem:[%s1 + $0x418] sm:$0xf]
  %v310 = vld [vmem:[%s1 + $0x41c] sm:$0xf]
  %v311 = vld [vmem:[%s1 + $0x420] sm:$0xf]
  %v312 = vld [vmem:[%s1 + $0x424] sm:$0xf]
  %v313 = vld [vmem:[%s1 + $0x428] sm:$0xf]
  %v314 = vld [vmem:[%s1 + $0x42c] sm:$0xf]
  %v315 = vld [vmem:[%s1 + $0x430] sm:$0xf]
  %v316 = vld [vmem:[%s1 + $0x434] sm:$0xf]
  %v317 = vld [vmem:[%s1 + $0x438] sm:$0xf]
  %v318 = vld [vmem:[%s1 + $0x43c] sm:$0xf]
  %v319 = vld [vmem:[%s1 + $0x440] sm:$0xf]
  %v320 = vld [vmem:[%s1 + $0x444] sm:$0xf]
  %v321 = vld [vmem:[%s1 + $0x448] sm:$0xf]
  %v322 = vld [vmem:[%s1 + $0x44c] sm:$0xf]
  %v323 = vld [vmem:[%s1 + $0x450] sm:$0xf]
  %v324 = vld [vmem:[%s1 + $0x454] sm:$0xf]
  %v325 = vld [vmem:[%s1 + $0x458] sm:$0xf]
  %v326 = vld [vmem:[%s1 + $0x45c] sm:$0xf]
  %v327 = vld [vmem:[%s1 + $0x460] sm:$0xf]
  %v328 = vld [vmem:[%s1 + $0x464] sm:$0xf]
  %v329 = vld [vmem:[%s1 + $0x468] sm:$0xf]
  %v330 = vld [vmem:[%s1 + $0x46c] sm:$0xf]
  %v331 = vld [vmem:[%s1 + $0x470] sm:$0xf]
  %v332 = vld [vmem:[%s1 + $0x474] sm:$0xf]
  %v333 = vld [vmem:[%s1 + $0x478] sm:$0xf]
  %v334 = vld [vmem:[%s1 + $0x47c] sm:$0xf]
  %v335 = vld [vmem:[%s1 + $0x480] sm:$0xf]
  %v336 = vld [vmem:[%s1 + $0x484] sm:$0xf]
  %v337 = vld [vmem:[%s1 + $0x488] sm:$0xf]
  %v338 = vld [vmem:[%s1 + $0x48c] sm:$0xf]
  %v339 = vld [vmem:[%s1 + $0x490] sm:$0xf]
  %v340 = vld [vmem:[%s1 + $0x494] sm:$0xf]
  %v341 = vld [vmem:[%s1 + $0x498] sm:$0xf]
  %v342 = vld [vmem:[%s1 + $0x49c] sm:$0xf]
  %v343 = vld [vmem:[%s1 + $0x4a0] sm:$0xf]
  %v344 = vld [vmem:[%s1 + $0x4a4] sm:$0xf]
  %v345 = vld [vmem:[%s1 + $0x4a8] sm:$0xf]
  %v346 = vld [vmem:[%s1 + $0x4ac] sm:$0xf]
  %v347 = vld [vmem:[%s1 + $0x4b0] sm:$0xf]
  %v348 = vld [vmem:[%s1 + $0x4b4] sm:$0xf]
  %v349 = vld [vmem:[%s1 + $0x4b8] sm:$0xf]
  %v350 = vld [vmem:[%s1 + $0x4bc] sm:$0xf]
  %v351 = vld [vmem:[%s1 + $0x4c0] sm:$0xf]
  %v352 = vld [vmem:[%s1 + $0x4c4] sm:$0xf]
  %v353 = vld [vmem:[%s1 + $0x4c8] sm:$0xf]
  %v354 = vld [vmem:[%s1 + $0x4cc] sm:$0xf]
  %v355 = vld [vmem:[%s1 + $0x4d0] sm:$0xf]
  %v356 = vld [vmem:[%s1 + $0x4d4] sm:$0xf]
  %v357 = vld [vmem:[%s1 + $0x4d8] sm:$0xf]
  %v358 = vld [vmem:[%s1 + $0x4dc] sm:$0xf]
  %v359 = vld [vmem:[%s1 + $0x4e0] sm:$0xf]
  %v360 = vld [vmem:[%s1 + $0x4e4] sm:$0xf]
  %v361 = vld [vmem:[%s1 + $0x4e8] sm:$0xf]
  %v362 = vld [vmem:[%s1 + $0x4ec] sm:$0xf]
  %v363 = vld [vmem:[%s1 + $0x4f0] sm:$0xf]
  %v364 = vld [vmem:[%s1 + $0x4f4] sm:$0xf]
  %v365 = vld [vmem:[%s1 + $0x4f8] sm:$0xf]
  %v366 = vld [vmem:[%s1 + $0x4fc] sm:$0xf]
  %v367 = vld [vmem:[%s1 + $0x500] sm:$0xf]
  %v368 = vld [vmem:[%s1 + $0x504] sm:$0xf]
  %v369 = vld [vmem:[%s1 + $0x508] sm:$0xf]
  %v370 = vld [vmem:[%s1 + $0x50c] sm:$0xf]
  %v371 = vld [vmem:[%s1 + $0x510] sm:$0xf]
  %v372 = vld [vmem:[%s1 + $0x514] sm:$0xf]
  %v373 = vld [vmem:[%s1 + $0x518] sm:$0xf]
  %v374 = vld [vmem:[%s1 + $0x51c] sm:$0xf]
  %v375 = vld [vmem:[%s1 + $0x520] sm:$0xf]
  %v376 = vld [vmem:[%s1 + $0x524] sm:$0xf]
  %v377 = vld [vmem:[%s1 + $0x528] sm:$0xf]
  %v378 = vld [vmem:[%s1 + $0x52c] sm:$0xf]
  %v379 = vld [vmem:[%s1 + $0x530] sm:$0xf]
  %v380 = vld [vmem:[%s1 + $0x534] sm:$0xf]
  %v381 = vld [vmem:[%s1 + $0x538] sm:$0xf]
  %v382 = vld [vmem:[%s1 + $0x53c] sm:$0xf]
  %v383 = vld [vmem:[%s1 + $0x540] sm:$0xf]
  %v384 = vld [vmem:[%s1 + $0x544] sm:$0xf]
  %v385 = vld [vmem:[%s1 + $0x548] sm:$0xf]
  %v386 = vld [vmem:[%s1 + $0x54c] sm:$0xf]
  %v387 = vld [vmem:[%s1 + $0x550] sm:$0xf]
  %v388 = vld [vmem:[%s1 + $0x554] sm:$0xf]
  %v389 = vld [vmem:[%s1 + $0x558] sm:$0xf]
  %v390 = vld [vmem:[%s1 + $0x55c] sm:$0xf]
  %v391 = vld [vmem:[%s1 + $0x560] sm:$0xf]
  %v392 = vld [vmem:[%s1 + $0x564] sm:$0xf]
  %v393 = vld [vmem:[%s1 + $0x568] sm:$0xf]
  %v394 = vld [vmem:[%s1 + $0x56c] sm:$0xf]
  %v395 = vld [vmem:[%s1 + $0x570] sm:$0xf]
  %v396 = vld [vmem:[%s1 + $0x574] sm:$0xf]
  %v397 = vld [vmem:[%s1 + $0x578] sm:$0xf]
  %v398 = vld [vmem:[%s1 + $0x57c] sm:$0xf]
  %v399 = vld [vmem:[%s1 + $0x580] sm:$0xf]
  %v400 = vld [vmem:[%s1 + $0x584] sm:$0xf]
  %v401 = vld [vmem:[%s1 + $0x588] sm:$0xf]
  %v402 = vld [vmem:[%s1 + $0x58c] sm:$0xf]
  %v403 = vld [vmem:[%s1 + $0x590] sm:$0xf]
  %v404 = vld [vmem:[%s1 + $0x594] sm:$0xf]
  %v405 = vld [vmem:[%s1 + $0x598] sm:$0xf]
  %v406 = vld [vmem:[%s1 + $0x59c] sm:$0xf]
  %v407 = vld [vmem:[%s1 + $0x5a0] sm:$0xf]
  %v408 = vld [vmem:[%s1 + $0x5a4] sm:$0xf]
  %v409 = vld [vmem:[%s1 + $0x5a8] sm:$0xf]
  %v410 = vld [vmem:[%s1 + $0x5ac] sm:$0xf]
  %v411 = vld [vmem:[%s1 + $0x5b0] sm:$0xf]
  %v412 = vld [vmem:[%s1 + $0x5b4] sm:$0xf]
  %v413 = vld [vmem:[%s1 + $0x5b8] sm:$0xf]
  %v414 = vld [vmem:[%s1 + $0x5bc] sm:$0xf]
  %v415 = vld [vmem:[%s1 + $0x5c0] sm:$0xf]
  %v416 = vld [vmem:[%s1 + $0x5c4] sm:$0xf]
  %v417 = vld [vmem:[%s1 + $0x5c8] sm:$0xf]
  %v418 = vld [vmem:[%s1 + $0x5cc] sm:$0xf]
  %v419 = vld [vmem:[%s1 + $0x5d0] sm:$0xf]
  %v420 = vld [vmem:[%s1 + $0x5d4] sm:$0xf]
  %v421 = vld [vmem:[%s1 + $0x5d8] sm:$0xf]
  %v422 = vld [vmem:[%s1 + $0x5dc] sm:$0xf]
  %v423 = vld [vmem:[%s1 + $0x5e0] sm:$0xf]
  %v424 = vld [vmem:[%s1 + $0x5e4] sm:$0xf]
  %v425 = vld [vmem:[%s1 + $0x5e8] sm:$0xf]
  %v426 = vld [vmem:[%s1 + $0x5ec] sm:$0xf]
  %v427 = vld [vmem:[%s1 + $0x5f0] sm:$0xf]
  %v428 = vld [vmem:[%s1 + $0x5f4] sm:$0xf]
  %v429 = vld [vmem:[%s1 + $0x5f8] sm:$0xf]
  %v430 = vld [vmem:[%s1 + $0x5fc] sm:$0xf]
  %v431 = vld [vmem:[%s1 + $0x600] sm:$0xf]
  %v432 = vld [vmem:[%s1 + $0x604] sm:$0xf]
  %v433 = vld [vmem:[%s1 + $0x608] sm:$0xf]
  %v434 = vld [vmem:[%s1 + $0x60c] sm:$0xf]
  %v435 = vld [vmem:[%s1 + $0x610] sm:$0xf]
  %v436 = vld [vmem:[%s1 + $0x614] sm:$0xf]
  %v437 = vld [vmem:[%s1 + $0x618] sm:$0xf]
  %v438 = vld [vmem:[%s1 + $0x61c] sm:$0xf]
  %v439 = vld [vmem:[%s1 + $0x620] sm:$0xf]
  %v440 = vld [vmem:[%s1 + $0x624] sm:$0xf]
  %v441 = vld [vmem:[%s1 + $0x628] sm:$0xf]
  %v442 = vld [vmem:[%s1 + $0x62c] sm:$0xf]
  %v443 = vld [vmem:[%s1 + $0x630] sm:$0xf]
  %v444 = vld [vmem:[%s1 + $0x634] sm:$0xf]
  %v445 = vld [vmem:[%s1 + $0x638] sm:$0xf]
  %v446 = vld [vmem:[%s1 + $0x63c] sm:$0xf]
  %v447 = vld [vmem:[%s1 + $0x640] sm:$0xf]
  %v448 = vld [vmem:[%s1 + $0x644] sm:$0xf]
  %v449 = vld [vmem:[%s1 + $0x648] sm:$0xf]
  %v450 = vld [vmem:[%s1 + $0x64c] sm:$0xf]
  %v451 = vld [vmem:[%s1 + $0x650] sm:$0xf]
  %v452 = vld [vmem:[%s1 + $0x654] sm:$0xf]
  %v453 = vld [vmem:[%s1 + $0x658] sm:$0xf]
  %v454 = vld [vmem:[%s1 + $0x65c] sm:$0xf]
  %v455 = vld [vmem:[%s1 + $0x660] sm:$0xf]
  %v456 = vld [vmem:[%s1 + $0x664] sm:$0xf]
  %v457 = vld [vmem:[%s1 + $0x668] sm:$0xf]
  %v458 = vld [vmem:[%s1 + $0x66c] sm:$0xf]
  %v459 = vld [vmem:[%s1 + $0x670] sm:$0xf]
  %v460 = vld [vmem:[%s1 + $0x674] sm:$0xf]
  %v461 = vld [vmem:[%s1 + $0x678] sm:$0xf]
  %v462 = vld [vmem:[%s1 + $0x67c] sm:$0xf]
  %v463 = vld [vmem:[%s1 + $0x680] sm:$0xf]
  %v464 = vld [vmem:[%s1 + $0x684] sm:$0xf]
  %v465 = vld [vmem:[%s1 + $0x688] sm:$0xf]
  %v466 = vld [vmem:[%s1 + $0x68c] sm:$0xf]
  %v467 = vld [vmem:[%s1 + $0x690] sm:$0xf]
  %v468 = vld [vmem:[%s1 + $0x694] sm:$0xf]
  %v469 = vld [vmem:[%s1 + $0x698] sm:$0xf]
  %v470 = vld [vmem:[%s1 + $0x69c] sm:$0xf]
  %v471 = vld [vmem:[%s1 + $0x6a0] sm:$0xf]
  %v472 = vld [vmem:[%s1 + $0x6a4] sm:$0xf]
  %v473 = vld [vmem:[%s1 + $0x6a8] sm:$0xf]
  %v474 = vld [vmem:[%s1 + $0x6ac] sm:$0xf]
  %v475 = vld [vmem:[%s1 + $0x6b0] sm:$0xf]
  %v476 = vld [vmem:[%s1 + $0x6b4] sm:$0xf]
  %v477 = vld [vmem:[%s1 + $0x6b8] sm:$0xf]
  %v478 = vld [vmem:[%s1 + $0x6bc] sm:$0xf]
  %v479 = vld [vmem:[%s1 + $0x6c0] sm:$0xf]
  %v480 = vld [vmem:[%s1 + $0x6c4] sm:$0xf]
  %v481 = vld [vmem:[%s1 + $0x6c8] sm:$0xf]
  %v482 = vld [vmem:[%s1 + $0x6cc] sm:$0xf]
  %v483 = vld [vmem:[%s1 + $0x6d0] sm:$0xf]
  %v484 = vld [vmem:[%s1 + $0x6d4] sm:$0xf]
  %v485 = vld [vmem:[%s1 + $0x6d8] sm:$0xf]
  %v486 = vld [vmem:[%s1 + $0x6dc] sm:$0xf]
  %v487 = vld [vmem:[%s1 + $0x6e0] sm:$0xf]
  %v488 = vld [vmem:[%s1 + $0x6e4] sm:$0xf]
  %v489 = vld [vmem:[%s1 + $0x6e8] sm:$0xf]
  %v490 = vld [vmem:[%s1 + $0x6ec] sm:$0xf]
  %v491 = vld [vmem:[%s1 + $0x6f0] sm:$0xf]
  %v492 = vld [vmem:[%s1 + $0x6f4] sm:$0xf]
  %v493 = vld [vmem:[%s1 + $0x6f8] sm:$0xf]
  %v494 = vld [vmem:[%s1 + $0x6fc] sm:$0xf]
  %v495 = vld [vmem:[%s1 + $0x700] sm:$0xf]
  %v496 = vld [vmem:[%s1 + $0x704] sm:$0xf]
  %v497 = vld [vmem:[%s1 + $0x708] sm:$0xf]
  %v498 = vld [vmem:[%s1 + $0x70c] sm:$0xf]
  %v499 = vld [vmem:[%s1 + $0x710] sm:$0xf]
  %v500 = vld [vmem:[%s1 + $0x714] sm:$0xf]
  %v501 = vld [vmem:[%s1 + $0x718] sm:$0xf]
  %v502 = vld [vmem:[%s1 + $0x71c] sm:$0xf]
  %v503 = vld [vmem:[%s1 + $0x720] sm:$0xf]
  %v504 = vld [vmem:[%s1 + $0x724] sm:$0xf]
  %v505 = vld [vmem:[%s1 + $0x728] sm:$0xf]
  %v506 = vld [vmem:[%s1 + $0x72c] sm:$0xf]
  %v507 = vld [vmem:[%s1 + $0x730] sm:$0xf]
  %v508 = vld [vmem:[%s1 + $0x734] sm:$0xf]
  %v509 = vld [vmem:[%s1 + $0x738] sm:$0xf]
  %v510 = vld [vmem:[%s1 + $0x73c] sm:$0xf]
  %v511 = vld [vmem:[%s1 + $0x740] sm:$0xf]
  %v512 = vld [vmem:[%s1 + $0x744] sm:$0xf]
  %v513 = vld [vmem:[%s1 + $0x748] sm:$0xf]
  %v514 = vld [vmem:[%s1 + $0x74c] sm:$0xf]
  %v515 = vld [vmem:[%s1 + $0x750] sm:$0xf]
  %v516 = vld [vmem:[%s1 + $0x754] sm:$0xf]
  %v517 = vld [vmem:[%s1 + $0x758] sm:$0xf]
  %v518 = vld [vmem:[%s1 + $0x75c] sm:$0xf]
  %v519 = vld [vmem:[%s1 + $0x760] sm:$0xf]
  %v520 = vld [vmem:[%s1 + $0x764] sm:$0xf]
  %v521 = vld [vmem:[%s1 + $0x768] sm:$0xf]
  %v522 = vld [vmem:[%s1 + $0x76c] sm:$0xf]
  %v523 = vld [vmem:[%s1 + $0x770] sm:$0xf]
  %v524 = vld [vmem:[%s1 + $0x774] sm:$0xf]
  %v525 = vld [vmem:[%s1 + $0x778] sm:$0xf]
  %v526 = vld [vmem:[%s1 + $0x77c] sm:$0xf]
  %v527 = vld [vmem:[%s1 + $0x780] sm:$0xf]
  %v528 = vld [vmem:[%s1 + $0x784] sm:$0xf]
  %v529 = vld [vmem:[%s1 + $0x788] sm:$0xf]
  %v530 = vld [vmem:[%s1 + $0x78c] sm:$0xf]
  %v531 = vld [vmem:[%s1 + $0x790] sm:$0xf]
  %v532 = vld [vmem:[%s1 + $0x794] sm:$0xf]
  %v533 = vld [vmem:[%s1 + $0x798] sm:$0xf]
  %v534 = vld [vmem:[%s1 + $0x79c] sm:$0xf]
  %v535 = vld [vmem:[%s1 + $0x7a0] sm:$0xf]
  %v536 = vld [vmem:[%s1 + $0x7a4] sm:$0xf]
  %v537 = vld [vmem:[%s1 + $0x7a8] sm:$0xf]
  %v538 = vld [vmem:[%s1 + $0x7ac] sm:$0xf]
  %v539 = vld [vmem:[%s1 + $0x7b0] sm:$0xf]
  %v540 = vld [vmem:[%s1 + $0x7b4] sm:$0xf]
  %v541 = vld [vmem:[%s1 + $0x7b8] sm:$0xf]
  %v542 = vld [vmem:[%s1 + $0x7bc] sm:$0xf]
  %v543 = vld [vmem:[%s1 + $0x7c0] sm:$0xf]
  %v544 = vld [vmem:[%s1 + $0x7c4] sm:$0xf]
  %v545 = vld [vmem:[%s1 + $0x7c8] sm:$0xf]
  %v546 = vld [vmem:[%s1 + $0x7cc] sm:$0xf]
  %v547 = vld [vmem:[%s1 + $0x7d0] sm:$0xf]
  %v548 = vld [vmem:[%s1 + $0x7d4] sm:$0xf]
  %v549 = vld [vmem:[%s1 + $0x7d8] sm:$0xf]
  %v550 = vld [vmem:[%s1 + $0x7dc] sm:$0xf]
  %v551 = vld [vmem:[%s1 + $0x7e0] sm:$0xf]
  %v552 = vld [vmem:[%s1 + $0x7e4] sm:$0xf]
  %v553 = vld [vmem:[%s1 + $0x7e8] sm:$0xf]
  %v554 = vld [vmem:[%s1 + $0x7ec] sm:$0xf]
  %v555 = vld [vmem:[%s1 + $0x7f0] sm:$0xf]
  %v556 = vld [vmem:[%s1 + $0x7f4] sm:$0xf]
  %v557 = vld [vmem:[%s1 + $0x7f8] sm:$0xf]
  %v558 = vld [vmem:[%s1 + $0x7fc] sm:$0xf]
  %v559 = vld [vmem:[%s1 + $0x800] sm:$0xf]
  %v560 = vld [vmem:[%s1 + $0x804] sm:$0xf]
  %v561 = vld [vmem:[%s1 + $0x808] sm:$0xf]
  %v562 = vld [vmem:[%s1 + $0x80c] sm:$0xf]
  %v563 = vld [vmem:[%s1 + $0x810] sm:$0xf]
  %v564 = vld [vmem:[%s1 + $0x814] sm:$0xf]
  %v565 = vld [vmem:[%s1 + $0x818] sm:$0xf]
  %v566 = vld [vmem:[%s1 + $0x81c] sm:$0xf]
  %v567 = vld [vmem:[%s1 + $0x820] sm:$0xf]
  %v568 = vld [vmem:[%s1 + $0x824] sm:$0xf]
  %v569 = vld [vmem:[%s1 + $0x828] sm:$0xf]
  %v570 = vld [vmem:[%s1 + $0x82c] sm:$0xf]
  %v571 = vld [vmem:[%s1 + $0x830] sm:$0xf]
  %v572 = vld [vmem:[%s1 + $0x834] sm:$0xf]
  %v573 = vld [vmem:[%s1 + $0x838] sm:$0xf]
  %v574 = vld [vmem:[%s1 + $0x83c] sm:$0xf]
  %v575 = vld [vmem:[%s1 + $0x840] sm:$0xf]
  %v576 = vld [vmem:[%s1 + $0x844] sm:$0xf]
  %v577 = vld [vmem:[%s1 + $0x848] sm:$0xf]
  %v578 = vld [vmem:[%s1 + $0x84c] sm:$0xf]
  %v579 = vld [vmem:[%s1 + $0x850] sm:$0xf]
  %v580 = vld [vmem:[%s1 + $0x854] sm:$0xf]
  %v581 = vld [vmem:[%s1 + $0x858] sm:$0xf]
  %v582 = vld [vmem:[%s1 + $0x85c] sm:$0xf]
  %v583 = vld [vmem:[%s1 + $0x860] sm:$0xf]
  %v584 = vld [vmem:[%s1 + $0x864] sm:$0xf]
  %v585 = vld [vmem:[%s1 + $0x868] sm:$0xf]
  %v586 = vld [vmem:[%s1 + $0x86c] sm:$0xf]
  %v587 = vld [vmem:[%s1 + $0x870] sm:$0xf]
  %v588 = vld [vmem:[%s1 + $0x874] sm:$0xf]
  %v589 = vld [vmem:[%s1 + $0x878] sm:$0xf]
  %v590 = vld [vmem:[%s1 + $0x87c] sm:$0xf]
  %v591 = vld [vmem:[%s1 + $0x880] sm:$0xf]
  %v592 = vld [vmem:[%s1 + $0x884] sm:$0xf]
  %v593 = vld [vmem:[%s1 + $0x888] sm:$0xf]
  %v594 = vld [vmem:[%s1 + $0x88c] sm:$0xf]
  %v595 = vld [vmem:[%s1 + $0x890] sm:$0xf]
  %v596 = vld [vmem:[%s1 + $0x894] sm:$0xf]
  %v597 = vld [vmem:[%s1 + $0x898] sm:$0xf]
  %v598 = vld [vmem:[%s1 + $0x89c] sm:$0xf]
  %v599 = vld [vmem:[%s1 + $0x8a0] sm:$0xf]
  %v600 = vld [vmem:[%s1 + $0x8a4] sm:$0xf]
  %v601 = vld [vmem:[%s1 + $0x8a8] sm:$0xf]
  %v602 = vld [vmem:[%s1 + $0x8ac] sm:$0xf]
  %v603 = vld [vmem:[%s1 + $0x8b0] sm:$0xf]
  %v604 = vld [vmem:[%s1 + $0x8b4] sm:$0xf]
  %v605 = vld [vmem:[%s1 + $0x8b8] sm:$0xf]
  %v606 = vld [vmem:[%s1 + $0x8bc] sm:$0xf]
  %v607 = vld [vmem:[%s1 + $0x8c0] sm:$0xf]
  %v608 = vld [vmem:[%s1 + $0x8c4] sm:$0xf]
  %v609 = vld [vmem:[%s1 + $0x8c8] sm:$0xf]
  %v610 = vld [vmem:[%s1 + $0x8cc] sm:$0xf]
  %v611 = vld [vmem:[%s1 + $0x8d0] sm:$0xf]
  %v612 = vld [vmem:[%s1 + $0x8d4] sm:$0xf]
  %v613 = vld [vmem:[%s1 + $0x8d8] sm:$0xf]
  %v614 = vld [vmem:[%s1 + $0x8dc] sm:$0xf]
  %v615 = vld [vmem:[%s1 + $0x8e0] sm:$0xf]
  %v616 = vld [vmem:[%s1 + $0x8e4] sm:$0xf]
  %v617 = vld [vmem:[%s1 + $0x8e8] sm:$0xf]
  %v618 = vld [vmem:[%s1 + $0x8ec] sm:$0xf]
  %v619 = vld [vmem:[%s1 + $0x8f0] sm:$0xf]
  %v620 = vld [vmem:[%s1 + $0x8f4] sm:$0xf]
  %v621 = vld [vmem:[%s1 + $0x8f8] sm:$0xf]
  %v622 = vld [vmem:[%s1 + $0x8fc] sm:$0xf]
  %v623 = vld [vmem:[%s1 + $0x900] sm:$0xf]
  %v624 = vld [vmem:[%s1 + $0x904] sm:$0xf]
  %v625 = vld [vmem:[%s1 + $0x908] sm:$0xf]
  %v626 = vld [vmem:[%s1 + $0x90c] sm:$0xf]
  %v627 = vld [vmem:[%s1 + $0x910] sm:$0xf]
  %v628 = vld [vmem:[%s1 + $0x914] sm:$0xf]
  %v629 = vld [vmem:[%s1 + $0x918] sm:$0xf]
  %v630 = vld [vmem:[%s1 + $0x91c] sm:$0xf]
  %v631 = vld [vmem:[%s1 + $0x920] sm:$0xf]
  %v632 = vld [vmem:[%s1 + $0x924] sm:$0xf]
  %v633 = vld [vmem:[%s1 + $0x928] sm:$0xf]
  %v634 = vld [vmem:[%s1 + $0x92c] sm:$0xf]
  %v635 = vld [vmem:[%s1 + $0x930] sm:$0xf]
  %v636 = vld [vmem:[%s1 + $0x934] sm:$0xf]
  %v637 = vld [vmem:[%s1 + $0x938] sm:$0xf]
  %v638 = vld [vmem:[%s1 + $0x93c] sm:$0xf]
  %v639 = vld [vmem:[%s1 + $0x940] sm:$0xf]
  %v640 = vld [vmem:[%s1 + $0x944] sm:$0xf]
  %v641 = vld [vmem:[%s1 + $0x948] sm:$0xf]
  %v642 = vld [vmem:[%s1 + $0x94c] sm:$0xf]
  %v643 = vld [vmem:[%s1 + $0x950] sm:$0xf]
  %v644 = vld [vmem:[%s1 + $0x954] sm:$0xf]
  %v645 = vld [vmem:[%s1 + $0x958] sm:$0xf]
  %v646 = vld [vmem:[%s1 + $0x95c] sm:$0xf]
  %v647 = vld [vmem:[%s1 + $0x960] sm:$0xf]
  %v648 = vld [vmem:[%s1 + $0x964] sm:$0xf]
  %v649 = vld [vmem:[%s1 + $0x968] sm:$0xf]
  %v650 = vld [vmem:[%s1 + $0x96c] sm:$0xf]
  %v651 = vld [vmem:[%s1 + $0x970] sm:$0xf]
  %v652 = vld [vmem:[%s1 + $0x974] sm:$0xf]
  %v653 = vld [vmem:[%s1 + $0x978] sm:$0xf]
  %v654 = vld [vmem:[%s1 + $0x97c] sm:$0xf]
  %v655 = vld [vmem:[%s1 + $0x980] sm:$0xf]
  %v656 = vld [vmem:[%s1 + $0x984] sm:$0xf]
  %v657 = vld [vmem:[%s1 + $0x988] sm:$0xf]
  %v658 = vld [vmem:[%s1 + $0x98c] sm:$0xf]
  %v659 = vld [vmem:[%s1 + $0x990] sm:$0xf]
  %v660 = vld [vmem:[%s1 + $0x994] sm:$0xf]
  %v661 = vld [vmem:[%s1 + $0x998] sm:$0xf]
  %v662 = vld [vmem:[%s1 + $0x99c] sm:$0xf]
  %v663 = vld [vmem:[%s1 + $0x9a0] sm:$0xf]
  %v664 = vld [vmem:[%s1 + $0x9a4] sm:$0xf]
  %v665 = vld [vmem:[%s1 + $0x9a8] sm:$0xf]
  %v666 = vld [vmem:[%s1 + $0x9ac] sm:$0xf]
  %v667 = vld [vmem:[%s1 + $0x9b0] sm:$0xf]
  %v668 = vld [vmem:[%s1 + $0x9b4] sm:$0xf]
  %v669 = vld [vmem:[%s1 + $0x9b8] sm:$0xf]
  %v670 = vld [vmem:[%s1 + $0x9bc] sm:$0xf]
  %v671 = vld [vmem:[%s1 + $0x9c0] sm:$0xf]
  %v672 = vld [vmem:[%s1 + $0x9c4] sm:$0xf]
  %v673 = vld [vmem:[%s1 + $0x9c8] sm:$0xf]
  %v674 = vld [vmem:[%s1 + $0x9cc] sm:$0xf]
  %v675 = vld [vmem:[%s1 + $0x9d0] sm:$0xf]
  %v676 = vld [vmem:[%s1 + $0x9d4] sm:$0xf]
  %v677 = vld [vmem:[%s1 + $0x9d8] sm:$0xf]
  %v678 = vld [vmem:[%s1 + $0x9dc] sm:$0xf]
  %v679 = vld [vmem:[%s1 + $0x9e0] sm:$0xf]
  %v680 = vld [vmem:[%s1 + $0x9e4] sm:$0xf]
  %v681 = vld [vmem:[%s1 + $0x9e8] sm:$0xf]
  %v682 = vld [vmem:[%s1 + $0x9ec] sm:$0xf]
  %v683 = vld [vmem:[%s1 + $0x9f0] sm:$0xf]
  %v684 = vld [vmem:[%s1 + $0x9f4] sm:$0xf]
  %v685 = vld [vmem:[%s1 + $0x9f8] sm:$0xf]
  %v686 = vld [vmem:[%s1 + $0x9fc] sm:$0xf]
  %v687 = vld [vmem:[%s2] sm:$0x1]
  %v689 = vlaneseq
  %v690 = vshrl.u32 %v689, 7
  %v691 = vsub.s32 0, %v690
  %v692 = vrot.slane %v687, %v691
  %v714 = vunpack.c.l.b16 %v27
  %v715 = vunpack.c.h.b16 %v27
  %v716 = vunpack.c.l.b16 %v28
  %v717 = vunpack.c.h.b16 %v28
  %v718 = vunpack.c.l.b16 %v29
  %v719 = vunpack.c.h.b16 %v29
  %v720 = vunpack.c.l.b16 %v30
  %v721 = vunpack.c.h.b16 %v30
  %v722 = vunpack.c.l.b16 %v31
  %v723 = vunpack.c.h.b16 %v31
  %v724 = vunpack.c.l.b16 %v32
  %v725 = vunpack.c.h.b16 %v32
  %v726 = vunpack.c.l.b16 %v33
  %v727 = vunpack.c.h.b16 %v33
  %v728 = vunpack.c.l.b16 %v34
  %v729 = vunpack.c.h.b16 %v34
  %v730 = vunpack.c.l.b16 %v35
  %v731 = vunpack.c.h.b16 %v35
  %v732 = vunpack.c.l.b16 %v36
  %v733 = vunpack.c.h.b16 %v36
  %v734 = vunpack.c.l.b16 %v37
  %v735 = vunpack.c.h.b16 %v37
  %v736 = vunpack.c.l.b16 %v38
  %v737 = vunpack.c.h.b16 %v38
  %v738 = vunpack.c.l.b16 %v39
  %v739 = vunpack.c.h.b16 %v39
  %v740 = vunpack.c.l.b16 %v40
  %v741 = vunpack.c.h.b16 %v40
  %v742 = vunpack.c.l.b16 %v41
  %v743 = vunpack.c.h.b16 %v41
  %v744 = vunpack.c.l.b16 %v42
  %v745 = vunpack.c.h.b16 %v42
  %v746 = vunpack.c.l.b16 %v43
  %v747 = vunpack.c.h.b16 %v43
  %v748 = vunpack.c.l.b16 %v44
  %v749 = vunpack.c.h.b16 %v44
  %v750 = vunpack.c.l.b16 %v45
  %v751 = vunpack.c.h.b16 %v45
  %v752 = vunpack.c.l.b16 %v46
  %v753 = vunpack.c.h.b16 %v46
  %v754 = vpack.c.b16 %v714, %v714
  %v755 = vpack.c.b16 %v715, %v715
  %v756 = vpack.c.b16 %v716, %v716
  %v757 = vpack.c.b16 %v717, %v717
  %v758 = vpack.c.b16 %v718, %v718
  %v759 = vpack.c.b16 %v719, %v719
  %v760 = vpack.c.b16 %v720, %v720
  %v761 = vpack.c.b16 %v721, %v721
  %v762 = vpack.c.b16 %v722, %v722
  %v763 = vpack.c.b16 %v723, %v723
  %v764 = vpack.c.b16 %v724, %v724
  %v765 = vpack.c.b16 %v725, %v725
  %v766 = vpack.c.b16 %v726, %v726
  %v767 = vpack.c.b16 %v727, %v727
  %v768 = vpack.c.b16 %v728, %v728
  %v769 = vpack.c.b16 %v729, %v729
  %v770 = vpack.c.b16 %v730, %v730
  %v771 = vpack.c.b16 %v731, %v731
  %v772 = vpack.c.b16 %v732, %v732
  %v773 = vpack.c.b16 %v733, %v733
  %v774 = vpack.c.b16 %v734, %v734
  %v775 = vpack.c.b16 %v735, %v735
  %v776 = vpack.c.b16 %v736, %v736
  %v777 = vpack.c.b16 %v737, %v737
  %v778 = vpack.c.b16 %v738, %v738
  %v779 = vpack.c.b16 %v739, %v739
  %v780 = vpack.c.b16 %v740, %v740
  %v781 = vpack.c.b16 %v741, %v741
  %v782 = vpack.c.b16 %v742, %v742
  %v783 = vpack.c.b16 %v743, %v743
  %v784 = vpack.c.b16 %v744, %v744
  %v785 = vpack.c.b16 %v745, %v745
  %v786 = vpack.c.b16 %v746, %v746
  %v787 = vpack.c.b16 %v747, %v747
  %v788 = vpack.c.b16 %v748, %v748
  %v789 = vpack.c.b16 %v749, %v749
  %v790 = vpack.c.b16 %v750, %v750
  %v791 = vpack.c.b16 %v751, %v751
  %v792 = vpack.c.b16 %v752, %v752
  %v793 = vpack.c.b16 %v753, %v753
  %v1474 = vunpack.c.l.b16 %v47
  %v1475 = vunpack.c.l.b16 %v48
  %v1476 = vunpack.c.l.b16 %v49
  %v1477 = vunpack.c.l.b16 %v50
  %v1478 = vunpack.c.l.b16 %v51
  %v1479 = vunpack.c.l.b16 %v52
  %v1480 = vunpack.c.l.b16 %v53
  %v1481 = vunpack.c.l.b16 %v54
  %v1482 = vunpack.c.l.b16 %v55
  %v1483 = vunpack.c.l.b16 %v56
  %v1484 = vunpack.c.l.b16 %v57
  %v1485 = vunpack.c.l.b16 %v58
  %v1486 = vunpack.c.l.b16 %v59
  %v1487 = vunpack.c.l.b16 %v60
  %v1488 = vunpack.c.l.b16 %v61
  %v1489 = vunpack.c.l.b16 %v62
  %v1490 = vunpack.c.l.b16 %v63
  %v1491 = vunpack.c.l.b16 %v64
  %v1492 = vunpack.c.l.b16 %v65
  %v1493 = vunpack.c.l.b16 %v66
  %v1494 = vunpack.c.l.b16 %v67
  %v1495 = vunpack.c.l.b16 %v68
  %v1496 = vunpack.c.l.b16 %v69
  %v1497 = vunpack.c.l.b16 %v70
  %v1498 = vunpack.c.l.b16 %v71
  %v1499 = vunpack.c.l.b16 %v72
  %v1500 = vunpack.c.l.b16 %v73
  %v1501 = vunpack.c.l.b16 %v74
  %v1502 = vunpack.c.l.b16 %v75
  %v1503 = vunpack.c.l.b16 %v76
  %v1504 = vunpack.c.l.b16 %v77
  %v1505 = vunpack.c.l.b16 %v78
  %v1506 = vunpack.c.l.b16 %v79
  %v1507 = vunpack.c.l.b16 %v80
  %v1508 = vunpack.c.l.b16 %v81
  %v1509 = vunpack.c.l.b16 %v82
  %v1510 = vunpack.c.l.b16 %v83
  %v1511 = vunpack.c.l.b16 %v84
  %v1512 = vunpack.c.l.b16 %v85
  %v1513 = vunpack.c.l.b16 %v86
  %v1514 = vunpack.c.l.b16 %v87
  %v1515 = vunpack.c.l.b16 %v88
  %v1516 = vunpack.c.l.b16 %v89
  %v1517 = vunpack.c.l.b16 %v90
  %v1518 = vunpack.c.l.b16 %v91
  %v1519 = vunpack.c.l.b16 %v92
  %v1520 = vunpack.c.l.b16 %v93
  %v1521 = vunpack.c.l.b16 %v94
  %v1522 = vunpack.c.l.b16 %v95
  %v1523 = vunpack.c.l.b16 %v96
  %v1524 = vunpack.c.l.b16 %v97
  %v1525 = vunpack.c.l.b16 %v98
  %v1526 = vunpack.c.l.b16 %v99
  %v1527 = vunpack.c.l.b16 %v100
  %v1528 = vunpack.c.l.b16 %v101
  %v1529 = vunpack.c.l.b16 %v102
  %v1530 = vunpack.c.l.b16 %v103
  %v1531 = vunpack.c.l.b16 %v104
  %v1532 = vunpack.c.l.b16 %v105
  %v1533 = vunpack.c.l.b16 %v106
  %v1534 = vunpack.c.l.b16 %v107
  %v1535 = vunpack.c.l.b16 %v108
  %v1536 = vunpack.c.l.b16 %v109
  %v1537 = vunpack.c.l.b16 %v110
  %v1538 = vunpack.c.l.b16 %v111
  %v1539 = vunpack.c.l.b16 %v112
  %v1540 = vunpack.c.l.b16 %v113
  %v1541 = vunpack.c.l.b16 %v114
  %v1542 = vunpack.c.l.b16 %v115
  %v1543 = vunpack.c.l.b16 %v116
  %v1544 = vunpack.c.l.b16 %v117
  %v1545 = vunpack.c.l.b16 %v118
  %v1546 = vunpack.c.l.b16 %v119
  %v1547 = vunpack.c.l.b16 %v120
  %v1548 = vunpack.c.l.b16 %v121
  %v1549 = vunpack.c.l.b16 %v122
  %v1550 = vunpack.c.l.b16 %v123
  %v1551 = vunpack.c.l.b16 %v124
  %v1552 = vunpack.c.l.b16 %v125
  %v1553 = vunpack.c.l.b16 %v126
  %v1554 = vunpack.c.l.b16 %v127
  %v1555 = vunpack.c.l.b16 %v128
  %v1556 = vunpack.c.l.b16 %v129
  %v1557 = vunpack.c.l.b16 %v130
  %v1558 = vunpack.c.l.b16 %v131
  %v1559 = vunpack.c.l.b16 %v132
  %v1560 = vunpack.c.l.b16 %v133
  %v1561 = vunpack.c.l.b16 %v134
  %v1562 = vunpack.c.l.b16 %v135
  %v1563 = vunpack.c.l.b16 %v136
  %v1564 = vunpack.c.l.b16 %v137
  %v1565 = vunpack.c.l.b16 %v138
  %v1566 = vunpack.c.l.b16 %v139
  %v1567 = vunpack.c.l.b16 %v140
  %v1568 = vunpack.c.l.b16 %v141
  %v1569 = vunpack.c.l.b16 %v142
  %v1570 = vunpack.c.l.b16 %v143
  %v1571 = vunpack.c.l.b16 %v144
  %v1572 = vunpack.c.l.b16 %v145
  %v1573 = vunpack.c.l.b16 %v146
  %v1574 = vunpack.c.l.b16 %v147
  %v1575 = vunpack.c.l.b16 %v148
  %v1576 = vunpack.c.l.b16 %v149
  %v1577 = vunpack.c.l.b16 %v150
  %v1578 = vunpack.c.l.b16 %v151
  %v1579 = vunpack.c.l.b16 %v152
  %v1580 = vunpack.c.l.b16 %v153
  %v1581 = vunpack.c.l.b16 %v154
  %v1582 = vunpack.c.l.b16 %v155
  %v1583 = vunpack.c.l.b16 %v156
  %v1584 = vunpack.c.l.b16 %v157
  %v1585 = vunpack.c.l.b16 %v158
  %v1586 = vunpack.c.l.b16 %v159
  %v1587 = vunpack.c.l.b16 %v160
  %v1588 = vunpack.c.l.b16 %v161
  %v1589 = vunpack.c.l.b16 %v162
  %v1590 = vunpack.c.l.b16 %v163
  %v1591 = vunpack.c.l.b16 %v164
  %v1592 = vunpack.c.l.b16 %v165
  %v1593 = vunpack.c.l.b16 %v166
  %v1594 = vunpack.c.l.b16 %v167
  %v1595 = vunpack.c.l.b16 %v168
  %v1596 = vunpack.c.l.b16 %v169
  %v1597 = vunpack.c.l.b16 %v170
  %v1598 = vunpack.c.l.b16 %v171
  %v1599 = vunpack.c.l.b16 %v172
  %v1600 = vunpack.c.l.b16 %v173
  %v1601 = vunpack.c.l.b16 %v174
  %v1602 = vunpack.c.l.b16 %v175
  %v1603 = vunpack.c.l.b16 %v176
  %v1604 = vunpack.c.l.b16 %v177
  %v1605 = vunpack.c.l.b16 %v178
  %v1606 = vunpack.c.l.b16 %v179
  %v1607 = vunpack.c.l.b16 %v180
  %v1608 = vunpack.c.l.b16 %v181
  %v1609 = vunpack.c.l.b16 %v182
  %v1610 = vunpack.c.l.b16 %v183
  %v1611 = vunpack.c.l.b16 %v184
  %v1612 = vunpack.c.l.b16 %v185
  %v1613 = vunpack.c.l.b16 %v186
  %v1614 = vunpack.c.l.b16 %v187
  %v1615 = vunpack.c.l.b16 %v188
  %v1616 = vunpack.c.l.b16 %v189
  %v1617 = vunpack.c.l.b16 %v190
  %v1618 = vunpack.c.l.b16 %v191
  %v1619 = vunpack.c.l.b16 %v192
  %v1620 = vunpack.c.l.b16 %v193
  %v1621 = vunpack.c.l.b16 %v194
  %v1622 = vunpack.c.l.b16 %v195
  %v1623 = vunpack.c.l.b16 %v196
  %v1624 = vunpack.c.l.b16 %v197
  %v1625 = vunpack.c.l.b16 %v198
  %v1626 = vunpack.c.l.b16 %v199
  %v1627 = vunpack.c.l.b16 %v200
  %v1628 = vunpack.c.l.b16 %v201
  %v1629 = vunpack.c.l.b16 %v202
  %v1630 = vunpack.c.l.b16 %v203
  %v1631 = vunpack.c.l.b16 %v204
  %v1632 = vunpack.c.l.b16 %v205
  %v1633 = vunpack.c.l.b16 %v206
  %v1634 = vunpack.c.l.b16 %v207
  %v1635 = vunpack.c.l.b16 %v208
  %v1636 = vunpack.c.l.b16 %v209
  %v1637 = vunpack.c.l.b16 %v210
  %v1638 = vunpack.c.l.b16 %v211
  %v1639 = vunpack.c.l.b16 %v212
  %v1640 = vunpack.c.l.b16 %v213
  %v1641 = vunpack.c.l.b16 %v214
  %v1642 = vunpack.c.l.b16 %v215
  %v1643 = vunpack.c.l.b16 %v216
  %v1644 = vunpack.c.l.b16 %v217
  %v1645 = vunpack.c.l.b16 %v218
  %v1646 = vunpack.c.l.b16 %v219
  %v1647 = vunpack.c.l.b16 %v220
  %v1648 = vunpack.c.l.b16 %v221
  %v1649 = vunpack.c.l.b16 %v222
  %v1650 = vunpack.c.l.b16 %v223
  %v1651 = vunpack.c.l.b16 %v224
  %v1652 = vunpack.c.l.b16 %v225
  %v1653 = vunpack.c.l.b16 %v226
  %v1654 = vunpack.c.l.b16 %v227
  %v1655 = vunpack.c.l.b16 %v228
  %v1656 = vunpack.c.l.b16 %v229
  %v1657 = vunpack.c.l.b16 %v230
  %v1658 = vunpack.c.l.b16 %v231
  %v1659 = vunpack.c.l.b16 %v232
  %v1660 = vunpack.c.l.b16 %v233
  %v1661 = vunpack.c.l.b16 %v234
  %v1662 = vunpack.c.l.b16 %v235
  %v1663 = vunpack.c.l.b16 %v236
  %v1664 = vunpack.c.l.b16 %v237
  %v1665 = vunpack.c.l.b16 %v238
  %v1666 = vunpack.c.l.b16 %v239
  %v1667 = vunpack.c.l.b16 %v240
  %v1668 = vunpack.c.l.b16 %v241
  %v1669 = vunpack.c.l.b16 %v242
  %v1670 = vunpack.c.l.b16 %v243
  %v1671 = vunpack.c.l.b16 %v244
  %v1672 = vunpack.c.l.b16 %v245
  %v1673 = vunpack.c.l.b16 %v246
  %v1674 = vunpack.c.l.b16 %v247
  %v1675 = vunpack.c.l.b16 %v248
  %v1676 = vunpack.c.l.b16 %v249
  %v1677 = vunpack.c.l.b16 %v250
  %v1678 = vunpack.c.l.b16 %v251
  %v1679 = vunpack.c.l.b16 %v252
  %v1680 = vunpack.c.l.b16 %v253
  %v1681 = vunpack.c.l.b16 %v254
  %v1682 = vunpack.c.l.b16 %v255
  %v1683 = vunpack.c.l.b16 %v256
  %v1684 = vunpack.c.l.b16 %v257
  %v1685 = vunpack.c.l.b16 %v258
  %v1686 = vunpack.c.l.b16 %v259
  %v1687 = vunpack.c.l.b16 %v260
  %v1688 = vunpack.c.l.b16 %v261
  %v1689 = vunpack.c.l.b16 %v262
  %v1690 = vunpack.c.l.b16 %v263
  %v1691 = vunpack.c.l.b16 %v264
  %v1692 = vunpack.c.l.b16 %v265
  %v1693 = vunpack.c.l.b16 %v266
  %v1694 = vunpack.c.l.b16 %v267
  %v1695 = vunpack.c.l.b16 %v268
  %v1696 = vunpack.c.l.b16 %v269
  %v1697 = vunpack.c.l.b16 %v270
  %v1698 = vunpack.c.l.b16 %v271
  %v1699 = vunpack.c.l.b16 %v272
  %v1700 = vunpack.c.l.b16 %v273
  %v1701 = vunpack.c.l.b16 %v274
  %v1702 = vunpack.c.l.b16 %v275
  %v1703 = vunpack.c.l.b16 %v276
  %v1704 = vunpack.c.l.b16 %v277
  %v1705 = vunpack.c.l.b16 %v278
  %v1706 = vunpack.c.l.b16 %v279
  %v1707 = vunpack.c.l.b16 %v280
  %v1708 = vunpack.c.l.b16 %v281
  %v1709 = vunpack.c.l.b16 %v282
  %v1710 = vunpack.c.l.b16 %v283
  %v1711 = vunpack.c.l.b16 %v284
  %v1712 = vunpack.c.l.b16 %v285
  %v1713 = vunpack.c.l.b16 %v286
  %v1714 = vunpack.c.l.b16 %v287
  %v1715 = vunpack.c.l.b16 %v288
  %v1716 = vunpack.c.l.b16 %v289
  %v1717 = vunpack.c.l.b16 %v290
  %v1718 = vunpack.c.l.b16 %v291
  %v1719 = vunpack.c.l.b16 %v292
  %v1720 = vunpack.c.l.b16 %v293
  %v1721 = vunpack.c.l.b16 %v294
  %v1722 = vunpack.c.l.b16 %v295
  %v1723 = vunpack.c.l.b16 %v296
  %v1724 = vunpack.c.l.b16 %v297
  %v1725 = vunpack.c.l.b16 %v298
  %v1726 = vunpack.c.l.b16 %v299
  %v1727 = vunpack.c.l.b16 %v300
  %v1728 = vunpack.c.l.b16 %v301
  %v1729 = vunpack.c.l.b16 %v302
  %v1730 = vunpack.c.l.b16 %v303
  %v1731 = vunpack.c.l.b16 %v304
  %v1732 = vunpack.c.l.b16 %v305
  %v1733 = vunpack.c.l.b16 %v306
  %v1734 = vunpack.c.l.b16 %v307
  %v1735 = vunpack.c.l.b16 %v308
  %v1736 = vunpack.c.l.b16 %v309
  %v1737 = vunpack.c.l.b16 %v310
  %v1738 = vunpack.c.l.b16 %v311
  %v1739 = vunpack.c.l.b16 %v312
  %v1740 = vunpack.c.l.b16 %v313
  %v1741 = vunpack.c.l.b16 %v314
  %v1742 = vunpack.c.l.b16 %v315
  %v1743 = vunpack.c.l.b16 %v316
  %v1744 = vunpack.c.l.b16 %v317
  %v1745 = vunpack.c.l.b16 %v318
  %v1746 = vunpack.c.l.b16 %v319
  %v1747 = vunpack.c.l.b16 %v320
  %v1748 = vunpack.c.l.b16 %v321
  %v1749 = vunpack.c.l.b16 %v322
  %v1750 = vunpack.c.l.b16 %v323
  %v1751 = vunpack.c.l.b16 %v324
  %v1752 = vunpack.c.l.b16 %v325
  %v1753 = vunpack.c.l.b16 %v326
  %v1754 = vunpack.c.l.b16 %v327
  %v1755 = vunpack.c.l.b16 %v328
  %v1756 = vunpack.c.l.b16 %v329
  %v1757 = vunpack.c.l.b16 %v330
  %v1758 = vunpack.c.l.b16 %v331
  %v1759 = vunpack.c.l.b16 %v332
  %v1760 = vunpack.c.l.b16 %v333
  %v1761 = vunpack.c.l.b16 %v334
  %v1762 = vunpack.c.l.b16 %v335
  %v1763 = vunpack.c.l.b16 %v336
  %v1764 = vunpack.c.l.b16 %v337
  %v1765 = vunpack.c.l.b16 %v338
  %v1766 = vunpack.c.l.b16 %v339
  %v1767 = vunpack.c.l.b16 %v340
  %v1768 = vunpack.c.l.b16 %v341
  %v1769 = vunpack.c.l.b16 %v342
  %v1770 = vunpack.c.l.b16 %v343
  %v1771 = vunpack.c.l.b16 %v344
  %v1772 = vunpack.c.l.b16 %v345
  %v1773 = vunpack.c.l.b16 %v346
  %v1774 = vunpack.c.l.b16 %v347
  %v1775 = vunpack.c.l.b16 %v348
  %v1776 = vunpack.c.l.b16 %v349
  %v1777 = vunpack.c.l.b16 %v350
  %v1778 = vunpack.c.l.b16 %v351
  %v1779 = vunpack.c.l.b16 %v352
  %v1780 = vunpack.c.l.b16 %v353
  %v1781 = vunpack.c.l.b16 %v354
  %v1782 = vunpack.c.l.b16 %v355
  %v1783 = vunpack.c.l.b16 %v356
  %v1784 = vunpack.c.l.b16 %v357
  %v1785 = vunpack.c.l.b16 %v358
  %v1786 = vunpack.c.l.b16 %v359
  %v1787 = vunpack.c.l.b16 %v360
  %v1788 = vunpack.c.l.b16 %v361
  %v1789 = vunpack.c.l.b16 %v362
  %v1790 = vunpack.c.l.b16 %v363
  %v1791 = vunpack.c.l.b16 %v364
  %v1792 = vunpack.c.l.b16 %v365
  %v1793 = vunpack.c.l.b16 %v366
  %v1794 = vunpack.c.l.b16 %v367
  %v1795 = vunpack.c.l.b16 %v368
  %v1796 = vunpack.c.l.b16 %v369
  %v1797 = vunpack.c.l.b16 %v370
  %v1798 = vunpack.c.l.b16 %v371
  %v1799 = vunpack.c.l.b16 %v372
  %v1800 = vunpack.c.l.b16 %v373
  %v1801 = vunpack.c.l.b16 %v374
  %v1802 = vunpack.c.l.b16 %v375
  %v1803 = vunpack.c.l.b16 %v376
  %v1804 = vunpack.c.l.b16 %v377
  %v1805 = vunpack.c.l.b16 %v378
  %v1806 = vunpack.c.l.b16 %v379
  %v1807 = vunpack.c.l.b16 %v380
  %v1808 = vunpack.c.l.b16 %v381
  %v1809 = vunpack.c.l.b16 %v382
  %v1810 = vunpack.c.l.b16 %v383
  %v1811 = vunpack.c.l.b16 %v384
  %v1812 = vunpack.c.l.b16 %v385
  %v1813 = vunpack.c.l.b16 %v386
  %v1814 = vunpack.c.l.b16 %v387
  %v1815 = vunpack.c.l.b16 %v388
  %v1816 = vunpack.c.l.b16 %v389
  %v1817 = vunpack.c.l.b16 %v390
  %v1818 = vunpack.c.l.b16 %v391
  %v1819 = vunpack.c.l.b16 %v392
  %v1820 = vunpack.c.l.b16 %v393
  %v1821 = vunpack.c.l.b16 %v394
  %v1822 = vunpack.c.l.b16 %v395
  %v1823 = vunpack.c.l.b16 %v396
  %v1824 = vunpack.c.l.b16 %v397
  %v1825 = vunpack.c.l.b16 %v398
  %v1826 = vunpack.c.l.b16 %v399
  %v1827 = vunpack.c.l.b16 %v400
  %v1828 = vunpack.c.l.b16 %v401
  %v1829 = vunpack.c.l.b16 %v402
  %v1830 = vunpack.c.l.b16 %v403
  %v1831 = vunpack.c.l.b16 %v404
  %v1832 = vunpack.c.l.b16 %v405
  %v1833 = vunpack.c.l.b16 %v406
  %v1834 = vunpack.c.l.b16 %v407
  %v1835 = vunpack.c.l.b16 %v408
  %v1836 = vunpack.c.l.b16 %v409
  %v1837 = vunpack.c.l.b16 %v410
  %v1838 = vunpack.c.l.b16 %v411
  %v1839 = vunpack.c.l.b16 %v412
  %v1840 = vunpack.c.l.b16 %v413
  %v1841 = vunpack.c.l.b16 %v414
  %v1842 = vunpack.c.l.b16 %v415
  %v1843 = vunpack.c.l.b16 %v416
  %v1844 = vunpack.c.l.b16 %v417
  %v1845 = vunpack.c.l.b16 %v418
  %v1846 = vunpack.c.l.b16 %v419
  %v1847 = vunpack.c.l.b16 %v420
  %v1848 = vunpack.c.l.b16 %v421
  %v1849 = vunpack.c.l.b16 %v422
  %v1850 = vunpack.c.l.b16 %v423
  %v1851 = vunpack.c.l.b16 %v424
  %v1852 = vunpack.c.l.b16 %v425
  %v1853 = vunpack.c.l.b16 %v426
  %v1854 = vunpack.c.l.b16 %v427
  %v1855 = vunpack.c.l.b16 %v428
  %v1856 = vunpack.c.l.b16 %v429
  %v1857 = vunpack.c.l.b16 %v430
  %v1858 = vunpack.c.l.b16 %v431
  %v1859 = vunpack.c.l.b16 %v432
  %v1860 = vunpack.c.l.b16 %v433
  %v1861 = vunpack.c.l.b16 %v434
  %v1862 = vunpack.c.l.b16 %v435
  %v1863 = vunpack.c.l.b16 %v436
  %v1864 = vunpack.c.l.b16 %v437
  %v1865 = vunpack.c.l.b16 %v438
  %v1866 = vunpack.c.l.b16 %v439
  %v1867 = vunpack.c.l.b16 %v440
  %v1868 = vunpack.c.l.b16 %v441
  %v1869 = vunpack.c.l.b16 %v442
  %v1870 = vunpack.c.l.b16 %v443
  %v1871 = vunpack.c.l.b16 %v444
  %v1872 = vunpack.c.l.b16 %v445
  %v1873 = vunpack.c.l.b16 %v446
  %v1874 = vunpack.c.l.b16 %v447
  %v1875 = vunpack.c.l.b16 %v448
  %v1876 = vunpack.c.l.b16 %v449
  %v1877 = vunpack.c.l.b16 %v450
  %v1878 = vunpack.c.l.b16 %v451
  %v1879 = vunpack.c.l.b16 %v452
  %v1880 = vunpack.c.l.b16 %v453
  %v1881 = vunpack.c.l.b16 %v454
  %v1882 = vunpack.c.l.b16 %v455
  %v1883 = vunpack.c.l.b16 %v456
  %v1884 = vunpack.c.l.b16 %v457
  %v1885 = vunpack.c.l.b16 %v458
  %v1886 = vunpack.c.l.b16 %v459
  %v1887 = vunpack.c.l.b16 %v460
  %v1888 = vunpack.c.l.b16 %v461
  %v1889 = vunpack.c.l.b16 %v462
  %v1890 = vunpack.c.l.b16 %v463
  %v1891 = vunpack.c.l.b16 %v464
  %v1892 = vunpack.c.l.b16 %v465
  %v1893 = vunpack.c.l.b16 %v466
  %v1894 = vunpack.c.l.b16 %v467
  %v1895 = vunpack.c.l.b16 %v468
  %v1896 = vunpack.c.l.b16 %v469
  %v1897 = vunpack.c.l.b16 %v470
  %v1898 = vunpack.c.l.b16 %v471
  %v1899 = vunpack.c.l.b16 %v472
  %v1900 = vunpack.c.l.b16 %v473
  %v1901 = vunpack.c.l.b16 %v474
  %v1902 = vunpack.c.l.b16 %v475
  %v1903 = vunpack.c.l.b16 %v476
  %v1904 = vunpack.c.l.b16 %v477
  %v1905 = vunpack.c.l.b16 %v478
  %v1906 = vunpack.c.l.b16 %v479
  %v1907 = vunpack.c.l.b16 %v480
  %v1908 = vunpack.c.l.b16 %v481
  %v1909 = vunpack.c.l.b16 %v482
  %v1910 = vunpack.c.l.b16 %v483
  %v1911 = vunpack.c.l.b16 %v484
  %v1912 = vunpack.c.l.b16 %v485
  %v1913 = vunpack.c.l.b16 %v486
  %v1914 = vunpack.c.l.b16 %v487
  %v1915 = vunpack.c.l.b16 %v488
  %v1916 = vunpack.c.l.b16 %v489
  %v1917 = vunpack.c.l.b16 %v490
  %v1918 = vunpack.c.l.b16 %v491
  %v1919 = vunpack.c.l.b16 %v492
  %v1920 = vunpack.c.l.b16 %v493
  %v1921 = vunpack.c.l.b16 %v494
  %v1922 = vunpack.c.l.b16 %v495
  %v1923 = vunpack.c.l.b16 %v496
  %v1924 = vunpack.c.l.b16 %v497
  %v1925 = vunpack.c.l.b16 %v498
  %v1926 = vunpack.c.l.b16 %v499
  %v1927 = vunpack.c.l.b16 %v500
  %v1928 = vunpack.c.l.b16 %v501
  %v1929 = vunpack.c.l.b16 %v502
  %v1930 = vunpack.c.l.b16 %v503
  %v1931 = vunpack.c.l.b16 %v504
  %v1932 = vunpack.c.l.b16 %v505
  %v1933 = vunpack.c.l.b16 %v506
  %v1934 = vunpack.c.l.b16 %v507
  %v1935 = vunpack.c.l.b16 %v508
  %v1936 = vunpack.c.l.b16 %v509
  %v1937 = vunpack.c.l.b16 %v510
  %v1938 = vunpack.c.l.b16 %v511
  %v1939 = vunpack.c.l.b16 %v512
  %v1940 = vunpack.c.l.b16 %v513
  %v1941 = vunpack.c.l.b16 %v514
  %v1942 = vunpack.c.l.b16 %v515
  %v1943 = vunpack.c.l.b16 %v516
  %v1944 = vunpack.c.l.b16 %v517
  %v1945 = vunpack.c.l.b16 %v518
  %v1946 = vunpack.c.l.b16 %v519
  %v1947 = vunpack.c.l.b16 %v520
  %v1948 = vunpack.c.l.b16 %v521
  %v1949 = vunpack.c.l.b16 %v522
  %v1950 = vunpack.c.l.b16 %v523
  %v1951 = vunpack.c.l.b16 %v524
  %v1952 = vunpack.c.l.b16 %v525
  %v1953 = vunpack.c.l.b16 %v526
  %v1954 = vunpack.c.l.b16 %v527
  %v1955 = vunpack.c.l.b16 %v528
  %v1956 = vunpack.c.l.b16 %v529
  %v1957 = vunpack.c.l.b16 %v530
  %v1958 = vunpack.c.l.b16 %v531
  %v1959 = vunpack.c.l.b16 %v532
  %v1960 = vunpack.c.l.b16 %v533
  %v1961 = vunpack.c.l.b16 %v534
  %v1962 = vunpack.c.l.b16 %v535
  %v1963 = vunpack.c.l.b16 %v536
  %v1964 = vunpack.c.l.b16 %v537
  %v1965 = vunpack.c.l.b16 %v538
  %v1966 = vunpack.c.l.b16 %v539
  %v1967 = vunpack.c.l.b16 %v540
  %v1968 = vunpack.c.l.b16 %v541
  %v1969 = vunpack.c.l.b16 %v542
  %v1970 = vunpack.c.l.b16 %v543
  %v1971 = vunpack.c.l.b16 %v544
  %v1972 = vunpack.c.l.b16 %v545
  %v1973 = vunpack.c.l.b16 %v546
  %v1974 = vunpack.c.l.b16 %v547
  %v1975 = vunpack.c.l.b16 %v548
  %v1976 = vunpack.c.l.b16 %v549
  %v1977 = vunpack.c.l.b16 %v550
  %v1978 = vunpack.c.l.b16 %v551
  %v1979 = vunpack.c.l.b16 %v552
  %v1980 = vunpack.c.l.b16 %v553
  %v1981 = vunpack.c.l.b16 %v554
  %v1982 = vunpack.c.l.b16 %v555
  %v1983 = vunpack.c.l.b16 %v556
  %v1984 = vunpack.c.l.b16 %v557
  %v1985 = vunpack.c.l.b16 %v558
  %v1986 = vunpack.c.l.b16 %v559
  %v1987 = vunpack.c.l.b16 %v560
  %v1988 = vunpack.c.l.b16 %v561
  %v1989 = vunpack.c.l.b16 %v562
  %v1990 = vunpack.c.l.b16 %v563
  %v1991 = vunpack.c.l.b16 %v564
  %v1992 = vunpack.c.l.b16 %v565
  %v1993 = vunpack.c.l.b16 %v566
  %v1994 = vunpack.c.l.b16 %v567
  %v1995 = vunpack.c.l.b16 %v568
  %v1996 = vunpack.c.l.b16 %v569
  %v1997 = vunpack.c.l.b16 %v570
  %v1998 = vunpack.c.l.b16 %v571
  %v1999 = vunpack.c.l.b16 %v572
  %v2000 = vunpack.c.l.b16 %v573
  %v2001 = vunpack.c.l.b16 %v574
  %v2002 = vunpack.c.l.b16 %v575
  %v2003 = vunpack.c.l.b16 %v576
  %v2004 = vunpack.c.l.b16 %v577
  %v2005 = vunpack.c.l.b16 %v578
  %v2006 = vunpack.c.l.b16 %v579
  %v2007 = vunpack.c.l.b16 %v580
  %v2008 = vunpack.c.l.b16 %v581
  %v2009 = vunpack.c.l.b16 %v582
  %v2010 = vunpack.c.l.b16 %v583
  %v2011 = vunpack.c.l.b16 %v584
  %v2012 = vunpack.c.l.b16 %v585
  %v2013 = vunpack.c.l.b16 %v586
  %v2014 = vunpack.c.l.b16 %v587
  %v2015 = vunpack.c.l.b16 %v588
  %v2016 = vunpack.c.l.b16 %v589
  %v2017 = vunpack.c.l.b16 %v590
  %v2018 = vunpack.c.l.b16 %v591
  %v2019 = vunpack.c.l.b16 %v592
  %v2020 = vunpack.c.l.b16 %v593
  %v2021 = vunpack.c.l.b16 %v594
  %v2022 = vunpack.c.l.b16 %v595
  %v2023 = vunpack.c.l.b16 %v596
  %v2024 = vunpack.c.l.b16 %v597
  %v2025 = vunpack.c.l.b16 %v598
  %v2026 = vunpack.c.l.b16 %v599
  %v2027 = vunpack.c.l.b16 %v600
  %v2028 = vunpack.c.l.b16 %v601
  %v2029 = vunpack.c.l.b16 %v602
  %v2030 = vunpack.c.l.b16 %v603
  %v2031 = vunpack.c.l.b16 %v604
  %v2032 = vunpack.c.l.b16 %v605
  %v2033 = vunpack.c.l.b16 %v606
  %v2034 = vunpack.c.l.b16 %v607
  %v2035 = vunpack.c.l.b16 %v608
  %v2036 = vunpack.c.l.b16 %v609
  %v2037 = vunpack.c.l.b16 %v610
  %v2038 = vunpack.c.l.b16 %v611
  %v2039 = vunpack.c.l.b16 %v612
  %v2040 = vunpack.c.l.b16 %v613
  %v2041 = vunpack.c.l.b16 %v614
  %v2042 = vunpack.c.l.b16 %v615
  %v2043 = vunpack.c.l.b16 %v616
  %v2044 = vunpack.c.l.b16 %v617
  %v2045 = vunpack.c.l.b16 %v618
  %v2046 = vunpack.c.l.b16 %v619
  %v2047 = vunpack.c.l.b16 %v620
  %v2048 = vunpack.c.l.b16 %v621
  %v2049 = vunpack.c.l.b16 %v622
  %v2050 = vunpack.c.l.b16 %v623
  %v2051 = vunpack.c.l.b16 %v624
  %v2052 = vunpack.c.l.b16 %v625
  %v2053 = vunpack.c.l.b16 %v626
  %v2054 = vunpack.c.l.b16 %v627
  %v2055 = vunpack.c.l.b16 %v628
  %v2056 = vunpack.c.l.b16 %v629
  %v2057 = vunpack.c.l.b16 %v630
  %v2058 = vunpack.c.l.b16 %v631
  %v2059 = vunpack.c.l.b16 %v632
  %v2060 = vunpack.c.l.b16 %v633
  %v2061 = vunpack.c.l.b16 %v634
  %v2062 = vunpack.c.l.b16 %v635
  %v2063 = vunpack.c.l.b16 %v636
  %v2064 = vunpack.c.l.b16 %v637
  %v2065 = vunpack.c.l.b16 %v638
  %v2066 = vunpack.c.l.b16 %v639
  %v2067 = vunpack.c.l.b16 %v640
  %v2068 = vunpack.c.l.b16 %v641
  %v2069 = vunpack.c.l.b16 %v642
  %v2070 = vunpack.c.l.b16 %v643
  %v2071 = vunpack.c.l.b16 %v644
  %v2072 = vunpack.c.l.b16 %v645
  %v2073 = vunpack.c.l.b16 %v646
  %v2074 = vunpack.c.l.b16 %v647
  %v2075 = vunpack.c.l.b16 %v648
  %v2076 = vunpack.c.l.b16 %v649
  %v2077 = vunpack.c.l.b16 %v650
  %v2078 = vunpack.c.l.b16 %v651
  %v2079 = vunpack.c.l.b16 %v652
  %v2080 = vunpack.c.l.b16 %v653
  %v2081 = vunpack.c.l.b16 %v654
  %v2082 = vunpack.c.l.b16 %v655
  %v2083 = vunpack.c.l.b16 %v656
  %v2084 = vunpack.c.l.b16 %v657
  %v2085 = vunpack.c.l.b16 %v658
  %v2086 = vunpack.c.l.b16 %v659
  %v2087 = vunpack.c.l.b16 %v660
  %v2088 = vunpack.c.l.b16 %v661
  %v2089 = vunpack.c.l.b16 %v662
  %v2090 = vunpack.c.l.b16 %v663
  %v2091 = vunpack.c.l.b16 %v664
  %v2092 = vunpack.c.l.b16 %v665
  %v2093 = vunpack.c.l.b16 %v666
  %v2094 = vunpack.c.l.b16 %v667
  %v2095 = vunpack.c.l.b16 %v668
  %v2096 = vunpack.c.l.b16 %v669
  %v2097 = vunpack.c.l.b16 %v670
  %v2098 = vunpack.c.l.b16 %v671
  %v2099 = vunpack.c.l.b16 %v672
  %v2100 = vunpack.c.l.b16 %v673
  %v2101 = vunpack.c.l.b16 %v674
  %v2102 = vunpack.c.l.b16 %v675
  %v2103 = vunpack.c.l.b16 %v676
  %v2104 = vunpack.c.l.b16 %v677
  %v2105 = vunpack.c.l.b16 %v678
  %v2106 = vunpack.c.l.b16 %v679
  %v2107 = vunpack.c.l.b16 %v680
  %v2108 = vunpack.c.l.b16 %v681
  %v2109 = vunpack.c.l.b16 %v682
  %v2110 = vunpack.c.l.b16 %v683
  %v2111 = vunpack.c.l.b16 %v684
  %v2112 = vunpack.c.l.b16 %v685
  %v2113 = vunpack.c.l.b16 %v686
  %v2114 = vpack.c.b16 %v1475, %v1474
  %v2115 = vpack.c.b16 %v1477, %v1476
  %v2116 = vpack.c.b16 %v1479, %v1478
  %v2117 = vpack.c.b16 %v1481, %v1480
  %v2118 = vpack.c.b16 %v1483, %v1482
  %v2119 = vpack.c.b16 %v1485, %v1484
  %v2120 = vpack.c.b16 %v1487, %v1486
  %v2121 = vpack.c.b16 %v1489, %v1488
  %v2122 = vpack.c.b16 %v1491, %v1490
  %v2123 = vpack.c.b16 %v1493, %v1492
  %v2124 = vpack.c.b16 %v1495, %v1494
  %v2125 = vpack.c.b16 %v1497, %v1496
  %v2126 = vpack.c.b16 %v1499, %v1498
  %v2127 = vpack.c.b16 %v1501, %v1500
  %v2128 = vpack.c.b16 %v1503, %v1502
  %v2129 = vpack.c.b16 %v1505, %v1504
  %v2130 = vpack.c.b16 %v1507, %v1506
  %v2131 = vpack.c.b16 %v1509, %v1508
  %v2132 = vpack.c.b16 %v1511, %v1510
  %v2133 = vpack.c.b16 %v1513, %v1512
  %v2134 = vpack.c.b16 %v1515, %v1514
  %v2135 = vpack.c.b16 %v1517, %v1516
  %v2136 = vpack.c.b16 %v1519, %v1518
  %v2137 = vpack.c.b16 %v1521, %v1520
  %v2138 = vpack.c.b16 %v1523, %v1522
  %v2139 = vpack.c.b16 %v1525, %v1524
  %v2140 = vpack.c.b16 %v1527, %v1526
  %v2141 = vpack.c.b16 %v1529, %v1528
  %v2142 = vpack.c.b16 %v1531, %v1530
  %v2143 = vpack.c.b16 %v1533, %v1532
  %v2144 = vpack.c.b16 %v1535, %v1534
  %v2145 = vpack.c.b16 %v1537, %v1536
  %v2146 = vpack.c.b16 %v1539, %v1538
  %v2147 = vpack.c.b16 %v1541, %v1540
  %v2148 = vpack.c.b16 %v1543, %v1542
  %v2149 = vpack.c.b16 %v1545, %v1544
  %v2150 = vpack.c.b16 %v1547, %v1546
  %v2151 = vpack.c.b16 %v1549, %v1548
  %v2152 = vpack.c.b16 %v1551, %v1550
  %v2153 = vpack.c.b16 %v1553, %v1552
  %v2154 = vpack.c.b16 %v1555, %v1554
  %v2155 = vpack.c.b16 %v1557, %v1556
  %v2156 = vpack.c.b16 %v1559, %v1558
  %v2157 = vpack.c.b16 %v1561, %v1560
  %v2158 = vpack.c.b16 %v1563, %v1562
  %v2159 = vpack.c.b16 %v1565, %v1564
  %v2160 = vpack.c.b16 %v1567, %v1566
  %v2161 = vpack.c.b16 %v1569, %v1568
  %v2162 = vpack.c.b16 %v1571, %v1570
  %v2163 = vpack.c.b16 %v1573, %v1572
  %v2164 = vpack.c.b16 %v1575, %v1574
  %v2165 = vpack.c.b16 %v1577, %v1576
  %v2166 = vpack.c.b16 %v1579, %v1578
  %v2167 = vpack.c.b16 %v1581, %v1580
  %v2168 = vpack.c.b16 %v1583, %v1582
  %v2169 = vpack.c.b16 %v1585, %v1584
  %v2170 = vpack.c.b16 %v1587, %v1586
  %v2171 = vpack.c.b16 %v1589, %v1588
  %v2172 = vpack.c.b16 %v1591, %v1590
  %v2173 = vpack.c.b16 %v1593, %v1592
  %v2174 = vpack.c.b16 %v1595, %v1594
  %v2175 = vpack.c.b16 %v1597, %v1596
  %v2176 = vpack.c.b16 %v1599, %v1598
  %v2177 = vpack.c.b16 %v1601, %v1600
  %v2178 = vpack.c.b16 %v1603, %v1602
  %v2179 = vpack.c.b16 %v1605, %v1604
  %v2180 = vpack.c.b16 %v1607, %v1606
  %v2181 = vpack.c.b16 %v1609, %v1608
  %v2182 = vpack.c.b16 %v1611, %v1610
  %v2183 = vpack.c.b16 %v1613, %v1612
  %v2184 = vpack.c.b16 %v1615, %v1614
  %v2185 = vpack.c.b16 %v1617, %v1616
  %v2186 = vpack.c.b16 %v1619, %v1618
  %v2187 = vpack.c.b16 %v1621, %v1620
  %v2188 = vpack.c.b16 %v1623, %v1622
  %v2189 = vpack.c.b16 %v1625, %v1624
  %v2190 = vpack.c.b16 %v1627, %v1626
  %v2191 = vpack.c.b16 %v1629, %v1628
  %v2192 = vpack.c.b16 %v1631, %v1630
  %v2193 = vpack.c.b16 %v1633, %v1632
  %v2194 = vpack.c.b16 %v1635, %v1634
  %v2195 = vpack.c.b16 %v1637, %v1636
  %v2196 = vpack.c.b16 %v1639, %v1638
  %v2197 = vpack.c.b16 %v1641, %v1640
  %v2198 = vpack.c.b16 %v1643, %v1642
  %v2199 = vpack.c.b16 %v1645, %v1644
  %v2200 = vpack.c.b16 %v1647, %v1646
  %v2201 = vpack.c.b16 %v1649, %v1648
  %v2202 = vpack.c.b16 %v1651, %v1650
  %v2203 = vpack.c.b16 %v1653, %v1652
  %v2204 = vpack.c.b16 %v1655, %v1654
  %v2205 = vpack.c.b16 %v1657, %v1656
  %v2206 = vpack.c.b16 %v1659, %v1658
  %v2207 = vpack.c.b16 %v1661, %v1660
  %v2208 = vpack.c.b16 %v1663, %v1662
  %v2209 = vpack.c.b16 %v1665, %v1664
  %v2210 = vpack.c.b16 %v1667, %v1666
  %v2211 = vpack.c.b16 %v1669, %v1668
  %v2212 = vpack.c.b16 %v1671, %v1670
  %v2213 = vpack.c.b16 %v1673, %v1672
  %v2214 = vpack.c.b16 %v1675, %v1674
  %v2215 = vpack.c.b16 %v1677, %v1676
  %v2216 = vpack.c.b16 %v1679, %v1678
  %v2217 = vpack.c.b16 %v1681, %v1680
  %v2218 = vpack.c.b16 %v1683, %v1682
  %v2219 = vpack.c.b16 %v1685, %v1684
  %v2220 = vpack.c.b16 %v1687, %v1686
  %v2221 = vpack.c.b16 %v1689, %v1688
  %v2222 = vpack.c.b16 %v1691, %v1690
  %v2223 = vpack.c.b16 %v1693, %v1692
  %v2224 = vpack.c.b16 %v1695, %v1694
  %v2225 = vpack.c.b16 %v1697, %v1696
  %v2226 = vpack.c.b16 %v1699, %v1698
  %v2227 = vpack.c.b16 %v1701, %v1700
  %v2228 = vpack.c.b16 %v1703, %v1702
  %v2229 = vpack.c.b16 %v1705, %v1704
  %v2230 = vpack.c.b16 %v1707, %v1706
  %v2231 = vpack.c.b16 %v1709, %v1708
  %v2232 = vpack.c.b16 %v1711, %v1710
  %v2233 = vpack.c.b16 %v1713, %v1712
  %v2234 = vpack.c.b16 %v1715, %v1714
  %v2235 = vpack.c.b16 %v1717, %v1716
  %v2236 = vpack.c.b16 %v1719, %v1718
  %v2237 = vpack.c.b16 %v1721, %v1720
  %v2238 = vpack.c.b16 %v1723, %v1722
  %v2239 = vpack.c.b16 %v1725, %v1724
  %v2240 = vpack.c.b16 %v1727, %v1726
  %v2241 = vpack.c.b16 %v1729, %v1728
  %v2242 = vpack.c.b16 %v1731, %v1730
  %v2243 = vpack.c.b16 %v1733, %v1732
  %v2244 = vpack.c.b16 %v1735, %v1734
  %v2245 = vpack.c.b16 %v1737, %v1736
  %v2246 = vpack.c.b16 %v1739, %v1738
  %v2247 = vpack.c.b16 %v1741, %v1740
  %v2248 = vpack.c.b16 %v1743, %v1742
  %v2249 = vpack.c.b16 %v1745, %v1744
  %v2250 = vpack.c.b16 %v1747, %v1746
  %v2251 = vpack.c.b16 %v1749, %v1748
  %v2252 = vpack.c.b16 %v1751, %v1750
  %v2253 = vpack.c.b16 %v1753, %v1752
  %v2254 = vpack.c.b16 %v1755, %v1754
  %v2255 = vpack.c.b16 %v1757, %v1756
  %v2256 = vpack.c.b16 %v1759, %v1758
  %v2257 = vpack.c.b16 %v1761, %v1760
  %v2258 = vpack.c.b16 %v1763, %v1762
  %v2259 = vpack.c.b16 %v1765, %v1764
  %v2260 = vpack.c.b16 %v1767, %v1766
  %v2261 = vpack.c.b16 %v1769, %v1768
  %v2262 = vpack.c.b16 %v1771, %v1770
  %v2263 = vpack.c.b16 %v1773, %v1772
  %v2264 = vpack.c.b16 %v1775, %v1774
  %v2265 = vpack.c.b16 %v1777, %v1776
  %v2266 = vpack.c.b16 %v1779, %v1778
  %v2267 = vpack.c.b16 %v1781, %v1780
  %v2268 = vpack.c.b16 %v1783, %v1782
  %v2269 = vpack.c.b16 %v1785, %v1784
  %v2270 = vpack.c.b16 %v1787, %v1786
  %v2271 = vpack.c.b16 %v1789, %v1788
  %v2272 = vpack.c.b16 %v1791, %v1790
  %v2273 = vpack.c.b16 %v1793, %v1792
  %v2274 = vpack.c.b16 %v1795, %v1794
  %v2275 = vpack.c.b16 %v1797, %v1796
  %v2276 = vpack.c.b16 %v1799, %v1798
  %v2277 = vpack.c.b16 %v1801, %v1800
  %v2278 = vpack.c.b16 %v1803, %v1802
  %v2279 = vpack.c.b16 %v1805, %v1804
  %v2280 = vpack.c.b16 %v1807, %v1806
  %v2281 = vpack.c.b16 %v1809, %v1808
  %v2282 = vpack.c.b16 %v1811, %v1810
  %v2283 = vpack.c.b16 %v1813, %v1812
  %v2284 = vpack.c.b16 %v1815, %v1814
  %v2285 = vpack.c.b16 %v1817, %v1816
  %v2286 = vpack.c.b16 %v1819, %v1818
  %v2287 = vpack.c.b16 %v1821, %v1820
  %v2288 = vpack.c.b16 %v1823, %v1822
  %v2289 = vpack.c.b16 %v1825, %v1824
  %v2290 = vpack.c.b16 %v1827, %v1826
  %v2291 = vpack.c.b16 %v1829, %v1828
  %v2292 = vpack.c.b16 %v1831, %v1830
  %v2293 = vpack.c.b16 %v1833, %v1832
  %v2294 = vpack.c.b16 %v1835, %v1834
  %v2295 = vpack.c.b16 %v1837, %v1836
  %v2296 = vpack.c.b16 %v1839, %v1838
  %v2297 = vpack.c.b16 %v1841, %v1840
  %v2298 = vpack.c.b16 %v1843, %v1842
  %v2299 = vpack.c.b16 %v1845, %v1844
  %v2300 = vpack.c.b16 %v1847, %v1846
  %v2301 = vpack.c.b16 %v1849, %v1848
  %v2302 = vpack.c.b16 %v1851, %v1850
  %v2303 = vpack.c.b16 %v1853, %v1852
  %v2304 = vpack.c.b16 %v1855, %v1854
  %v2305 = vpack.c.b16 %v1857, %v1856
  %v2306 = vpack.c.b16 %v1859, %v1858
  %v2307 = vpack.c.b16 %v1861, %v1860
  %v2308 = vpack.c.b16 %v1863, %v1862
  %v2309 = vpack.c.b16 %v1865, %v1864
  %v2310 = vpack.c.b16 %v1867, %v1866
  %v2311 = vpack.c.b16 %v1869, %v1868
  %v2312 = vpack.c.b16 %v1871, %v1870
  %v2313 = vpack.c.b16 %v1873, %v1872
  %v2314 = vpack.c.b16 %v1875, %v1874
  %v2315 = vpack.c.b16 %v1877, %v1876
  %v2316 = vpack.c.b16 %v1879, %v1878
  %v2317 = vpack.c.b16 %v1881, %v1880
  %v2318 = vpack.c.b16 %v1883, %v1882
  %v2319 = vpack.c.b16 %v1885, %v1884
  %v2320 = vpack.c.b16 %v1887, %v1886
  %v2321 = vpack.c.b16 %v1889, %v1888
  %v2322 = vpack.c.b16 %v1891, %v1890
  %v2323 = vpack.c.b16 %v1893, %v1892
  %v2324 = vpack.c.b16 %v1895, %v1894
  %v2325 = vpack.c.b16 %v1897, %v1896
  %v2326 = vpack.c.b16 %v1899, %v1898
  %v2327 = vpack.c.b16 %v1901, %v1900
  %v2328 = vpack.c.b16 %v1903, %v1902
  %v2329 = vpack.c.b16 %v1905, %v1904
  %v2330 = vpack.c.b16 %v1907, %v1906
  %v2331 = vpack.c.b16 %v1909, %v1908
  %v2332 = vpack.c.b16 %v1911, %v1910
  %v2333 = vpack.c.b16 %v1913, %v1912
  %v2334 = vpack.c.b16 %v1915, %v1914
  %v2335 = vpack.c.b16 %v1917, %v1916
  %v2336 = vpack.c.b16 %v1919, %v1918
  %v2337 = vpack.c.b16 %v1921, %v1920
  %v2338 = vpack.c.b16 %v1923, %v1922
  %v2339 = vpack.c.b16 %v1925, %v1924
  %v2340 = vpack.c.b16 %v1927, %v1926
  %v2341 = vpack.c.b16 %v1929, %v1928
  %v2342 = vpack.c.b16 %v1931, %v1930
  %v2343 = vpack.c.b16 %v1933, %v1932
  %v2344 = vpack.c.b16 %v1935, %v1934
  %v2345 = vpack.c.b16 %v1937, %v1936
  %v2346 = vpack.c.b16 %v1939, %v1938
  %v2347 = vpack.c.b16 %v1941, %v1940
  %v2348 = vpack.c.b16 %v1943, %v1942
  %v2349 = vpack.c.b16 %v1945, %v1944
  %v2350 = vpack.c.b16 %v1947, %v1946
  %v2351 = vpack.c.b16 %v1949, %v1948
  %v2352 = vpack.c.b16 %v1951, %v1950
  %v2353 = vpack.c.b16 %v1953, %v1952
  %v2354 = vpack.c.b16 %v1955, %v1954
  %v2355 = vpack.c.b16 %v1957, %v1956
  %v2356 = vpack.c.b16 %v1959, %v1958
  %v2357 = vpack.c.b16 %v1961, %v1960
  %v2358 = vpack.c.b16 %v1963, %v1962
  %v2359 = vpack.c.b16 %v1965, %v1964
  %v2360 = vpack.c.b16 %v1967, %v1966
  %v2361 = vpack.c.b16 %v1969, %v1968
  %v2362 = vpack.c.b16 %v1971, %v1970
  %v2363 = vpack.c.b16 %v1973, %v1972
  %v2364 = vpack.c.b16 %v1975, %v1974
  %v2365 = vpack.c.b16 %v1977, %v1976
  %v2366 = vpack.c.b16 %v1979, %v1978
  %v2367 = vpack.c.b16 %v1981, %v1980
  %v2368 = vpack.c.b16 %v1983, %v1982
  %v2369 = vpack.c.b16 %v1985, %v1984
  %v2370 = vpack.c.b16 %v1987, %v1986
  %v2371 = vpack.c.b16 %v1989, %v1988
  %v2372 = vpack.c.b16 %v1991, %v1990
  %v2373 = vpack.c.b16 %v1993, %v1992
  %v2374 = vpack.c.b16 %v1995, %v1994
  %v2375 = vpack.c.b16 %v1997, %v1996
  %v2376 = vpack.c.b16 %v1999, %v1998
  %v2377 = vpack.c.b16 %v2001, %v2000
  %v2378 = vpack.c.b16 %v2003, %v2002
  %v2379 = vpack.c.b16 %v2005, %v2004
  %v2380 = vpack.c.b16 %v2007, %v2006
  %v2381 = vpack.c.b16 %v2009, %v2008
  %v2382 = vpack.c.b16 %v2011, %v2010
  %v2383 = vpack.c.b16 %v2013, %v2012
  %v2384 = vpack.c.b16 %v2015, %v2014
  %v2385 = vpack.c.b16 %v2017, %v2016
  %v2386 = vpack.c.b16 %v2019, %v2018
  %v2387 = vpack.c.b16 %v2021, %v2020
  %v2388 = vpack.c.b16 %v2023, %v2022
  %v2389 = vpack.c.b16 %v2025, %v2024
  %v2390 = vpack.c.b16 %v2027, %v2026
  %v2391 = vpack.c.b16 %v2029, %v2028
  %v2392 = vpack.c.b16 %v2031, %v2030
  %v2393 = vpack.c.b16 %v2033, %v2032
  %v2394 = vpack.c.b16 %v2035, %v2034
  %v2395 = vpack.c.b16 %v2037, %v2036
  %v2396 = vpack.c.b16 %v2039, %v2038
  %v2397 = vpack.c.b16 %v2041, %v2040
  %v2398 = vpack.c.b16 %v2043, %v2042
  %v2399 = vpack.c.b16 %v2045, %v2044
  %v2400 = vpack.c.b16 %v2047, %v2046
  %v2401 = vpack.c.b16 %v2049, %v2048
  %v2402 = vpack.c.b16 %v2051, %v2050
  %v2403 = vpack.c.b16 %v2053, %v2052
  %v2404 = vpack.c.b16 %v2055, %v2054
  %v2405 = vpack.c.b16 %v2057, %v2056
  %v2406 = vpack.c.b16 %v2059, %v2058
  %v2407 = vpack.c.b16 %v2061, %v2060
  %v2408 = vpack.c.b16 %v2063, %v2062
  %v2409 = vpack.c.b16 %v2065, %v2064
  %v2410 = vpack.c.b16 %v2067, %v2066
  %v2411 = vpack.c.b16 %v2069, %v2068
  %v2412 = vpack.c.b16 %v2071, %v2070
  %v2413 = vpack.c.b16 %v2073, %v2072
  %v2414 = vpack.c.b16 %v2075, %v2074
  %v2415 = vpack.c.b16 %v2077, %v2076
  %v2416 = vpack.c.b16 %v2079, %v2078
  %v2417 = vpack.c.b16 %v2081, %v2080
  %v2418 = vpack.c.b16 %v2083, %v2082
  %v2419 = vpack.c.b16 %v2085, %v2084
  %v2420 = vpack.c.b16 %v2087, %v2086
  %v2421 = vpack.c.b16 %v2089, %v2088
  %v2422 = vpack.c.b16 %v2091, %v2090
  %v2423 = vpack.c.b16 %v2093, %v2092
  %v2424 = vpack.c.b16 %v2095, %v2094
  %v2425 = vpack.c.b16 %v2097, %v2096
  %v2426 = vpack.c.b16 %v2099, %v2098
  %v2427 = vpack.c.b16 %v2101, %v2100
  %v2428 = vpack.c.b16 %v2103, %v2102
  %v2429 = vpack.c.b16 %v2105, %v2104
  %v2430 = vpack.c.b16 %v2107, %v2106
  %v2431 = vpack.c.b16 %v2109, %v2108
  %v2432 = vpack.c.b16 %v2111, %v2110
  %v2433 = vpack.c.b16 %v2113, %v2112
  %2754 = vmatprep.subr.bf16.mxu0 0
  %2755 = vmatpush1.bf16.msra.mxu0 %v2114
  %2756 = vmatprep.subr.bf16.mxu0 0
  %2757 = vmatpush1.bf16.msra.mxu0 %v2115
  %2758 = vmatprep.subr.bf16.mxu0 0
  %2759 = vmatpush1.bf16.msra.mxu0 %v2116
  %2760 = vmatprep.subr.bf16.mxu0 0
  %2761 = vmatpush1.bf16.msra.mxu0 %v2117
  %2762 = vmatprep.subr.bf16.mxu0 0
  %2763 = vmatpush1.bf16.msra.mxu0 %v2118
  %2764 = vmatprep.subr.bf16.mxu0 0
  %2765 = vmatpush1.bf16.msra.mxu0 %v2119
  %2766 = vmatprep.subr.bf16.mxu0 0
  %2767 = vmatpush1.bf16.msra.mxu0 %v2120
  %2768 = vmatprep.subr.bf16.mxu0 0
  %2769 = vmatpush1.bf16.msra.mxu0 %v2121
  %2770 = vmatprep.subr.bf16.mxu0 0
  %2771 = vmatpush1.bf16.msra.mxu0 %v2122
  %2772 = vmatprep.subr.bf16.mxu0 0
  %2773 = vmatpush1.bf16.msra.mxu0 %v2123
  %2774 = vmatprep.subr.bf16.mxu0 0
  %2775 = vmatpush1.bf16.msra.mxu0 %v2124
  %2776 = vmatprep.subr.bf16.mxu0 0
  %2777 = vmatpush1.bf16.msra.mxu0 %v2125
  %2778 = vmatprep.subr.bf16.mxu0 0
  %2779 = vmatpush1.bf16.msra.mxu0 %v2126
  %2780 = vmatprep.subr.bf16.mxu0 0
  %2781 = vmatpush1.bf16.msra.mxu0 %v2127
  %2782 = vmatprep.subr.bf16.mxu0 0
  %2783 = vmatpush1.bf16.msra.mxu0 %v2128
  %2784 = vmatprep.subr.bf16.mxu0 0
  %2785 = vmatpush1.bf16.msra.mxu0 %v2129
  %2786 = vmatprep.mubr.bf16.mxu0 %v755
  %2787 = vmatmul.mubr.bf16.gmra.mrb[0].mxu0 %v754
  %v2788 = vpop.f32.mrb[0].mxu0
  %v2789 = vadd.f32 %v692, %v2788
  %v2790 = vpop.f32.mrb[0].mxu0
  %v2791 = vpop.f32.mrb[0].mxu0
  %v2792 = vpop.f32.mrb[0].mxu0
  %2793 = vdwg.mxu0
  %2794 = vmatprep.subr.bf16.mxu0 0
  %2795 = vmatpush1.bf16.msra.mxu0 %v2130
  %2796 = vmatprep.subr.bf16.mxu0 0
  %2797 = vmatpush1.bf16.msra.mxu0 %v2131
  %2798 = vmatprep.subr.bf16.mxu0 0
  %2799 = vmatpush1.bf16.msra.mxu0 %v2132
  %2800 = vmatprep.subr.bf16.mxu0 0
  %2801 = vmatpush1.bf16.msra.mxu0 %v2133
  %2802 = vmatprep.subr.bf16.mxu0 0
  %2803 = vmatpush1.bf16.msra.mxu0 %v2134
  %2804 = vmatprep.subr.bf16.mxu0 0
  %2805 = vmatpush1.bf16.msra.mxu0 %v2135
  %2806 = vmatprep.subr.bf16.mxu0 0
  %2807 = vmatpush1.bf16.msra.mxu0 %v2136
  %2808 = vmatprep.subr.bf16.mxu0 0
  %2809 = vmatpush1.bf16.msra.mxu0 %v2137
  %2810 = vmatprep.subr.bf16.mxu0 0
  %2811 = vmatpush1.bf16.msra.mxu0 %v2138
  %2812 = vmatprep.subr.bf16.mxu0 0
  %2813 = vmatpush1.bf16.msra.mxu0 %v2139
  %2814 = vmatprep.subr.bf16.mxu0 0
  %2815 = vmatpush1.bf16.msra.mxu0 %v2140
  %2816 = vmatprep.subr.bf16.mxu0 0
  %2817 = vmatpush1.bf16.msra.mxu0 %v2141
  %2818 = vmatprep.subr.bf16.mxu0 0
  %2819 = vmatpush1.bf16.msra.mxu0 %v2142
  %2820 = vmatprep.subr.bf16.mxu0 0
  %2821 = vmatpush1.bf16.msra.mxu0 %v2143
  %2822 = vmatprep.subr.bf16.mxu0 0
  %2823 = vmatpush1.bf16.msra.mxu0 %v2144
  %2824 = vmatprep.subr.bf16.mxu0 0
  %2825 = vmatpush1.bf16.msra.mxu0 %v2145
  %2826 = vmatprep.mubr.bf16.mxu0 %v757
  %2827 = vmatmul.mubr.bf16.gmra.mrb[0].mxu0 %v756
  %v2828 = vpop.f32.mrb[0].mxu0
  %v2829 = vadd.f32 %v2789, %v2828
  %v2830 = vpop.f32.mrb[0].mxu0
  %v2831 = vpop.f32.mrb[0].mxu0
  %v2832 = vpop.f32.mrb[0].mxu0
  %2833 = vdwg.mxu0
  %2834 = vmatprep.subr.bf16.mxu0 0
  %2835 = vmatpush1.bf16.msra.mxu0 %v2146
  %2836 = vmatprep.subr.bf16.mxu0 0
  %2837 = vmatpush1.bf16.msra.mxu0 %v2147
  %2838 = vmatprep.subr.bf16.mxu0 0
  %2839 = vmatpush1.bf16.msra.mxu0 %v2148
  %2840 = vmatprep.subr.bf16.mxu0 0
  %2841 = vmatpush1.bf16.msra.mxu0 %v2149
  %2842 = vmatprep.subr.bf16.mxu0 0
  %2843 = vmatpush1.bf16.msra.mxu0 %v2150
  %2844 = vmatprep.subr.bf16.mxu0 0
  %2845 = vmatpush1.bf16.msra.mxu0 %v2151
  %2846 = vmatprep.subr.bf16.mxu0 0
  %2847 = vmatpush1.bf16.msra.mxu0 %v2152
  %2848 = vmatprep.subr.bf16.mxu0 0
  %2849 = vmatpush1.bf16.msra.mxu0 %v2153
  %2850 = vmatprep.subr.bf16.mxu0 0
  %2851 = vmatpush1.bf16.msra.mxu0 %v2154
  %2852 = vmatprep.subr.bf16.mxu0 0
  %2853 = vmatpush1.bf16.msra.mxu0 %v2155
  %2854 = vmatprep.subr.bf16.mxu0 0
  %2855 = vmatpush1.bf16.msra.mxu0 %v2156
  %2856 = vmatprep.subr.bf16.mxu0 0
  %2857 = vmatpush1.bf16.msra.mxu0 %v2157
  %2858 = vmatprep.subr.bf16.mxu0 0
  %2859 = vmatpush1.bf16.msra.mxu0 %v2158
  %2860 = vmatprep.subr.bf16.mxu0 0
  %2861 = vmatpush1.bf16.msra.mxu0 %v2159
  %2862 = vmatprep.subr.bf16.mxu0 0
  %2863 = vmatpush1.bf16.msra.mxu0 %v2160
  %2864 = vmatprep.subr.bf16.mxu0 0
  %2865 = vmatpush1.bf16.msra.mxu0 %v2161
  %2866 = vmatprep.mubr.bf16.mxu0 %v759
  %2867 = vmatmul.mubr.bf16.gmra.mrb[0].mxu0 %v758
  %v2868 = vpop.f32.mrb[0].mxu0
  %v2869 = vadd.f32 %v2829, %v2868
  %v2870 = vpop.f32.mrb[0].mxu0
  %v2871 = vpop.f32.mrb[0].mxu0
  %v2872 = vpop.f32.mrb[0].mxu0
  %2873 = vdwg.mxu0
  %2874 = vmatprep.subr.bf16.mxu0 0
  %2875 = vmatpush1.bf16.msra.mxu0 %v2162
  %2876 = vmatprep.subr.bf16.mxu0 0
  %2877 = vmatpush1.bf16.msra.mxu0 %v2163
  %2878 = vmatprep.subr.bf16.mxu0 0
  %2879 = vmatpush1.bf16.msra.mxu0 %v2164
  %2880 = vmatprep.subr.bf16.mxu0 0
  %2881 = vmatpush1.bf16.msra.mxu0 %v2165
  %2882 = vmatprep.subr.bf16.mxu0 0
  %2883 = vmatpush1.bf16.msra.mxu0 %v2166
  %2884 = vmatprep.subr.bf16.mxu0 0
  %2885 = vmatpush1.bf16.msra.mxu0 %v2167
  %2886 = vmatprep.subr.bf16.mxu0 0
  %2887 = vmatpush1.bf16.msra.mxu0 %v2168
  %2888 = vmatprep.subr.bf16.mxu0 0
  %2889 = vmatpush1.bf16.msra.mxu0 %v2169
  %2890 = vmatprep.subr.bf16.mxu0 0
  %2891 = vmatpush1.bf16.msra.mxu0 %v2170
  %2892 = vmatprep.subr.bf16.mxu0 0
  %2893 = vmatpush1.bf16.msra.mxu0 %v2171
  %2894 = vmatprep.subr.bf16.mxu0 0
  %2895 = vmatpush1.bf16.msra.mxu0 %v2172
  %2896 = vmatprep.subr.bf16.mxu0 0
  %2897 = vmatpush1.bf16.msra.mxu0 %v2173
  %2898 = vmatprep.subr.bf16.mxu0 0
  %2899 = vmatpush1.bf16.msra.mxu0 %v2174
  %2900 = vmatprep.subr.bf16.mxu0 0
  %2901 = vmatpush1.bf16.msra.mxu0 %v2175
  %2902 = vmatprep.subr.bf16.mxu0 0
  %2903 = vmatpush1.bf16.msra.mxu0 %v2176
  %2904 = vmatprep.subr.bf16.mxu0 0
  %2905 = vmatpush1.bf16.msra.mxu0 %v2177
  %2906 = vmatprep.mubr.bf16.mxu0 %v761
  %2907 = vmatmul.mubr.bf16.gmra.mrb[0].mxu0 %v760
  %v2908 = vpop.f32.mrb[0].mxu0
  %v2909 = vadd.f32 %v2869, %v2908
  %v2910 = vpop.f32.mrb[0].mxu0
  %v2911 = vpop.f32.mrb[0].mxu0
  %v2912 = vpop.f32.mrb[0].mxu0
  %2913 = vdwg.mxu0
  %2914 = vmatprep.subr.bf16.mxu0 0
  %2915 = vmatpush1.bf16.msra.mxu0 %v2178
  %2916 = vmatprep.subr.bf16.mxu0 0
  %2917 = vmatpush1.bf16.msra.mxu0 %v2179
  %2918 = vmatprep.subr.bf16.mxu0 0
  %2919 = vmatpush1.bf16.msra.mxu0 %v2180
  %2920 = vmatprep.subr.bf16.mxu0 0
  %2921 = vmatpush1.bf16.msra.mxu0 %v2181
  %2922 = vmatprep.subr.bf16.mxu0 0
  %2923 = vmatpush1.bf16.msra.mxu0 %v2182
  %2924 = vmatprep.subr.bf16.mxu0 0
  %2925 = vmatpush1.bf16.msra.mxu0 %v2183
  %2926 = vmatprep.subr.bf16.mxu0 0
  %2927 = vmatpush1.bf16.msra.mxu0 %v2184
  %2928 = vmatprep.subr.bf16.mxu0 0
  %2929 = vmatpush1.bf16.msra.mxu0 %v2185
  %2930 = vmatprep.subr.bf16.mxu0 0
  %2931 = vmatpush1.bf16.msra.mxu0 %v2186
  %2932 = vmatprep.subr.bf16.mxu0 0
  %2933 = vmatpush1.bf16.msra.mxu0 %v2187
  %2934 = vmatprep.subr.bf16.mxu0 0
  %2935 = vmatpush1.bf16.msra.mxu0 %v2188
  %2936 = vmatprep.subr.bf16.mxu0 0
  %2937 = vmatpush1.bf16.msra.mxu0 %v2189
  %2938 = vmatprep.subr.bf16.mxu0 0
  %2939 = vmatpush1.bf16.msra.mxu0 %v2190
  %2940 = vmatprep.subr.bf16.mxu0 0
  %2941 = vmatpush1.bf16.msra.mxu0 %v2191
  %2942 = vmatprep.subr.bf16.mxu0 0
  %2943 = vmatpush1.bf16.msra.mxu0 %v2192
  %2944 = vmatprep.subr.bf16.mxu0 0
  %2945 = vmatpush1.bf16.msra.mxu0 %v2193
  %2946 = vmatprep.mubr.bf16.mxu0 %v763
  %2947 = vmatmul.mubr.bf16.gmra.mrb[0].mxu0 %v762
  %v2948 = vpop.f32.mrb[0].mxu0
  %v2949 = vadd.f32 %v2909, %v2948
  %v2950 = vpop.f32.mrb[0].mxu0
  %v2951 = vpop.f32.mrb[0].mxu0
  %v2952 = vpop.f32.mrb[0].mxu0
  %2953 = vdwg.mxu0
  %2954 = vmatprep.subr.bf16.mxu0 0
  %2955 = vmatpush1.bf16.msra.mxu0 %v2194
  %2956 = vmatprep.subr.bf16.mxu0 0
  %2957 = vmatpush1.bf16.msra.mxu0 %v2195
  %2958 = vmatprep.subr.bf16.mxu0 0
  %2959 = vmatpush1.bf16.msra.mxu0 %v2196
  %2960 = vmatprep.subr.bf16.mxu0 0
  %2961 = vmatpush1.bf16.msra.mxu0 %v2197
  %2962 = vmatprep.subr.bf16.mxu0 0
  %2963 = vmatpush1.bf16.msra.mxu0 %v2198
  %2964 = vmatprep.subr.bf16.mxu0 0
  %2965 = vmatpush1.bf16.msra.mxu0 %v2199
  %2966 = vmatprep.subr.bf16.mxu0 0
  %2967 = vmatpush1.bf16.msra.mxu0 %v2200
  %2968 = vmatprep.subr.bf16.mxu0 0
  %2969 = vmatpush1.bf16.msra.mxu0 %v2201
  %2970 = vmatprep.subr.bf16.mxu0 0
  %2971 = vmatpush1.bf16.msra.mxu0 %v2202
  %2972 = vmatprep.subr.bf16.mxu0 0
  %2973 = vmatpush1.bf16.msra.mxu0 %v2203
  %2974 = vmatprep.subr.bf16.mxu0 0
  %2975 = vmatpush1.bf16.msra.mxu0 %v2204
  %2976 = vmatprep.subr.bf16.mxu0 0
  %2977 = vmatpush1.bf16.msra.mxu0 %v2205
  %2978 = vmatprep.subr.bf16.mxu0 0
  %2979 = vmatpush1.bf16.msra.mxu0 %v2206
  %2980 = vmatprep.subr.bf16.mxu0 0
  %2981 = vmatpush1.bf16.msra.mxu0 %v2207
  %2982 = vmatprep.subr.bf16.mxu0 0
  %2983 = vmatpush1.bf16.msra.mxu0 %v2208
  %2984 = vmatprep.subr.bf16.mxu0 0
  %2985 = vmatpush1.bf16.msra.mxu0 %v2209
  %2986 = vmatprep.mubr.bf16.mxu0 %v765
  %2987 = vmatmul.mubr.bf16.gmra.mrb[0].mxu0 %v764
  %v2988 = vpop.f32.mrb[0].mxu0
  %v2989 = vadd.f32 %v2949, %v2988
  %v2990 = vpop.f32.mrb[0].mxu0
  %v2991 = vpop.f32.mrb[0].mxu0
  %v2992 = vpop.f32.mrb[0].mxu0
  %2993 = vdwg.mxu0
  %2994 = vmatprep.subr.bf16.mxu0 0
  %2995 = vmatpush1.bf16.msra.mxu0 %v2210
  %2996 = vmatprep.subr.bf16.mxu0 0
  %2997 = vmatpush1.bf16.msra.mxu0 %v2211
  %2998 = vmatprep.subr.bf16.mxu0 0
  %2999 = vmatpush1.bf16.msra.mxu0 %v2212
  %3000 = vmatprep.subr.bf16.mxu0 0
  %3001 = vmatpush1.bf16.msra.mxu0 %v2213
  %3002 = vmatprep.subr.bf16.mxu0 0
  %3003 = vmatpush1.bf16.msra.mxu0 %v2214
  %3004 = vmatprep.subr.bf16.mxu0 0
  %3005 = vmatpush1.bf16.msra.mxu0 %v2215
  %3006 = vmatprep.subr.bf16.mxu0 0
  %3007 = vmatpush1.bf16.msra.mxu0 %v2216
  %3008 = vmatprep.subr.bf16.mxu0 0
  %3009 = vmatpush1.bf16.msra.mxu0 %v2217
  %3010 = vmatprep.subr.bf16.mxu0 0
  %3011 = vmatpush1.bf16.msra.mxu0 %v2218
  %3012 = vmatprep.subr.bf16.mxu0 0
  %3013 = vmatpush1.bf16.msra.mxu0 %v2219
  %3014 = vmatprep.subr.bf16.mxu0 0
  %3015 = vmatpush1.bf16.msra.mxu0 %v2220
  %3016 = vmatprep.subr.bf16.mxu0 0
  %3017 = vmatpush1.bf16.msra.mxu0 %v2221
  %3018 = vmatprep.subr.bf16.mxu0 0
  %3019 = vmatpush1.bf16.msra.mxu0 %v2222
  %3020 = vmatprep.subr.bf16.mxu0 0
  %3021 = vmatpush1.bf16.msra.mxu0 %v2223
  %3022 = vmatprep.subr.bf16.mxu0 0
  %3023 = vmatpush1.bf16.msra.mxu0 %v2224
  %3024 = vmatprep.subr.bf16.mxu0 0
  %3025 = vmatpush1.bf16.msra.mxu0 %v2225
  %3026 = vmatprep.mubr.bf16.mxu0 %v767
  %3027 = vmatmul.mubr.bf16.gmra.mrb[0].mxu0 %v766
  %v3028 = vpop.f32.mrb[0].mxu0
  %v3029 = vadd.f32 %v2989, %v3028
  %v3030 = vpop.f32.mrb[0].mxu0
  %v3031 = vpop.f32.mrb[0].mxu0
  %v3032 = vpop.f32.mrb[0].mxu0
  %3033 = vdwg.mxu0
  %3034 = vmatprep.subr.bf16.mxu0 0
  %3035 = vmatpush1.bf16.msra.mxu0 %v2226
  %3036 = vmatprep.subr.bf16.mxu0 0
  %3037 = vmatpush1.bf16.msra.mxu0 %v2227
  %3038 = vmatprep.subr.bf16.mxu0 0
  %3039 = vmatpush1.bf16.msra.mxu0 %v2228
  %3040 = vmatprep.subr.bf16.mxu0 0
  %3041 = vmatpush1.bf16.msra.mxu0 %v2229
  %3042 = vmatprep.subr.bf16.mxu0 0
  %3043 = vmatpush1.bf16.msra.mxu0 %v2230
  %3044 = vmatprep.subr.bf16.mxu0 0
  %3045 = vmatpush1.bf16.msra.mxu0 %v2231
  %3046 = vmatprep.subr.bf16.mxu0 0
  %3047 = vmatpush1.bf16.msra.mxu0 %v2232
  %3048 = vmatprep.subr.bf16.mxu0 0
  %3049 = vmatpush1.bf16.msra.mxu0 %v2233
  %3050 = vmatprep.subr.bf16.mxu0 0
  %3051 = vmatpush1.bf16.msra.mxu0 %v2234
  %3052 = vmatprep.subr.bf16.mxu0 0
  %3053 = vmatpush1.bf16.msra.mxu0 %v2235
  %3054 = vmatprep.subr.bf16.mxu0 0
  %3055 = vmatpush1.bf16.msra.mxu0 %v2236
  %3056 = vmatprep.subr.bf16.mxu0 0
  %3057 = vmatpush1.bf16.msra.mxu0 %v2237
  %3058 = vmatprep.subr.bf16.mxu0 0
  %3059 = vmatpush1.bf16.msra.mxu0 %v2238
  %3060 = vmatprep.subr.bf16.mxu0 0
  %3061 = vmatpush1.bf16.msra.mxu0 %v2239
  %3062 = vmatprep.subr.bf16.mxu0 0
  %3063 = vmatpush1.bf16.msra.mxu0 %v2240
  %3064 = vmatprep.subr.bf16.mxu0 0
  %3065 = vmatpush1.bf16.msra.mxu0 %v2241
  %3066 = vmatprep.mubr.bf16.mxu0 %v769
  %3067 = vmatmul.mubr.bf16.gmra.mrb[0].mxu0 %v768
  %v3068 = vpop.f32.mrb[0].mxu0
  %v3069 = vadd.f32 %v3029, %v3068
  %v3070 = vpop.f32.mrb[0].mxu0
  %v3071 = vpop.f32.mrb[0].mxu0
  %v3072 = vpop.f32.mrb[0].mxu0
  %3073 = vdwg.mxu0
  %3074 = vmatprep.subr.bf16.mxu0 0
  %3075 = vmatpush1.bf16.msra.mxu0 %v2242
  %3076 = vmatprep.subr.bf16.mxu0 0
  %3077 = vmatpush1.bf16.msra.mxu0 %v2243
  %3078 = vmatprep.subr.bf16.mxu0 0
  %3079 = vmatpush1.bf16.msra.mxu0 %v2244
  %3080 = vmatprep.subr.bf16.mxu0 0
  %3081 = vmatpush1.bf16.msra.mxu0 %v2245
  %3082 = vmatprep.subr.bf16.mxu0 0
  %3083 = vmatpush1.bf16.msra.mxu0 %v2246
  %3084 = vmatprep.subr.bf16.mxu0 0
  %3085 = vmatpush1.bf16.msra.mxu0 %v2247
  %3086 = vmatprep.subr.bf16.mxu0 0
  %3087 = vmatpush1.bf16.msra.mxu0 %v2248
  %3088 = vmatprep.subr.bf16.mxu0 0
  %3089 = vmatpush1.bf16.msra.mxu0 %v2249
  %3090 = vmatprep.subr.bf16.mxu0 0
  %3091 = vmatpush1.bf16.msra.mxu0 %v2250
  %3092 = vmatprep.subr.bf16.mxu0 0
  %3093 = vmatpush1.bf16.msra.mxu0 %v2251
  %3094 = vmatprep.subr.bf16.mxu0 0
  %3095 = vmatpush1.bf16.msra.mxu0 %v2252
  %3096 = vmatprep.subr.bf16.mxu0 0
  %3097 = vmatpush1.bf16.msra.mxu0 %v2253
  %3098 = vmatprep.subr.bf16.mxu0 0
  %3099 = vmatpush1.bf16.msra.mxu0 %v2254
  %3100 = vmatprep.subr.bf16.mxu0 0
  %3101 = vmatpush1.bf16.msra.mxu0 %v2255
  %3102 = vmatprep.subr.bf16.mxu0 0
  %3103 = vmatpush1.bf16.msra.mxu0 %v2256
  %3104 = vmatprep.subr.bf16.mxu0 0
  %3105 = vmatpush1.bf16.msra.mxu0 %v2257
  %3106 = vmatprep.mubr.bf16.mxu0 %v771
  %3107 = vmatmul.mubr.bf16.gmra.mrb[0].mxu0 %v770
  %v3108 = vpop.f32.mrb[0].mxu0
  %v3109 = vadd.f32 %v3069, %v3108
  %v3110 = vpop.f32.mrb[0].mxu0
  %v3111 = vpop.f32.mrb[0].mxu0
  %v3112 = vpop.f32.mrb[0].mxu0
  %3113 = vdwg.mxu0
  %3114 = vmatprep.subr.bf16.mxu0 0
  %3115 = vmatpush1.bf16.msra.mxu0 %v2258
  %3116 = vmatprep.subr.bf16.mxu0 0
  %3117 = vmatpush1.bf16.msra.mxu0 %v2259
  %3118 = vmatprep.subr.bf16.mxu0 0
  %3119 = vmatpush1.bf16.msra.mxu0 %v2260
  %3120 = vmatprep.subr.bf16.mxu0 0
  %3121 = vmatpush1.bf16.msra.mxu0 %v2261
  %3122 = vmatprep.subr.bf16.mxu0 0
  %3123 = vmatpush1.bf16.msra.mxu0 %v2262
  %3124 = vmatprep.subr.bf16.mxu0 0
  %3125 = vmatpush1.bf16.msra.mxu0 %v2263
  %3126 = vmatprep.subr.bf16.mxu0 0
  %3127 = vmatpush1.bf16.msra.mxu0 %v2264
  %3128 = vmatprep.subr.bf16.mxu0 0
  %3129 = vmatpush1.bf16.msra.mxu0 %v2265
  %3130 = vmatprep.subr.bf16.mxu0 0
  %3131 = vmatpush1.bf16.msra.mxu0 %v2266
  %3132 = vmatprep.subr.bf16.mxu0 0
  %3133 = vmatpush1.bf16.msra.mxu0 %v2267
  %3134 = vmatprep.subr.bf16.mxu0 0
  %3135 = vmatpush1.bf16.msra.mxu0 %v2268
  %3136 = vmatprep.subr.bf16.mxu0 0
  %3137 = vmatpush1.bf16.msra.mxu0 %v2269
  %3138 = vmatprep.subr.bf16.mxu0 0
  %3139 = vmatpush1.bf16.msra.mxu0 %v2270
  %3140 = vmatprep.subr.bf16.mxu0 0
  %3141 = vmatpush1.bf16.msra.mxu0 %v2271
  %3142 = vmatprep.subr.bf16.mxu0 0
  %3143 = vmatpush1.bf16.msra.mxu0 %v2272
  %3144 = vmatprep.subr.bf16.mxu0 0
  %3145 = vmatpush1.bf16.msra.mxu0 %v2273
  %3146 = vmatprep.mubr.bf16.mxu0 %v773
  %3147 = vmatmul.mubr.bf16.gmra.mrb[0].mxu0 %v772
  %v3148 = vpop.f32.mrb[0].mxu0
  %v3149 = vadd.f32 %v3109, %v3148
  %v3150 = vpop.f32.mrb[0].mxu0
  %v3151 = vpop.f32.mrb[0].mxu0
  %v3152 = vpop.f32.mrb[0].mxu0
  %3153 = vdwg.mxu0
  %3154 = vmatprep.subr.bf16.mxu0 0
  %3155 = vmatpush1.bf16.msra.mxu0 %v2274
  %3156 = vmatprep.subr.bf16.mxu0 0
  %3157 = vmatpush1.bf16.msra.mxu0 %v2275
  %3158 = vmatprep.subr.bf16.mxu0 0
  %3159 = vmatpush1.bf16.msra.mxu0 %v2276
  %3160 = vmatprep.subr.bf16.mxu0 0
  %3161 = vmatpush1.bf16.msra.mxu0 %v2277
  %3162 = vmatprep.subr.bf16.mxu0 0
  %3163 = vmatpush1.bf16.msra.mxu0 %v2278
  %3164 = vmatprep.subr.bf16.mxu0 0
  %3165 = vmatpush1.bf16.msra.mxu0 %v2279
  %3166 = vmatprep.subr.bf16.mxu0 0
  %3167 = vmatpush1.bf16.msra.mxu0 %v2280
  %3168 = vmatprep.subr.bf16.mxu0 0
  %3169 = vmatpush1.bf16.msra.mxu0 %v2281
  %3170 = vmatprep.subr.bf16.mxu0 0
  %3171 = vmatpush1.bf16.msra.mxu0 %v2282
  %3172 = vmatprep.subr.bf16.mxu0 0
  %3173 = vmatpush1.bf16.msra.mxu0 %v2283
  %3174 = vmatprep.subr.bf16.mxu0 0
  %3175 = vmatpush1.bf16.msra.mxu0 %v2284
  %3176 = vmatprep.subr.bf16.mxu0 0
  %3177 = vmatpush1.bf16.msra.mxu0 %v2285
  %3178 = vmatprep.subr.bf16.mxu0 0
  %3179 = vmatpush1.bf16.msra.mxu0 %v2286
  %3180 = vmatprep.subr.bf16.mxu0 0
  %3181 = vmatpush1.bf16.msra.mxu0 %v2287
  %3182 = vmatprep.subr.bf16.mxu0 0
  %3183 = vmatpush1.bf16.msra.mxu0 %v2288
  %3184 = vmatprep.subr.bf16.mxu0 0
  %3185 = vmatpush1.bf16.msra.mxu0 %v2289
  %3186 = vmatprep.mubr.bf16.mxu0 %v775
  %3187 = vmatmul.mubr.bf16.gmra.mrb[0].mxu0 %v774
  %v3188 = vpop.f32.mrb[0].mxu0
  %v3189 = vadd.f32 %v3149, %v3188
  %v3190 = vpop.f32.mrb[0].mxu0
  %v3191 = vpop.f32.mrb[0].mxu0
  %v3192 = vpop.f32.mrb[0].mxu0
  %3193 = vdwg.mxu0
  %3194 = vmatprep.subr.bf16.mxu0 0
  %3195 = vmatpush1.bf16.msra.mxu0 %v2290
  %3196 = vmatprep.subr.bf16.mxu0 0
  %3197 = vmatpush1.bf16.msra.mxu0 %v2291
  %3198 = vmatprep.subr.bf16.mxu0 0
  %3199 = vmatpush1.bf16.msra.mxu0 %v2292
  %3200 = vmatprep.subr.bf16.mxu0 0
  %3201 = vmatpush1.bf16.msra.mxu0 %v2293
  %3202 = vmatprep.subr.bf16.mxu0 0
  %3203 = vmatpush1.bf16.msra.mxu0 %v2294
  %3204 = vmatprep.subr.bf16.mxu0 0
  %3205 = vmatpush1.bf16.msra.mxu0 %v2295
  %3206 = vmatprep.subr.bf16.mxu0 0
  %3207 = vmatpush1.bf16.msra.mxu0 %v2296
  %3208 = vmatprep.subr.bf16.mxu0 0
  %3209 = vmatpush1.bf16.msra.mxu0 %v2297
  %3210 = vmatprep.subr.bf16.mxu0 0
  %3211 = vmatpush1.bf16.msra.mxu0 %v2298
  %3212 = vmatprep.subr.bf16.mxu0 0
  %3213 = vmatpush1.bf16.msra.mxu0 %v2299
  %3214 = vmatprep.subr.bf16.mxu0 0
  %3215 = vmatpush1.bf16.msra.mxu0 %v2300
  %3216 = vmatprep.subr.bf16.mxu0 0
  %3217 = vmatpush1.bf16.msra.mxu0 %v2301
  %3218 = vmatprep.subr.bf16.mxu0 0
  %3219 = vmatpush1.bf16.msra.mxu0 %v2302
  %3220 = vmatprep.subr.bf16.mxu0 0
  %3221 = vmatpush1.bf16.msra.mxu0 %v2303
  %3222 = vmatprep.subr.bf16.mxu0 0
  %3223 = vmatpush1.bf16.msra.mxu0 %v2304
  %3224 = vmatprep.subr.bf16.mxu0 0
  %3225 = vmatpush1.bf16.msra.mxu0 %v2305
  %3226 = vmatprep.mubr.bf16.mxu0 %v777
  %3227 = vmatmul.mubr.bf16.gmra.mrb[0].mxu0 %v776
  %v3228 = vpop.f32.mrb[0].mxu0
  %v3229 = vadd.f32 %v3189, %v3228
  %v3230 = vpop.f32.mrb[0].mxu0
  %v3231 = vpop.f32.mrb[0].mxu0
  %v3232 = vpop.f32.mrb[0].mxu0
  %3233 = vdwg.mxu0
  %3234 = vmatprep.subr.bf16.mxu0 0
  %3235 = vmatpush1.bf16.msra.mxu0 %v2306
  %3236 = vmatprep.subr.bf16.mxu0 0
  %3237 = vmatpush1.bf16.msra.mxu0 %v2307
  %3238 = vmatprep.subr.bf16.mxu0 0
  %3239 = vmatpush1.bf16.msra.mxu0 %v2308
  %3240 = vmatprep.subr.bf16.mxu0 0
  %3241 = vmatpush1.bf16.msra.mxu0 %v2309
  %3242 = vmatprep.subr.bf16.mxu0 0
  %3243 = vmatpush1.bf16.msra.mxu0 %v2310
  %3244 = vmatprep.subr.bf16.mxu0 0
  %3245 = vmatpush1.bf16.msra.mxu0 %v2311
  %3246 = vmatprep.subr.bf16.mxu0 0
  %3247 = vmatpush1.bf16.msra.mxu0 %v2312
  %3248 = vmatprep.subr.bf16.mxu0 0
  %3249 = vmatpush1.bf16.msra.mxu0 %v2313
  %3250 = vmatprep.subr.bf16.mxu0 0
  %3251 = vmatpush1.bf16.msra.mxu0 %v2314
  %3252 = vmatprep.subr.bf16.mxu0 0
  %3253 = vmatpush1.bf16.msra.mxu0 %v2315
  %3254 = vmatprep.subr.bf16.mxu0 0
  %3255 = vmatpush1.bf16.msra.mxu0 %v2316
  %3256 = vmatprep.subr.bf16.mxu0 0
  %3257 = vmatpush1.bf16.msra.mxu0 %v2317
  %3258 = vmatprep.subr.bf16.mxu0 0
  %3259 = vmatpush1.bf16.msra.mxu0 %v2318
  %3260 = vmatprep.subr.bf16.mxu0 0
  %3261 = vmatpush1.bf16.msra.mxu0 %v2319
  %3262 = vmatprep.subr.bf16.mxu0 0
  %3263 = vmatpush1.bf16.msra.mxu0 %v2320
  %3264 = vmatprep.subr.bf16.mxu0 0
  %3265 = vmatpush1.bf16.msra.mxu0 %v2321
  %3266 = vmatprep.mubr.bf16.mxu0 %v779
  %3267 = vmatmul.mubr.bf16.gmra.mrb[0].mxu0 %v778
  %v3268 = vpop.f32.mrb[0].mxu0
  %v3269 = vadd.f32 %v3229, %v3268
  %v3270 = vpop.f32.mrb[0].mxu0
  %v3271 = vpop.f32.mrb[0].mxu0
  %v3272 = vpop.f32.mrb[0].mxu0
  %3273 = vdwg.mxu0
  %3274 = vmatprep.subr.bf16.mxu0 0
  %3275 = vmatpush1.bf16.msra.mxu0 %v2322
  %3276 = vmatprep.subr.bf16.mxu0 0
  %3277 = vmatpush1.bf16.msra.mxu0 %v2323
  %3278 = vmatprep.subr.bf16.mxu0 0
  %3279 = vmatpush1.bf16.msra.mxu0 %v2324
  %3280 = vmatprep.subr.bf16.mxu0 0
  %3281 = vmatpush1.bf16.msra.mxu0 %v2325
  %3282 = vmatprep.subr.bf16.mxu0 0
  %3283 = vmatpush1.bf16.msra.mxu0 %v2326
  %3284 = vmatprep.subr.bf16.mxu0 0
  %3285 = vmatpush1.bf16.msra.mxu0 %v2327
  %3286 = vmatprep.subr.bf16.mxu0 0
  %3287 = vmatpush1.bf16.msra.mxu0 %v2328
  %3288 = vmatprep.subr.bf16.mxu0 0
  %3289 = vmatpush1.bf16.msra.mxu0 %v2329
  %3290 = vmatprep.subr.bf16.mxu0 0
  %3291 = vmatpush1.bf16.msra.mxu0 %v2330
  %3292 = vmatprep.subr.bf16.mxu0 0
  %3293 = vmatpush1.bf16.msra.mxu0 %v2331
  %3294 = vmatprep.subr.bf16.mxu0 0
  %3295 = vmatpush1.bf16.msra.mxu0 %v2332
  %3296 = vmatprep.subr.bf16.mxu0 0
  %3297 = vmatpush1.bf16.msra.mxu0 %v2333
  %3298 = vmatprep.subr.bf16.mxu0 0
  %3299 = vmatpush1.bf16.msra.mxu0 %v2334
  %3300 = vmatprep.subr.bf16.mxu0 0
  %3301 = vmatpush1.bf16.msra.mxu0 %v2335
  %3302 = vmatprep.subr.bf16.mxu0 0
  %3303 = vmatpush1.bf16.msra.mxu0 %v2336
  %3304 = vmatprep.subr.bf16.mxu0 0
  %3305 = vmatpush1.bf16.msra.mxu0 %v2337
  %3306 = vmatprep.mubr.bf16.mxu0 %v781
  %3307 = vmatmul.mubr.bf16.gmra.mrb[0].mxu0 %v780
  %v3308 = vpop.f32.mrb[0].mxu0
  %v3309 = vadd.f32 %v3269, %v3308
  %v3310 = vpop.f32.mrb[0].mxu0
  %v3311 = vpop.f32.mrb[0].mxu0
  %v3312 = vpop.f32.mrb[0].mxu0
  %3313 = vdwg.mxu0
  %3314 = vmatprep.subr.bf16.mxu0 0
  %3315 = vmatpush1.bf16.msra.mxu0 %v2338
  %3316 = vmatprep.subr.bf16.mxu0 0
  %3317 = vmatpush1.bf16.msra.mxu0 %v2339
  %3318 = vmatprep.subr.bf16.mxu0 0
  %3319 = vmatpush1.bf16.msra.mxu0 %v2340
  %3320 = vmatprep.subr.bf16.mxu0 0
  %3321 = vmatpush1.bf16.msra.mxu0 %v2341
  %3322 = vmatprep.subr.bf16.mxu0 0
  %3323 = vmatpush1.bf16.msra.mxu0 %v2342
  %3324 = vmatprep.subr.bf16.mxu0 0
  %3325 = vmatpush1.bf16.msra.mxu0 %v2343
  %3326 = vmatprep.subr.bf16.mxu0 0
  %3327 = vmatpush1.bf16.msra.mxu0 %v2344
  %3328 = vmatprep.subr.bf16.mxu0 0
  %3329 = vmatpush1.bf16.msra.mxu0 %v2345
  %3330 = vmatprep.subr.bf16.mxu0 0
  %3331 = vmatpush1.bf16.msra.mxu0 %v2346
  %3332 = vmatprep.subr.bf16.mxu0 0
  %3333 = vmatpush1.bf16.msra.mxu0 %v2347
  %3334 = vmatprep.subr.bf16.mxu0 0
  %3335 = vmatpush1.bf16.msra.mxu0 %v2348
  %3336 = vmatprep.subr.bf16.mxu0 0
  %3337 = vmatpush1.bf16.msra.mxu0 %v2349
  %3338 = vmatprep.subr.bf16.mxu0 0
  %3339 = vmatpush1.bf16.msra.mxu0 %v2350
  %3340 = vmatprep.subr.bf16.mxu0 0
  %3341 = vmatpush1.bf16.msra.mxu0 %v2351
  %3342 = vmatprep.subr.bf16.mxu0 0
  %3343 = vmatpush1.bf16.msra.mxu0 %v2352
  %3344 = vmatprep.subr.bf16.mxu0 0
  %3345 = vmatpush1.bf16.msra.mxu0 %v2353
  %3346 = vmatprep.mubr.bf16.mxu0 %v783
  %3347 = vmatmul.mubr.bf16.gmra.mrb[0].mxu0 %v782
  %v3348 = vpop.f32.mrb[0].mxu0
  %v3349 = vadd.f32 %v3309, %v3348
  %v3350 = vpop.f32.mrb[0].mxu0
  %v3351 = vpop.f32.mrb[0].mxu0
  %v3352 = vpop.f32.mrb[0].mxu0
  %3353 = vdwg.mxu0
  %3354 = vmatprep.subr.bf16.mxu0 0
  %3355 = vmatpush1.bf16.msra.mxu0 %v2354
  %3356 = vmatprep.subr.bf16.mxu0 0
  %3357 = vmatpush1.bf16.msra.mxu0 %v2355
  %3358 = vmatprep.subr.bf16.mxu0 0
  %3359 = vmatpush1.bf16.msra.mxu0 %v2356
  %3360 = vmatprep.subr.bf16.mxu0 0
  %3361 = vmatpush1.bf16.msra.mxu0 %v2357
  %3362 = vmatprep.subr.bf16.mxu0 0
  %3363 = vmatpush1.bf16.msra.mxu0 %v2358
  %3364 = vmatprep.subr.bf16.mxu0 0
  %3365 = vmatpush1.bf16.msra.mxu0 %v2359
  %3366 = vmatprep.subr.bf16.mxu0 0
  %3367 = vmatpush1.bf16.msra.mxu0 %v2360
  %3368 = vmatprep.subr.bf16.mxu0 0
  %3369 = vmatpush1.bf16.msra.mxu0 %v2361
  %3370 = vmatprep.subr.bf16.mxu0 0
  %3371 = vmatpush1.bf16.msra.mxu0 %v2362
  %3372 = vmatprep.subr.bf16.mxu0 0
  %3373 = vmatpush1.bf16.msra.mxu0 %v2363
  %3374 = vmatprep.subr.bf16.mxu0 0
  %3375 = vmatpush1.bf16.msra.mxu0 %v2364
  %3376 = vmatprep.subr.bf16.mxu0 0
  %3377 = vmatpush1.bf16.msra.mxu0 %v2365
  %3378 = vmatprep.subr.bf16.mxu0 0
  %3379 = vmatpush1.bf16.msra.mxu0 %v2366
  %3380 = vmatprep.subr.bf16.mxu0 0
  %3381 = vmatpush1.bf16.msra.mxu0 %v2367
  %3382 = vmatprep.subr.bf16.mxu0 0
  %3383 = vmatpush1.bf16.msra.mxu0 %v2368
  %3384 = vmatprep.subr.bf16.mxu0 0
  %3385 = vmatpush1.bf16.msra.mxu0 %v2369
  %3386 = vmatprep.mubr.bf16.mxu0 %v785
  %3387 = vmatmul.mubr.bf16.gmra.mrb[0].mxu0 %v784
  %v3388 = vpop.f32.mrb[0].mxu0
  %v3389 = vadd.f32 %v3349, %v3388
  %v3390 = vpop.f32.mrb[0].mxu0
  %v3391 = vpop.f32.mrb[0].mxu0
  %v3392 = vpop.f32.mrb[0].mxu0
  %3393 = vdwg.mxu0
  %3394 = vmatprep.subr.bf16.mxu0 0
  %3395 = vmatpush1.bf16.msra.mxu0 %v2370
  %3396 = vmatprep.subr.bf16.mxu0 0
  %3397 = vmatpush1.bf16.msra.mxu0 %v2371
  %3398 = vmatprep.subr.bf16.mxu0 0
  %3399 = vmatpush1.bf16.msra.mxu0 %v2372
  %3400 = vmatprep.subr.bf16.mxu0 0
  %3401 = vmatpush1.bf16.msra.mxu0 %v2373
  %3402 = vmatprep.subr.bf16.mxu0 0
  %3403 = vmatpush1.bf16.msra.mxu0 %v2374
  %3404 = vmatprep.subr.bf16.mxu0 0
  %3405 = vmatpush1.bf16.msra.mxu0 %v2375
  %3406 = vmatprep.subr.bf16.mxu0 0
  %3407 = vmatpush1.bf16.msra.mxu0 %v2376
  %3408 = vmatprep.subr.bf16.mxu0 0
  %3409 = vmatpush1.bf16.msra.mxu0 %v2377
  %3410 = vmatprep.subr.bf16.mxu0 0
  %3411 = vmatpush1.bf16.msra.mxu0 %v2378
  %3412 = vmatprep.subr.bf16.mxu0 0
  %3413 = vmatpush1.bf16.msra.mxu0 %v2379
  %3414 = vmatprep.subr.bf16.mxu0 0
  %3415 = vmatpush1.bf16.msra.mxu0 %v2380
  %3416 = vmatprep.subr.bf16.mxu0 0
  %3417 = vmatpush1.bf16.msra.mxu0 %v2381
  %3418 = vmatprep.subr.bf16.mxu0 0
  %3419 = vmatpush1.bf16.msra.mxu0 %v2382
  %3420 = vmatprep.subr.bf16.mxu0 0
  %3421 = vmatpush1.bf16.msra.mxu0 %v2383
  %3422 = vmatprep.subr.bf16.mxu0 0
  %3423 = vmatpush1.bf16.msra.mxu0 %v2384
  %3424 = vmatprep.subr.bf16.mxu0 0
  %3425 = vmatpush1.bf16.msra.mxu0 %v2385
  %3426 = vmatprep.mubr.bf16.mxu0 %v787
  %3427 = vmatmul.mubr.bf16.gmra.mrb[0].mxu0 %v786
  %v3428 = vpop.f32.mrb[0].mxu0
  %v3429 = vadd.f32 %v3389, %v3428
  %v3430 = vpop.f32.mrb[0].mxu0
  %v3431 = vpop.f32.mrb[0].mxu0
  %v3432 = vpop.f32.mrb[0].mxu0
  %3433 = vdwg.mxu0
  %3434 = vmatprep.subr.bf16.mxu0 0
  %3435 = vmatpush1.bf16.msra.mxu0 %v2386
  %3436 = vmatprep.subr.bf16.mxu0 0
  %3437 = vmatpush1.bf16.msra.mxu0 %v2387
  %3438 = vmatprep.subr.bf16.mxu0 0
  %3439 = vmatpush1.bf16.msra.mxu0 %v2388
  %3440 = vmatprep.subr.bf16.mxu0 0
  %3441 = vmatpush1.bf16.msra.mxu0 %v2389
  %3442 = vmatprep.subr.bf16.mxu0 0
  %3443 = vmatpush1.bf16.msra.mxu0 %v2390
  %3444 = vmatprep.subr.bf16.mxu0 0
  %3445 = vmatpush1.bf16.msra.mxu0 %v2391
  %3446 = vmatprep.subr.bf16.mxu0 0
  %3447 = vmatpush1.bf16.msra.mxu0 %v2392
  %3448 = vmatprep.subr.bf16.mxu0 0
  %3449 = vmatpush1.bf16.msra.mxu0 %v2393
  %3450 = vmatprep.subr.bf16.mxu0 0
  %3451 = vmatpush1.bf16.msra.mxu0 %v2394
  %3452 = vmatprep.subr.bf16.mxu0 0
  %3453 = vmatpush1.bf16.msra.mxu0 %v2395
  %3454 = vmatprep.subr.bf16.mxu0 0
  %3455 = vmatpush1.bf16.msra.mxu0 %v2396
  %3456 = vmatprep.subr.bf16.mxu0 0
  %3457 = vmatpush1.bf16.msra.mxu0 %v2397
  %3458 = vmatprep.subr.bf16.mxu0 0
  %3459 = vmatpush1.bf16.msra.mxu0 %v2398
  %3460 = vmatprep.subr.bf16.mxu0 0
  %3461 = vmatpush1.bf16.msra.mxu0 %v2399
  %3462 = vmatprep.subr.bf16.mxu0 0
  %3463 = vmatpush1.bf16.msra.mxu0 %v2400
  %3464 = vmatprep.subr.bf16.mxu0 0
  %3465 = vmatpush1.bf16.msra.mxu0 %v2401
  %3466 = vmatprep.mubr.bf16.mxu0 %v789
  %3467 = vmatmul.mubr.bf16.gmra.mrb[0].mxu0 %v788
  %v3468 = vpop.f32.mrb[0].mxu0
  %v3469 = vadd.f32 %v3429, %v3468
  %v3470 = vpop.f32.mrb[0].mxu0
  %v3471 = vpop.f32.mrb[0].mxu0
  %v3472 = vpop.f32.mrb[0].mxu0
  %3473 = vdwg.mxu0
  %3474 = vmatprep.subr.bf16.mxu0 0
  %3475 = vmatpush1.bf16.msra.mxu0 %v2402
  %3476 = vmatprep.subr.bf16.mxu0 0
  %3477 = vmatpush1.bf16.msra.mxu0 %v2403
  %3478 = vmatprep.subr.bf16.mxu0 0
  %3479 = vmatpush1.bf16.msra.mxu0 %v2404
  %3480 = vmatprep.subr.bf16.mxu0 0
  %3481 = vmatpush1.bf16.msra.mxu0 %v2405
  %3482 = vmatprep.subr.bf16.mxu0 0
  %3483 = vmatpush1.bf16.msra.mxu0 %v2406
  %3484 = vmatprep.subr.bf16.mxu0 0
  %3485 = vmatpush1.bf16.msra.mxu0 %v2407
  %3486 = vmatprep.subr.bf16.mxu0 0
  %3487 = vmatpush1.bf16.msra.mxu0 %v2408
  %3488 = vmatprep.subr.bf16.mxu0 0
  %3489 = vmatpush1.bf16.msra.mxu0 %v2409
  %3490 = vmatprep.subr.bf16.mxu0 0
  %3491 = vmatpush1.bf16.msra.mxu0 %v2410
  %3492 = vmatprep.subr.bf16.mxu0 0
  %3493 = vmatpush1.bf16.msra.mxu0 %v2411
  %3494 = vmatprep.subr.bf16.mxu0 0
  %3495 = vmatpush1.bf16.msra.mxu0 %v2412
  %3496 = vmatprep.subr.bf16.mxu0 0
  %3497 = vmatpush1.bf16.msra.mxu0 %v2413
  %3498 = vmatprep.subr.bf16.mxu0 0
  %3499 = vmatpush1.bf16.msra.mxu0 %v2414
  %3500 = vmatprep.subr.bf16.mxu0 0
  %3501 = vmatpush1.bf16.msra.mxu0 %v2415
  %3502 = vmatprep.subr.bf16.mxu0 0
  %3503 = vmatpush1.bf16.msra.mxu0 %v2416
  %3504 = vmatprep.subr.bf16.mxu0 0
  %3505 = vmatpush1.bf16.msra.mxu0 %v2417
  %3506 = vmatprep.mubr.bf16.mxu0 %v791
  %3507 = vmatmul.mubr.bf16.gmra.mrb[0].mxu0 %v790
  %v3508 = vpop.f32.mrb[0].mxu0
  %v3509 = vadd.f32 %v3469, %v3508
  %v3510 = vpop.f32.mrb[0].mxu0
  %v3511 = vpop.f32.mrb[0].mxu0
  %v3512 = vpop.f32.mrb[0].mxu0
  %3513 = vdwg.mxu0
  %3514 = vmatprep.subr.bf16.mxu0 0
  %3515 = vmatpush1.bf16.msra.mxu0 %v2418
  %3516 = vmatprep.subr.bf16.mxu0 0
  %3517 = vmatpush1.bf16.msra.mxu0 %v2419
  %3518 = vmatprep.subr.bf16.mxu0 0
  %3519 = vmatpush1.bf16.msra.mxu0 %v2420
  %3520 = vmatprep.subr.bf16.mxu0 0
  %3521 = vmatpush1.bf16.msra.mxu0 %v2421
  %3522 = vmatprep.subr.bf16.mxu0 0
  %3523 = vmatpush1.bf16.msra.mxu0 %v2422
  %3524 = vmatprep.subr.bf16.mxu0 0
  %3525 = vmatpush1.bf16.msra.mxu0 %v2423
  %3526 = vmatprep.subr.bf16.mxu0 0
  %3527 = vmatpush1.bf16.msra.mxu0 %v2424
  %3528 = vmatprep.subr.bf16.mxu0 0
  %3529 = vmatpush1.bf16.msra.mxu0 %v2425
  %3530 = vmatprep.subr.bf16.mxu0 0
  %3531 = vmatpush1.bf16.msra.mxu0 %v2426
  %3532 = vmatprep.subr.bf16.mxu0 0
  %3533 = vmatpush1.bf16.msra.mxu0 %v2427
  %3534 = vmatprep.subr.bf16.mxu0 0
  %3535 = vmatpush1.bf16.msra.mxu0 %v2428
  %3536 = vmatprep.subr.bf16.mxu0 0
  %3537 = vmatpush1.bf16.msra.mxu0 %v2429
  %3538 = vmatprep.subr.bf16.mxu0 0
  %3539 = vmatpush1.bf16.msra.mxu0 %v2430
  %3540 = vmatprep.subr.bf16.mxu0 0
  %3541 = vmatpush1.bf16.msra.mxu0 %v2431
  %3542 = vmatprep.subr.bf16.mxu0 0
  %3543 = vmatpush1.bf16.msra.mxu0 %v2432
  %3544 = vmatprep.subr.bf16.mxu0 0
  %3545 = vmatpush1.bf16.msra.mxu0 %v2433
  %3546 = vmatprep.mubr.bf16.mxu0 %v793
  %3547 = vmatmul.mubr.bf16.gmra.mrb[0].mxu0 %v792
  %v3548 = vpop.f32.mrb[0].mxu0
  %v3549 = vadd.f32 %v3509, %v3548
  %v3550 = vpop.f32.mrb[0].mxu0
  %v3551 = vpop.f32.mrb[0].mxu0
  %v3552 = vpop.f32.mrb[0].mxu0
  %3553 = vdwg.mxu0
  %v3554 = vmax.f32 %v3549, 0.0
  %v3555 = vpack.c.bf16 %v3554, %v3554
  %v3556 = vld [vmem:[%s3] sm:$0xf]
  %v3557 = vld [vmem:[%s3 + $0x4] sm:$0xf]
  %v3558 = vld [vmem:[%s3 + $0x8] sm:$0xf]
  %v3559 = vld [vmem:[%s3 + $0xc] sm:$0xf]
  %v3560 = vld [vmem:[%s3 + $0x10] sm:$0xf]
  %v3561 = vld [vmem:[%s3 + $0x14] sm:$0xf]
  %v3562 = vld [vmem:[%s3 + $0x18] sm:$0xf]
  %v3563 = vld [vmem:[%s3 + $0x1c] sm:$0xf]
  %v3564 = vld [vmem:[%s3 + $0x20] sm:$0xf]
  %v3565 = vld [vmem:[%s3 + $0x24] sm:$0xf]
  %v3566 = vld [vmem:[%s3 + $0x28] sm:$0xf]
  %v3567 = vld [vmem:[%s3 + $0x2c] sm:$0xf]
  %v3568 = vld [vmem:[%s3 + $0x30] sm:$0xf]
  %v3569 = vld [vmem:[%s3 + $0x34] sm:$0xf]
  %v3570 = vld [vmem:[%s3 + $0x38] sm:$0xf]
  %v3571 = vld [vmem:[%s3 + $0x3c] sm:$0xf]
  %v3572 = vld [vmem:[%s4] sm:$0x1]
  %v3574 = vlaneseq
  %v3575 = vshrl.u32 %v3574, 7
  %v3576 = vsub.s32 0, %v3575
  %v3577 = vrot.slane %v3572, %v3576
  %v3595 = vunpack.c.l.b16 %v3556
  %v3596 = vunpack.c.l.b16 %v3557
  %v3597 = vunpack.c.l.b16 %v3558
  %v3598 = vunpack.c.l.b16 %v3559
  %v3599 = vunpack.c.l.b16 %v3560
  %v3600 = vunpack.c.l.b16 %v3561
  %v3601 = vunpack.c.l.b16 %v3562
  %v3602 = vunpack.c.l.b16 %v3563
  %v3603 = vunpack.c.l.b16 %v3564
  %v3604 = vunpack.c.l.b16 %v3565
  %v3605 = vunpack.c.l.b16 %v3566
  %v3606 = vunpack.c.l.b16 %v3567
  %v3607 = vunpack.c.l.b16 %v3568
  %v3608 = vunpack.c.l.b16 %v3569
  %v3609 = vunpack.c.l.b16 %v3570
  %v3610 = vunpack.c.l.b16 %v3571
  %v3611 = vpack.c.b16 %v3596, %v3595
  %v3612 = vpack.c.b16 %v3598, %v3597
  %v3613 = vpack.c.b16 %v3600, %v3599
  %v3614 = vpack.c.b16 %v3602, %v3601
  %v3615 = vpack.c.b16 %v3604, %v3603
  %v3616 = vpack.c.b16 %v3606, %v3605
  %v3617 = vpack.c.b16 %v3608, %v3607
  %v3618 = vpack.c.b16 %v3610, %v3609
  %3627 = vmatprep.subr.bf16.mxu0 0
  %3628 = vmatpush1.bf16.msra.mxu0 %v3611
  %3629 = vmatprep.subr.bf16.mxu0 0
  %3630 = vmatpush1.bf16.msra.mxu0 %v3612
  %3631 = vmatprep.subr.bf16.mxu0 0
  %3632 = vmatpush1.bf16.msra.mxu0 %v3613
  %3633 = vmatprep.subr.bf16.mxu0 0
  %3634 = vmatpush1.bf16.msra.mxu0 %v3614
  %3635 = vmatprep.subr.bf16.mxu0 0
  %3636 = vmatpush1.bf16.msra.mxu0 %v3615
  %3637 = vmatprep.subr.bf16.mxu0 0
  %3638 = vmatpush1.bf16.msra.mxu0 %v3616
  %3639 = vmatprep.subr.bf16.mxu0 0
  %3640 = vmatpush1.bf16.msra.mxu0 %v3617
  %3641 = vmatprep.subr.bf16.mxu0 0
  %3642 = vmatpush1.bf16.msra.mxu0 %v3618
  %3643 = vmatprep.subr.bf16.mxu0 0
  %3644 = vmatpush1.bf16.msra.mxu0 0
  %3645 = vmatprep.subr.bf16.mxu0 0
  %3646 = vmatpush1.bf16.msra.mxu0 0
  %3647 = vmatprep.subr.bf16.mxu0 0
  %3648 = vmatpush1.bf16.msra.mxu0 0
  %3649 = vmatprep.subr.bf16.mxu0 0
  %3650 = vmatpush1.bf16.msra.mxu0 0
  %3651 = vmatprep.subr.bf16.mxu0 0
  %3652 = vmatpush1.bf16.msra.mxu0 0
  %3653 = vmatprep.subr.bf16.mxu0 0
  %3654 = vmatpush1.bf16.msra.mxu0 0
  %3655 = vmatprep.subr.bf16.mxu0 0
  %3656 = vmatpush1.bf16.msra.mxu0 0
  %3657 = vmatprep.subr.bf16.mxu0 0
  %3658 = vmatpush1.bf16.msra.mxu0 0
  %3659 = vmatprep.mubr.bf16.mxu0 0
  %3660 = vmatmul.mubr.bf16.gmra.mrb[0].mxu0 %v3555
  %v3661 = vpop.f32.mrb[0].mxu0
  %v3662 = vadd.f32 %v3577, %v3661
  %v3663 = vpop.f32.mrb[0].mxu0
  %v3664 = vpop.f32.mrb[0].mxu0
  %v3665 = vpop.f32.mrb[0].mxu0
  %3666 = vdwg.mxu0
  %v3667 = vmax.f32 %v3662, 0.0
  %v3668 = vpack.c.bf16 %v3667, %v3667
  %v3669 = vld [vmem:[%s5] sm:$0xf]
  %v3670 = vld [vmem:[%s5 + $0x4] sm:$0xf]
  %v3671 = vld [vmem:[%s5 + $0x8] sm:$0xf]
  %v3672 = vld [vmem:[%s5 + $0xc] sm:$0xf]
  %v3673 = vld [vmem:[%s5 + $0x10] sm:$0xf]
  %v3674 = vld [vmem:[%s5 + $0x14] sm:$0xf]
  %v3675 = vld [vmem:[%s5 + $0x18] sm:$0xf]
  %v3676 = vld [vmem:[%s5 + $0x1c] sm:$0xf]
  %v3677 = vld [vmem:[%s5 + $0x20] sm:$0xf]
  %v3678 = vld [vmem:[%s5 + $0x24] sm:$0xf]
  %v3679 = vld [vmem:[%s5 + $0x28] sm:$0xf]
  %v3680 = vld [vmem:[%s5 + $0x2c] sm:$0xf]
  %v3681 = vld [vmem:[%s5 + $0x30] sm:$0xf]
  %v3682 = vld [vmem:[%s5 + $0x34] sm:$0xf]
  %v3683 = vld [vmem:[%s5 + $0x38] sm:$0xf]
  %v3684 = vld [vmem:[%s5 + $0x3c] sm:$0xf]
  %v3685 = vld [vmem:[%s6] sm:$0x1]
  %v3687 = vlaneseq
  %v3688 = vshrl.u32 %v3687, 7
  %v3689 = vsub.s32 0, %v3688
  %v3690 = vrot.slane %v3685, %v3689
  %v3708 = vunpack.c.l.b16 %v3669
  %v3709 = vunpack.c.l.b16 %v3670
  %v3710 = vunpack.c.l.b16 %v3671
  %v3711 = vunpack.c.l.b16 %v3672
  %v3712 = vunpack.c.l.b16 %v3673
  %v3713 = vunpack.c.l.b16 %v3674
  %v3714 = vunpack.c.l.b16 %v3675
  %v3715 = vunpack.c.l.b16 %v3676
  %v3716 = vunpack.c.l.b16 %v3677
  %v3717 = vunpack.c.l.b16 %v3678
  %v3718 = vunpack.c.l.b16 %v3679
  %v3719 = vunpack.c.l.b16 %v3680
  %v3720 = vunpack.c.l.b16 %v3681
  %v3721 = vunpack.c.l.b16 %v3682
  %v3722 = vunpack.c.l.b16 %v3683
  %v3723 = vunpack.c.l.b16 %v3684
  %v3724 = vpack.c.b16 %v3709, %v3708
  %v3725 = vpack.c.b16 %v3711, %v3710
  %v3726 = vpack.c.b16 %v3713, %v3712
  %v3727 = vpack.c.b16 %v3715, %v3714
  %v3728 = vpack.c.b16 %v3717, %v3716
  %v3729 = vpack.c.b16 %v3719, %v3718
  %v3730 = vpack.c.b16 %v3721, %v3720
  %v3731 = vpack.c.b16 %v3723, %v3722
  %3740 = vmatprep.subr.bf16.mxu0 0
  %3741 = vmatpush1.bf16.msra.mxu0 %v3724
  %3742 = vmatprep.subr.bf16.mxu0 0
  %3743 = vmatpush1.bf16.msra.mxu0 %v3725
  %3744 = vmatprep.subr.bf16.mxu0 0
  %3745 = vmatpush1.bf16.msra.mxu0 %v3726
  %3746 = vmatprep.subr.bf16.mxu0 0
  %3747 = vmatpush1.bf16.msra.mxu0 %v3727
  %3748 = vmatprep.subr.bf16.mxu0 0
  %3749 = vmatpush1.bf16.msra.mxu0 %v3728
  %3750 = vmatprep.subr.bf16.mxu0 0
  %3751 = vmatpush1.bf16.msra.mxu0 %v3729
  %3752 = vmatprep.subr.bf16.mxu0 0
  %3753 = vmatpush1.bf16.msra.mxu0 %v3730
  %3754 = vmatprep.subr.bf16.mxu0 0
  %3755 = vmatpush1.bf16.msra.mxu0 %v3731
  %3756 = vmatprep.subr.bf16.mxu0 0
  %3757 = vmatpush1.bf16.msra.mxu0 0
  %3758 = vmatprep.subr.bf16.mxu0 0
  %3759 = vmatpush1.bf16.msra.mxu0 0
  %3760 = vmatprep.subr.bf16.mxu0 0
  %3761 = vmatpush1.bf16.msra.mxu0 0
  %3762 = vmatprep.subr.bf16.mxu0 0
  %3763 = vmatpush1.bf16.msra.mxu0 0
  %3764 = vmatprep.subr.bf16.mxu0 0
  %3765 = vmatpush1.bf16.msra.mxu0 0
  %3766 = vmatprep.subr.bf16.mxu0 0
  %3767 = vmatpush1.bf16.msra.mxu0 0
  %3768 = vmatprep.subr.bf16.mxu0 0
  %3769 = vmatpush1.bf16.msra.mxu0 0
  %3770 = vmatprep.subr.bf16.mxu0 0
  %3771 = vmatpush1.bf16.msra.mxu0 0
  %3772 = vmatprep.mubr.bf16.mxu0 0
  %3773 = vmatmul.mubr.bf16.gmra.mrb[0].mxu0 %v3668
  %v3774 = vpop.f32.mrb[0].mxu0
  %v3775 = vadd.f32 %v3690, %v3774
  %v3776 = vpop.f32.mrb[0].mxu0
  %v3777 = vpop.f32.mrb[0].mxu0
  %v3778 = vpop.f32.mrb[0].mxu0
  %3779 = vdwg.mxu0
  %3780 = vst [vmem:[%s7] sm:$0xff] %v3775
  // Predicated region
  $region30: #{_lambda_.5} parent=0 // pred_check
    _
  $region31: #{_lambda_.5} parent=0 // pred_check_branch
    %3782 = sbr.rel (0) target = $region33
  $region32: #{_lambda_.5} parent=0 // pred_region
    _
  $region33: #{_lambda_.5} parent=0 // pred_fallthru
    _
  // Predicated region
  $region34: #{_lambda_.5} parent=0 // pred_check
    _
  $region35: #{_lambda_.5} parent=0 // pred_check_branch
    %3784 = sbr.rel (0) target = $region37
  $region36: #{_lambda_.5} parent=0 // pred_region
    _
  $region37: #{_lambda_.5} parent=0 // pred_fallthru
    _

</llo_original>
